<compile_context>
chip_gen: v7x
topology: tpu7x:2x2x1
jax: 0.10.0
libtpu: 0.0.40
codegen_flags: <defaults>
</compile_context>

<pallas_src>
import functools
import math

import jax
import jax.numpy as jnp
from jax.experimental import pallas as pl
from jax.experimental.pallas import tpu as pltpu


_INV_SQRT2 = 0.7071067811865476
_SQRT_2_OVER_PI = 0.7978845608028654
_GELU_CUBIC = 0.044715


def _gelu_tanh(x):
    """tanh-form GELU (standard 'approximate' GELU).

    ~8 VALU ops + one EUP tanh per element; keeps v6e/v7x MXU-bound.
    Max deviation from the exact erf GELU is ~5e-4, below the bf16-MXU
    rounding already present in this kernel.
    """
    u = _SQRT_2_OVER_PI * (x + _GELU_CUBIC * x * x * x)
    return 0.5 * x * (1.0 + jnp.tanh(u))


def _erf(x):
    """Abramowitz & Stegun 7.1.26 erf (|err| <= 1.5e-7).

    Mosaic-lowerable ops only; the divide goes through the EUP via
    pl.reciprocal(approx=True).
    """
    a1, a2, a3, a4, a5 = (0.254829592, -0.284496736, 1.421413741,
                          -1.453152027, 1.061405429)
    p = 0.3275911
    ax = jnp.abs(x)
    t = pl.reciprocal(1.0 + p * ax, approx=True)
    poly = ((((a5 * t + a4) * t + a3) * t + a2) * t + a1) * t
    y = 1.0 - poly * jnp.exp(-ax * ax)
    return jnp.where(x >= 0.0, y, -y)


def _gelu_erf(x):
    # x * 0.5 * (1 + erf(x / sqrt(2)))  — exact PyTorch-reference form.
    return x * 0.5 * (1.0 + _erf(x * _INV_SQRT2))


_GELUS = {"tanh": _gelu_tanh, "erf": _gelu_erf}


def _ffn_kernel(x_ref, w1_ref, b1_ref, w2_ref, b2_ref, o_ref, *, gelu_fn):
    f = pl.program_id(1)

    # fc1: (TM, d_model) bf16 @ (d_model, TF) bf16 -> (TM, TF) f32 accumulate.
    h = jnp.dot(x_ref[...], w1_ref[...], preferred_element_type=jnp.float32)
    h = gelu_fn(h + b1_ref[...])                      # (1, TF) bias broadcast

    # fc2 partial: (TM, TF) bf16 @ (TF, d_model) bf16 -> (TM, d_model) f32.
    partial = jnp.dot(h.astype(jnp.bfloat16), w2_ref[...],
                      preferred_element_type=jnp.float32)

    # Output block is resident across the f (d_ff) axis: accumulate in place.
    @pl.when(f == 0)
    def _init():
        o_ref[...] = partial + b2_ref[...]

    @pl.when(f != 0)
    def _accum():
        o_ref[...] += partial


def _round_up(x, m):
    return ((x + m - 1) // m) * m


def _choose_tm(m, tm_max):
    """Token-tile rows: <= tm_max, multiple of 256 where possible (fills the
    256-wide MXU on v6e/v7x and keeps the weight-stream arithmetic intensity
    above the HBM ridge point), always a multiple of 8."""
    m8 = _round_up(m, 8)
    if m8 <= 256:
        return m8
    n_tiles = -(-m8 // tm_max)
    tm = _round_up(-(-m8 // n_tiles), 256)
    return min(tm, m8)


def _vmem_limit_bytes():
    # ~75% of physical VMEM: ~96 MiB on v5e/v6e (128 MiB), ~48 MiB on v7x
    # (64 MiB).  Fallback assumes the smallest generation (v7x-safe).
    try:
        cap = pltpu.get_tpu_info().vmem_capacity_bytes
    except Exception:
        cap = 64 << 20
    return min(int(cap * 3 // 4), 100 << 20)


def poswise_ffn(x, w1, b1, w2, b2, *, tm=1024, tf=1536, gelu_impl="tanh"):
    """Fused FFN forward: fc2(gelu(fc1(x))).

    x  : (..., d_model) float32
    w1 : (d_ff, d_model), b1: (d_ff,)      -- fc1 (PyTorch nn.Linear layout)
    w2 : (d_model, d_ff), b2: (d_model,)   -- fc2
    tm : max token-tile rows (tunable per TPU generation)
    tf : d_ff tile width (multiple of 128)
    """
    gelu_fn = _GELUS[gelu_impl]
    orig_shape = x.shape
    d_model = orig_shape[-1]
    d_ff = w1.shape[0]

    # Activations shipped as bf16 (halves x HBM read + resident VMEM block,
    # removes the per-f-step cast of the resident x block in the kernel).
    x2 = x.reshape(-1, d_model).astype(jnp.bfloat16)
    m = x2.shape[0]

    tm = _choose_tm(m, tm)
    mp = _round_up(m, tm)
    if mp != m:
        x2 = jnp.pad(x2, ((0, mp - m), (0, 0)))

    # d_ff tile: multiple of 128 lanes.  Zero-padding the hidden dim is exact
    # (zero w1 columns / zero w2 rows contribute nothing to the output).
    tf = min(tf, _round_up(d_ff, 128))
    assert tf % 128 == 0, "d_ff tile must be a multiple of 128 lanes"
    d_ffp = _round_up(d_ff, tf)

    # Pre-transposed bf16 weights: both in-kernel matmuls become canonical
    # (M,K)@(K,N) (no per-step RHS relayout) and the w2 tile is a contiguous
    # leading-dim slab for the DMA.  Biases stay f32.
    w1t = jnp.transpose(w1).astype(jnp.bfloat16)      # (d_model, d_ff)
    w2t = jnp.transpose(w2).astype(jnp.bfloat16)      # (d_ff, d_model)
    if d_ffp != d_ff:
        w1t = jnp.pad(w1t, ((0, 0), (0, d_ffp - d_ff)))
        w2t = jnp.pad(w2t, ((0, d_ffp - d_ff), (0, 0)))
        b1 = jnp.pad(b1, ((0, d_ffp - d_ff),))
    b1_2d = b1.reshape(1, d_ffp).astype(jnp.float32)
    b2_2d = b2.reshape(1, d_model).astype(jnp.float32)

    grid = (mp // tm, d_ffp // tf)

    out = pl.pallas_call(
        functools.partial(_ffn_kernel, gelu_fn=gelu_fn),
        out_shape=jax.ShapeDtypeStruct((mp, d_model), jnp.float32),
        grid_spec=pltpu.PrefetchScalarGridSpec(
            num_scalar_prefetch=0,
            grid=grid,
            in_specs=[
                pl.BlockSpec((tm, d_model), lambda i, f: (i, 0)),   # x (bf16)
                pl.BlockSpec((d_model, tf), lambda i, f: (0, f)),   # w1^T tile
                pl.BlockSpec((1, tf),       lambda i, f: (0, f)),   # b1 tile
                pl.BlockSpec((tf, d_model), lambda i, f: (f, 0)),   # w2^T tile
                pl.BlockSpec((1, d_model),  lambda i, f: (0, 0)),   # b2
            ],
            out_specs=pl.BlockSpec((tm, d_model), lambda i, f: (i, 0)),
        ),
        compiler_params=pltpu.CompilerParams(
            dimension_semantics=("parallel", "arbitrary"),
            vmem_limit_bytes=_vmem_limit_bytes(),
        ),
    )(x2, w1t, b1_2d, w2t, b2_2d)

    if mp != m:
        out = out[:m]
    return out.reshape(orig_shape)


def _reference(x, w1, b1, w2, b2):
    """Pure-JAX f32 reference matching the PyTorch module (exact erf GELU)."""
    h = x @ w1.T + b1
    h = h * 0.5 * (1.0 + jax.lax.erf(h * _INV_SQRT2))
    return h @ w2.T + b2


if __name__ == "__main__":
    # Module-fixed feature sizes, small batch/seq for the smoke test.
    batch, seq = 2, 8
    d_model, d_ff = 768, 768 * 4

    key = jax.random.PRNGKey(0)
    kx, kw1, kb1, kw2, kb2 = jax.random.split(key, 5)

    x = jax.random.normal(kx, (batch, seq, d_model), dtype=jnp.float32)

    # nn.Linear default init: U(-1/sqrt(fan_in), 1/sqrt(fan_in)).
    bnd1 = 1.0 / math.sqrt(d_model)
    bnd2 = 1.0 / math.sqrt(d_ff)
    w1 = jax.random.uniform(kw1, (d_ff, d_model), jnp.float32, -bnd1, bnd1)
    b1 = jax.random.uniform(kb1, (d_ff,), jnp.float32, -bnd1, bnd1)
    w2 = jax.random.uniform(kw2, (d_model, d_ff), jnp.float32, -bnd2, bnd2)
    b2 = jax.random.uniform(kb2, (d_model,), jnp.float32, -bnd2, bnd2)

    out = poswise_ffn(x, w1, b1, w2, b2)
    out = jax.block_until_ready(out)

    ref = _reference(x.reshape(-1, d_model), w1, b1, w2, b2).reshape(x.shape)

    assert out.shape == x.shape
    # bf16 MXU inputs (f32 accumulate) + tanh-form GELU vs exact-erf f32 ref.
    err = float(jnp.max(jnp.abs(out - ref)))
    assert err < 2.5e-2, err

    print("KERNEL_OK")
</pallas_src>

<mosaic_0001>
module attributes {stable_mosaic.version = 11 : i64} {
  func.func @_ffn_kernel(%arg0: i32, %arg1: i32, %arg2: memref<16x768xbf16, #tpu.memory_space<vmem>>, %arg3: memref<768x1536xbf16, #tpu.memory_space<vmem>>, %arg4: memref<1x1536xf32, #tpu.memory_space<vmem>>, %arg5: memref<1536x768xbf16, #tpu.memory_space<vmem>>, %arg6: memref<1x768xf32, #tpu.memory_space<vmem>>, %arg7: memref<16x768xf32, #tpu.memory_space<vmem>>) attributes {dimension_semantics = [#tpu.dimension_semantics<parallel>, #tpu.dimension_semantics<arbitrary>], iteration_bounds = array<i64: 1, 2>, scalar_prefetch = 0 : i64, scratch_operands = 0 : i64, tpu.core_type = #tpu.core_type<tc>, window_params = [{transform_indices = @transform_0, window_bounds = array<i64: 16, 768>}, {transform_indices = @transform_1, window_bounds = array<i64: 768, 1536>}, {transform_indices = @transform_2, window_bounds = array<i64: 1, 1536>}, {transform_indices = @transform_3, window_bounds = array<i64: 1536, 768>}, {pipeline_mode = #tpu.pipeline_mode<synchronous>, transform_indices = @transform_4, window_bounds = array<i64: 1, 768>}, {transform_indices = @transform_5, window_bounds = array<i64: 16, 768>}]} {
    %c0 = arith.constant 0 : index
    %c0_0 = arith.constant 0 : index
    %0 = vector.load %arg2[%c0, %c0_0] : memref<16x768xbf16, #tpu.memory_space<vmem>>, vector<16x768xbf16>
    %c0_1 = arith.constant 0 : index
    %c0_2 = arith.constant 0 : index
    %1 = vector.load %arg3[%c0_1, %c0_2] : memref<768x1536xbf16, #tpu.memory_space<vmem>>, vector<768x1536xbf16>
    %cst = arith.constant dense<0.000000e+00> : vector<16x1536xf32>
    %2 = tpu.matmul %0, %1, %cst {dimension_numbers = #tpu.dot_dimension_numbers<[1], [0], [0], [1], [0, 0, 1, 1], [], []>} : vector<16x768xbf16>, vector<768x1536xbf16>, vector<16x1536xf32> -> vector<16x1536xf32>
    %c0_3 = arith.constant 0 : index
    %c0_4 = arith.constant 0 : index
    %3 = vector.load %arg4[%c0_3, %c0_4] : memref<1x1536xf32, #tpu.memory_space<vmem>>, vector<1x1536xf32>
    %4 = vector.broadcast %3 : vector<1x1536xf32> to vector<16x1536xf32>
    %5 = arith.addf %2, %4 : vector<16x1536xf32>
    %cst_5 = arith.constant 4.471500e-02 : f32
    %6 = vector.broadcast %cst_5 : f32 to vector<16x1536xf32>
    %7 = arith.mulf %6, %5 : vector<16x1536xf32>
    %8 = arith.mulf %7, %5 : vector<16x1536xf32>
    %9 = arith.mulf %8, %5 : vector<16x1536xf32>
    %10 = arith.addf %5, %9 : vector<16x1536xf32>
    %cst_6 = arith.constant 0.797884583 : f32
    %11 = vector.broadcast %cst_6 : f32 to vector<16x1536xf32>
    %12 = arith.mulf %11, %10 : vector<16x1536xf32>
    %cst_7 = arith.constant 5.000000e-01 : f32
    %13 = vector.broadcast %cst_7 : f32 to vector<16x1536xf32>
    %14 = arith.mulf %13, %5 : vector<16x1536xf32>
    %15 = math.tanh %12 : vector<16x1536xf32>
    %cst_8 = arith.constant 1.000000e+00 : f32
    %16 = vector.broadcast %cst_8 : f32 to vector<16x1536xf32>
    %17 = arith.addf %16, %15 : vector<16x1536xf32>
    %18 = arith.mulf %14, %17 : vector<16x1536xf32>
    %19 = arith.truncf %18 : vector<16x1536xf32> to vector<16x1536xbf16>
    %c0_9 = arith.constant 0 : index
    %c0_10 = arith.constant 0 : index
    %20 = vector.load %arg5[%c0_9, %c0_10] : memref<1536x768xbf16, #tpu.memory_space<vmem>>, vector<1536x768xbf16>
    %cst_11 = arith.constant dense<0.000000e+00> : vector<16x768xf32>
    %21 = tpu.matmul %19, %20, %cst_11 {dimension_numbers = #tpu.dot_dimension_numbers<[1], [0], [0], [1], [0, 0, 1, 1], [], []>} : vector<16x1536xbf16>, vector<1536x768xbf16>, vector<16x768xf32> -> vector<16x768xf32>
    %c0_i32 = arith.constant 0 : i32
    %22 = arith.cmpi eq, %arg1, %c0_i32 : i32
    %23 = arith.extui %22 : i1 to i32
    %c0_i32_12 = arith.constant 0 : i32
    %24 = arith.cmpi ne, %23, %c0_i32_12 : i32
    scf.if %24 {
      %c0_15 = arith.constant 0 : index
      %c0_16 = arith.constant 0 : index
      %28 = vector.load %arg6[%c0_15, %c0_16] : memref<1x768xf32, #tpu.memory_space<vmem>>, vector<1x768xf32>
      %29 = vector.broadcast %28 : vector<1x768xf32> to vector<16x768xf32>
      %30 = arith.addf %21, %29 : vector<16x768xf32>
      %c0_17 = arith.constant 0 : index
      %c0_18 = arith.constant 0 : index
      %31 = vector.load %arg7[%c0_17, %c0_18] : memref<16x768xf32, #tpu.memory_space<vmem>>, vector<16x768xf32>
      tpu.vector_store %arg7[%c0_17, %c0_18], %30 {strides = array<i32>} : memref<16x768xf32, #tpu.memory_space<vmem>>, vector<16x768xf32>,
    } else {
    }
    %c0_i32_13 = arith.constant 0 : i32
    %25 = arith.cmpi ne, %arg1, %c0_i32_13 : i32
    %26 = arith.extui %25 : i1 to i32
    %c0_i32_14 = arith.constant 0 : i32
    %27 = arith.cmpi ne, %26, %c0_i32_14 : i32
    scf.if %27 {
      %c0_15 = arith.constant 0 : index
      %c0_16 = arith.constant 0 : index
      %28 = vector.load %arg7[%c0_15, %c0_16] : memref<16x768xf32, #tpu.memory_space<vmem>>, vector<16x768xf32>
      %29 = arith.addf %28, %21 : vector<16x768xf32>
      %c0_17 = arith.constant 0 : index
      %c0_18 = arith.constant 0 : index
      %30 = vector.load %arg7[%c0_17, %c0_18] : memref<16x768xf32, #tpu.memory_space<vmem>>, vector<16x768xf32>
      tpu.vector_store %arg7[%c0_17, %c0_18], %29 {strides = array<i32>} : memref<16x768xf32, #tpu.memory_space<vmem>>, vector<16x768xf32>,
    } else {
    }
    return
  }
  func.func @transform_0(%arg0: i32, %arg1: i32) -> (i32, i32) {
    %c0_i32 = arith.constant 0 : i32
    %c0_i32_0 = arith.constant 0 : i32
    return %arg0, %c0_i32 : i32, i32
  }
  func.func @transform_1(%arg0: i32, %arg1: i32) -> (i32, i32) {
    %c0_i32 = arith.constant 0 : i32
    %c0_i32_0 = arith.constant 0 : i32
    return %c0_i32, %arg1 : i32, i32
  }
  func.func @transform_2(%arg0: i32, %arg1: i32) -> (i32, i32) {
    %c0_i32 = arith.constant 0 : i32
    %c0_i32_0 = arith.constant 0 : i32
    return %c0_i32, %arg1 : i32, i32
  }
  func.func @transform_3(%arg0: i32, %arg1: i32) -> (i32, i32) {
    %c0_i32 = arith.constant 0 : i32
    %c0_i32_0 = arith.constant 0 : i32
    return %arg1, %c0_i32 : i32, i32
  }
  func.func @transform_4(%arg0: i32, %arg1: i32) -> (i32, i32) {
    %c0_i32 = arith.constant 0 : i32
    %c0_i32_0 = arith.constant 0 : i32
    %c0_i32_1 = arith.constant 0 : i32
    return %c0_i32, %c0_i32_0 : i32, i32
  }
  func.func @transform_5(%arg0: i32, %arg1: i32) -> (i32, i32) {
    %c0_i32 = arith.constant 0 : i32
    %c0_i32_0 = arith.constant 0 : i32
    return %arg0, %c0_i32 : i32, i32
  }
}

</mosaic_0001>

<llo_original>
// kernel: tpu_custom_call.1
$region0: #{tpu_custom_call.1}
  #allocation0 [shape = 'u32[]', space=smem, size = 0x4, offset = 0x4, fixed_abs, tag = 'smem constant byte address 0x4 - core index']
  #allocation1 [shape = 'u32[144,128]{1,0:T(1,128)}', space=vmem, size = 0x12000, scoped, tag = 'internal scratch']
  %s0 = inlined_call_operand.hbm [shape: bf16[16,768], index: 0, kind: input, shape index: {}]
  %s1 = inlined_call_operand.hbm [shape: bf16[768,3072], index: 1, kind: input, shape index: {}]
  %s2 = inlined_call_operand.hbm [shape: f32[1,3072], index: 2, kind: input, shape index: {}]
  %s3 = inlined_call_operand.hbm [shape: bf16[3072,768], index: 3, kind: input, shape index: {}]
  %s4 = inlined_call_operand.hbm [shape: f32[1,768], index: 4, kind: input, shape index: {}]
  %s5 = inlined_call_operand.hbm [shape: f32[16,768], index: 5, kind: output, shape index: {}]
  %s6 = sld [smem:[#allocation0]]
  $region81: #{tpu_custom_call.1} parent=0
    _
  %s8 = ssub.s32 1, %s6
  %s9 = scalar_select 0, %s8, %s6
  $region1: #{tpu_custom_call.1} parent=0
    #allocation2 [shape = 'u8[24576]{0}', space=vmem, size = 0x6000, scoped, tag = 'input window, operand 0, single buffered']
    #allocation3 [shape = 's32[2]{0}', space=sflag, size = 0x8, scoped, tag = 'scoped memory for tpu_custom_call.1']
    #allocation4 [shape = 's32[2]{0}', space=sflag, size = 0x8, scoped, tag = 'scoped memory for tpu_custom_call.1']
    #allocation5 [shape = 'u8[4718592]{0}', space=vmem, size = 0x480000, scoped, tag = 'input window, operand 1']
    #allocation6 [shape = 's32[2]{0}', space=sflag, size = 0x8, scoped, tag = 'scoped memory for tpu_custom_call.1']
    #allocation7 [shape = 'u8[12288]{0}', space=vmem, size = 0x3000, scoped, tag = 'input window, operand 2']
    #allocation8 [shape = 'u8[4718592]{0}', space=vmem, size = 0x480000, scoped, tag = 'input window, operand 3']
    #allocation9 [shape = 's32[2]{0}', space=sflag, size = 0x8, scoped, tag = 'scoped memory for tpu_custom_call.1']
    #allocation10 [shape = 'u8[3072]{0}', space=vmem, size = 0xc00, scoped, tag = 'input window, operand 4, single buffered']
    #allocation11 [shape = 'u8[49152]{0}', space=vmem, size = 0xc000, scoped, tag = 'output window, operand 0, single buffered']
    %10 = vsyncpa [#allocation3], 0
    %11 = vsyncpa [#allocation6], 0
    %s12 = scalar_lea.sflag [#allocation6], 1
    %13 = vsyncpa %s12, 0
    %14 = vsyncpa [#allocation9], 0
    %s15 = scalar_lea.sflag [#allocation9], 1
    %16 = vsyncpa %s15, 0
    %17 = vsyncpa [#allocation4], 0
    loop: start=0, step=1, limit=4
    $region2: #{tpu_custom_call.1} parent=1 // loop_pre_header
      _
    $region3: #{tpu_custom_call.1} parent=1 // loop_header
      %s19 = sphi 0, %s23
      %p20 = scmp.ge.s32.totalorder %s19, 4
      %s26 = sphi 0, %s38
      %s27 = sphi 0, %s34
      %s28 = sphi 0, %s26
      %s29 = sphi 0, %s27
      %s30 = sphi 0, %s28
      %s31 = sphi 0, %s29
      %s41 = sphi 0, %s43
      %s44 = sphi 0, %s41
      %s45 = sphi 0, %s44
      %s61 = sphi 0, %s45
      %s67 = sphi 0, %s69
      %s70 = sphi 0, %s67
      %s71 = sphi 0, %s70
      %s87 = sphi 0, %s71
      %s93 = sphi 0, %s95
      %s96 = sphi 0, %s93
      %s97 = sphi 0, %s96
      %s113 = sphi 0, %s97
      %s119 = sphi 0, %s121
      %s122 = sphi 0, %s119
      %s123 = sphi 0, %s122
      %s139 = sphi 0, %s123
      %s143 = sphi 0, %s143
      %s145 = sphi 0, %s143
      %s146 = sphi 0, %s145
      %s160 = sphi 0, %s146
      %s166 = sphi 0, %s168
      %s169 = sphi 0, %s166
      %s170 = sphi 0, %s169
      %s186 = sphi 0, %s170
    $region4: #{tpu_custom_call.1} parent=1 // loop_header_branch
      %22 = sbr.rel (%p20) target = $region8
    $region5: #{tpu_custom_call.1} parent=1 // loop_body
      %s24 = ssub.s32 %s19, 1
      %s25 = ssub.s32 %s19, 2
      %s32 = sadd.s32 1, %s27
      %p33 = scmp.ge.s32.totalorder %s32, 2
      %s34 = scalar_select %p33, 0, %s32
      %s35 = sadd.s32 1, %s26
      %s36 = scalar_select %p33, %s35, %s26
      %p37 = scmp.ge.s32.totalorder %s36, 1
      %s38 = scalar_select %p37, 0, %s36
      %s39 = ssub.s32 %s26, %s38
      %p40 = scmp.eq.s32.totalorder %s39, 0
      %s42 = sadd.s32 %s41, 1
      %s43 = scalar_select %p40, %s41, %s42
      %p46 = pneg %p40
      %p47 = scmp.eq.s32.totalorder %s19, 1
      %p48 = por %p46, %p47
      %p49 = scmp.ne.s32.totalorder %s41, %s44
      %p50 = scmp.eq.s32.totalorder %s19, 0
      %p51 = por %p49, %p50
      %p52 = scmp.ne.s32.totalorder %s41, %s44
      %p53 = scmp.eq.s32.totalorder %s24, 1
      %p54 = por %p52, %p53
      %p55 = scmp.ne.s32.totalorder %s44, %s45
      %p56 = scmp.eq.s32.totalorder %s24, 0
      %p57 = por %p55, %p56
      %p58 = scmp.ne.s32.totalorder %s44, %s45
      %p59 = scmp.eq.s32.totalorder %s25, 1
      %p60 = por %p58, %p59
      %p62 = scmp.ne.s32.totalorder %s45, %s61
      %p63 = scmp.eq.s32.totalorder %s25, 0
      %p64 = por %p62, %p63
      %s65 = ssub.s32 %s27, %s34
      %p66 = scmp.eq.s32.totalorder %s65, 0
      %s68 = sadd.s32 %s67, 1
      %s69 = scalar_select %p66, %s67, %s68
      %p72 = pneg %p66
      %p73 = scmp.eq.s32.totalorder %s19, 1
      %p74 = por %p72, %p73
      %p75 = scmp.ne.s32.totalorder %s67, %s70
      %p76 = scmp.eq.s32.totalorder %s19, 0
      %p77 = por %p75, %p76
      %p78 = scmp.ne.s32.totalorder %s67, %s70
      %p79 = scmp.eq.s32.totalorder %s24, 1
      %p80 = por %p78, %p79
      %p81 = scmp.ne.s32.totalorder %s70, %s71
      %p82 = scmp.eq.s32.totalorder %s24, 0
      %p83 = por %p81, %p82
      %p84 = scmp.ne.s32.totalorder %s70, %s71
      %p85 = scmp.eq.s32.totalorder %s25, 1
      %p86 = por %p84, %p85
      %p88 = scmp.ne.s32.totalorder %s71, %s87
      %p89 = scmp.eq.s32.totalorder %s25, 0
      %p90 = por %p88, %p89
      %s91 = ssub.s32 %s27, %s34
      %p92 = scmp.eq.s32.totalorder %s91, 0
      %s94 = sadd.s32 %s93, 1
      %s95 = scalar_select %p92, %s93, %s94
      %p98 = pneg %p92
      %p99 = scmp.eq.s32.totalorder %s19, 1
      %p100 = por %p98, %p99
      %p101 = scmp.ne.s32.totalorder %s93, %s96
      %p102 = scmp.eq.s32.totalorder %s19, 0
      %p103 = por %p101, %p102
      %p104 = scmp.ne.s32.totalorder %s93, %s96
      %p105 = scmp.eq.s32.totalorder %s24, 1
      %p106 = por %p104, %p105
      %p107 = scmp.ne.s32.totalorder %s96, %s97
      %p108 = scmp.eq.s32.totalorder %s24, 0
      %p109 = por %p107, %p108
      %p110 = scmp.ne.s32.totalorder %s96, %s97
      %p111 = scmp.eq.s32.totalorder %s25, 1
      %p112 = por %p110, %p111
      %p114 = scmp.ne.s32.totalorder %s97, %s113
      %p115 = scmp.eq.s32.totalorder %s25, 0
      %p116 = por %p114, %p115
      %s117 = ssub.s32 %s27, %s34
      %p118 = scmp.eq.s32.totalorder %s117, 0
      %s120 = sadd.s32 %s119, 1
      %s121 = scalar_select %p118, %s119, %s120
      %p124 = pneg %p118
      %p125 = scmp.eq.s32.totalorder %s19, 1
      %p126 = por %p124, %p125
      %p127 = scmp.ne.s32.totalorder %s119, %s122
      %p128 = scmp.eq.s32.totalorder %s19, 0
      %p129 = por %p127, %p128
      %p130 = scmp.ne.s32.totalorder %s119, %s122
      %p131 = scmp.eq.s32.totalorder %s24, 1
      %p132 = por %p130, %p131
      %p133 = scmp.ne.s32.totalorder %s122, %s123
      %p134 = scmp.eq.s32.totalorder %s24, 0
      %p135 = por %p133, %p134
      %p136 = scmp.ne.s32.totalorder %s122, %s123
      %p137 = scmp.eq.s32.totalorder %s25, 1
      %p138 = por %p136, %p137
      %p140 = scmp.ne.s32.totalorder %s123, %s139
      %p141 = scmp.eq.s32.totalorder %s25, 0
      %p142 = por %p140, %p141
      %s144 = sadd.s32 %s143, 1
      %p147 = scmp.eq.s32.totalorder %s19, 1
      %p148 = scmp.ne.s32.totalorder %s143, %s145
      %p149 = scmp.eq.s32.totalorder %s19, 0
      %p150 = por %p148, %p149
      %p151 = scmp.ne.s32.totalorder %s143, %s145
      %p152 = scmp.eq.s32.totalorder %s24, 1
      %p153 = por %p151, %p152
      %p154 = scmp.ne.s32.totalorder %s145, %s146
      %p155 = scmp.eq.s32.totalorder %s24, 0
      %p156 = por %p154, %p155
      %p157 = scmp.ne.s32.totalorder %s145, %s146
      %p158 = scmp.eq.s32.totalorder %s25, 1
      %p159 = por %p157, %p158
      %p161 = scmp.ne.s32.totalorder %s146, %s160
      %p162 = scmp.eq.s32.totalorder %s25, 0
      %p163 = por %p161, %p162
      %s164 = ssub.s32 %s26, %s38
      %p165 = scmp.eq.s32.totalorder %s164, 0
      %s167 = sadd.s32 %s166, 1
      %s168 = scalar_select %p165, %s166, %s167
      %p171 = pneg %p165
      %p172 = scmp.eq.s32.totalorder %s19, 1
      %p173 = por %p171, %p172
      %p174 = scmp.ne.s32.totalorder %s166, %s169
      %p175 = scmp.eq.s32.totalorder %s19, 0
      %p176 = por %p174, %p175
      %p177 = scmp.ne.s32.totalorder %s166, %s169
      %p178 = scmp.eq.s32.totalorder %s24, 1
      %p179 = por %p177, %p178
      %p180 = scmp.ne.s32.totalorder %s169, %s170
      %p181 = scmp.eq.s32.totalorder %s24, 0
      %p182 = por %p180, %p181
      %p183 = scmp.ne.s32.totalorder %s169, %s170
      %p184 = scmp.eq.s32.totalorder %s25, 1
      %p185 = por %p183, %p184
      %p187 = scmp.ne.s32.totalorder %s170, %s186
      %p188 = scmp.eq.s32.totalorder %s25, 0
      %p189 = por %p187, %p188
      %p190 = scmp.le.s32.totalorder 1, %s19
      %p191 = scmp.lt.s32.totalorder %s19, 3
      %p192 = pnand %p190, %p191
      %p193 = pneg %p192
      // Predicated region
      $region9: #{tpu_custom_call.1} parent=5 // pred_check
        _
      $region10: #{tpu_custom_call.1} parent=5 // pred_check_branch
        %195 = sbr.rel (%p192) target = $region12
      $region11: #{tpu_custom_call.1} parent=5 // pred_region
        %s196 = ssub.s32 %s19, 1
        // Predicated region
        $region13: #{tpu_custom_call.1} parent=11 // pred_check
          %p197 = pneg %p57
        $region14: #{tpu_custom_call.1} parent=11 // pred_check_branch
          %199 = sbr.rel (%p197) target = $region16
        $region15: #{tpu_custom_call.1} parent=11 // pred_region
          %s200 = smul.u32 2, %s28
          %s202 = ssub.s32 768, 768
          %203 = vsyncadd [#allocation3], %s202
          %s204 = smul.addr %s200, 6
          %s205 = smul.addr %s204, 64
          %s206 = scalar_lea.hbm %s0, %s205
          %s207 = sshll.u32 [#allocation2], 4
          %s208 = int_to_ptr.vmem [resolvable:$true] %s207
          %213 = dma.hbm_to_vmem [thread:$0]  %s206, 768, %s208, [#allocation3], 384, 384, 24
        $region16: #{tpu_custom_call.1} parent=11 // pred_fallthru
          _
        // Predicated region
        $region17: #{tpu_custom_call.1} parent=11 // pred_check
          %p214 = pneg %p156
        $region18: #{tpu_custom_call.1} parent=11 // pred_check_branch
          %216 = sbr.rel (%p214) target = $region20
        $region19: #{tpu_custom_call.1} parent=11 // pred_region
          %s218 = ssub.s32 96, 96
          %219 = vsyncadd [#allocation9], %s218
          %s221 = sshll.u32 [#allocation10], 4
          %s222 = int_to_ptr.vmem [resolvable:$true] %s221
          %224 = dma.hbm_to_vmem [thread:$0]  %s4, 96, %s222, [#allocation9]
        $region20: #{tpu_custom_call.1} parent=11 // pred_fallthru
          _
      $region12: #{tpu_custom_call.1} parent=5 // pred_fallthru
        _
      %p225 = scmp.lt.s32.totalorder %s19, 2
      // Predicated region
      $region21: #{tpu_custom_call.1} parent=5 // pred_check
        %p226 = pneg %p225
      $region22: #{tpu_custom_call.1} parent=5 // pred_check_branch
        %228 = sbr.rel (%p226) target = $region24
      $region23: #{tpu_custom_call.1} parent=5 // pred_region
        // Predicated region
        $region25: #{tpu_custom_call.1} parent=23 // pred_check
          %p229 = pneg %p77
        $region26: #{tpu_custom_call.1} parent=23 // pred_check_branch
          %231 = sbr.rel (%p229) target = $region28
        $region27: #{tpu_custom_call.1} parent=23 // pred_region
          %s232 = sand.u32 %s19, 1
          %s233 = scalar_lea.sflag [#allocation6], %s232
          %s234 = sand.u32 %s67, 1
          %s235 = smul.addr %s234, 4608
          %s236 = scalar_lea.vmem [#allocation5], %s235
          %s237 = smul.u32 12, %s27
          %s239 = ssub.s32 73728, 73728
          %240 = vsyncadd %s233, %s239
          %s241 = smul.addr %s237, 64
          %s242 = scalar_lea.hbm %s1, %s241
          %s243 = sshll.u32 %s236, 4
          %s244 = int_to_ptr.vmem [resolvable:$true] %s243
          %249 = dma.hbm_to_vmem [thread:$0]  %s242, 73728, %s244, %s233, 1536, 768, 48
        $region28: #{tpu_custom_call.1} parent=23 // pred_fallthru
          _
        // Predicated region
        $region29: #{tpu_custom_call.1} parent=23 // pred_check
          %p250 = pneg %p103
        $region30: #{tpu_custom_call.1} parent=23 // pred_check_branch
          %252 = sbr.rel (%p250) target = $region32
        $region31: #{tpu_custom_call.1} parent=23 // pred_region
          %s253 = sand.u32 %s19, 1
          %s254 = scalar_lea.sflag [#allocation6], %s253
          %s255 = sand.u32 %s93, 1
          %s256 = smul.addr %s255, 12
          %s257 = scalar_lea.vmem [#allocation7], %s256
          %s258 = smul.u32 12, %s27
          %s260 = ssub.s32 192, 192
          %261 = vsyncadd %s254, %s260
          %s262 = smul.addr %s258, 16
          %s263 = scalar_lea.hbm %s2, %s262
          %s265 = sshll.u32 %s257, 4
          %s266 = int_to_ptr.vmem [resolvable:$true] %s265
          %268 = dma.hbm_to_vmem [thread:$0]  %s263, 192, %s266, %s254
        $region32: #{tpu_custom_call.1} parent=23 // pred_fallthru
          _
        // Predicated region
        $region33: #{tpu_custom_call.1} parent=23 // pred_check
          %p269 = pneg %p129
        $region34: #{tpu_custom_call.1} parent=23 // pred_check_branch
          %271 = sbr.rel (%p269) target = $region36
        $region35: #{tpu_custom_call.1} parent=23 // pred_region
          %s272 = sand.u32 %s19, 1
          %s273 = scalar_lea.sflag [#allocation9], %s272
          %s274 = sand.u32 %s119, 1
          %s275 = smul.addr %s274, 4608
          %s276 = scalar_lea.vmem [#allocation8], %s275
          %s277 = smul.u32 192, %s27
          %s279 = ssub.s32 73728, 73728
          %280 = vsyncadd %s273, %s279
          %s281 = smul.addr %s277, 6
          %s282 = smul.addr %s281, 64
          %s283 = scalar_lea.hbm %s3, %s282
          %s284 = sshll.u32 %s276, 4
          %s285 = int_to_ptr.vmem [resolvable:$true] %s284
          %290 = dma.hbm_to_vmem [thread:$0]  %s283, 73728, %s285, %s273, 384, 384, 24
        $region36: #{tpu_custom_call.1} parent=23 // pred_fallthru
          _
      $region24: #{tpu_custom_call.1} parent=5 // pred_fallthru
        _
      %p291 = scmp.le.s32.totalorder 1, %s19
      %p292 = scmp.lt.s32.totalorder %s19, 3
      %p293 = pnand %p291, %p292
      %p294 = pneg %p293
      // Predicated region
      $region37: #{tpu_custom_call.1} parent=5 // pred_check
        _
      $region38: #{tpu_custom_call.1} parent=5 // pred_check_branch
        %296 = sbr.rel (%p293) target = $region40
      $region39: #{tpu_custom_call.1} parent=5 // pred_region
        %s297 = ssub.s32 %s19, 1
        // Predicated region
        $region41: #{tpu_custom_call.1} parent=39 // pred_check
          %p298 = pneg %p57
        $region42: #{tpu_custom_call.1} parent=39 // pred_check_branch
          %300 = sbr.rel (%p298) target = $region44
        $region43: #{tpu_custom_call.1} parent=39 // pred_region
          %301 = dma.done [#allocation3], 768
        $region44: #{tpu_custom_call.1} parent=39 // pred_fallthru
          _
        %s302 = sand.u32 %s24, 1
        %s303 = scalar_lea.sflag [#allocation6], %s302
        %s304 = sand.u32 %s70, 1
        %s305 = smul.addr %s304, 4608
        %s306 = scalar_lea.vmem [#allocation5], %s305
        // Predicated region
        $region45: #{tpu_custom_call.1} parent=39 // pred_check
          %p307 = pneg %p83
        $region46: #{tpu_custom_call.1} parent=39 // pred_check_branch
          %309 = sbr.rel (%p307) target = $region48
        $region47: #{tpu_custom_call.1} parent=39 // pred_region
          %310 = dma.done %s303, 73728
        $region48: #{tpu_custom_call.1} parent=39 // pred_fallthru
          _
        %s311 = sand.u32 %s24, 1
        %s312 = scalar_lea.sflag [#allocation6], %s311
        %s313 = sand.u32 %s96, 1
        %s314 = smul.addr %s313, 12
        %s315 = scalar_lea.vmem [#allocation7], %s314
        // Predicated region
        $region49: #{tpu_custom_call.1} parent=39 // pred_check
          %p316 = pneg %p109
        $region50: #{tpu_custom_call.1} parent=39 // pred_check_branch
          %318 = sbr.rel (%p316) target = $region52
        $region51: #{tpu_custom_call.1} parent=39 // pred_region
          %319 = dma.done %s312, 192
        $region52: #{tpu_custom_call.1} parent=39 // pred_fallthru
          _
        %s320 = sand.u32 %s24, 1
        %s321 = scalar_lea.sflag [#allocation9], %s320
        %s322 = sand.u32 %s122, 1
        %s323 = smul.addr %s322, 4608
        %s324 = scalar_lea.vmem [#allocation8], %s323
        // Predicated region
        $region53: #{tpu_custom_call.1} parent=39 // pred_check
          %p325 = pneg %p135
        $region54: #{tpu_custom_call.1} parent=39 // pred_check_branch
          %327 = sbr.rel (%p325) target = $region56
        $region55: #{tpu_custom_call.1} parent=39 // pred_region
          %328 = dma.done %s321, 73728
        $region56: #{tpu_custom_call.1} parent=39 // pred_fallthru
          _
        // Predicated region
        $region57: #{tpu_custom_call.1} parent=39 // pred_check
          %p329 = pneg %p156
        $region58: #{tpu_custom_call.1} parent=39 // pred_check_branch
          %331 = sbr.rel (%p329) target = $region60
        $region59: #{tpu_custom_call.1} parent=39 // pred_region
          %332 = dma.done [#allocation9], 96
        $region60: #{tpu_custom_call.1} parent=39 // pred_fallthru
          _
        %p333 = pneg %p57
        %p334 = pneg %p54
        %s335 = sand.u32 %s24, 1
        %s336 = scalar_lea.sflag [#allocation6], %s335
        %s337 = sand.u32 %s70, 1
        %s338 = smul.addr %s337, 4608
        %s339 = scalar_lea.vmem [#allocation5], %s338
        %p340 = pneg %p83
        %p341 = pneg %p80
        %s342 = sand.u32 %s24, 1
        %s343 = scalar_lea.sflag [#allocation6], %s342
        %s344 = sand.u32 %s96, 1
        %s345 = smul.addr %s344, 12
        %s346 = scalar_lea.vmem [#allocation7], %s345
        %p347 = pneg %p109
        %p348 = pneg %p106
        %s349 = sand.u32 %s24, 1
        %s350 = scalar_lea.sflag [#allocation9], %s349
        %s351 = sand.u32 %s122, 1
        %s352 = smul.addr %s351, 4608
        %s353 = scalar_lea.vmem [#allocation8], %s352
        %p354 = pneg %p135
        %p355 = pneg %p132
        %p356 = pneg %p156
        %p357 = pneg %p153
        %p358 = pneg %p182
        %p359 = pneg %p179
        %s360 = smul.u32 2, %s28
        %s361 = smul.u32 12, %s29
        %s362 = smul.u32 12, %s29
        %s363 = smul.u32 192, %s29
        %s364 = smul.u32 2, %s28
        %v365 = vld [vmem:[#allocation2] sm:$0xff]
        %v366 = vld [vmem:[#allocation2 + $0x8] sm:$0xff]
        %v367 = vld [vmem:[#allocation2 + $0x10] sm:$0xff]
        %v368 = vld [vmem:[#allocation2 + $0x18] sm:$0xff]
        %v369 = vld [vmem:[#allocation2 + $0x20] sm:$0xff]
        %v370 = vld [vmem:[#allocation2 + $0x28] sm:$0xff]
        %v371 = vld [vmem:[%s306] sm:$0xff]
        %v372 = vld [vmem:[%s306 + $0x8] sm:$0xff]
        %v373 = vld [vmem:[%s306 + $0x10] sm:$0xff]
        %v374 = vld [vmem:[%s306 + $0x18] sm:$0xff]
        %v375 = vld [vmem:[%s306 + $0x20] sm:$0xff]
        %v376 = vld [vmem:[%s306 + $0x28] sm:$0xff]
        %v377 = vld [vmem:[%s306 + $0x30] sm:$0xff]
        %v378 = vld [vmem:[%s306 + $0x38] sm:$0xff]
        %v379 = vld [vmem:[%s306 + $0x40] sm:$0xff]
        %v380 = vld [vmem:[%s306 + $0x48] sm:$0xff]
        %v381 = vld [vmem:[%s306 + $0x50] sm:$0xff]
        %v382 = vld [vmem:[%s306 + $0x58] sm:$0xff]
        %v383 = vld [vmem:[%s306 + $0x60] sm:$0xff]
        %v384 = vld [vmem:[%s306 + $0x68] sm:$0xff]
        %v385 = vld [vmem:[%s306 + $0x70] sm:$0xff]
        %v386 = vld [vmem:[%s306 + $0x78] sm:$0xff]
        %v387 = vld [vmem:[%s306 + $0x80] sm:$0xff]
        %v388 = vld [vmem:[%s306 + $0x88] sm:$0xff]
        %v389 = vld [vmem:[%s306 + $0x90] sm:$0xff]
        %v390 = vld [vmem:[%s306 + $0x98] sm:$0xff]
        %v391 = vld [vmem:[%s306 + $0xa0] sm:$0xff]
        %v392 = vld [vmem:[%s306 + $0xa8] sm:$0xff]
        %v393 = vld [vmem:[%s306 + $0xb0] sm:$0xff]
        %v394 = vld [vmem:[%s306 + $0xb8] sm:$0xff]
        %v395 = vld [vmem:[%s306 + $0xc0] sm:$0xff]
        %v396 = vld [vmem:[%s306 + $0xc8] sm:$0xff]
        %v397 = vld [vmem:[%s306 + $0xd0] sm:$0xff]
        %v398 = vld [vmem:[%s306 + $0xd8] sm:$0xff]
        %v399 = vld [vmem:[%s306 + $0xe0] sm:$0xff]
        %v400 = vld [vmem:[%s306 + $0xe8] sm:$0xff]
        %v401 = vld [vmem:[%s306 + $0xf0] sm:$0xff]
        %v402 = vld [vmem:[%s306 + $0xf8] sm:$0xff]
        %v403 = vld [vmem:[%s306 + $0x100] sm:$0xff]
        %v404 = vld [vmem:[%s306 + $0x108] sm:$0xff]
        %v405 = vld [vmem:[%s306 + $0x110] sm:$0xff]
        %v406 = vld [vmem:[%s306 + $0x118] sm:$0xff]
        %v407 = vld [vmem:[%s306 + $0x120] sm:$0xff]
        %v408 = vld [vmem:[%s306 + $0x128] sm:$0xff]
        %v409 = vld [vmem:[%s306 + $0x130] sm:$0xff]
        %v410 = vld [vmem:[%s306 + $0x138] sm:$0xff]
        %v411 = vld [vmem:[%s306 + $0x140] sm:$0xff]
        %v412 = vld [vmem:[%s306 + $0x148] sm:$0xff]
        %v413 = vld [vmem:[%s306 + $0x150] sm:$0xff]
        %v414 = vld [vmem:[%s306 + $0x158] sm:$0xff]
        %v415 = vld [vmem:[%s306 + $0x160] sm:$0xff]
        %v416 = vld [vmem:[%s306 + $0x168] sm:$0xff]
        %v417 = vld [vmem:[%s306 + $0x170] sm:$0xff]
        %v418 = vld [vmem:[%s306 + $0x178] sm:$0xff]
        %v419 = vld [vmem:[%s306 + $0x180] sm:$0xff]
        %v420 = vld [vmem:[%s306 + $0x188] sm:$0xff]
        %v421 = vld [vmem:[%s306 + $0x190] sm:$0xff]
        %v422 = vld [vmem:[%s306 + $0x198] sm:$0xff]
        %v423 = vld [vmem:[%s306 + $0x1a0] sm:$0xff]
        %v424 = vld [vmem:[%s306 + $0x1a8] sm:$0xff]
        %v425 = vld [vmem:[%s306 + $0x1b0] sm:$0xff]
        %v426 = vld [vmem:[%s306 + $0x1b8] sm:$0xff]
        %v427 = vld [vmem:[%s306 + $0x1c0] sm:$0xff]
        %v428 = vld [vmem:[%s306 + $0x1c8] sm:$0xff]
        %v429 = vld [vmem:[%s306 + $0x1d0] sm:$0xff]
        %v430 = vld [vmem:[%s306 + $0x1d8] sm:$0xff]
        %v431 = vld [vmem:[%s306 + $0x1e0] sm:$0xff]
        %v432 = vld [vmem:[%s306 + $0x1e8] sm:$0xff]
        %v433 = vld [vmem:[%s306 + $0x1f0] sm:$0xff]
        %v434 = vld [vmem:[%s306 + $0x1f8] sm:$0xff]
        %v435 = vld [vmem:[%s306 + $0x200] sm:$0xff]
        %v436 = vld [vmem:[%s306 + $0x208] sm:$0xff]
        %v437 = vld [vmem:[%s306 + $0x210] sm:$0xff]
        %v438 = vld [vmem:[%s306 + $0x218] sm:$0xff]
        %v439 = vld [vmem:[%s306 + $0x220] sm:$0xff]
        %v440 = vld [vmem:[%s306 + $0x228] sm:$0xff]
        %v441 = vld [vmem:[%s306 + $0x230] sm:$0xff]
        %v442 = vld [vmem:[%s306 + $0x238] sm:$0xff]
        %v443 = vld [vmem:[%s306 + $0x240] sm:$0xff]
        %v444 = vld [vmem:[%s306 + $0x248] sm:$0xff]
        %v445 = vld [vmem:[%s306 + $0x250] sm:$0xff]
        %v446 = vld [vmem:[%s306 + $0x258] sm:$0xff]
        %v447 = vld [vmem:[%s306 + $0x260] sm:$0xff]
        %v448 = vld [vmem:[%s306 + $0x268] sm:$0xff]
        %v449 = vld [vmem:[%s306 + $0x270] sm:$0xff]
        %v450 = vld [vmem:[%s306 + $0x278] sm:$0xff]
        %v451 = vld [vmem:[%s306 + $0x280] sm:$0xff]
        %v452 = vld [vmem:[%s306 + $0x288] sm:$0xff]
        %v453 = vld [vmem:[%s306 + $0x290] sm:$0xff]
        %v454 = vld [vmem:[%s306 + $0x298] sm:$0xff]
        %v455 = vld [vmem:[%s306 + $0x2a0] sm:$0xff]
        %v456 = vld [vmem:[%s306 + $0x2a8] sm:$0xff]
        %v457 = vld [vmem:[%s306 + $0x2b0] sm:$0xff]
        %v458 = vld [vmem:[%s306 + $0x2b8] sm:$0xff]
        %v459 = vld [vmem:[%s306 + $0x2c0] sm:$0xff]
        %v460 = vld [vmem:[%s306 + $0x2c8] sm:$0xff]
        %v461 = vld [vmem:[%s306 + $0x2d0] sm:$0xff]
        %v462 = vld [vmem:[%s306 + $0x2d8] sm:$0xff]
        %v463 = vld [vmem:[%s306 + $0x2e0] sm:$0xff]
        %v464 = vld [vmem:[%s306 + $0x2e8] sm:$0xff]
        %v465 = vld [vmem:[%s306 + $0x2f0] sm:$0xff]
        %v466 = vld [vmem:[%s306 + $0x2f8] sm:$0xff]
        %v467 = vld [vmem:[%s306 + $0x300] sm:$0xff]
        %v468 = vld [vmem:[%s306 + $0x308] sm:$0xff]
        %v469 = vld [vmem:[%s306 + $0x310] sm:$0xff]
        %v470 = vld [vmem:[%s306 + $0x318] sm:$0xff]
        %v471 = vld [vmem:[%s306 + $0x320] sm:$0xff]
        %v472 = vld [vmem:[%s306 + $0x328] sm:$0xff]
        %v473 = vld [vmem:[%s306 + $0x330] sm:$0xff]
        %v474 = vld [vmem:[%s306 + $0x338] sm:$0xff]
        %v475 = vld [vmem:[%s306 + $0x340] sm:$0xff]
        %v476 = vld [vmem:[%s306 + $0x348] sm:$0xff]
        %v477 = vld [vmem:[%s306 + $0x350] sm:$0xff]
        %v478 = vld [vmem:[%s306 + $0x358] sm:$0xff]
        %v479 = vld [vmem:[%s306 + $0x360] sm:$0xff]
        %v480 = vld [vmem:[%s306 + $0x368] sm:$0xff]
        %v481 = vld [vmem:[%s306 + $0x370] sm:$0xff]
        %v482 = vld [vmem:[%s306 + $0x378] sm:$0xff]
        %v483 = vld [vmem:[%s306 + $0x380] sm:$0xff]
        %v484 = vld [vmem:[%s306 + $0x388] sm:$0xff]
        %v485 = vld [vmem:[%s306 + $0x390] sm:$0xff]
        %v486 = vld [vmem:[%s306 + $0x398] sm:$0xff]
        %v487 = vld [vmem:[%s306 + $0x3a0] sm:$0xff]
        %v488 = vld [vmem:[%s306 + $0x3a8] sm:$0xff]
        %v489 = vld [vmem:[%s306 + $0x3b0] sm:$0xff]
        %v490 = vld [vmem:[%s306 + $0x3b8] sm:$0xff]
        %v491 = vld [vmem:[%s306 + $0x3c0] sm:$0xff]
        %v492 = vld [vmem:[%s306 + $0x3c8] sm:$0xff]
        %v493 = vld [vmem:[%s306 + $0x3d0] sm:$0xff]
        %v494 = vld [vmem:[%s306 + $0x3d8] sm:$0xff]
        %v495 = vld [vmem:[%s306 + $0x3e0] sm:$0xff]
        %v496 = vld [vmem:[%s306 + $0x3e8] sm:$0xff]
        %v497 = vld [vmem:[%s306 + $0x3f0] sm:$0xff]
        %v498 = vld [vmem:[%s306 + $0x3f8] sm:$0xff]
        %v499 = vld [vmem:[%s306 + $0x400] sm:$0xff]
        %v500 = vld [vmem:[%s306 + $0x408] sm:$0xff]
        %v501 = vld [vmem:[%s306 + $0x410] sm:$0xff]
        %v502 = vld [vmem:[%s306 + $0x418] sm:$0xff]
        %v503 = vld [vmem:[%s306 + $0x420] sm:$0xff]
        %v504 = vld [vmem:[%s306 + $0x428] sm:$0xff]
        %v505 = vld [vmem:[%s306 + $0x430] sm:$0xff]
        %v506 = vld [vmem:[%s306 + $0x438] sm:$0xff]
        %v507 = vld [vmem:[%s306 + $0x440] sm:$0xff]
        %v508 = vld [vmem:[%s306 + $0x448] sm:$0xff]
        %v509 = vld [vmem:[%s306 + $0x450] sm:$0xff]
        %v510 = vld [vmem:[%s306 + $0x458] sm:$0xff]
        %v511 = vld [vmem:[%s306 + $0x460] sm:$0xff]
        %v512 = vld [vmem:[%s306 + $0x468] sm:$0xff]
        %v513 = vld [vmem:[%s306 + $0x470] sm:$0xff]
        %v514 = vld [vmem:[%s306 + $0x478] sm:$0xff]
        %v515 = vld [vmem:[%s306 + $0x480] sm:$0xff]
        %v516 = vld [vmem:[%s306 + $0x488] sm:$0xff]
        %v517 = vld [vmem:[%s306 + $0x490] sm:$0xff]
        %v518 = vld [vmem:[%s306 + $0x498] sm:$0xff]
        %v519 = vld [vmem:[%s306 + $0x4a0] sm:$0xff]
        %v520 = vld [vmem:[%s306 + $0x4a8] sm:$0xff]
        %v521 = vld [vmem:[%s306 + $0x4b0] sm:$0xff]
        %v522 = vld [vmem:[%s306 + $0x4b8] sm:$0xff]
        %v523 = vld [vmem:[%s306 + $0x4c0] sm:$0xff]
        %v524 = vld [vmem:[%s306 + $0x4c8] sm:$0xff]
        %v525 = vld [vmem:[%s306 + $0x4d0] sm:$0xff]
        %v526 = vld [vmem:[%s306 + $0x4d8] sm:$0xff]
        %v527 = vld [vmem:[%s306 + $0x4e0] sm:$0xff]
        %v528 = vld [vmem:[%s306 + $0x4e8] sm:$0xff]
        %v529 = vld [vmem:[%s306 + $0x4f0] sm:$0xff]
        %v530 = vld [vmem:[%s306 + $0x4f8] sm:$0xff]
        %v531 = vld [vmem:[%s306 + $0x500] sm:$0xff]
        %v532 = vld [vmem:[%s306 + $0x508] sm:$0xff]
        %v533 = vld [vmem:[%s306 + $0x510] sm:$0xff]
        %v534 = vld [vmem:[%s306 + $0x518] sm:$0xff]
        %v535 = vld [vmem:[%s306 + $0x520] sm:$0xff]
        %v536 = vld [vmem:[%s306 + $0x528] sm:$0xff]
        %v537 = vld [vmem:[%s306 + $0x530] sm:$0xff]
        %v538 = vld [vmem:[%s306 + $0x538] sm:$0xff]
        %v539 = vld [vmem:[%s306 + $0x540] sm:$0xff]
        %v540 = vld [vmem:[%s306 + $0x548] sm:$0xff]
        %v541 = vld [vmem:[%s306 + $0x550] sm:$0xff]
        %v542 = vld [vmem:[%s306 + $0x558] sm:$0xff]
        %v543 = vld [vmem:[%s306 + $0x560] sm:$0xff]
        %v544 = vld [vmem:[%s306 + $0x568] sm:$0xff]
        %v545 = vld [vmem:[%s306 + $0x570] sm:$0xff]
        %v546 = vld [vmem:[%s306 + $0x578] sm:$0xff]
        %v547 = vld [vmem:[%s306 + $0x580] sm:$0xff]
        %v548 = vld [vmem:[%s306 + $0x588] sm:$0xff]
        %v549 = vld [vmem:[%s306 + $0x590] sm:$0xff]
        %v550 = vld [vmem:[%s306 + $0x598] sm:$0xff]
        %v551 = vld [vmem:[%s306 + $0x5a0] sm:$0xff]
        %v552 = vld [vmem:[%s306 + $0x5a8] sm:$0xff]
        %v553 = vld [vmem:[%s306 + $0x5b0] sm:$0xff]
        %v554 = vld [vmem:[%s306 + $0x5b8] sm:$0xff]
        %v555 = vld [vmem:[%s306 + $0x5c0] sm:$0xff]
        %v556 = vld [vmem:[%s306 + $0x5c8] sm:$0xff]
        %v557 = vld [vmem:[%s306 + $0x5d0] sm:$0xff]
        %v558 = vld [vmem:[%s306 + $0x5d8] sm:$0xff]
        %v559 = vld [vmem:[%s306 + $0x5e0] sm:$0xff]
        %v560 = vld [vmem:[%s306 + $0x5e8] sm:$0xff]
        %v561 = vld [vmem:[%s306 + $0x5f0] sm:$0xff]
        %v562 = vld [vmem:[%s306 + $0x5f8] sm:$0xff]
        %v563 = vld [vmem:[%s306 + $0x600] sm:$0xff]
        %v564 = vld [vmem:[%s306 + $0x608] sm:$0xff]
        %v565 = vld [vmem:[%s306 + $0x610] sm:$0xff]
        %v566 = vld [vmem:[%s306 + $0x618] sm:$0xff]
        %v567 = vld [vmem:[%s306 + $0x620] sm:$0xff]
        %v568 = vld [vmem:[%s306 + $0x628] sm:$0xff]
        %v569 = vld [vmem:[%s306 + $0x630] sm:$0xff]
        %v570 = vld [vmem:[%s306 + $0x638] sm:$0xff]
        %v571 = vld [vmem:[%s306 + $0x640] sm:$0xff]
        %v572 = vld [vmem:[%s306 + $0x648] sm:$0xff]
        %v573 = vld [vmem:[%s306 + $0x650] sm:$0xff]
        %v574 = vld [vmem:[%s306 + $0x658] sm:$0xff]
        %v575 = vld [vmem:[%s306 + $0x660] sm:$0xff]
        %v576 = vld [vmem:[%s306 + $0x668] sm:$0xff]
        %v577 = vld [vmem:[%s306 + $0x670] sm:$0xff]
        %v578 = vld [vmem:[%s306 + $0x678] sm:$0xff]
        %v579 = vld [vmem:[%s306 + $0x680] sm:$0xff]
        %v580 = vld [vmem:[%s306 + $0x688] sm:$0xff]
        %v581 = vld [vmem:[%s306 + $0x690] sm:$0xff]
        %v582 = vld [vmem:[%s306 + $0x698] sm:$0xff]
        %v583 = vld [vmem:[%s306 + $0x6a0] sm:$0xff]
        %v584 = vld [vmem:[%s306 + $0x6a8] sm:$0xff]
        %v585 = vld [vmem:[%s306 + $0x6b0] sm:$0xff]
        %v586 = vld [vmem:[%s306 + $0x6b8] sm:$0xff]
        %v587 = vld [vmem:[%s306 + $0x6c0] sm:$0xff]
        %v588 = vld [vmem:[%s306 + $0x6c8] sm:$0xff]
        %v589 = vld [vmem:[%s306 + $0x6d0] sm:$0xff]
        %v590 = vld [vmem:[%s306 + $0x6d8] sm:$0xff]
        %v591 = vld [vmem:[%s306 + $0x6e0] sm:$0xff]
        %v592 = vld [vmem:[%s306 + $0x6e8] sm:$0xff]
        %v593 = vld [vmem:[%s306 + $0x6f0] sm:$0xff]
        %v594 = vld [vmem:[%s306 + $0x6f8] sm:$0xff]
        %v595 = vld [vmem:[%s306 + $0x700] sm:$0xff]
        %v596 = vld [vmem:[%s306 + $0x708] sm:$0xff]
        %v597 = vld [vmem:[%s306 + $0x710] sm:$0xff]
        %v598 = vld [vmem:[%s306 + $0x718] sm:$0xff]
        %v599 = vld [vmem:[%s306 + $0x720] sm:$0xff]
        %v600 = vld [vmem:[%s306 + $0x728] sm:$0xff]
        %v601 = vld [vmem:[%s306 + $0x730] sm:$0xff]
        %v602 = vld [vmem:[%s306 + $0x738] sm:$0xff]
        %v603 = vld [vmem:[%s306 + $0x740] sm:$0xff]
        %v604 = vld [vmem:[%s306 + $0x748] sm:$0xff]
        %v605 = vld [vmem:[%s306 + $0x750] sm:$0xff]
        %v606 = vld [vmem:[%s306 + $0x758] sm:$0xff]
        %v607 = vld [vmem:[%s306 + $0x760] sm:$0xff]
        %v608 = vld [vmem:[%s306 + $0x768] sm:$0xff]
        %v609 = vld [vmem:[%s306 + $0x770] sm:$0xff]
        %v610 = vld [vmem:[%s306 + $0x778] sm:$0xff]
        %v611 = vld [vmem:[%s306 + $0x780] sm:$0xff]
        %v612 = vld [vmem:[%s306 + $0x788] sm:$0xff]
        %v613 = vld [vmem:[%s306 + $0x790] sm:$0xff]
        %v614 = vld [vmem:[%s306 + $0x798] sm:$0xff]
        %v615 = vld [vmem:[%s306 + $0x7a0] sm:$0xff]
        %v616 = vld [vmem:[%s306 + $0x7a8] sm:$0xff]
        %v617 = vld [vmem:[%s306 + $0x7b0] sm:$0xff]
        %v618 = vld [vmem:[%s306 + $0x7b8] sm:$0xff]
        %v619 = vld [vmem:[%s306 + $0x7c0] sm:$0xff]
        %v620 = vld [vmem:[%s306 + $0x7c8] sm:$0xff]
        %v621 = vld [vmem:[%s306 + $0x7d0] sm:$0xff]
        %v622 = vld [vmem:[%s306 + $0x7d8] sm:$0xff]
        %v623 = vld [vmem:[%s306 + $0x7e0] sm:$0xff]
        %v624 = vld [vmem:[%s306 + $0x7e8] sm:$0xff]
        %v625 = vld [vmem:[%s306 + $0x7f0] sm:$0xff]
        %v626 = vld [vmem:[%s306 + $0x7f8] sm:$0xff]
        %v627 = vld [vmem:[%s306 + $0x800] sm:$0xff]
        %v628 = vld [vmem:[%s306 + $0x808] sm:$0xff]
        %v629 = vld [vmem:[%s306 + $0x810] sm:$0xff]
        %v630 = vld [vmem:[%s306 + $0x818] sm:$0xff]
        %v631 = vld [vmem:[%s306 + $0x820] sm:$0xff]
        %v632 = vld [vmem:[%s306 + $0x828] sm:$0xff]
        %v633 = vld [vmem:[%s306 + $0x830] sm:$0xff]
        %v634 = vld [vmem:[%s306 + $0x838] sm:$0xff]
        %v635 = vld [vmem:[%s306 + $0x840] sm:$0xff]
        %v636 = vld [vmem:[%s306 + $0x848] sm:$0xff]
        %v637 = vld [vmem:[%s306 + $0x850] sm:$0xff]
        %v638 = vld [vmem:[%s306 + $0x858] sm:$0xff]
        %v639 = vld [vmem:[%s306 + $0x860] sm:$0xff]
        %v640 = vld [vmem:[%s306 + $0x868] sm:$0xff]
        %v641 = vld [vmem:[%s306 + $0x870] sm:$0xff]
        %v642 = vld [vmem:[%s306 + $0x878] sm:$0xff]
        %v643 = vld [vmem:[%s306 + $0x880] sm:$0xff]
        %v644 = vld [vmem:[%s306 + $0x888] sm:$0xff]
        %v645 = vld [vmem:[%s306 + $0x890] sm:$0xff]
        %v646 = vld [vmem:[%s306 + $0x898] sm:$0xff]
        %v647 = vld [vmem:[%s306 + $0x8a0] sm:$0xff]
        %v648 = vld [vmem:[%s306 + $0x8a8] sm:$0xff]
        %v649 = vld [vmem:[%s306 + $0x8b0] sm:$0xff]
        %v650 = vld [vmem:[%s306 + $0x8b8] sm:$0xff]
        %v651 = vld [vmem:[%s306 + $0x8c0] sm:$0xff]
        %v652 = vld [vmem:[%s306 + $0x8c8] sm:$0xff]
        %v653 = vld [vmem:[%s306 + $0x8d0] sm:$0xff]
        %v654 = vld [vmem:[%s306 + $0x8d8] sm:$0xff]
        %v655 = vld [vmem:[%s306 + $0x8e0] sm:$0xff]
        %v656 = vld [vmem:[%s306 + $0x8e8] sm:$0xff]
        %v657 = vld [vmem:[%s306 + $0x8f0] sm:$0xff]
        %v658 = vld [vmem:[%s306 + $0x8f8] sm:$0xff]
        %v659 = vld [vmem:[%s306 + $0x900] sm:$0xff]
        %v660 = vld [vmem:[%s306 + $0x908] sm:$0xff]
        %v661 = vld [vmem:[%s306 + $0x910] sm:$0xff]
        %v662 = vld [vmem:[%s306 + $0x918] sm:$0xff]
        %v663 = vld [vmem:[%s306 + $0x920] sm:$0xff]
        %v664 = vld [vmem:[%s306 + $0x928] sm:$0xff]
        %v665 = vld [vmem:[%s306 + $0x930] sm:$0xff]
        %v666 = vld [vmem:[%s306 + $0x938] sm:$0xff]
        %v667 = vld [vmem:[%s306 + $0x940] sm:$0xff]
        %v668 = vld [vmem:[%s306 + $0x948] sm:$0xff]
        %v669 = vld [vmem:[%s306 + $0x950] sm:$0xff]
        %v670 = vld [vmem:[%s306 + $0x958] sm:$0xff]
        %v671 = vld [vmem:[%s306 + $0x960] sm:$0xff]
        %v672 = vld [vmem:[%s306 + $0x968] sm:$0xff]
        %v673 = vld [vmem:[%s306 + $0x970] sm:$0xff]
        %v674 = vld [vmem:[%s306 + $0x978] sm:$0xff]
        %v675 = vld [vmem:[%s306 + $0x980] sm:$0xff]
        %v676 = vld [vmem:[%s306 + $0x988] sm:$0xff]
        %v677 = vld [vmem:[%s306 + $0x990] sm:$0xff]
        %v678 = vld [vmem:[%s306 + $0x998] sm:$0xff]
        %v679 = vld [vmem:[%s306 + $0x9a0] sm:$0xff]
        %v680 = vld [vmem:[%s306 + $0x9a8] sm:$0xff]
        %v681 = vld [vmem:[%s306 + $0x9b0] sm:$0xff]
        %v682 = vld [vmem:[%s306 + $0x9b8] sm:$0xff]
        %v683 = vld [vmem:[%s306 + $0x9c0] sm:$0xff]
        %v684 = vld [vmem:[%s306 + $0x9c8] sm:$0xff]
        %v685 = vld [vmem:[%s306 + $0x9d0] sm:$0xff]
        %v686 = vld [vmem:[%s306 + $0x9d8] sm:$0xff]
        %v687 = vld [vmem:[%s306 + $0x9e0] sm:$0xff]
        %v688 = vld [vmem:[%s306 + $0x9e8] sm:$0xff]
        %v689 = vld [vmem:[%s306 + $0x9f0] sm:$0xff]
        %v690 = vld [vmem:[%s306 + $0x9f8] sm:$0xff]
        %v691 = vld [vmem:[%s306 + $0xa00] sm:$0xff]
        %v692 = vld [vmem:[%s306 + $0xa08] sm:$0xff]
        %v693 = vld [vmem:[%s306 + $0xa10] sm:$0xff]
        %v694 = vld [vmem:[%s306 + $0xa18] sm:$0xff]
        %v695 = vld [vmem:[%s306 + $0xa20] sm:$0xff]
        %v696 = vld [vmem:[%s306 + $0xa28] sm:$0xff]
        %v697 = vld [vmem:[%s306 + $0xa30] sm:$0xff]
        %v698 = vld [vmem:[%s306 + $0xa38] sm:$0xff]
        %v699 = vld [vmem:[%s306 + $0xa40] sm:$0xff]
        %v700 = vld [vmem:[%s306 + $0xa48] sm:$0xff]
        %v701 = vld [vmem:[%s306 + $0xa50] sm:$0xff]
        %v702 = vld [vmem:[%s306 + $0xa58] sm:$0xff]
        %v703 = vld [vmem:[%s306 + $0xa60] sm:$0xff]
        %v704 = vld [vmem:[%s306 + $0xa68] sm:$0xff]
        %v705 = vld [vmem:[%s306 + $0xa70] sm:$0xff]
        %v706 = vld [vmem:[%s306 + $0xa78] sm:$0xff]
        %v707 = vld [vmem:[%s306 + $0xa80] sm:$0xff]
        %v708 = vld [vmem:[%s306 + $0xa88] sm:$0xff]
        %v709 = vld [vmem:[%s306 + $0xa90] sm:$0xff]
        %v710 = vld [vmem:[%s306 + $0xa98] sm:$0xff]
        %v711 = vld [vmem:[%s306 + $0xaa0] sm:$0xff]
        %v712 = vld [vmem:[%s306 + $0xaa8] sm:$0xff]
        %v713 = vld [vmem:[%s306 + $0xab0] sm:$0xff]
        %v714 = vld [vmem:[%s306 + $0xab8] sm:$0xff]
        %v715 = vld [vmem:[%s306 + $0xac0] sm:$0xff]
        %v716 = vld [vmem:[%s306 + $0xac8] sm:$0xff]
        %v717 = vld [vmem:[%s306 + $0xad0] sm:$0xff]
        %v718 = vld [vmem:[%s306 + $0xad8] sm:$0xff]
        %v719 = vld [vmem:[%s306 + $0xae0] sm:$0xff]
        %v720 = vld [vmem:[%s306 + $0xae8] sm:$0xff]
        %v721 = vld [vmem:[%s306 + $0xaf0] sm:$0xff]
        %v722 = vld [vmem:[%s306 + $0xaf8] sm:$0xff]
        %v723 = vld [vmem:[%s306 + $0xb00] sm:$0xff]
        %v724 = vld [vmem:[%s306 + $0xb08] sm:$0xff]
        %v725 = vld [vmem:[%s306 + $0xb10] sm:$0xff]
        %v726 = vld [vmem:[%s306 + $0xb18] sm:$0xff]
        %v727 = vld [vmem:[%s306 + $0xb20] sm:$0xff]
        %v728 = vld [vmem:[%s306 + $0xb28] sm:$0xff]
        %v729 = vld [vmem:[%s306 + $0xb30] sm:$0xff]
        %v730 = vld [vmem:[%s306 + $0xb38] sm:$0xff]
        %v731 = vld [vmem:[%s306 + $0xb40] sm:$0xff]
        %v732 = vld [vmem:[%s306 + $0xb48] sm:$0xff]
        %v733 = vld [vmem:[%s306 + $0xb50] sm:$0xff]
        %v734 = vld [vmem:[%s306 + $0xb58] sm:$0xff]
        %v735 = vld [vmem:[%s306 + $0xb60] sm:$0xff]
        %v736 = vld [vmem:[%s306 + $0xb68] sm:$0xff]
        %v737 = vld [vmem:[%s306 + $0xb70] sm:$0xff]
        %v738 = vld [vmem:[%s306 + $0xb78] sm:$0xff]
        %v739 = vld [vmem:[%s306 + $0xb80] sm:$0xff]
        %v740 = vld [vmem:[%s306 + $0xb88] sm:$0xff]
        %v741 = vld [vmem:[%s306 + $0xb90] sm:$0xff]
        %v742 = vld [vmem:[%s306 + $0xb98] sm:$0xff]
        %v743 = vld [vmem:[%s306 + $0xba0] sm:$0xff]
        %v744 = vld [vmem:[%s306 + $0xba8] sm:$0xff]
        %v745 = vld [vmem:[%s306 + $0xbb0] sm:$0xff]
        %v746 = vld [vmem:[%s306 + $0xbb8] sm:$0xff]
        %v747 = vld [vmem:[%s306 + $0xbc0] sm:$0xff]
        %v748 = vld [vmem:[%s306 + $0xbc8] sm:$0xff]
        %v749 = vld [vmem:[%s306 + $0xbd0] sm:$0xff]
        %v750 = vld [vmem:[%s306 + $0xbd8] sm:$0xff]
        %v751 = vld [vmem:[%s306 + $0xbe0] sm:$0xff]
        %v752 = vld [vmem:[%s306 + $0xbe8] sm:$0xff]
        %v753 = vld [vmem:[%s306 + $0xbf0] sm:$0xff]
        %v754 = vld [vmem:[%s306 + $0xbf8] sm:$0xff]
        %v755 = vld [vmem:[%s306 + $0xc00] sm:$0xff]
        %v756 = vld [vmem:[%s306 + $0xc08] sm:$0xff]
        %v757 = vld [vmem:[%s306 + $0xc10] sm:$0xff]
        %v758 = vld [vmem:[%s306 + $0xc18] sm:$0xff]
        %v759 = vld [vmem:[%s306 + $0xc20] sm:$0xff]
        %v760 = vld [vmem:[%s306 + $0xc28] sm:$0xff]
        %v761 = vld [vmem:[%s306 + $0xc30] sm:$0xff]
        %v762 = vld [vmem:[%s306 + $0xc38] sm:$0xff]
        %v763 = vld [vmem:[%s306 + $0xc40] sm:$0xff]
        %v764 = vld [vmem:[%s306 + $0xc48] sm:$0xff]
        %v765 = vld [vmem:[%s306 + $0xc50] sm:$0xff]
        %v766 = vld [vmem:[%s306 + $0xc58] sm:$0xff]
        %v767 = vld [vmem:[%s306 + $0xc60] sm:$0xff]
        %v768 = vld [vmem:[%s306 + $0xc68] sm:$0xff]
        %v769 = vld [vmem:[%s306 + $0xc70] sm:$0xff]
        %v770 = vld [vmem:[%s306 + $0xc78] sm:$0xff]
        %v771 = vld [vmem:[%s306 + $0xc80] sm:$0xff]
        %v772 = vld [vmem:[%s306 + $0xc88] sm:$0xff]
        %v773 = vld [vmem:[%s306 + $0xc90] sm:$0xff]
        %v774 = vld [vmem:[%s306 + $0xc98] sm:$0xff]
        %v775 = vld [vmem:[%s306 + $0xca0] sm:$0xff]
        %v776 = vld [vmem:[%s306 + $0xca8] sm:$0xff]
        %v777 = vld [vmem:[%s306 + $0xcb0] sm:$0xff]
        %v778 = vld [vmem:[%s306 + $0xcb8] sm:$0xff]
        %v779 = vld [vmem:[%s306 + $0xcc0] sm:$0xff]
        %v780 = vld [vmem:[%s306 + $0xcc8] sm:$0xff]
        %v781 = vld [vmem:[%s306 + $0xcd0] sm:$0xff]
        %v782 = vld [vmem:[%s306 + $0xcd8] sm:$0xff]
        %v783 = vld [vmem:[%s306 + $0xce0] sm:$0xff]
        %v784 = vld [vmem:[%s306 + $0xce8] sm:$0xff]
        %v785 = vld [vmem:[%s306 + $0xcf0] sm:$0xff]
        %v786 = vld [vmem:[%s306 + $0xcf8] sm:$0xff]
        %v787 = vld [vmem:[%s306 + $0xd00] sm:$0xff]
        %v788 = vld [vmem:[%s306 + $0xd08] sm:$0xff]
        %v789 = vld [vmem:[%s306 + $0xd10] sm:$0xff]
        %v790 = vld [vmem:[%s306 + $0xd18] sm:$0xff]
        %v791 = vld [vmem:[%s306 + $0xd20] sm:$0xff]
        %v792 = vld [vmem:[%s306 + $0xd28] sm:$0xff]
        %v793 = vld [vmem:[%s306 + $0xd30] sm:$0xff]
        %v794 = vld [vmem:[%s306 + $0xd38] sm:$0xff]
        %v795 = vld [vmem:[%s306 + $0xd40] sm:$0xff]
        %v796 = vld [vmem:[%s306 + $0xd48] sm:$0xff]
        %v797 = vld [vmem:[%s306 + $0xd50] sm:$0xff]
        %v798 = vld [vmem:[%s306 + $0xd58] sm:$0xff]
        %v799 = vld [vmem:[%s306 + $0xd60] sm:$0xff]
        %v800 = vld [vmem:[%s306 + $0xd68] sm:$0xff]
        %v801 = vld [vmem:[%s306 + $0xd70] sm:$0xff]
        %v802 = vld [vmem:[%s306 + $0xd78] sm:$0xff]
        %v803 = vld [vmem:[%s306 + $0xd80] sm:$0xff]
        %v804 = vld [vmem:[%s306 + $0xd88] sm:$0xff]
        %v805 = vld [vmem:[%s306 + $0xd90] sm:$0xff]
        %v806 = vld [vmem:[%s306 + $0xd98] sm:$0xff]
        %v807 = vld [vmem:[%s306 + $0xda0] sm:$0xff]
        %v808 = vld [vmem:[%s306 + $0xda8] sm:$0xff]
        %v809 = vld [vmem:[%s306 + $0xdb0] sm:$0xff]
        %v810 = vld [vmem:[%s306 + $0xdb8] sm:$0xff]
        %v811 = vld [vmem:[%s306 + $0xdc0] sm:$0xff]
        %v812 = vld [vmem:[%s306 + $0xdc8] sm:$0xff]
        %v813 = vld [vmem:[%s306 + $0xdd0] sm:$0xff]
        %v814 = vld [vmem:[%s306 + $0xdd8] sm:$0xff]
        %v815 = vld [vmem:[%s306 + $0xde0] sm:$0xff]
        %v816 = vld [vmem:[%s306 + $0xde8] sm:$0xff]
        %v817 = vld [vmem:[%s306 + $0xdf0] sm:$0xff]
        %v818 = vld [vmem:[%s306 + $0xdf8] sm:$0xff]
        %v819 = vld [vmem:[%s306 + $0xe00] sm:$0xff]
        %v820 = vld [vmem:[%s306 + $0xe08] sm:$0xff]
        %v821 = vld [vmem:[%s306 + $0xe10] sm:$0xff]
        %v822 = vld [vmem:[%s306 + $0xe18] sm:$0xff]
        %v823 = vld [vmem:[%s306 + $0xe20] sm:$0xff]
        %v824 = vld [vmem:[%s306 + $0xe28] sm:$0xff]
        %v825 = vld [vmem:[%s306 + $0xe30] sm:$0xff]
        %v826 = vld [vmem:[%s306 + $0xe38] sm:$0xff]
        %v827 = vld [vmem:[%s306 + $0xe40] sm:$0xff]
        %v828 = vld [vmem:[%s306 + $0xe48] sm:$0xff]
        %v829 = vld [vmem:[%s306 + $0xe50] sm:$0xff]
        %v830 = vld [vmem:[%s306 + $0xe58] sm:$0xff]
        %v831 = vld [vmem:[%s306 + $0xe60] sm:$0xff]
        %v832 = vld [vmem:[%s306 + $0xe68] sm:$0xff]
        %v833 = vld [vmem:[%s306 + $0xe70] sm:$0xff]
        %v834 = vld [vmem:[%s306 + $0xe78] sm:$0xff]
        %v835 = vld [vmem:[%s306 + $0xe80] sm:$0xff]
        %v836 = vld [vmem:[%s306 + $0xe88] sm:$0xff]
        %v837 = vld [vmem:[%s306 + $0xe90] sm:$0xff]
        %v838 = vld [vmem:[%s306 + $0xe98] sm:$0xff]
        %v839 = vld [vmem:[%s306 + $0xea0] sm:$0xff]
        %v840 = vld [vmem:[%s306 + $0xea8] sm:$0xff]
        %v841 = vld [vmem:[%s306 + $0xeb0] sm:$0xff]
        %v842 = vld [vmem:[%s306 + $0xeb8] sm:$0xff]
        %v843 = vld [vmem:[%s306 + $0xec0] sm:$0xff]
        %v844 = vld [vmem:[%s306 + $0xec8] sm:$0xff]
        %v845 = vld [vmem:[%s306 + $0xed0] sm:$0xff]
        %v846 = vld [vmem:[%s306 + $0xed8] sm:$0xff]
        %v847 = vld [vmem:[%s306 + $0xee0] sm:$0xff]
        %v848 = vld [vmem:[%s306 + $0xee8] sm:$0xff]
        %v849 = vld [vmem:[%s306 + $0xef0] sm:$0xff]
        %v850 = vld [vmem:[%s306 + $0xef8] sm:$0xff]
        %v851 = vld [vmem:[%s306 + $0xf00] sm:$0xff]
        %v852 = vld [vmem:[%s306 + $0xf08] sm:$0xff]
        %v853 = vld [vmem:[%s306 + $0xf10] sm:$0xff]
        %v854 = vld [vmem:[%s306 + $0xf18] sm:$0xff]
        %v855 = vld [vmem:[%s306 + $0xf20] sm:$0xff]
        %v856 = vld [vmem:[%s306 + $0xf28] sm:$0xff]
        %v857 = vld [vmem:[%s306 + $0xf30] sm:$0xff]
        %v858 = vld [vmem:[%s306 + $0xf38] sm:$0xff]
        %v859 = vld [vmem:[%s306 + $0xf40] sm:$0xff]
        %v860 = vld [vmem:[%s306 + $0xf48] sm:$0xff]
        %v861 = vld [vmem:[%s306 + $0xf50] sm:$0xff]
        %v862 = vld [vmem:[%s306 + $0xf58] sm:$0xff]
        %v863 = vld [vmem:[%s306 + $0xf60] sm:$0xff]
        %v864 = vld [vmem:[%s306 + $0xf68] sm:$0xff]
        %v865 = vld [vmem:[%s306 + $0xf70] sm:$0xff]
        %v866 = vld [vmem:[%s306 + $0xf78] sm:$0xff]
        %v867 = vld [vmem:[%s306 + $0xf80] sm:$0xff]
        %v868 = vld [vmem:[%s306 + $0xf88] sm:$0xff]
        %v869 = vld [vmem:[%s306 + $0xf90] sm:$0xff]
        %v870 = vld [vmem:[%s306 + $0xf98] sm:$0xff]
        %v871 = vld [vmem:[%s306 + $0xfa0] sm:$0xff]
        %v872 = vld [vmem:[%s306 + $0xfa8] sm:$0xff]
        %v873 = vld [vmem:[%s306 + $0xfb0] sm:$0xff]
        %v874 = vld [vmem:[%s306 + $0xfb8] sm:$0xff]
        %v875 = vld [vmem:[%s306 + $0xfc0] sm:$0xff]
        %v876 = vld [vmem:[%s306 + $0xfc8] sm:$0xff]
        %v877 = vld [vmem:[%s306 + $0xfd0] sm:$0xff]
        %v878 = vld [vmem:[%s306 + $0xfd8] sm:$0xff]
        %v879 = vld [vmem:[%s306 + $0xfe0] sm:$0xff]
        %v880 = vld [vmem:[%s306 + $0xfe8] sm:$0xff]
        %v881 = vld [vmem:[%s306 + $0xff0] sm:$0xff]
        %v882 = vld [vmem:[%s306 + $0xff8] sm:$0xff]
        %v883 = vld [vmem:[%s306 + $0x1000] sm:$0xff]
        %v884 = vld [vmem:[%s306 + $0x1008] sm:$0xff]
        %v885 = vld [vmem:[%s306 + $0x1010] sm:$0xff]
        %v886 = vld [vmem:[%s306 + $0x1018] sm:$0xff]
        %v887 = vld [vmem:[%s306 + $0x1020] sm:$0xff]
        %v888 = vld [vmem:[%s306 + $0x1028] sm:$0xff]
        %v889 = vld [vmem:[%s306 + $0x1030] sm:$0xff]
        %v890 = vld [vmem:[%s306 + $0x1038] sm:$0xff]
        %v891 = vld [vmem:[%s306 + $0x1040] sm:$0xff]
        %v892 = vld [vmem:[%s306 + $0x1048] sm:$0xff]
        %v893 = vld [vmem:[%s306 + $0x1050] sm:$0xff]
        %v894 = vld [vmem:[%s306 + $0x1058] sm:$0xff]
        %v895 = vld [vmem:[%s306 + $0x1060] sm:$0xff]
        %v896 = vld [vmem:[%s306 + $0x1068] sm:$0xff]
        %v897 = vld [vmem:[%s306 + $0x1070] sm:$0xff]
        %v898 = vld [vmem:[%s306 + $0x1078] sm:$0xff]
        %v899 = vld [vmem:[%s306 + $0x1080] sm:$0xff]
        %v900 = vld [vmem:[%s306 + $0x1088] sm:$0xff]
        %v901 = vld [vmem:[%s306 + $0x1090] sm:$0xff]
        %v902 = vld [vmem:[%s306 + $0x1098] sm:$0xff]
        %v903 = vld [vmem:[%s306 + $0x10a0] sm:$0xff]
        %v904 = vld [vmem:[%s306 + $0x10a8] sm:$0xff]
        %v905 = vld [vmem:[%s306 + $0x10b0] sm:$0xff]
        %v906 = vld [vmem:[%s306 + $0x10b8] sm:$0xff]
        %v907 = vld [vmem:[%s306 + $0x10c0] sm:$0xff]
        %v908 = vld [vmem:[%s306 + $0x10c8] sm:$0xff]
        %v909 = vld [vmem:[%s306 + $0x10d0] sm:$0xff]
        %v910 = vld [vmem:[%s306 + $0x10d8] sm:$0xff]
        %v911 = vld [vmem:[%s306 + $0x10e0] sm:$0xff]
        %v912 = vld [vmem:[%s306 + $0x10e8] sm:$0xff]
        %v913 = vld [vmem:[%s306 + $0x10f0] sm:$0xff]
        %v914 = vld [vmem:[%s306 + $0x10f8] sm:$0xff]
        %v915 = vld [vmem:[%s306 + $0x1100] sm:$0xff]
        %v916 = vld [vmem:[%s306 + $0x1108] sm:$0xff]
        %v917 = vld [vmem:[%s306 + $0x1110] sm:$0xff]
        %v918 = vld [vmem:[%s306 + $0x1118] sm:$0xff]
        %v919 = vld [vmem:[%s306 + $0x1120] sm:$0xff]
        %v920 = vld [vmem:[%s306 + $0x1128] sm:$0xff]
        %v921 = vld [vmem:[%s306 + $0x1130] sm:$0xff]
        %v922 = vld [vmem:[%s306 + $0x1138] sm:$0xff]
        %v923 = vld [vmem:[%s306 + $0x1140] sm:$0xff]
        %v924 = vld [vmem:[%s306 + $0x1148] sm:$0xff]
        %v925 = vld [vmem:[%s306 + $0x1150] sm:$0xff]
        %v926 = vld [vmem:[%s306 + $0x1158] sm:$0xff]
        %v927 = vld [vmem:[%s306 + $0x1160] sm:$0xff]
        %v928 = vld [vmem:[%s306 + $0x1168] sm:$0xff]
        %v929 = vld [vmem:[%s306 + $0x1170] sm:$0xff]
        %v930 = vld [vmem:[%s306 + $0x1178] sm:$0xff]
        %v931 = vld [vmem:[%s306 + $0x1180] sm:$0xff]
        %v932 = vld [vmem:[%s306 + $0x1188] sm:$0xff]
        %v933 = vld [vmem:[%s306 + $0x1190] sm:$0xff]
        %v934 = vld [vmem:[%s306 + $0x1198] sm:$0xff]
        %v935 = vld [vmem:[%s306 + $0x11a0] sm:$0xff]
        %v936 = vld [vmem:[%s306 + $0x11a8] sm:$0xff]
        %v937 = vld [vmem:[%s306 + $0x11b0] sm:$0xff]
        %v938 = vld [vmem:[%s306 + $0x11b8] sm:$0xff]
        %v939 = vld [vmem:[%s306 + $0x11c0] sm:$0xff]
        %v940 = vld [vmem:[%s306 + $0x11c8] sm:$0xff]
        %v941 = vld [vmem:[%s306 + $0x11d0] sm:$0xff]
        %v942 = vld [vmem:[%s306 + $0x11d8] sm:$0xff]
        %v943 = vld [vmem:[%s306 + $0x11e0] sm:$0xff]
        %v944 = vld [vmem:[%s306 + $0x11e8] sm:$0xff]
        %v945 = vld [vmem:[%s306 + $0x11f0] sm:$0xff]
        %v946 = vld [vmem:[%s306 + $0x11f8] sm:$0xff]
        %v947 = vld [vmem:[%s315] sm:$0xff]
        %v948 = vld [vmem:[%s315 + $0x8] sm:$0xf]
        %v951 = vlaneseq
        %v952 = vshrl.u32 %v951, 7
        %v953 = vsub.s32 0, %v952
        %v954 = vrot.slane %v947, %v953
        %v955 = vlaneseq
        %v956 = vshrl.u32 %v955, 7
        %v957 = vsub.s32 1, %v956
        %v958 = vrot.slane %v947, %v957
        %v959 = vlaneseq
        %v960 = vshrl.u32 %v959, 7
        %v961 = vsub.s32 2, %v960
        %v962 = vrot.slane %v947, %v961
        %v963 = vlaneseq
        %v964 = vshrl.u32 %v963, 7
        %v965 = vsub.s32 3, %v964
        %v966 = vrot.slane %v947, %v965
        %v967 = vlaneseq
        %v968 = vshrl.u32 %v967, 7
        %v969 = vsub.s32 4, %v968
        %v970 = vrot.slane %v947, %v969
        %v971 = vlaneseq
        %v972 = vshrl.u32 %v971, 7
        %v973 = vsub.s32 5, %v972
        %v974 = vrot.slane %v947, %v973
        %v975 = vlaneseq
        %v976 = vshrl.u32 %v975, 7
        %v977 = vsub.s32 6, %v976
        %v978 = vrot.slane %v947, %v977
        %v979 = vlaneseq
        %v980 = vshrl.u32 %v979, 7
        %v981 = vsub.s32 7, %v980
        %v982 = vrot.slane %v947, %v981
        %v983 = vlaneseq
        %v984 = vshrl.u32 %v983, 7
        %v985 = vsub.s32 0, %v984
        %v986 = vrot.slane %v948, %v985
        %v987 = vlaneseq
        %v988 = vshrl.u32 %v987, 7
        %v989 = vsub.s32 1, %v988
        %v990 = vrot.slane %v948, %v989
        %v991 = vlaneseq
        %v992 = vshrl.u32 %v991, 7
        %v993 = vsub.s32 2, %v992
        %v994 = vrot.slane %v948, %v993
        %v995 = vlaneseq
        %v996 = vshrl.u32 %v995, 7
        %v997 = vsub.s32 3, %v996
        %v998 = vrot.slane %v948, %v997
        %v1017 = vunpack.c.l.b16 %v365
        %v1018 = vunpack.c.h.b16 %v365
        %v1019 = vunpack.c.l.b16 %v366
        %v1020 = vunpack.c.h.b16 %v366
        %v1021 = vunpack.c.l.b16 %v367
        %v1022 = vunpack.c.h.b16 %v367
        %v1023 = vunpack.c.l.b16 %v368
        %v1024 = vunpack.c.h.b16 %v368
        %v1025 = vunpack.c.l.b16 %v369
        %v1026 = vunpack.c.h.b16 %v369
        %v1027 = vunpack.c.l.b16 %v370
        %v1028 = vunpack.c.h.b16 %v370
        %v1029 = vpack.c.b16 %v1023, %v1017
        %v1030 = vpack.c.b16 %v1024, %v1018
        %v1031 = vpack.c.b16 %v1025, %v1019
        %v1032 = vpack.c.b16 %v1026, %v1020
        %v1033 = vpack.c.b16 %v1027, %v1021
        %v1034 = vpack.c.b16 %v1028, %v1022
        %v1617 = vunpack.c.l.b16 %v371
        %v1618 = vunpack.c.h.b16 %v371
        %v1619 = vunpack.c.l.b16 %v372
        %v1620 = vunpack.c.h.b16 %v372
        %v1621 = vunpack.c.l.b16 %v373
        %v1622 = vunpack.c.h.b16 %v373
        %v1623 = vunpack.c.l.b16 %v374
        %v1624 = vunpack.c.h.b16 %v374
        %v1625 = vunpack.c.l.b16 %v375
        %v1626 = vunpack.c.h.b16 %v375
        %v1627 = vunpack.c.l.b16 %v376
        %v1628 = vunpack.c.h.b16 %v376
        %v1629 = vunpack.c.l.b16 %v377
        %v1630 = vunpack.c.h.b16 %v377
        %v1631 = vunpack.c.l.b16 %v378
        %v1632 = vunpack.c.h.b16 %v378
        %v1633 = vunpack.c.l.b16 %v379
        %v1634 = vunpack.c.h.b16 %v379
        %v1635 = vunpack.c.l.b16 %v380
        %v1636 = vunpack.c.h.b16 %v380
        %v1637 = vunpack.c.l.b16 %v381
        %v1638 = vunpack.c.h.b16 %v381
        %v1639 = vunpack.c.l.b16 %v382
        %v1640 = vunpack.c.h.b16 %v382
        %v1641 = vunpack.c.l.b16 %v383
        %v1642 = vunpack.c.h.b16 %v383
        %v1643 = vunpack.c.l.b16 %v384
        %v1644 = vunpack.c.h.b16 %v384
        %v1645 = vunpack.c.l.b16 %v385
        %v1646 = vunpack.c.h.b16 %v385
        %v1647 = vunpack.c.l.b16 %v386
        %v1648 = vunpack.c.h.b16 %v386
        %v1649 = vunpack.c.l.b16 %v387
        %v1650 = vunpack.c.h.b16 %v387
        %v1651 = vunpack.c.l.b16 %v388
        %v1652 = vunpack.c.h.b16 %v388
        %v1653 = vunpack.c.l.b16 %v389
        %v1654 = vunpack.c.h.b16 %v389
        %v1655 = vunpack.c.l.b16 %v390
        %v1656 = vunpack.c.h.b16 %v390
        %v1657 = vunpack.c.l.b16 %v391
        %v1658 = vunpack.c.h.b16 %v391
        %v1659 = vunpack.c.l.b16 %v392
        %v1660 = vunpack.c.h.b16 %v392
        %v1661 = vunpack.c.l.b16 %v393
        %v1662 = vunpack.c.h.b16 %v393
        %v1663 = vunpack.c.l.b16 %v394
        %v1664 = vunpack.c.h.b16 %v394
        %v1665 = vunpack.c.l.b16 %v395
        %v1666 = vunpack.c.h.b16 %v395
        %v1667 = vunpack.c.l.b16 %v396
        %v1668 = vunpack.c.h.b16 %v396
        %v1669 = vunpack.c.l.b16 %v397
        %v1670 = vunpack.c.h.b16 %v397
        %v1671 = vunpack.c.l.b16 %v398
        %v1672 = vunpack.c.h.b16 %v398
        %v1673 = vunpack.c.l.b16 %v399
        %v1674 = vunpack.c.h.b16 %v399
        %v1675 = vunpack.c.l.b16 %v400
        %v1676 = vunpack.c.h.b16 %v400
        %v1677 = vunpack.c.l.b16 %v401
        %v1678 = vunpack.c.h.b16 %v401
        %v1679 = vunpack.c.l.b16 %v402
        %v1680 = vunpack.c.h.b16 %v402
        %v1681 = vunpack.c.l.b16 %v403
        %v1682 = vunpack.c.h.b16 %v403
        %v1683 = vunpack.c.l.b16 %v404
        %v1684 = vunpack.c.h.b16 %v404
        %v1685 = vunpack.c.l.b16 %v405
        %v1686 = vunpack.c.h.b16 %v405
        %v1687 = vunpack.c.l.b16 %v406
        %v1688 = vunpack.c.h.b16 %v406
        %v1689 = vunpack.c.l.b16 %v407
        %v1690 = vunpack.c.h.b16 %v407
        %v1691 = vunpack.c.l.b16 %v408
        %v1692 = vunpack.c.h.b16 %v408
        %v1693 = vunpack.c.l.b16 %v409
        %v1694 = vunpack.c.h.b16 %v409
        %v1695 = vunpack.c.l.b16 %v410
        %v1696 = vunpack.c.h.b16 %v410
        %v1697 = vunpack.c.l.b16 %v411
        %v1698 = vunpack.c.h.b16 %v411
        %v1699 = vunpack.c.l.b16 %v412
        %v1700 = vunpack.c.h.b16 %v412
        %v1701 = vunpack.c.l.b16 %v413
        %v1702 = vunpack.c.h.b16 %v413
        %v1703 = vunpack.c.l.b16 %v414
        %v1704 = vunpack.c.h.b16 %v414
        %v1705 = vunpack.c.l.b16 %v415
        %v1706 = vunpack.c.h.b16 %v415
        %v1707 = vunpack.c.l.b16 %v416
        %v1708 = vunpack.c.h.b16 %v416
        %v1709 = vunpack.c.l.b16 %v417
        %v1710 = vunpack.c.h.b16 %v417
        %v1711 = vunpack.c.l.b16 %v418
        %v1712 = vunpack.c.h.b16 %v418
        %v1713 = vunpack.c.l.b16 %v419
        %v1714 = vunpack.c.h.b16 %v419
        %v1715 = vunpack.c.l.b16 %v420
        %v1716 = vunpack.c.h.b16 %v420
        %v1717 = vunpack.c.l.b16 %v421
        %v1718 = vunpack.c.h.b16 %v421
        %v1719 = vunpack.c.l.b16 %v422
        %v1720 = vunpack.c.h.b16 %v422
        %v1721 = vunpack.c.l.b16 %v423
        %v1722 = vunpack.c.h.b16 %v423
        %v1723 = vunpack.c.l.b16 %v424
        %v1724 = vunpack.c.h.b16 %v424
        %v1725 = vunpack.c.l.b16 %v425
        %v1726 = vunpack.c.h.b16 %v425
        %v1727 = vunpack.c.l.b16 %v426
        %v1728 = vunpack.c.h.b16 %v426
        %v1729 = vunpack.c.l.b16 %v427
        %v1730 = vunpack.c.h.b16 %v427
        %v1731 = vunpack.c.l.b16 %v428
        %v1732 = vunpack.c.h.b16 %v428
        %v1733 = vunpack.c.l.b16 %v429
        %v1734 = vunpack.c.h.b16 %v429
        %v1735 = vunpack.c.l.b16 %v430
        %v1736 = vunpack.c.h.b16 %v430
        %v1737 = vunpack.c.l.b16 %v431
        %v1738 = vunpack.c.h.b16 %v431
        %v1739 = vunpack.c.l.b16 %v432
        %v1740 = vunpack.c.h.b16 %v432
        %v1741 = vunpack.c.l.b16 %v433
        %v1742 = vunpack.c.h.b16 %v433
        %v1743 = vunpack.c.l.b16 %v434
        %v1744 = vunpack.c.h.b16 %v434
        %v1745 = vunpack.c.l.b16 %v435
        %v1746 = vunpack.c.h.b16 %v435
        %v1747 = vunpack.c.l.b16 %v436
        %v1748 = vunpack.c.h.b16 %v436
        %v1749 = vunpack.c.l.b16 %v437
        %v1750 = vunpack.c.h.b16 %v437
        %v1751 = vunpack.c.l.b16 %v438
        %v1752 = vunpack.c.h.b16 %v438
        %v1753 = vunpack.c.l.b16 %v439
        %v1754 = vunpack.c.h.b16 %v439
        %v1755 = vunpack.c.l.b16 %v440
        %v1756 = vunpack.c.h.b16 %v440
        %v1757 = vunpack.c.l.b16 %v441
        %v1758 = vunpack.c.h.b16 %v441
        %v1759 = vunpack.c.l.b16 %v442
        %v1760 = vunpack.c.h.b16 %v442
        %v1761 = vunpack.c.l.b16 %v443
        %v1762 = vunpack.c.h.b16 %v443
        %v1763 = vunpack.c.l.b16 %v444
        %v1764 = vunpack.c.h.b16 %v444
        %v1765 = vunpack.c.l.b16 %v445
        %v1766 = vunpack.c.h.b16 %v445
        %v1767 = vunpack.c.l.b16 %v446
        %v1768 = vunpack.c.h.b16 %v446
        %v1769 = vunpack.c.l.b16 %v447
        %v1770 = vunpack.c.h.b16 %v447
        %v1771 = vunpack.c.l.b16 %v448
        %v1772 = vunpack.c.h.b16 %v448
        %v1773 = vunpack.c.l.b16 %v449
        %v1774 = vunpack.c.h.b16 %v449
        %v1775 = vunpack.c.l.b16 %v450
        %v1776 = vunpack.c.h.b16 %v450
        %v1777 = vunpack.c.l.b16 %v451
        %v1778 = vunpack.c.h.b16 %v451
        %v1779 = vunpack.c.l.b16 %v452
        %v1780 = vunpack.c.h.b16 %v452
        %v1781 = vunpack.c.l.b16 %v453
        %v1782 = vunpack.c.h.b16 %v453
        %v1783 = vunpack.c.l.b16 %v454
        %v1784 = vunpack.c.h.b16 %v454
        %v1785 = vunpack.c.l.b16 %v455
        %v1786 = vunpack.c.h.b16 %v455
        %v1787 = vunpack.c.l.b16 %v456
        %v1788 = vunpack.c.h.b16 %v456
        %v1789 = vunpack.c.l.b16 %v457
        %v1790 = vunpack.c.h.b16 %v457
        %v1791 = vunpack.c.l.b16 %v458
        %v1792 = vunpack.c.h.b16 %v458
        %v1793 = vunpack.c.l.b16 %v459
        %v1794 = vunpack.c.h.b16 %v459
        %v1795 = vunpack.c.l.b16 %v460
        %v1796 = vunpack.c.h.b16 %v460
        %v1797 = vunpack.c.l.b16 %v461
        %v1798 = vunpack.c.h.b16 %v461
        %v1799 = vunpack.c.l.b16 %v462
        %v1800 = vunpack.c.h.b16 %v462
        %v1801 = vunpack.c.l.b16 %v463
        %v1802 = vunpack.c.h.b16 %v463
        %v1803 = vunpack.c.l.b16 %v464
        %v1804 = vunpack.c.h.b16 %v464
        %v1805 = vunpack.c.l.b16 %v465
        %v1806 = vunpack.c.h.b16 %v465
        %v1807 = vunpack.c.l.b16 %v466
        %v1808 = vunpack.c.h.b16 %v466
        %v1809 = vunpack.c.l.b16 %v467
        %v1810 = vunpack.c.h.b16 %v467
        %v1811 = vunpack.c.l.b16 %v468
        %v1812 = vunpack.c.h.b16 %v468
        %v1813 = vunpack.c.l.b16 %v469
        %v1814 = vunpack.c.h.b16 %v469
        %v1815 = vunpack.c.l.b16 %v470
        %v1816 = vunpack.c.h.b16 %v470
        %v1817 = vunpack.c.l.b16 %v471
        %v1818 = vunpack.c.h.b16 %v471
        %v1819 = vunpack.c.l.b16 %v472
        %v1820 = vunpack.c.h.b16 %v472
        %v1821 = vunpack.c.l.b16 %v473
        %v1822 = vunpack.c.h.b16 %v473
        %v1823 = vunpack.c.l.b16 %v474
        %v1824 = vunpack.c.h.b16 %v474
        %v1825 = vunpack.c.l.b16 %v475
        %v1826 = vunpack.c.h.b16 %v475
        %v1827 = vunpack.c.l.b16 %v476
        %v1828 = vunpack.c.h.b16 %v476
        %v1829 = vunpack.c.l.b16 %v477
        %v1830 = vunpack.c.h.b16 %v477
        %v1831 = vunpack.c.l.b16 %v478
        %v1832 = vunpack.c.h.b16 %v478
        %v1833 = vunpack.c.l.b16 %v479
        %v1834 = vunpack.c.h.b16 %v479
        %v1835 = vunpack.c.l.b16 %v480
        %v1836 = vunpack.c.h.b16 %v480
        %v1837 = vunpack.c.l.b16 %v481
        %v1838 = vunpack.c.h.b16 %v481
        %v1839 = vunpack.c.l.b16 %v482
        %v1840 = vunpack.c.h.b16 %v482
        %v1841 = vunpack.c.l.b16 %v483
        %v1842 = vunpack.c.h.b16 %v483
        %v1843 = vunpack.c.l.b16 %v484
        %v1844 = vunpack.c.h.b16 %v484
        %v1845 = vunpack.c.l.b16 %v485
        %v1846 = vunpack.c.h.b16 %v485
        %v1847 = vunpack.c.l.b16 %v486
        %v1848 = vunpack.c.h.b16 %v486
        %v1849 = vunpack.c.l.b16 %v487
        %v1850 = vunpack.c.h.b16 %v487
        %v1851 = vunpack.c.l.b16 %v488
        %v1852 = vunpack.c.h.b16 %v488
        %v1853 = vunpack.c.l.b16 %v489
        %v1854 = vunpack.c.h.b16 %v489
        %v1855 = vunpack.c.l.b16 %v490
        %v1856 = vunpack.c.h.b16 %v490
        %v1857 = vunpack.c.l.b16 %v491
        %v1858 = vunpack.c.h.b16 %v491
        %v1859 = vunpack.c.l.b16 %v492
        %v1860 = vunpack.c.h.b16 %v492
        %v1861 = vunpack.c.l.b16 %v493
        %v1862 = vunpack.c.h.b16 %v493
        %v1863 = vunpack.c.l.b16 %v494
        %v1864 = vunpack.c.h.b16 %v494
        %v1865 = vunpack.c.l.b16 %v495
        %v1866 = vunpack.c.h.b16 %v495
        %v1867 = vunpack.c.l.b16 %v496
        %v1868 = vunpack.c.h.b16 %v496
        %v1869 = vunpack.c.l.b16 %v497
        %v1870 = vunpack.c.h.b16 %v497
        %v1871 = vunpack.c.l.b16 %v498
        %v1872 = vunpack.c.h.b16 %v498
        %v1873 = vunpack.c.l.b16 %v499
        %v1874 = vunpack.c.h.b16 %v499
        %v1875 = vunpack.c.l.b16 %v500
        %v1876 = vunpack.c.h.b16 %v500
        %v1877 = vunpack.c.l.b16 %v501
        %v1878 = vunpack.c.h.b16 %v501
        %v1879 = vunpack.c.l.b16 %v502
        %v1880 = vunpack.c.h.b16 %v502
        %v1881 = vunpack.c.l.b16 %v503
        %v1882 = vunpack.c.h.b16 %v503
        %v1883 = vunpack.c.l.b16 %v504
        %v1884 = vunpack.c.h.b16 %v504
        %v1885 = vunpack.c.l.b16 %v505
        %v1886 = vunpack.c.h.b16 %v505
        %v1887 = vunpack.c.l.b16 %v506
        %v1888 = vunpack.c.h.b16 %v506
        %v1889 = vunpack.c.l.b16 %v507
        %v1890 = vunpack.c.h.b16 %v507
        %v1891 = vunpack.c.l.b16 %v508
        %v1892 = vunpack.c.h.b16 %v508
        %v1893 = vunpack.c.l.b16 %v509
        %v1894 = vunpack.c.h.b16 %v509
        %v1895 = vunpack.c.l.b16 %v510
        %v1896 = vunpack.c.h.b16 %v510
        %v1897 = vunpack.c.l.b16 %v511
        %v1898 = vunpack.c.h.b16 %v511
        %v1899 = vunpack.c.l.b16 %v512
        %v1900 = vunpack.c.h.b16 %v512
        %v1901 = vunpack.c.l.b16 %v513
        %v1902 = vunpack.c.h.b16 %v513
        %v1903 = vunpack.c.l.b16 %v514
        %v1904 = vunpack.c.h.b16 %v514
        %v1905 = vunpack.c.l.b16 %v515
        %v1906 = vunpack.c.h.b16 %v515
        %v1907 = vunpack.c.l.b16 %v516
        %v1908 = vunpack.c.h.b16 %v516
        %v1909 = vunpack.c.l.b16 %v517
        %v1910 = vunpack.c.h.b16 %v517
        %v1911 = vunpack.c.l.b16 %v518
        %v1912 = vunpack.c.h.b16 %v518
        %v1913 = vunpack.c.l.b16 %v519
        %v1914 = vunpack.c.h.b16 %v519
        %v1915 = vunpack.c.l.b16 %v520
        %v1916 = vunpack.c.h.b16 %v520
        %v1917 = vunpack.c.l.b16 %v521
        %v1918 = vunpack.c.h.b16 %v521
        %v1919 = vunpack.c.l.b16 %v522
        %v1920 = vunpack.c.h.b16 %v522
        %v1921 = vunpack.c.l.b16 %v523
        %v1922 = vunpack.c.h.b16 %v523
        %v1923 = vunpack.c.l.b16 %v524
        %v1924 = vunpack.c.h.b16 %v524
        %v1925 = vunpack.c.l.b16 %v525
        %v1926 = vunpack.c.h.b16 %v525
        %v1927 = vunpack.c.l.b16 %v526
        %v1928 = vunpack.c.h.b16 %v526
        %v1929 = vunpack.c.l.b16 %v527
        %v1930 = vunpack.c.h.b16 %v527
        %v1931 = vunpack.c.l.b16 %v528
        %v1932 = vunpack.c.h.b16 %v528
        %v1933 = vunpack.c.l.b16 %v529
        %v1934 = vunpack.c.h.b16 %v529
        %v1935 = vunpack.c.l.b16 %v530
        %v1936 = vunpack.c.h.b16 %v530
        %v1937 = vunpack.c.l.b16 %v531
        %v1938 = vunpack.c.h.b16 %v531
        %v1939 = vunpack.c.l.b16 %v532
        %v1940 = vunpack.c.h.b16 %v532
        %v1941 = vunpack.c.l.b16 %v533
        %v1942 = vunpack.c.h.b16 %v533
        %v1943 = vunpack.c.l.b16 %v534
        %v1944 = vunpack.c.h.b16 %v534
        %v1945 = vunpack.c.l.b16 %v535
        %v1946 = vunpack.c.h.b16 %v535
        %v1947 = vunpack.c.l.b16 %v536
        %v1948 = vunpack.c.h.b16 %v536
        %v1949 = vunpack.c.l.b16 %v537
        %v1950 = vunpack.c.h.b16 %v537
        %v1951 = vunpack.c.l.b16 %v538
        %v1952 = vunpack.c.h.b16 %v538
        %v1953 = vunpack.c.l.b16 %v539
        %v1954 = vunpack.c.h.b16 %v539
        %v1955 = vunpack.c.l.b16 %v540
        %v1956 = vunpack.c.h.b16 %v540
        %v1957 = vunpack.c.l.b16 %v541
        %v1958 = vunpack.c.h.b16 %v541
        %v1959 = vunpack.c.l.b16 %v542
        %v1960 = vunpack.c.h.b16 %v542
        %v1961 = vunpack.c.l.b16 %v543
        %v1962 = vunpack.c.h.b16 %v543
        %v1963 = vunpack.c.l.b16 %v544
        %v1964 = vunpack.c.h.b16 %v544
        %v1965 = vunpack.c.l.b16 %v545
        %v1966 = vunpack.c.h.b16 %v545
        %v1967 = vunpack.c.l.b16 %v546
        %v1968 = vunpack.c.h.b16 %v546
        %v1969 = vunpack.c.l.b16 %v547
        %v1970 = vunpack.c.h.b16 %v547
        %v1971 = vunpack.c.l.b16 %v548
        %v1972 = vunpack.c.h.b16 %v548
        %v1973 = vunpack.c.l.b16 %v549
        %v1974 = vunpack.c.h.b16 %v549
        %v1975 = vunpack.c.l.b16 %v550
        %v1976 = vunpack.c.h.b16 %v550
        %v1977 = vunpack.c.l.b16 %v551
        %v1978 = vunpack.c.h.b16 %v551
        %v1979 = vunpack.c.l.b16 %v552
        %v1980 = vunpack.c.h.b16 %v552
        %v1981 = vunpack.c.l.b16 %v553
        %v1982 = vunpack.c.h.b16 %v553
        %v1983 = vunpack.c.l.b16 %v554
        %v1984 = vunpack.c.h.b16 %v554
        %v1985 = vunpack.c.l.b16 %v555
        %v1986 = vunpack.c.h.b16 %v555
        %v1987 = vunpack.c.l.b16 %v556
        %v1988 = vunpack.c.h.b16 %v556
        %v1989 = vunpack.c.l.b16 %v557
        %v1990 = vunpack.c.h.b16 %v557
        %v1991 = vunpack.c.l.b16 %v558
        %v1992 = vunpack.c.h.b16 %v558
        %v1993 = vunpack.c.l.b16 %v559
        %v1994 = vunpack.c.h.b16 %v559
        %v1995 = vunpack.c.l.b16 %v560
        %v1996 = vunpack.c.h.b16 %v560
        %v1997 = vunpack.c.l.b16 %v561
        %v1998 = vunpack.c.h.b16 %v561
        %v1999 = vunpack.c.l.b16 %v562
        %v2000 = vunpack.c.h.b16 %v562
        %v2001 = vunpack.c.l.b16 %v563
        %v2002 = vunpack.c.h.b16 %v563
        %v2003 = vunpack.c.l.b16 %v564
        %v2004 = vunpack.c.h.b16 %v564
        %v2005 = vunpack.c.l.b16 %v565
        %v2006 = vunpack.c.h.b16 %v565
        %v2007 = vunpack.c.l.b16 %v566
        %v2008 = vunpack.c.h.b16 %v566
        %v2009 = vunpack.c.l.b16 %v567
        %v2010 = vunpack.c.h.b16 %v567
        %v2011 = vunpack.c.l.b16 %v568
        %v2012 = vunpack.c.h.b16 %v568
        %v2013 = vunpack.c.l.b16 %v569
        %v2014 = vunpack.c.h.b16 %v569
        %v2015 = vunpack.c.l.b16 %v570
        %v2016 = vunpack.c.h.b16 %v570
        %v2017 = vunpack.c.l.b16 %v571
        %v2018 = vunpack.c.h.b16 %v571
        %v2019 = vunpack.c.l.b16 %v572
        %v2020 = vunpack.c.h.b16 %v572
        %v2021 = vunpack.c.l.b16 %v573
        %v2022 = vunpack.c.h.b16 %v573
        %v2023 = vunpack.c.l.b16 %v574
        %v2024 = vunpack.c.h.b16 %v574
        %v2025 = vunpack.c.l.b16 %v575
        %v2026 = vunpack.c.h.b16 %v575
        %v2027 = vunpack.c.l.b16 %v576
        %v2028 = vunpack.c.h.b16 %v576
        %v2029 = vunpack.c.l.b16 %v577
        %v2030 = vunpack.c.h.b16 %v577
        %v2031 = vunpack.c.l.b16 %v578
        %v2032 = vunpack.c.h.b16 %v578
        %v2033 = vunpack.c.l.b16 %v579
        %v2034 = vunpack.c.h.b16 %v579
        %v2035 = vunpack.c.l.b16 %v580
        %v2036 = vunpack.c.h.b16 %v580
        %v2037 = vunpack.c.l.b16 %v581
        %v2038 = vunpack.c.h.b16 %v581
        %v2039 = vunpack.c.l.b16 %v582
        %v2040 = vunpack.c.h.b16 %v582
        %v2041 = vunpack.c.l.b16 %v583
        %v2042 = vunpack.c.h.b16 %v583
        %v2043 = vunpack.c.l.b16 %v584
        %v2044 = vunpack.c.h.b16 %v584
        %v2045 = vunpack.c.l.b16 %v585
        %v2046 = vunpack.c.h.b16 %v585
        %v2047 = vunpack.c.l.b16 %v586
        %v2048 = vunpack.c.h.b16 %v586
        %v2049 = vunpack.c.l.b16 %v587
        %v2050 = vunpack.c.h.b16 %v587
        %v2051 = vunpack.c.l.b16 %v588
        %v2052 = vunpack.c.h.b16 %v588
        %v2053 = vunpack.c.l.b16 %v589
        %v2054 = vunpack.c.h.b16 %v589
        %v2055 = vunpack.c.l.b16 %v590
        %v2056 = vunpack.c.h.b16 %v590
        %v2057 = vunpack.c.l.b16 %v591
        %v2058 = vunpack.c.h.b16 %v591
        %v2059 = vunpack.c.l.b16 %v592
        %v2060 = vunpack.c.h.b16 %v592
        %v2061 = vunpack.c.l.b16 %v593
        %v2062 = vunpack.c.h.b16 %v593
        %v2063 = vunpack.c.l.b16 %v594
        %v2064 = vunpack.c.h.b16 %v594
        %v2065 = vunpack.c.l.b16 %v595
        %v2066 = vunpack.c.h.b16 %v595
        %v2067 = vunpack.c.l.b16 %v596
        %v2068 = vunpack.c.h.b16 %v596
        %v2069 = vunpack.c.l.b16 %v597
        %v2070 = vunpack.c.h.b16 %v597
        %v2071 = vunpack.c.l.b16 %v598
        %v2072 = vunpack.c.h.b16 %v598
        %v2073 = vunpack.c.l.b16 %v599
        %v2074 = vunpack.c.h.b16 %v599
        %v2075 = vunpack.c.l.b16 %v600
        %v2076 = vunpack.c.h.b16 %v600
        %v2077 = vunpack.c.l.b16 %v601
        %v2078 = vunpack.c.h.b16 %v601
        %v2079 = vunpack.c.l.b16 %v602
        %v2080 = vunpack.c.h.b16 %v602
        %v2081 = vunpack.c.l.b16 %v603
        %v2082 = vunpack.c.h.b16 %v603
        %v2083 = vunpack.c.l.b16 %v604
        %v2084 = vunpack.c.h.b16 %v604
        %v2085 = vunpack.c.l.b16 %v605
        %v2086 = vunpack.c.h.b16 %v605
        %v2087 = vunpack.c.l.b16 %v606
        %v2088 = vunpack.c.h.b16 %v606
        %v2089 = vunpack.c.l.b16 %v607
        %v2090 = vunpack.c.h.b16 %v607
        %v2091 = vunpack.c.l.b16 %v608
        %v2092 = vunpack.c.h.b16 %v608
        %v2093 = vunpack.c.l.b16 %v609
        %v2094 = vunpack.c.h.b16 %v609
        %v2095 = vunpack.c.l.b16 %v610
        %v2096 = vunpack.c.h.b16 %v610
        %v2097 = vunpack.c.l.b16 %v611
        %v2098 = vunpack.c.h.b16 %v611
        %v2099 = vunpack.c.l.b16 %v612
        %v2100 = vunpack.c.h.b16 %v612
        %v2101 = vunpack.c.l.b16 %v613
        %v2102 = vunpack.c.h.b16 %v613
        %v2103 = vunpack.c.l.b16 %v614
        %v2104 = vunpack.c.h.b16 %v614
        %v2105 = vunpack.c.l.b16 %v615
        %v2106 = vunpack.c.h.b16 %v615
        %v2107 = vunpack.c.l.b16 %v616
        %v2108 = vunpack.c.h.b16 %v616
        %v2109 = vunpack.c.l.b16 %v617
        %v2110 = vunpack.c.h.b16 %v617
        %v2111 = vunpack.c.l.b16 %v618
        %v2112 = vunpack.c.h.b16 %v618
        %v2113 = vunpack.c.l.b16 %v619
        %v2114 = vunpack.c.h.b16 %v619
        %v2115 = vunpack.c.l.b16 %v620
        %v2116 = vunpack.c.h.b16 %v620
        %v2117 = vunpack.c.l.b16 %v621
        %v2118 = vunpack.c.h.b16 %v621
        %v2119 = vunpack.c.l.b16 %v622
        %v2120 = vunpack.c.h.b16 %v622
        %v2121 = vunpack.c.l.b16 %v623
        %v2122 = vunpack.c.h.b16 %v623
        %v2123 = vunpack.c.l.b16 %v624
        %v2124 = vunpack.c.h.b16 %v624
        %v2125 = vunpack.c.l.b16 %v625
        %v2126 = vunpack.c.h.b16 %v625
        %v2127 = vunpack.c.l.b16 %v626
        %v2128 = vunpack.c.h.b16 %v626
        %v2129 = vunpack.c.l.b16 %v627
        %v2130 = vunpack.c.h.b16 %v627
        %v2131 = vunpack.c.l.b16 %v628
        %v2132 = vunpack.c.h.b16 %v628
        %v2133 = vunpack.c.l.b16 %v629
        %v2134 = vunpack.c.h.b16 %v629
        %v2135 = vunpack.c.l.b16 %v630
        %v2136 = vunpack.c.h.b16 %v630
        %v2137 = vunpack.c.l.b16 %v631
        %v2138 = vunpack.c.h.b16 %v631
        %v2139 = vunpack.c.l.b16 %v632
        %v2140 = vunpack.c.h.b16 %v632
        %v2141 = vunpack.c.l.b16 %v633
        %v2142 = vunpack.c.h.b16 %v633
        %v2143 = vunpack.c.l.b16 %v634
        %v2144 = vunpack.c.h.b16 %v634
        %v2145 = vunpack.c.l.b16 %v635
        %v2146 = vunpack.c.h.b16 %v635
        %v2147 = vunpack.c.l.b16 %v636
        %v2148 = vunpack.c.h.b16 %v636
        %v2149 = vunpack.c.l.b16 %v637
        %v2150 = vunpack.c.h.b16 %v637
        %v2151 = vunpack.c.l.b16 %v638
        %v2152 = vunpack.c.h.b16 %v638
        %v2153 = vunpack.c.l.b16 %v639
        %v2154 = vunpack.c.h.b16 %v639
        %v2155 = vunpack.c.l.b16 %v640
        %v2156 = vunpack.c.h.b16 %v640
        %v2157 = vunpack.c.l.b16 %v641
        %v2158 = vunpack.c.h.b16 %v641
        %v2159 = vunpack.c.l.b16 %v642
        %v2160 = vunpack.c.h.b16 %v642
        %v2161 = vunpack.c.l.b16 %v643
        %v2162 = vunpack.c.h.b16 %v643
        %v2163 = vunpack.c.l.b16 %v644
        %v2164 = vunpack.c.h.b16 %v644
        %v2165 = vunpack.c.l.b16 %v645
        %v2166 = vunpack.c.h.b16 %v645
        %v2167 = vunpack.c.l.b16 %v646
        %v2168 = vunpack.c.h.b16 %v646
        %v2169 = vunpack.c.l.b16 %v647
        %v2170 = vunpack.c.h.b16 %v647
        %v2171 = vunpack.c.l.b16 %v648
        %v2172 = vunpack.c.h.b16 %v648
        %v2173 = vunpack.c.l.b16 %v649
        %v2174 = vunpack.c.h.b16 %v649
        %v2175 = vunpack.c.l.b16 %v650
        %v2176 = vunpack.c.h.b16 %v650
        %v2177 = vunpack.c.l.b16 %v651
        %v2178 = vunpack.c.h.b16 %v651
        %v2179 = vunpack.c.l.b16 %v652
        %v2180 = vunpack.c.h.b16 %v652
        %v2181 = vunpack.c.l.b16 %v653
        %v2182 = vunpack.c.h.b16 %v653
        %v2183 = vunpack.c.l.b16 %v654
        %v2184 = vunpack.c.h.b16 %v654
        %v2185 = vunpack.c.l.b16 %v655
        %v2186 = vunpack.c.h.b16 %v655
        %v2187 = vunpack.c.l.b16 %v656
        %v2188 = vunpack.c.h.b16 %v656
        %v2189 = vunpack.c.l.b16 %v657
        %v2190 = vunpack.c.h.b16 %v657
        %v2191 = vunpack.c.l.b16 %v658
        %v2192 = vunpack.c.h.b16 %v658
        %v2193 = vunpack.c.l.b16 %v659
        %v2194 = vunpack.c.h.b16 %v659
        %v2195 = vunpack.c.l.b16 %v660
        %v2196 = vunpack.c.h.b16 %v660
        %v2197 = vunpack.c.l.b16 %v661
        %v2198 = vunpack.c.h.b16 %v661
        %v2199 = vunpack.c.l.b16 %v662
        %v2200 = vunpack.c.h.b16 %v662
        %v2201 = vunpack.c.l.b16 %v663
        %v2202 = vunpack.c.h.b16 %v663
        %v2203 = vunpack.c.l.b16 %v664
        %v2204 = vunpack.c.h.b16 %v664
        %v2205 = vunpack.c.l.b16 %v665
        %v2206 = vunpack.c.h.b16 %v665
        %v2207 = vunpack.c.l.b16 %v666
        %v2208 = vunpack.c.h.b16 %v666
        %v2209 = vunpack.c.l.b16 %v667
        %v2210 = vunpack.c.h.b16 %v667
        %v2211 = vunpack.c.l.b16 %v668
        %v2212 = vunpack.c.h.b16 %v668
        %v2213 = vunpack.c.l.b16 %v669
        %v2214 = vunpack.c.h.b16 %v669
        %v2215 = vunpack.c.l.b16 %v670
        %v2216 = vunpack.c.h.b16 %v670
        %v2217 = vunpack.c.l.b16 %v671
        %v2218 = vunpack.c.h.b16 %v671
        %v2219 = vunpack.c.l.b16 %v672
        %v2220 = vunpack.c.h.b16 %v672
        %v2221 = vunpack.c.l.b16 %v673
        %v2222 = vunpack.c.h.b16 %v673
        %v2223 = vunpack.c.l.b16 %v674
        %v2224 = vunpack.c.h.b16 %v674
        %v2225 = vunpack.c.l.b16 %v675
        %v2226 = vunpack.c.h.b16 %v675
        %v2227 = vunpack.c.l.b16 %v676
        %v2228 = vunpack.c.h.b16 %v676
        %v2229 = vunpack.c.l.b16 %v677
        %v2230 = vunpack.c.h.b16 %v677
        %v2231 = vunpack.c.l.b16 %v678
        %v2232 = vunpack.c.h.b16 %v678
        %v2233 = vunpack.c.l.b16 %v679
        %v2234 = vunpack.c.h.b16 %v679
        %v2235 = vunpack.c.l.b16 %v680
        %v2236 = vunpack.c.h.b16 %v680
        %v2237 = vunpack.c.l.b16 %v681
        %v2238 = vunpack.c.h.b16 %v681
        %v2239 = vunpack.c.l.b16 %v682
        %v2240 = vunpack.c.h.b16 %v682
        %v2241 = vunpack.c.l.b16 %v683
        %v2242 = vunpack.c.h.b16 %v683
        %v2243 = vunpack.c.l.b16 %v684
        %v2244 = vunpack.c.h.b16 %v684
        %v2245 = vunpack.c.l.b16 %v685
        %v2246 = vunpack.c.h.b16 %v685
        %v2247 = vunpack.c.l.b16 %v686
        %v2248 = vunpack.c.h.b16 %v686
        %v2249 = vunpack.c.l.b16 %v687
        %v2250 = vunpack.c.h.b16 %v687
        %v2251 = vunpack.c.l.b16 %v688
        %v2252 = vunpack.c.h.b16 %v688
        %v2253 = vunpack.c.l.b16 %v689
        %v2254 = vunpack.c.h.b16 %v689
        %v2255 = vunpack.c.l.b16 %v690
        %v2256 = vunpack.c.h.b16 %v690
        %v2257 = vunpack.c.l.b16 %v691
        %v2258 = vunpack.c.h.b16 %v691
        %v2259 = vunpack.c.l.b16 %v692
        %v2260 = vunpack.c.h.b16 %v692
        %v2261 = vunpack.c.l.b16 %v693
        %v2262 = vunpack.c.h.b16 %v693
        %v2263 = vunpack.c.l.b16 %v694
        %v2264 = vunpack.c.h.b16 %v694
        %v2265 = vunpack.c.l.b16 %v695
        %v2266 = vunpack.c.h.b16 %v695
        %v2267 = vunpack.c.l.b16 %v696
        %v2268 = vunpack.c.h.b16 %v696
        %v2269 = vunpack.c.l.b16 %v697
        %v2270 = vunpack.c.h.b16 %v697
        %v2271 = vunpack.c.l.b16 %v698
        %v2272 = vunpack.c.h.b16 %v698
        %v2273 = vunpack.c.l.b16 %v699
        %v2274 = vunpack.c.h.b16 %v699
        %v2275 = vunpack.c.l.b16 %v700
        %v2276 = vunpack.c.h.b16 %v700
        %v2277 = vunpack.c.l.b16 %v701
        %v2278 = vunpack.c.h.b16 %v701
        %v2279 = vunpack.c.l.b16 %v702
        %v2280 = vunpack.c.h.b16 %v702
        %v2281 = vunpack.c.l.b16 %v703
        %v2282 = vunpack.c.h.b16 %v703
        %v2283 = vunpack.c.l.b16 %v704
        %v2284 = vunpack.c.h.b16 %v704
        %v2285 = vunpack.c.l.b16 %v705
        %v2286 = vunpack.c.h.b16 %v705
        %v2287 = vunpack.c.l.b16 %v706
        %v2288 = vunpack.c.h.b16 %v706
        %v2289 = vunpack.c.l.b16 %v707
        %v2290 = vunpack.c.h.b16 %v707
        %v2291 = vunpack.c.l.b16 %v708
        %v2292 = vunpack.c.h.b16 %v708
        %v2293 = vunpack.c.l.b16 %v709
        %v2294 = vunpack.c.h.b16 %v709
        %v2295 = vunpack.c.l.b16 %v710
        %v2296 = vunpack.c.h.b16 %v710
        %v2297 = vunpack.c.l.b16 %v711
        %v2298 = vunpack.c.h.b16 %v711
        %v2299 = vunpack.c.l.b16 %v712
        %v2300 = vunpack.c.h.b16 %v712
        %v2301 = vunpack.c.l.b16 %v713
        %v2302 = vunpack.c.h.b16 %v713
        %v2303 = vunpack.c.l.b16 %v714
        %v2304 = vunpack.c.h.b16 %v714
        %v2305 = vunpack.c.l.b16 %v715
        %v2306 = vunpack.c.h.b16 %v715
        %v2307 = vunpack.c.l.b16 %v716
        %v2308 = vunpack.c.h.b16 %v716
        %v2309 = vunpack.c.l.b16 %v717
        %v2310 = vunpack.c.h.b16 %v717
        %v2311 = vunpack.c.l.b16 %v718
        %v2312 = vunpack.c.h.b16 %v718
        %v2313 = vunpack.c.l.b16 %v719
        %v2314 = vunpack.c.h.b16 %v719
        %v2315 = vunpack.c.l.b16 %v720
        %v2316 = vunpack.c.h.b16 %v720
        %v2317 = vunpack.c.l.b16 %v721
        %v2318 = vunpack.c.h.b16 %v721
        %v2319 = vunpack.c.l.b16 %v722
        %v2320 = vunpack.c.h.b16 %v722
        %v2321 = vunpack.c.l.b16 %v723
        %v2322 = vunpack.c.h.b16 %v723
        %v2323 = vunpack.c.l.b16 %v724
        %v2324 = vunpack.c.h.b16 %v724
        %v2325 = vunpack.c.l.b16 %v725
        %v2326 = vunpack.c.h.b16 %v725
        %v2327 = vunpack.c.l.b16 %v726
        %v2328 = vunpack.c.h.b16 %v726
        %v2329 = vunpack.c.l.b16 %v727
        %v2330 = vunpack.c.h.b16 %v727
        %v2331 = vunpack.c.l.b16 %v728
        %v2332 = vunpack.c.h.b16 %v728
        %v2333 = vunpack.c.l.b16 %v729
        %v2334 = vunpack.c.h.b16 %v729
        %v2335 = vunpack.c.l.b16 %v730
        %v2336 = vunpack.c.h.b16 %v730
        %v2337 = vunpack.c.l.b16 %v731
        %v2338 = vunpack.c.h.b16 %v731
        %v2339 = vunpack.c.l.b16 %v732
        %v2340 = vunpack.c.h.b16 %v732
        %v2341 = vunpack.c.l.b16 %v733
        %v2342 = vunpack.c.h.b16 %v733
        %v2343 = vunpack.c.l.b16 %v734
        %v2344 = vunpack.c.h.b16 %v734
        %v2345 = vunpack.c.l.b16 %v735
        %v2346 = vunpack.c.h.b16 %v735
        %v2347 = vunpack.c.l.b16 %v736
        %v2348 = vunpack.c.h.b16 %v736
        %v2349 = vunpack.c.l.b16 %v737
        %v2350 = vunpack.c.h.b16 %v737
        %v2351 = vunpack.c.l.b16 %v738
        %v2352 = vunpack.c.h.b16 %v738
        %v2353 = vunpack.c.l.b16 %v739
        %v2354 = vunpack.c.h.b16 %v739
        %v2355 = vunpack.c.l.b16 %v740
        %v2356 = vunpack.c.h.b16 %v740
        %v2357 = vunpack.c.l.b16 %v741
        %v2358 = vunpack.c.h.b16 %v741
        %v2359 = vunpack.c.l.b16 %v742
        %v2360 = vunpack.c.h.b16 %v742
        %v2361 = vunpack.c.l.b16 %v743
        %v2362 = vunpack.c.h.b16 %v743
        %v2363 = vunpack.c.l.b16 %v744
        %v2364 = vunpack.c.h.b16 %v744
        %v2365 = vunpack.c.l.b16 %v745
        %v2366 = vunpack.c.h.b16 %v745
        %v2367 = vunpack.c.l.b16 %v746
        %v2368 = vunpack.c.h.b16 %v746
        %v2369 = vunpack.c.l.b16 %v747
        %v2370 = vunpack.c.h.b16 %v747
        %v2371 = vunpack.c.l.b16 %v748
        %v2372 = vunpack.c.h.b16 %v748
        %v2373 = vunpack.c.l.b16 %v749
        %v2374 = vunpack.c.h.b16 %v749
        %v2375 = vunpack.c.l.b16 %v750
        %v2376 = vunpack.c.h.b16 %v750
        %v2377 = vunpack.c.l.b16 %v751
        %v2378 = vunpack.c.h.b16 %v751
        %v2379 = vunpack.c.l.b16 %v752
        %v2380 = vunpack.c.h.b16 %v752
        %v2381 = vunpack.c.l.b16 %v753
        %v2382 = vunpack.c.h.b16 %v753
        %v2383 = vunpack.c.l.b16 %v754
        %v2384 = vunpack.c.h.b16 %v754
        %v2385 = vunpack.c.l.b16 %v755
        %v2386 = vunpack.c.h.b16 %v755
        %v2387 = vunpack.c.l.b16 %v756
        %v2388 = vunpack.c.h.b16 %v756
        %v2389 = vunpack.c.l.b16 %v757
        %v2390 = vunpack.c.h.b16 %v757
        %v2391 = vunpack.c.l.b16 %v758
        %v2392 = vunpack.c.h.b16 %v758
        %v2393 = vunpack.c.l.b16 %v759
        %v2394 = vunpack.c.h.b16 %v759
        %v2395 = vunpack.c.l.b16 %v760
        %v2396 = vunpack.c.h.b16 %v760
        %v2397 = vunpack.c.l.b16 %v761
        %v2398 = vunpack.c.h.b16 %v761
        %v2399 = vunpack.c.l.b16 %v762
        %v2400 = vunpack.c.h.b16 %v762
        %v2401 = vunpack.c.l.b16 %v763
        %v2402 = vunpack.c.h.b16 %v763
        %v2403 = vunpack.c.l.b16 %v764
        %v2404 = vunpack.c.h.b16 %v764
        %v2405 = vunpack.c.l.b16 %v765
        %v2406 = vunpack.c.h.b16 %v765
        %v2407 = vunpack.c.l.b16 %v766
        %v2408 = vunpack.c.h.b16 %v766
        %v2409 = vunpack.c.l.b16 %v767
        %v2410 = vunpack.c.h.b16 %v767
        %v2411 = vunpack.c.l.b16 %v768
        %v2412 = vunpack.c.h.b16 %v768
        %v2413 = vunpack.c.l.b16 %v769
        %v2414 = vunpack.c.h.b16 %v769
        %v2415 = vunpack.c.l.b16 %v770
        %v2416 = vunpack.c.h.b16 %v770
        %v2417 = vunpack.c.l.b16 %v771
        %v2418 = vunpack.c.h.b16 %v771
        %v2419 = vunpack.c.l.b16 %v772
        %v2420 = vunpack.c.h.b16 %v772
        %v2421 = vunpack.c.l.b16 %v773
        %v2422 = vunpack.c.h.b16 %v773
        %v2423 = vunpack.c.l.b16 %v774
        %v2424 = vunpack.c.h.b16 %v774
        %v2425 = vunpack.c.l.b16 %v775
        %v2426 = vunpack.c.h.b16 %v775
        %v2427 = vunpack.c.l.b16 %v776
        %v2428 = vunpack.c.h.b16 %v776
        %v2429 = vunpack.c.l.b16 %v777
        %v2430 = vunpack.c.h.b16 %v777
        %v2431 = vunpack.c.l.b16 %v778
        %v2432 = vunpack.c.h.b16 %v778
        %v2433 = vunpack.c.l.b16 %v779
        %v2434 = vunpack.c.h.b16 %v779
        %v2435 = vunpack.c.l.b16 %v780
        %v2436 = vunpack.c.h.b16 %v780
        %v2437 = vunpack.c.l.b16 %v781
        %v2438 = vunpack.c.h.b16 %v781
        %v2439 = vunpack.c.l.b16 %v782
        %v2440 = vunpack.c.h.b16 %v782
        %v2441 = vunpack.c.l.b16 %v783
        %v2442 = vunpack.c.h.b16 %v783
        %v2443 = vunpack.c.l.b16 %v784
        %v2444 = vunpack.c.h.b16 %v784
        %v2445 = vunpack.c.l.b16 %v785
        %v2446 = vunpack.c.h.b16 %v785
        %v2447 = vunpack.c.l.b16 %v786
        %v2448 = vunpack.c.h.b16 %v786
        %v2449 = vunpack.c.l.b16 %v787
        %v2450 = vunpack.c.h.b16 %v787
        %v2451 = vunpack.c.l.b16 %v788
        %v2452 = vunpack.c.h.b16 %v788
        %v2453 = vunpack.c.l.b16 %v789
        %v2454 = vunpack.c.h.b16 %v789
        %v2455 = vunpack.c.l.b16 %v790
        %v2456 = vunpack.c.h.b16 %v790
        %v2457 = vunpack.c.l.b16 %v791
        %v2458 = vunpack.c.h.b16 %v791
        %v2459 = vunpack.c.l.b16 %v792
        %v2460 = vunpack.c.h.b16 %v792
        %v2461 = vunpack.c.l.b16 %v793
        %v2462 = vunpack.c.h.b16 %v793
        %v2463 = vunpack.c.l.b16 %v794
        %v2464 = vunpack.c.h.b16 %v794
        %v2465 = vunpack.c.l.b16 %v795
        %v2466 = vunpack.c.h.b16 %v795
        %v2467 = vunpack.c.l.b16 %v796
        %v2468 = vunpack.c.h.b16 %v796
        %v2469 = vunpack.c.l.b16 %v797
        %v2470 = vunpack.c.h.b16 %v797
        %v2471 = vunpack.c.l.b16 %v798
        %v2472 = vunpack.c.h.b16 %v798
        %v2473 = vunpack.c.l.b16 %v799
        %v2474 = vunpack.c.h.b16 %v799
        %v2475 = vunpack.c.l.b16 %v800
        %v2476 = vunpack.c.h.b16 %v800
        %v2477 = vunpack.c.l.b16 %v801
        %v2478 = vunpack.c.h.b16 %v801
        %v2479 = vunpack.c.l.b16 %v802
        %v2480 = vunpack.c.h.b16 %v802
        %v2481 = vunpack.c.l.b16 %v803
        %v2482 = vunpack.c.h.b16 %v803
        %v2483 = vunpack.c.l.b16 %v804
        %v2484 = vunpack.c.h.b16 %v804
        %v2485 = vunpack.c.l.b16 %v805
        %v2486 = vunpack.c.h.b16 %v805
        %v2487 = vunpack.c.l.b16 %v806
        %v2488 = vunpack.c.h.b16 %v806
        %v2489 = vunpack.c.l.b16 %v807
        %v2490 = vunpack.c.h.b16 %v807
        %v2491 = vunpack.c.l.b16 %v808
        %v2492 = vunpack.c.h.b16 %v808
        %v2493 = vunpack.c.l.b16 %v809
        %v2494 = vunpack.c.h.b16 %v809
        %v2495 = vunpack.c.l.b16 %v810
        %v2496 = vunpack.c.h.b16 %v810
        %v2497 = vunpack.c.l.b16 %v811
        %v2498 = vunpack.c.h.b16 %v811
        %v2499 = vunpack.c.l.b16 %v812
        %v2500 = vunpack.c.h.b16 %v812
        %v2501 = vunpack.c.l.b16 %v813
        %v2502 = vunpack.c.h.b16 %v813
        %v2503 = vunpack.c.l.b16 %v814
        %v2504 = vunpack.c.h.b16 %v814
        %v2505 = vunpack.c.l.b16 %v815
        %v2506 = vunpack.c.h.b16 %v815
        %v2507 = vunpack.c.l.b16 %v816
        %v2508 = vunpack.c.h.b16 %v816
        %v2509 = vunpack.c.l.b16 %v817
        %v2510 = vunpack.c.h.b16 %v817
        %v2511 = vunpack.c.l.b16 %v818
        %v2512 = vunpack.c.h.b16 %v818
        %v2513 = vunpack.c.l.b16 %v819
        %v2514 = vunpack.c.h.b16 %v819
        %v2515 = vunpack.c.l.b16 %v820
        %v2516 = vunpack.c.h.b16 %v820
        %v2517 = vunpack.c.l.b16 %v821
        %v2518 = vunpack.c.h.b16 %v821
        %v2519 = vunpack.c.l.b16 %v822
        %v2520 = vunpack.c.h.b16 %v822
        %v2521 = vunpack.c.l.b16 %v823
        %v2522 = vunpack.c.h.b16 %v823
        %v2523 = vunpack.c.l.b16 %v824
        %v2524 = vunpack.c.h.b16 %v824
        %v2525 = vunpack.c.l.b16 %v825
        %v2526 = vunpack.c.h.b16 %v825
        %v2527 = vunpack.c.l.b16 %v826
        %v2528 = vunpack.c.h.b16 %v826
        %v2529 = vunpack.c.l.b16 %v827
        %v2530 = vunpack.c.h.b16 %v827
        %v2531 = vunpack.c.l.b16 %v828
        %v2532 = vunpack.c.h.b16 %v828
        %v2533 = vunpack.c.l.b16 %v829
        %v2534 = vunpack.c.h.b16 %v829
        %v2535 = vunpack.c.l.b16 %v830
        %v2536 = vunpack.c.h.b16 %v830
        %v2537 = vunpack.c.l.b16 %v831
        %v2538 = vunpack.c.h.b16 %v831
        %v2539 = vunpack.c.l.b16 %v832
        %v2540 = vunpack.c.h.b16 %v832
        %v2541 = vunpack.c.l.b16 %v833
        %v2542 = vunpack.c.h.b16 %v833
        %v2543 = vunpack.c.l.b16 %v834
        %v2544 = vunpack.c.h.b16 %v834
        %v2545 = vunpack.c.l.b16 %v835
        %v2546 = vunpack.c.h.b16 %v835
        %v2547 = vunpack.c.l.b16 %v836
        %v2548 = vunpack.c.h.b16 %v836
        %v2549 = vunpack.c.l.b16 %v837
        %v2550 = vunpack.c.h.b16 %v837
        %v2551 = vunpack.c.l.b16 %v838
        %v2552 = vunpack.c.h.b16 %v838
        %v2553 = vunpack.c.l.b16 %v839
        %v2554 = vunpack.c.h.b16 %v839
        %v2555 = vunpack.c.l.b16 %v840
        %v2556 = vunpack.c.h.b16 %v840
        %v2557 = vunpack.c.l.b16 %v841
        %v2558 = vunpack.c.h.b16 %v841
        %v2559 = vunpack.c.l.b16 %v842
        %v2560 = vunpack.c.h.b16 %v842
        %v2561 = vunpack.c.l.b16 %v843
        %v2562 = vunpack.c.h.b16 %v843
        %v2563 = vunpack.c.l.b16 %v844
        %v2564 = vunpack.c.h.b16 %v844
        %v2565 = vunpack.c.l.b16 %v845
        %v2566 = vunpack.c.h.b16 %v845
        %v2567 = vunpack.c.l.b16 %v846
        %v2568 = vunpack.c.h.b16 %v846
        %v2569 = vunpack.c.l.b16 %v847
        %v2570 = vunpack.c.h.b16 %v847
        %v2571 = vunpack.c.l.b16 %v848
        %v2572 = vunpack.c.h.b16 %v848
        %v2573 = vunpack.c.l.b16 %v849
        %v2574 = vunpack.c.h.b16 %v849
        %v2575 = vunpack.c.l.b16 %v850
        %v2576 = vunpack.c.h.b16 %v850
        %v2577 = vunpack.c.l.b16 %v851
        %v2578 = vunpack.c.h.b16 %v851
        %v2579 = vunpack.c.l.b16 %v852
        %v2580 = vunpack.c.h.b16 %v852
        %v2581 = vunpack.c.l.b16 %v853
        %v2582 = vunpack.c.h.b16 %v853
        %v2583 = vunpack.c.l.b16 %v854
        %v2584 = vunpack.c.h.b16 %v854
        %v2585 = vunpack.c.l.b16 %v855
        %v2586 = vunpack.c.h.b16 %v855
        %v2587 = vunpack.c.l.b16 %v856
        %v2588 = vunpack.c.h.b16 %v856
        %v2589 = vunpack.c.l.b16 %v857
        %v2590 = vunpack.c.h.b16 %v857
        %v2591 = vunpack.c.l.b16 %v858
        %v2592 = vunpack.c.h.b16 %v858
        %v2593 = vunpack.c.l.b16 %v859
        %v2594 = vunpack.c.h.b16 %v859
        %v2595 = vunpack.c.l.b16 %v860
        %v2596 = vunpack.c.h.b16 %v860
        %v2597 = vunpack.c.l.b16 %v861
        %v2598 = vunpack.c.h.b16 %v861
        %v2599 = vunpack.c.l.b16 %v862
        %v2600 = vunpack.c.h.b16 %v862
        %v2601 = vunpack.c.l.b16 %v863
        %v2602 = vunpack.c.h.b16 %v863
        %v2603 = vunpack.c.l.b16 %v864
        %v2604 = vunpack.c.h.b16 %v864
        %v2605 = vunpack.c.l.b16 %v865
        %v2606 = vunpack.c.h.b16 %v865
        %v2607 = vunpack.c.l.b16 %v866
        %v2608 = vunpack.c.h.b16 %v866
        %v2609 = vunpack.c.l.b16 %v867
        %v2610 = vunpack.c.h.b16 %v867
        %v2611 = vunpack.c.l.b16 %v868
        %v2612 = vunpack.c.h.b16 %v868
        %v2613 = vunpack.c.l.b16 %v869
        %v2614 = vunpack.c.h.b16 %v869
        %v2615 = vunpack.c.l.b16 %v870
        %v2616 = vunpack.c.h.b16 %v870
        %v2617 = vunpack.c.l.b16 %v871
        %v2618 = vunpack.c.h.b16 %v871
        %v2619 = vunpack.c.l.b16 %v872
        %v2620 = vunpack.c.h.b16 %v872
        %v2621 = vunpack.c.l.b16 %v873
        %v2622 = vunpack.c.h.b16 %v873
        %v2623 = vunpack.c.l.b16 %v874
        %v2624 = vunpack.c.h.b16 %v874
        %v2625 = vunpack.c.l.b16 %v875
        %v2626 = vunpack.c.h.b16 %v875
        %v2627 = vunpack.c.l.b16 %v876
        %v2628 = vunpack.c.h.b16 %v876
        %v2629 = vunpack.c.l.b16 %v877
        %v2630 = vunpack.c.h.b16 %v877
        %v2631 = vunpack.c.l.b16 %v878
        %v2632 = vunpack.c.h.b16 %v878
        %v2633 = vunpack.c.l.b16 %v879
        %v2634 = vunpack.c.h.b16 %v879
        %v2635 = vunpack.c.l.b16 %v880
        %v2636 = vunpack.c.h.b16 %v880
        %v2637 = vunpack.c.l.b16 %v881
        %v2638 = vunpack.c.h.b16 %v881
        %v2639 = vunpack.c.l.b16 %v882
        %v2640 = vunpack.c.h.b16 %v882
        %v2641 = vunpack.c.l.b16 %v883
        %v2642 = vunpack.c.h.b16 %v883
        %v2643 = vunpack.c.l.b16 %v884
        %v2644 = vunpack.c.h.b16 %v884
        %v2645 = vunpack.c.l.b16 %v885
        %v2646 = vunpack.c.h.b16 %v885
        %v2647 = vunpack.c.l.b16 %v886
        %v2648 = vunpack.c.h.b16 %v886
        %v2649 = vunpack.c.l.b16 %v887
        %v2650 = vunpack.c.h.b16 %v887
        %v2651 = vunpack.c.l.b16 %v888
        %v2652 = vunpack.c.h.b16 %v888
        %v2653 = vunpack.c.l.b16 %v889
        %v2654 = vunpack.c.h.b16 %v889
        %v2655 = vunpack.c.l.b16 %v890
        %v2656 = vunpack.c.h.b16 %v890
        %v2657 = vunpack.c.l.b16 %v891
        %v2658 = vunpack.c.h.b16 %v891
        %v2659 = vunpack.c.l.b16 %v892
        %v2660 = vunpack.c.h.b16 %v892
        %v2661 = vunpack.c.l.b16 %v893
        %v2662 = vunpack.c.h.b16 %v893
        %v2663 = vunpack.c.l.b16 %v894
        %v2664 = vunpack.c.h.b16 %v894
        %v2665 = vunpack.c.l.b16 %v895
        %v2666 = vunpack.c.h.b16 %v895
        %v2667 = vunpack.c.l.b16 %v896
        %v2668 = vunpack.c.h.b16 %v896
        %v2669 = vunpack.c.l.b16 %v897
        %v2670 = vunpack.c.h.b16 %v897
        %v2671 = vunpack.c.l.b16 %v898
        %v2672 = vunpack.c.h.b16 %v898
        %v2673 = vunpack.c.l.b16 %v899
        %v2674 = vunpack.c.h.b16 %v899
        %v2675 = vunpack.c.l.b16 %v900
        %v2676 = vunpack.c.h.b16 %v900
        %v2677 = vunpack.c.l.b16 %v901
        %v2678 = vunpack.c.h.b16 %v901
        %v2679 = vunpack.c.l.b16 %v902
        %v2680 = vunpack.c.h.b16 %v902
        %v2681 = vunpack.c.l.b16 %v903
        %v2682 = vunpack.c.h.b16 %v903
        %v2683 = vunpack.c.l.b16 %v904
        %v2684 = vunpack.c.h.b16 %v904
        %v2685 = vunpack.c.l.b16 %v905
        %v2686 = vunpack.c.h.b16 %v905
        %v2687 = vunpack.c.l.b16 %v906
        %v2688 = vunpack.c.h.b16 %v906
        %v2689 = vunpack.c.l.b16 %v907
        %v2690 = vunpack.c.h.b16 %v907
        %v2691 = vunpack.c.l.b16 %v908
        %v2692 = vunpack.c.h.b16 %v908
        %v2693 = vunpack.c.l.b16 %v909
        %v2694 = vunpack.c.h.b16 %v909
        %v2695 = vunpack.c.l.b16 %v910
        %v2696 = vunpack.c.h.b16 %v910
        %v2697 = vunpack.c.l.b16 %v911
        %v2698 = vunpack.c.h.b16 %v911
        %v2699 = vunpack.c.l.b16 %v912
        %v2700 = vunpack.c.h.b16 %v912
        %v2701 = vunpack.c.l.b16 %v913
        %v2702 = vunpack.c.h.b16 %v913
        %v2703 = vunpack.c.l.b16 %v914
        %v2704 = vunpack.c.h.b16 %v914
        %v2705 = vunpack.c.l.b16 %v915
        %v2706 = vunpack.c.h.b16 %v915
        %v2707 = vunpack.c.l.b16 %v916
        %v2708 = vunpack.c.h.b16 %v916
        %v2709 = vunpack.c.l.b16 %v917
        %v2710 = vunpack.c.h.b16 %v917
        %v2711 = vunpack.c.l.b16 %v918
        %v2712 = vunpack.c.h.b16 %v918
        %v2713 = vunpack.c.l.b16 %v919
        %v2714 = vunpack.c.h.b16 %v919
        %v2715 = vunpack.c.l.b16 %v920
        %v2716 = vunpack.c.h.b16 %v920
        %v2717 = vunpack.c.l.b16 %v921
        %v2718 = vunpack.c.h.b16 %v921
        %v2719 = vunpack.c.l.b16 %v922
        %v2720 = vunpack.c.h.b16 %v922
        %v2721 = vunpack.c.l.b16 %v923
        %v2722 = vunpack.c.h.b16 %v923
        %v2723 = vunpack.c.l.b16 %v924
        %v2724 = vunpack.c.h.b16 %v924
        %v2725 = vunpack.c.l.b16 %v925
        %v2726 = vunpack.c.h.b16 %v925
        %v2727 = vunpack.c.l.b16 %v926
        %v2728 = vunpack.c.h.b16 %v926
        %v2729 = vunpack.c.l.b16 %v927
        %v2730 = vunpack.c.h.b16 %v927
        %v2731 = vunpack.c.l.b16 %v928
        %v2732 = vunpack.c.h.b16 %v928
        %v2733 = vunpack.c.l.b16 %v929
        %v2734 = vunpack.c.h.b16 %v929
        %v2735 = vunpack.c.l.b16 %v930
        %v2736 = vunpack.c.h.b16 %v930
        %v2737 = vunpack.c.l.b16 %v931
        %v2738 = vunpack.c.h.b16 %v931
        %v2739 = vunpack.c.l.b16 %v932
        %v2740 = vunpack.c.h.b16 %v932
        %v2741 = vunpack.c.l.b16 %v933
        %v2742 = vunpack.c.h.b16 %v933
        %v2743 = vunpack.c.l.b16 %v934
        %v2744 = vunpack.c.h.b16 %v934
        %v2745 = vunpack.c.l.b16 %v935
        %v2746 = vunpack.c.h.b16 %v935
        %v2747 = vunpack.c.l.b16 %v936
        %v2748 = vunpack.c.h.b16 %v936
        %v2749 = vunpack.c.l.b16 %v937
        %v2750 = vunpack.c.h.b16 %v937
        %v2751 = vunpack.c.l.b16 %v938
        %v2752 = vunpack.c.h.b16 %v938
        %v2753 = vunpack.c.l.b16 %v939
        %v2754 = vunpack.c.h.b16 %v939
        %v2755 = vunpack.c.l.b16 %v940
        %v2756 = vunpack.c.h.b16 %v940
        %v2757 = vunpack.c.l.b16 %v941
        %v2758 = vunpack.c.h.b16 %v941
        %v2759 = vunpack.c.l.b16 %v942
        %v2760 = vunpack.c.h.b16 %v942
        %v2761 = vunpack.c.l.b16 %v943
        %v2762 = vunpack.c.h.b16 %v943
        %v2763 = vunpack.c.l.b16 %v944
        %v2764 = vunpack.c.h.b16 %v944
        %v2765 = vunpack.c.l.b16 %v945
        %v2766 = vunpack.c.h.b16 %v945
        %v2767 = vunpack.c.l.b16 %v946
        %v2768 = vunpack.c.h.b16 %v946
        %v2769 = vpack.c.b16 %v1629, %v1617
        %v2770 = vpack.c.b16 %v1630, %v1618
        %v2771 = vpack.c.b16 %v1631, %v1619
        %v2772 = vpack.c.b16 %v1632, %v1620
        %v2773 = vpack.c.b16 %v1633, %v1621
        %v2774 = vpack.c.b16 %v1634, %v1622
        %v2775 = vpack.c.b16 %v1635, %v1623
        %v2776 = vpack.c.b16 %v1636, %v1624
        %v2777 = vpack.c.b16 %v1637, %v1625
        %v2778 = vpack.c.b16 %v1638, %v1626
        %v2779 = vpack.c.b16 %v1639, %v1627
        %v2780 = vpack.c.b16 %v1640, %v1628
        %v2781 = vpack.c.b16 %v1653, %v1641
        %v2782 = vpack.c.b16 %v1654, %v1642
        %v2783 = vpack.c.b16 %v1655, %v1643
        %v2784 = vpack.c.b16 %v1656, %v1644
        %v2785 = vpack.c.b16 %v1657, %v1645
        %v2786 = vpack.c.b16 %v1658, %v1646
        %v2787 = vpack.c.b16 %v1659, %v1647
        %v2788 = vpack.c.b16 %v1660, %v1648
        %v2789 = vpack.c.b16 %v1661, %v1649
        %v2790 = vpack.c.b16 %v1662, %v1650
        %v2791 = vpack.c.b16 %v1663, %v1651
        %v2792 = vpack.c.b16 %v1664, %v1652
        %v2793 = vpack.c.b16 %v1677, %v1665
        %v2794 = vpack.c.b16 %v1678, %v1666
        %v2795 = vpack.c.b16 %v1679, %v1667
        %v2796 = vpack.c.b16 %v1680, %v1668
        %v2797 = vpack.c.b16 %v1681, %v1669
        %v2798 = vpack.c.b16 %v1682, %v1670
        %v2799 = vpack.c.b16 %v1683, %v1671
        %v2800 = vpack.c.b16 %v1684, %v1672
        %v2801 = vpack.c.b16 %v1685, %v1673
        %v2802 = vpack.c.b16 %v1686, %v1674
        %v2803 = vpack.c.b16 %v1687, %v1675
        %v2804 = vpack.c.b16 %v1688, %v1676
        %v2805 = vpack.c.b16 %v1701, %v1689
        %v2806 = vpack.c.b16 %v1702, %v1690
        %v2807 = vpack.c.b16 %v1703, %v1691
        %v2808 = vpack.c.b16 %v1704, %v1692
        %v2809 = vpack.c.b16 %v1705, %v1693
        %v2810 = vpack.c.b16 %v1706, %v1694
        %v2811 = vpack.c.b16 %v1707, %v1695
        %v2812 = vpack.c.b16 %v1708, %v1696
        %v2813 = vpack.c.b16 %v1709, %v1697
        %v2814 = vpack.c.b16 %v1710, %v1698
        %v2815 = vpack.c.b16 %v1711, %v1699
        %v2816 = vpack.c.b16 %v1712, %v1700
        %v2817 = vpack.c.b16 %v1725, %v1713
        %v2818 = vpack.c.b16 %v1726, %v1714
        %v2819 = vpack.c.b16 %v1727, %v1715
        %v2820 = vpack.c.b16 %v1728, %v1716
        %v2821 = vpack.c.b16 %v1729, %v1717
        %v2822 = vpack.c.b16 %v1730, %v1718
        %v2823 = vpack.c.b16 %v1731, %v1719
        %v2824 = vpack.c.b16 %v1732, %v1720
        %v2825 = vpack.c.b16 %v1733, %v1721
        %v2826 = vpack.c.b16 %v1734, %v1722
        %v2827 = vpack.c.b16 %v1735, %v1723
        %v2828 = vpack.c.b16 %v1736, %v1724
        %v2829 = vpack.c.b16 %v1749, %v1737
        %v2830 = vpack.c.b16 %v1750, %v1738
        %v2831 = vpack.c.b16 %v1751, %v1739
        %v2832 = vpack.c.b16 %v1752, %v1740
        %v2833 = vpack.c.b16 %v1753, %v1741
        %v2834 = vpack.c.b16 %v1754, %v1742
        %v2835 = vpack.c.b16 %v1755, %v1743
        %v2836 = vpack.c.b16 %v1756, %v1744
        %v2837 = vpack.c.b16 %v1757, %v1745
        %v2838 = vpack.c.b16 %v1758, %v1746
        %v2839 = vpack.c.b16 %v1759, %v1747
        %v2840 = vpack.c.b16 %v1760, %v1748
        %v2841 = vpack.c.b16 %v1773, %v1761
        %v2842 = vpack.c.b16 %v1774, %v1762
        %v2843 = vpack.c.b16 %v1775, %v1763
        %v2844 = vpack.c.b16 %v1776, %v1764
        %v2845 = vpack.c.b16 %v1777, %v1765
        %v2846 = vpack.c.b16 %v1778, %v1766
        %v2847 = vpack.c.b16 %v1779, %v1767
        %v2848 = vpack.c.b16 %v1780, %v1768
        %v2849 = vpack.c.b16 %v1781, %v1769
        %v2850 = vpack.c.b16 %v1782, %v1770
        %v2851 = vpack.c.b16 %v1783, %v1771
        %v2852 = vpack.c.b16 %v1784, %v1772
        %v2853 = vpack.c.b16 %v1797, %v1785
        %v2854 = vpack.c.b16 %v1798, %v1786
        %v2855 = vpack.c.b16 %v1799, %v1787
        %v2856 = vpack.c.b16 %v1800, %v1788
        %v2857 = vpack.c.b16 %v1801, %v1789
        %v2858 = vpack.c.b16 %v1802, %v1790
        %v2859 = vpack.c.b16 %v1803, %v1791
        %v2860 = vpack.c.b16 %v1804, %v1792
        %v2861 = vpack.c.b16 %v1805, %v1793
        %v2862 = vpack.c.b16 %v1806, %v1794
        %v2863 = vpack.c.b16 %v1807, %v1795
        %v2864 = vpack.c.b16 %v1808, %v1796
        %v2865 = vpack.c.b16 %v1821, %v1809
        %v2866 = vpack.c.b16 %v1822, %v1810
        %v2867 = vpack.c.b16 %v1823, %v1811
        %v2868 = vpack.c.b16 %v1824, %v1812
        %v2869 = vpack.c.b16 %v1825, %v1813
        %v2870 = vpack.c.b16 %v1826, %v1814
        %v2871 = vpack.c.b16 %v1827, %v1815
        %v2872 = vpack.c.b16 %v1828, %v1816
        %v2873 = vpack.c.b16 %v1829, %v1817
        %v2874 = vpack.c.b16 %v1830, %v1818
        %v2875 = vpack.c.b16 %v1831, %v1819
        %v2876 = vpack.c.b16 %v1832, %v1820
        %v2877 = vpack.c.b16 %v1845, %v1833
        %v2878 = vpack.c.b16 %v1846, %v1834
        %v2879 = vpack.c.b16 %v1847, %v1835
        %v2880 = vpack.c.b16 %v1848, %v1836
        %v2881 = vpack.c.b16 %v1849, %v1837
        %v2882 = vpack.c.b16 %v1850, %v1838
        %v2883 = vpack.c.b16 %v1851, %v1839
        %v2884 = vpack.c.b16 %v1852, %v1840
        %v2885 = vpack.c.b16 %v1853, %v1841
        %v2886 = vpack.c.b16 %v1854, %v1842
        %v2887 = vpack.c.b16 %v1855, %v1843
        %v2888 = vpack.c.b16 %v1856, %v1844
        %v2889 = vpack.c.b16 %v1869, %v1857
        %v2890 = vpack.c.b16 %v1870, %v1858
        %v2891 = vpack.c.b16 %v1871, %v1859
        %v2892 = vpack.c.b16 %v1872, %v1860
        %v2893 = vpack.c.b16 %v1873, %v1861
        %v2894 = vpack.c.b16 %v1874, %v1862
        %v2895 = vpack.c.b16 %v1875, %v1863
        %v2896 = vpack.c.b16 %v1876, %v1864
        %v2897 = vpack.c.b16 %v1877, %v1865
        %v2898 = vpack.c.b16 %v1878, %v1866
        %v2899 = vpack.c.b16 %v1879, %v1867
        %v2900 = vpack.c.b16 %v1880, %v1868
        %v2901 = vpack.c.b16 %v1893, %v1881
        %v2902 = vpack.c.b16 %v1894, %v1882
        %v2903 = vpack.c.b16 %v1895, %v1883
        %v2904 = vpack.c.b16 %v1896, %v1884
        %v2905 = vpack.c.b16 %v1897, %v1885
        %v2906 = vpack.c.b16 %v1898, %v1886
        %v2907 = vpack.c.b16 %v1899, %v1887
        %v2908 = vpack.c.b16 %v1900, %v1888
        %v2909 = vpack.c.b16 %v1901, %v1889
        %v2910 = vpack.c.b16 %v1902, %v1890
        %v2911 = vpack.c.b16 %v1903, %v1891
        %v2912 = vpack.c.b16 %v1904, %v1892
        %v2913 = vpack.c.b16 %v1917, %v1905
        %v2914 = vpack.c.b16 %v1918, %v1906
        %v2915 = vpack.c.b16 %v1919, %v1907
        %v2916 = vpack.c.b16 %v1920, %v1908
        %v2917 = vpack.c.b16 %v1921, %v1909
        %v2918 = vpack.c.b16 %v1922, %v1910
        %v2919 = vpack.c.b16 %v1923, %v1911
        %v2920 = vpack.c.b16 %v1924, %v1912
        %v2921 = vpack.c.b16 %v1925, %v1913
        %v2922 = vpack.c.b16 %v1926, %v1914
        %v2923 = vpack.c.b16 %v1927, %v1915
        %v2924 = vpack.c.b16 %v1928, %v1916
        %v2925 = vpack.c.b16 %v1941, %v1929
        %v2926 = vpack.c.b16 %v1942, %v1930
        %v2927 = vpack.c.b16 %v1943, %v1931
        %v2928 = vpack.c.b16 %v1944, %v1932
        %v2929 = vpack.c.b16 %v1945, %v1933
        %v2930 = vpack.c.b16 %v1946, %v1934
        %v2931 = vpack.c.b16 %v1947, %v1935
        %v2932 = vpack.c.b16 %v1948, %v1936
        %v2933 = vpack.c.b16 %v1949, %v1937
        %v2934 = vpack.c.b16 %v1950, %v1938
        %v2935 = vpack.c.b16 %v1951, %v1939
        %v2936 = vpack.c.b16 %v1952, %v1940
        %v2937 = vpack.c.b16 %v1965, %v1953
        %v2938 = vpack.c.b16 %v1966, %v1954
        %v2939 = vpack.c.b16 %v1967, %v1955
        %v2940 = vpack.c.b16 %v1968, %v1956
        %v2941 = vpack.c.b16 %v1969, %v1957
        %v2942 = vpack.c.b16 %v1970, %v1958
        %v2943 = vpack.c.b16 %v1971, %v1959
        %v2944 = vpack.c.b16 %v1972, %v1960
        %v2945 = vpack.c.b16 %v1973, %v1961
        %v2946 = vpack.c.b16 %v1974, %v1962
        %v2947 = vpack.c.b16 %v1975, %v1963
        %v2948 = vpack.c.b16 %v1976, %v1964
        %v2949 = vpack.c.b16 %v1989, %v1977
        %v2950 = vpack.c.b16 %v1990, %v1978
        %v2951 = vpack.c.b16 %v1991, %v1979
        %v2952 = vpack.c.b16 %v1992, %v1980
        %v2953 = vpack.c.b16 %v1993, %v1981
        %v2954 = vpack.c.b16 %v1994, %v1982
        %v2955 = vpack.c.b16 %v1995, %v1983
        %v2956 = vpack.c.b16 %v1996, %v1984
        %v2957 = vpack.c.b16 %v1997, %v1985
        %v2958 = vpack.c.b16 %v1998, %v1986
        %v2959 = vpack.c.b16 %v1999, %v1987
        %v2960 = vpack.c.b16 %v2000, %v1988
        %v2961 = vpack.c.b16 %v2013, %v2001
        %v2962 = vpack.c.b16 %v2014, %v2002
        %v2963 = vpack.c.b16 %v2015, %v2003
        %v2964 = vpack.c.b16 %v2016, %v2004
        %v2965 = vpack.c.b16 %v2017, %v2005
        %v2966 = vpack.c.b16 %v2018, %v2006
        %v2967 = vpack.c.b16 %v2019, %v2007
        %v2968 = vpack.c.b16 %v2020, %v2008
        %v2969 = vpack.c.b16 %v2021, %v2009
        %v2970 = vpack.c.b16 %v2022, %v2010
        %v2971 = vpack.c.b16 %v2023, %v2011
        %v2972 = vpack.c.b16 %v2024, %v2012
        %v2973 = vpack.c.b16 %v2037, %v2025
        %v2974 = vpack.c.b16 %v2038, %v2026
        %v2975 = vpack.c.b16 %v2039, %v2027
        %v2976 = vpack.c.b16 %v2040, %v2028
        %v2977 = vpack.c.b16 %v2041, %v2029
        %v2978 = vpack.c.b16 %v2042, %v2030
        %v2979 = vpack.c.b16 %v2043, %v2031
        %v2980 = vpack.c.b16 %v2044, %v2032
        %v2981 = vpack.c.b16 %v2045, %v2033
        %v2982 = vpack.c.b16 %v2046, %v2034
        %v2983 = vpack.c.b16 %v2047, %v2035
        %v2984 = vpack.c.b16 %v2048, %v2036
        %v2985 = vpack.c.b16 %v2061, %v2049
        %v2986 = vpack.c.b16 %v2062, %v2050
        %v2987 = vpack.c.b16 %v2063, %v2051
        %v2988 = vpack.c.b16 %v2064, %v2052
        %v2989 = vpack.c.b16 %v2065, %v2053
        %v2990 = vpack.c.b16 %v2066, %v2054
        %v2991 = vpack.c.b16 %v2067, %v2055
        %v2992 = vpack.c.b16 %v2068, %v2056
        %v2993 = vpack.c.b16 %v2069, %v2057
        %v2994 = vpack.c.b16 %v2070, %v2058
        %v2995 = vpack.c.b16 %v2071, %v2059
        %v2996 = vpack.c.b16 %v2072, %v2060
        %v2997 = vpack.c.b16 %v2085, %v2073
        %v2998 = vpack.c.b16 %v2086, %v2074
        %v2999 = vpack.c.b16 %v2087, %v2075
        %v3000 = vpack.c.b16 %v2088, %v2076
        %v3001 = vpack.c.b16 %v2089, %v2077
        %v3002 = vpack.c.b16 %v2090, %v2078
        %v3003 = vpack.c.b16 %v2091, %v2079
        %v3004 = vpack.c.b16 %v2092, %v2080
        %v3005 = vpack.c.b16 %v2093, %v2081
        %v3006 = vpack.c.b16 %v2094, %v2082
        %v3007 = vpack.c.b16 %v2095, %v2083
        %v3008 = vpack.c.b16 %v2096, %v2084
        %v3009 = vpack.c.b16 %v2109, %v2097
        %v3010 = vpack.c.b16 %v2110, %v2098
        %v3011 = vpack.c.b16 %v2111, %v2099
        %v3012 = vpack.c.b16 %v2112, %v2100
        %v3013 = vpack.c.b16 %v2113, %v2101
        %v3014 = vpack.c.b16 %v2114, %v2102
        %v3015 = vpack.c.b16 %v2115, %v2103
        %v3016 = vpack.c.b16 %v2116, %v2104
        %v3017 = vpack.c.b16 %v2117, %v2105
        %v3018 = vpack.c.b16 %v2118, %v2106
        %v3019 = vpack.c.b16 %v2119, %v2107
        %v3020 = vpack.c.b16 %v2120, %v2108
        %v3021 = vpack.c.b16 %v2133, %v2121
        %v3022 = vpack.c.b16 %v2134, %v2122
        %v3023 = vpack.c.b16 %v2135, %v2123
        %v3024 = vpack.c.b16 %v2136, %v2124
        %v3025 = vpack.c.b16 %v2137, %v2125
        %v3026 = vpack.c.b16 %v2138, %v2126
        %v3027 = vpack.c.b16 %v2139, %v2127
        %v3028 = vpack.c.b16 %v2140, %v2128
        %v3029 = vpack.c.b16 %v2141, %v2129
        %v3030 = vpack.c.b16 %v2142, %v2130
        %v3031 = vpack.c.b16 %v2143, %v2131
        %v3032 = vpack.c.b16 %v2144, %v2132
        %v3033 = vpack.c.b16 %v2157, %v2145
        %v3034 = vpack.c.b16 %v2158, %v2146
        %v3035 = vpack.c.b16 %v2159, %v2147
        %v3036 = vpack.c.b16 %v2160, %v2148
        %v3037 = vpack.c.b16 %v2161, %v2149
        %v3038 = vpack.c.b16 %v2162, %v2150
        %v3039 = vpack.c.b16 %v2163, %v2151
        %v3040 = vpack.c.b16 %v2164, %v2152
        %v3041 = vpack.c.b16 %v2165, %v2153
        %v3042 = vpack.c.b16 %v2166, %v2154
        %v3043 = vpack.c.b16 %v2167, %v2155
        %v3044 = vpack.c.b16 %v2168, %v2156
        %v3045 = vpack.c.b16 %v2181, %v2169
        %v3046 = vpack.c.b16 %v2182, %v2170
        %v3047 = vpack.c.b16 %v2183, %v2171
        %v3048 = vpack.c.b16 %v2184, %v2172
        %v3049 = vpack.c.b16 %v2185, %v2173
        %v3050 = vpack.c.b16 %v2186, %v2174
        %v3051 = vpack.c.b16 %v2187, %v2175
        %v3052 = vpack.c.b16 %v2188, %v2176
        %v3053 = vpack.c.b16 %v2189, %v2177
        %v3054 = vpack.c.b16 %v2190, %v2178
        %v3055 = vpack.c.b16 %v2191, %v2179
        %v3056 = vpack.c.b16 %v2192, %v2180
        %v3057 = vpack.c.b16 %v2205, %v2193
        %v3058 = vpack.c.b16 %v2206, %v2194
        %v3059 = vpack.c.b16 %v2207, %v2195
        %v3060 = vpack.c.b16 %v2208, %v2196
        %v3061 = vpack.c.b16 %v2209, %v2197
        %v3062 = vpack.c.b16 %v2210, %v2198
        %v3063 = vpack.c.b16 %v2211, %v2199
        %v3064 = vpack.c.b16 %v2212, %v2200
        %v3065 = vpack.c.b16 %v2213, %v2201
        %v3066 = vpack.c.b16 %v2214, %v2202
        %v3067 = vpack.c.b16 %v2215, %v2203
        %v3068 = vpack.c.b16 %v2216, %v2204
        %v3069 = vpack.c.b16 %v2229, %v2217
        %v3070 = vpack.c.b16 %v2230, %v2218
        %v3071 = vpack.c.b16 %v2231, %v2219
        %v3072 = vpack.c.b16 %v2232, %v2220
        %v3073 = vpack.c.b16 %v2233, %v2221
        %v3074 = vpack.c.b16 %v2234, %v2222
        %v3075 = vpack.c.b16 %v2235, %v2223
        %v3076 = vpack.c.b16 %v2236, %v2224
        %v3077 = vpack.c.b16 %v2237, %v2225
        %v3078 = vpack.c.b16 %v2238, %v2226
        %v3079 = vpack.c.b16 %v2239, %v2227
        %v3080 = vpack.c.b16 %v2240, %v2228
        %v3081 = vpack.c.b16 %v2253, %v2241
        %v3082 = vpack.c.b16 %v2254, %v2242
        %v3083 = vpack.c.b16 %v2255, %v2243
        %v3084 = vpack.c.b16 %v2256, %v2244
        %v3085 = vpack.c.b16 %v2257, %v2245
        %v3086 = vpack.c.b16 %v2258, %v2246
        %v3087 = vpack.c.b16 %v2259, %v2247
        %v3088 = vpack.c.b16 %v2260, %v2248
        %v3089 = vpack.c.b16 %v2261, %v2249
        %v3090 = vpack.c.b16 %v2262, %v2250
        %v3091 = vpack.c.b16 %v2263, %v2251
        %v3092 = vpack.c.b16 %v2264, %v2252
        %v3093 = vpack.c.b16 %v2277, %v2265
        %v3094 = vpack.c.b16 %v2278, %v2266
        %v3095 = vpack.c.b16 %v2279, %v2267
        %v3096 = vpack.c.b16 %v2280, %v2268
        %v3097 = vpack.c.b16 %v2281, %v2269
        %v3098 = vpack.c.b16 %v2282, %v2270
        %v3099 = vpack.c.b16 %v2283, %v2271
        %v3100 = vpack.c.b16 %v2284, %v2272
        %v3101 = vpack.c.b16 %v2285, %v2273
        %v3102 = vpack.c.b16 %v2286, %v2274
        %v3103 = vpack.c.b16 %v2287, %v2275
        %v3104 = vpack.c.b16 %v2288, %v2276
        %v3105 = vpack.c.b16 %v2301, %v2289
        %v3106 = vpack.c.b16 %v2302, %v2290
        %v3107 = vpack.c.b16 %v2303, %v2291
        %v3108 = vpack.c.b16 %v2304, %v2292
        %v3109 = vpack.c.b16 %v2305, %v2293
        %v3110 = vpack.c.b16 %v2306, %v2294
        %v3111 = vpack.c.b16 %v2307, %v2295
        %v3112 = vpack.c.b16 %v2308, %v2296
        %v3113 = vpack.c.b16 %v2309, %v2297
        %v3114 = vpack.c.b16 %v2310, %v2298
        %v3115 = vpack.c.b16 %v2311, %v2299
        %v3116 = vpack.c.b16 %v2312, %v2300
        %v3117 = vpack.c.b16 %v2325, %v2313
        %v3118 = vpack.c.b16 %v2326, %v2314
        %v3119 = vpack.c.b16 %v2327, %v2315
        %v3120 = vpack.c.b16 %v2328, %v2316
        %v3121 = vpack.c.b16 %v2329, %v2317
        %v3122 = vpack.c.b16 %v2330, %v2318
        %v3123 = vpack.c.b16 %v2331, %v2319
        %v3124 = vpack.c.b16 %v2332, %v2320
        %v3125 = vpack.c.b16 %v2333, %v2321
        %v3126 = vpack.c.b16 %v2334, %v2322
        %v3127 = vpack.c.b16 %v2335, %v2323
        %v3128 = vpack.c.b16 %v2336, %v2324
        %v3129 = vpack.c.b16 %v2349, %v2337
        %v3130 = vpack.c.b16 %v2350, %v2338
        %v3131 = vpack.c.b16 %v2351, %v2339
        %v3132 = vpack.c.b16 %v2352, %v2340
        %v3133 = vpack.c.b16 %v2353, %v2341
        %v3134 = vpack.c.b16 %v2354, %v2342
        %v3135 = vpack.c.b16 %v2355, %v2343
        %v3136 = vpack.c.b16 %v2356, %v2344
        %v3137 = vpack.c.b16 %v2357, %v2345
        %v3138 = vpack.c.b16 %v2358, %v2346
        %v3139 = vpack.c.b16 %v2359, %v2347
        %v3140 = vpack.c.b16 %v2360, %v2348
        %v3141 = vpack.c.b16 %v2373, %v2361
        %v3142 = vpack.c.b16 %v2374, %v2362
        %v3143 = vpack.c.b16 %v2375, %v2363
        %v3144 = vpack.c.b16 %v2376, %v2364
        %v3145 = vpack.c.b16 %v2377, %v2365
        %v3146 = vpack.c.b16 %v2378, %v2366
        %v3147 = vpack.c.b16 %v2379, %v2367
        %v3148 = vpack.c.b16 %v2380, %v2368
        %v3149 = vpack.c.b16 %v2381, %v2369
        %v3150 = vpack.c.b16 %v2382, %v2370
        %v3151 = vpack.c.b16 %v2383, %v2371
        %v3152 = vpack.c.b16 %v2384, %v2372
        %v3153 = vpack.c.b16 %v2397, %v2385
        %v3154 = vpack.c.b16 %v2398, %v2386
        %v3155 = vpack.c.b16 %v2399, %v2387
        %v3156 = vpack.c.b16 %v2400, %v2388
        %v3157 = vpack.c.b16 %v2401, %v2389
        %v3158 = vpack.c.b16 %v2402, %v2390
        %v3159 = vpack.c.b16 %v2403, %v2391
        %v3160 = vpack.c.b16 %v2404, %v2392
        %v3161 = vpack.c.b16 %v2405, %v2393
        %v3162 = vpack.c.b16 %v2406, %v2394
        %v3163 = vpack.c.b16 %v2407, %v2395
        %v3164 = vpack.c.b16 %v2408, %v2396
        %v3165 = vpack.c.b16 %v2421, %v2409
        %v3166 = vpack.c.b16 %v2422, %v2410
        %v3167 = vpack.c.b16 %v2423, %v2411
        %v3168 = vpack.c.b16 %v2424, %v2412
        %v3169 = vpack.c.b16 %v2425, %v2413
        %v3170 = vpack.c.b16 %v2426, %v2414
        %v3171 = vpack.c.b16 %v2427, %v2415
        %v3172 = vpack.c.b16 %v2428, %v2416
        %v3173 = vpack.c.b16 %v2429, %v2417
        %v3174 = vpack.c.b16 %v2430, %v2418
        %v3175 = vpack.c.b16 %v2431, %v2419
        %v3176 = vpack.c.b16 %v2432, %v2420
        %v3177 = vpack.c.b16 %v2445, %v2433
        %v3178 = vpack.c.b16 %v2446, %v2434
        %v3179 = vpack.c.b16 %v2447, %v2435
        %v3180 = vpack.c.b16 %v2448, %v2436
        %v3181 = vpack.c.b16 %v2449, %v2437
        %v3182 = vpack.c.b16 %v2450, %v2438
        %v3183 = vpack.c.b16 %v2451, %v2439
        %v3184 = vpack.c.b16 %v2452, %v2440
        %v3185 = vpack.c.b16 %v2453, %v2441
        %v3186 = vpack.c.b16 %v2454, %v2442
        %v3187 = vpack.c.b16 %v2455, %v2443
        %v3188 = vpack.c.b16 %v2456, %v2444
        %v3189 = vpack.c.b16 %v2469, %v2457
        %v3190 = vpack.c.b16 %v2470, %v2458
        %v3191 = vpack.c.b16 %v2471, %v2459
        %v3192 = vpack.c.b16 %v2472, %v2460
        %v3193 = vpack.c.b16 %v2473, %v2461
        %v3194 = vpack.c.b16 %v2474, %v2462
        %v3195 = vpack.c.b16 %v2475, %v2463
        %v3196 = vpack.c.b16 %v2476, %v2464
        %v3197 = vpack.c.b16 %v2477, %v2465
        %v3198 = vpack.c.b16 %v2478, %v2466
        %v3199 = vpack.c.b16 %v2479, %v2467
        %v3200 = vpack.c.b16 %v2480, %v2468
        %v3201 = vpack.c.b16 %v2493, %v2481
        %v3202 = vpack.c.b16 %v2494, %v2482
        %v3203 = vpack.c.b16 %v2495, %v2483
        %v3204 = vpack.c.b16 %v2496, %v2484
        %v3205 = vpack.c.b16 %v2497, %v2485
        %v3206 = vpack.c.b16 %v2498, %v2486
        %v3207 = vpack.c.b16 %v2499, %v2487
        %v3208 = vpack.c.b16 %v2500, %v2488
        %v3209 = vpack.c.b16 %v2501, %v2489
        %v3210 = vpack.c.b16 %v2502, %v2490
        %v3211 = vpack.c.b16 %v2503, %v2491
        %v3212 = vpack.c.b16 %v2504, %v2492
        %v3213 = vpack.c.b16 %v2517, %v2505
        %v3214 = vpack.c.b16 %v2518, %v2506
        %v3215 = vpack.c.b16 %v2519, %v2507
        %v3216 = vpack.c.b16 %v2520, %v2508
        %v3217 = vpack.c.b16 %v2521, %v2509
        %v3218 = vpack.c.b16 %v2522, %v2510
        %v3219 = vpack.c.b16 %v2523, %v2511
        %v3220 = vpack.c.b16 %v2524, %v2512
        %v3221 = vpack.c.b16 %v2525, %v2513
        %v3222 = vpack.c.b16 %v2526, %v2514
        %v3223 = vpack.c.b16 %v2527, %v2515
        %v3224 = vpack.c.b16 %v2528, %v2516
        %v3225 = vpack.c.b16 %v2541, %v2529
        %v3226 = vpack.c.b16 %v2542, %v2530
        %v3227 = vpack.c.b16 %v2543, %v2531
        %v3228 = vpack.c.b16 %v2544, %v2532
        %v3229 = vpack.c.b16 %v2545, %v2533
        %v3230 = vpack.c.b16 %v2546, %v2534
        %v3231 = vpack.c.b16 %v2547, %v2535
        %v3232 = vpack.c.b16 %v2548, %v2536
        %v3233 = vpack.c.b16 %v2549, %v2537
        %v3234 = vpack.c.b16 %v2550, %v2538
        %v3235 = vpack.c.b16 %v2551, %v2539
        %v3236 = vpack.c.b16 %v2552, %v2540
        %v3237 = vpack.c.b16 %v2565, %v2553
        %v3238 = vpack.c.b16 %v2566, %v2554
        %v3239 = vpack.c.b16 %v2567, %v2555
        %v3240 = vpack.c.b16 %v2568, %v2556
        %v3241 = vpack.c.b16 %v2569, %v2557
        %v3242 = vpack.c.b16 %v2570, %v2558
        %v3243 = vpack.c.b16 %v2571, %v2559
        %v3244 = vpack.c.b16 %v2572, %v2560
        %v3245 = vpack.c.b16 %v2573, %v2561
        %v3246 = vpack.c.b16 %v2574, %v2562
        %v3247 = vpack.c.b16 %v2575, %v2563
        %v3248 = vpack.c.b16 %v2576, %v2564
        %v3249 = vpack.c.b16 %v2589, %v2577
        %v3250 = vpack.c.b16 %v2590, %v2578
        %v3251 = vpack.c.b16 %v2591, %v2579
        %v3252 = vpack.c.b16 %v2592, %v2580
        %v3253 = vpack.c.b16 %v2593, %v2581
        %v3254 = vpack.c.b16 %v2594, %v2582
        %v3255 = vpack.c.b16 %v2595, %v2583
        %v3256 = vpack.c.b16 %v2596, %v2584
        %v3257 = vpack.c.b16 %v2597, %v2585
        %v3258 = vpack.c.b16 %v2598, %v2586
        %v3259 = vpack.c.b16 %v2599, %v2587
        %v3260 = vpack.c.b16 %v2600, %v2588
        %v3261 = vpack.c.b16 %v2613, %v2601
        %v3262 = vpack.c.b16 %v2614, %v2602
        %v3263 = vpack.c.b16 %v2615, %v2603
        %v3264 = vpack.c.b16 %v2616, %v2604
        %v3265 = vpack.c.b16 %v2617, %v2605
        %v3266 = vpack.c.b16 %v2618, %v2606
        %v3267 = vpack.c.b16 %v2619, %v2607
        %v3268 = vpack.c.b16 %v2620, %v2608
        %v3269 = vpack.c.b16 %v2621, %v2609
        %v3270 = vpack.c.b16 %v2622, %v2610
        %v3271 = vpack.c.b16 %v2623, %v2611
        %v3272 = vpack.c.b16 %v2624, %v2612
        %v3273 = vpack.c.b16 %v2637, %v2625
        %v3274 = vpack.c.b16 %v2638, %v2626
        %v3275 = vpack.c.b16 %v2639, %v2627
        %v3276 = vpack.c.b16 %v2640, %v2628
        %v3277 = vpack.c.b16 %v2641, %v2629
        %v3278 = vpack.c.b16 %v2642, %v2630
        %v3279 = vpack.c.b16 %v2643, %v2631
        %v3280 = vpack.c.b16 %v2644, %v2632
        %v3281 = vpack.c.b16 %v2645, %v2633
        %v3282 = vpack.c.b16 %v2646, %v2634
        %v3283 = vpack.c.b16 %v2647, %v2635
        %v3284 = vpack.c.b16 %v2648, %v2636
        %v3285 = vpack.c.b16 %v2661, %v2649
        %v3286 = vpack.c.b16 %v2662, %v2650
        %v3287 = vpack.c.b16 %v2663, %v2651
        %v3288 = vpack.c.b16 %v2664, %v2652
        %v3289 = vpack.c.b16 %v2665, %v2653
        %v3290 = vpack.c.b16 %v2666, %v2654
        %v3291 = vpack.c.b16 %v2667, %v2655
        %v3292 = vpack.c.b16 %v2668, %v2656
        %v3293 = vpack.c.b16 %v2669, %v2657
        %v3294 = vpack.c.b16 %v2670, %v2658
        %v3295 = vpack.c.b16 %v2671, %v2659
        %v3296 = vpack.c.b16 %v2672, %v2660
        %v3297 = vpack.c.b16 %v2685, %v2673
        %v3298 = vpack.c.b16 %v2686, %v2674
        %v3299 = vpack.c.b16 %v2687, %v2675
        %v3300 = vpack.c.b16 %v2688, %v2676
        %v3301 = vpack.c.b16 %v2689, %v2677
        %v3302 = vpack.c.b16 %v2690, %v2678
        %v3303 = vpack.c.b16 %v2691, %v2679
        %v3304 = vpack.c.b16 %v2692, %v2680
        %v3305 = vpack.c.b16 %v2693, %v2681
        %v3306 = vpack.c.b16 %v2694, %v2682
        %v3307 = vpack.c.b16 %v2695, %v2683
        %v3308 = vpack.c.b16 %v2696, %v2684
        %v3309 = vpack.c.b16 %v2709, %v2697
        %v3310 = vpack.c.b16 %v2710, %v2698
        %v3311 = vpack.c.b16 %v2711, %v2699
        %v3312 = vpack.c.b16 %v2712, %v2700
        %v3313 = vpack.c.b16 %v2713, %v2701
        %v3314 = vpack.c.b16 %v2714, %v2702
        %v3315 = vpack.c.b16 %v2715, %v2703
        %v3316 = vpack.c.b16 %v2716, %v2704
        %v3317 = vpack.c.b16 %v2717, %v2705
        %v3318 = vpack.c.b16 %v2718, %v2706
        %v3319 = vpack.c.b16 %v2719, %v2707
        %v3320 = vpack.c.b16 %v2720, %v2708
        %v3321 = vpack.c.b16 %v2733, %v2721
        %v3322 = vpack.c.b16 %v2734, %v2722
        %v3323 = vpack.c.b16 %v2735, %v2723
        %v3324 = vpack.c.b16 %v2736, %v2724
        %v3325 = vpack.c.b16 %v2737, %v2725
        %v3326 = vpack.c.b16 %v2738, %v2726
        %v3327 = vpack.c.b16 %v2739, %v2727
        %v3328 = vpack.c.b16 %v2740, %v2728
        %v3329 = vpack.c.b16 %v2741, %v2729
        %v3330 = vpack.c.b16 %v2742, %v2730
        %v3331 = vpack.c.b16 %v2743, %v2731
        %v3332 = vpack.c.b16 %v2744, %v2732
        %v3333 = vpack.c.b16 %v2757, %v2745
        %v3334 = vpack.c.b16 %v2758, %v2746
        %v3335 = vpack.c.b16 %v2759, %v2747
        %v3336 = vpack.c.b16 %v2760, %v2748
        %v3337 = vpack.c.b16 %v2761, %v2749
        %v3338 = vpack.c.b16 %v2762, %v2750
        %v3339 = vpack.c.b16 %v2763, %v2751
        %v3340 = vpack.c.b16 %v2764, %v2752
        %v3341 = vpack.c.b16 %v2765, %v2753
        %v3342 = vpack.c.b16 %v2766, %v2754
        %v3343 = vpack.c.b16 %v2767, %v2755
        %v3344 = vpack.c.b16 %v2768, %v2756
        %3921 = vmatprep.subr.bf16.mxu0 %v2770
        %3922 = vmatpush1.bf16.msra.mxu0 %v2769
        %3923 = vmatprep.subr.bf16.mxu0 %v2782
        %3924 = vmatpush1.bf16.msra.mxu0 %v2781
        %3925 = vmatprep.subr.bf16.mxu0 %v2794
        %3926 = vmatpush1.bf16.msra.mxu0 %v2793
        %3927 = vmatprep.subr.bf16.mxu0 %v2806
        %3928 = vmatpush1.bf16.msra.mxu0 %v2805
        %3929 = vmatprep.subr.bf16.mxu0 %v2818
        %3930 = vmatpush1.bf16.msra.mxu0 %v2817
        %3931 = vmatprep.subr.bf16.mxu0 %v2830
        %3932 = vmatpush1.bf16.msra.mxu0 %v2829
        %3933 = vmatprep.subr.bf16.mxu0 %v2842
        %3934 = vmatpush1.bf16.msra.mxu0 %v2841
        %3935 = vmatprep.subr.bf16.mxu0 %v2854
        %3936 = vmatpush1.bf16.msra.mxu0 %v2853
        %3937 = vmatprep.subr.bf16.mxu0 %v2866
        %3938 = vmatpush1.bf16.msra.mxu0 %v2865
        %3939 = vmatprep.subr.bf16.mxu0 %v2878
        %3940 = vmatpush1.bf16.msra.mxu0 %v2877
        %3941 = vmatprep.subr.bf16.mxu0 %v2890
        %3942 = vmatpush1.bf16.msra.mxu0 %v2889
        %3943 = vmatprep.subr.bf16.mxu0 %v2902
        %3944 = vmatpush1.bf16.msra.mxu0 %v2901
        %3945 = vmatprep.subr.bf16.mxu0 %v2914
        %3946 = vmatpush1.bf16.msra.mxu0 %v2913
        %3947 = vmatprep.subr.bf16.mxu0 %v2926
        %3948 = vmatpush1.bf16.msra.mxu0 %v2925
        %3949 = vmatprep.subr.bf16.mxu0 %v2938
        %3950 = vmatpush1.bf16.msra.mxu0 %v2937
        %3951 = vmatprep.subr.bf16.mxu0 %v2950
        %3952 = vmatpush1.bf16.msra.mxu0 %v2949
        %3953 = vmatprep.mubr.bf16.mxu0 %v1030
        %3954 = vmatmul.mubr.bf16.gmra.mrb[0].mxu0 %v1029
        %v3955 = vpop.f32.mrb[0].mxu0
        %v3956 = vadd.f32 %v954, %v3955
        %v3957 = vpop.f32.mrb[0].mxu0
        %v3958 = vadd.f32 %v958, %v3957
        %v3959 = vpop.f32.mrb[0].mxu0
        %v3960 = vadd.f32 %v954, %v3959
        %v3961 = vpop.f32.mrb[0].mxu0
        %v3962 = vadd.f32 %v958, %v3961
        %3963 = vdwg.mxu0
        %3964 = vmatprep.subr.bf16.mxu0 %v2962
        %3965 = vmatpush1.bf16.msra.mxu0 %v2961
        %3966 = vmatprep.subr.bf16.mxu0 %v2974
        %3967 = vmatpush1.bf16.msra.mxu0 %v2973
        %3968 = vmatprep.subr.bf16.mxu0 %v2986
        %3969 = vmatpush1.bf16.msra.mxu0 %v2985
        %3970 = vmatprep.subr.bf16.mxu0 %v2998
        %3971 = vmatpush1.bf16.msra.mxu0 %v2997
        %3972 = vmatprep.subr.bf16.mxu0 %v3010
        %3973 = vmatpush1.bf16.msra.mxu0 %v3009
        %3974 = vmatprep.subr.bf16.mxu0 %v3022
        %3975 = vmatpush1.bf16.msra.mxu0 %v3021
        %3976 = vmatprep.subr.bf16.mxu0 %v3034
        %3977 = vmatpush1.bf16.msra.mxu0 %v3033
        %3978 = vmatprep.subr.bf16.mxu0 %v3046
        %3979 = vmatpush1.bf16.msra.mxu0 %v3045
        %3980 = vmatprep.subr.bf16.mxu0 %v3058
        %3981 = vmatpush1.bf16.msra.mxu0 %v3057
        %3982 = vmatprep.subr.bf16.mxu0 %v3070
        %3983 = vmatpush1.bf16.msra.mxu0 %v3069
        %3984 = vmatprep.subr.bf16.mxu0 %v3082
        %3985 = vmatpush1.bf16.msra.mxu0 %v3081
        %3986 = vmatprep.subr.bf16.mxu0 %v3094
        %3987 = vmatpush1.bf16.msra.mxu0 %v3093
        %3988 = vmatprep.subr.bf16.mxu0 %v3106
        %3989 = vmatpush1.bf16.msra.mxu0 %v3105
        %3990 = vmatprep.subr.bf16.mxu0 %v3118
        %3991 = vmatpush1.bf16.msra.mxu0 %v3117
        %3992 = vmatprep.subr.bf16.mxu0 %v3130
        %3993 = vmatpush1.bf16.msra.mxu0 %v3129
        %3994 = vmatprep.subr.bf16.mxu0 %v3142
        %3995 = vmatpush1.bf16.msra.mxu0 %v3141
        %3996 = vmatprep.mubr.bf16.mxu0 %v1032
        %3997 = vmatmul.mubr.bf16.gmra.mrb[0].mxu0 %v1031
        %v3998 = vpop.f32.mrb[0].mxu0
        %v3999 = vadd.f32 %v3956, %v3998
        %v4000 = vpop.f32.mrb[0].mxu0
        %v4001 = vadd.f32 %v3958, %v4000
        %v4002 = vpop.f32.mrb[0].mxu0
        %v4003 = vadd.f32 %v3960, %v4002
        %v4004 = vpop.f32.mrb[0].mxu0
        %v4005 = vadd.f32 %v3962, %v4004
        %4006 = vdwg.mxu0
        %4007 = vmatprep.subr.bf16.mxu0 %v3154
        %4008 = vmatpush1.bf16.msra.mxu0 %v3153
        %4009 = vmatprep.subr.bf16.mxu0 %v3166
        %4010 = vmatpush1.bf16.msra.mxu0 %v3165
        %4011 = vmatprep.subr.bf16.mxu0 %v3178
        %4012 = vmatpush1.bf16.msra.mxu0 %v3177
        %4013 = vmatprep.subr.bf16.mxu0 %v3190
        %4014 = vmatpush1.bf16.msra.mxu0 %v3189
        %4015 = vmatprep.subr.bf16.mxu0 %v3202
        %4016 = vmatpush1.bf16.msra.mxu0 %v3201
        %4017 = vmatprep.subr.bf16.mxu0 %v3214
        %4018 = vmatpush1.bf16.msra.mxu0 %v3213
        %4019 = vmatprep.subr.bf16.mxu0 %v3226
        %4020 = vmatpush1.bf16.msra.mxu0 %v3225
        %4021 = vmatprep.subr.bf16.mxu0 %v3238
        %4022 = vmatpush1.bf16.msra.mxu0 %v3237
        %4023 = vmatprep.subr.bf16.mxu0 %v3250
        %4024 = vmatpush1.bf16.msra.mxu0 %v3249
        %4025 = vmatprep.subr.bf16.mxu0 %v3262
        %4026 = vmatpush1.bf16.msra.mxu0 %v3261
        %4027 = vmatprep.subr.bf16.mxu0 %v3274
        %4028 = vmatpush1.bf16.msra.mxu0 %v3273
        %4029 = vmatprep.subr.bf16.mxu0 %v3286
        %4030 = vmatpush1.bf16.msra.mxu0 %v3285
        %4031 = vmatprep.subr.bf16.mxu0 %v3298
        %4032 = vmatpush1.bf16.msra.mxu0 %v3297
        %4033 = vmatprep.subr.bf16.mxu0 %v3310
        %4034 = vmatpush1.bf16.msra.mxu0 %v3309
        %4035 = vmatprep.subr.bf16.mxu0 %v3322
        %4036 = vmatpush1.bf16.msra.mxu0 %v3321
        %4037 = vmatprep.subr.bf16.mxu0 %v3334
        %4038 = vmatpush1.bf16.msra.mxu0 %v3333
        %4039 = vmatprep.mubr.bf16.mxu0 %v1034
        %4040 = vmatmul.mubr.bf16.gmra.mrb[0].mxu0 %v1033
        %v4041 = vpop.f32.mrb[0].mxu0
        %v4042 = vadd.f32 %v3999, %v4041
        %v4043 = vpop.f32.mrb[0].mxu0
        %v4044 = vadd.f32 %v4001, %v4043
        %v4045 = vpop.f32.mrb[0].mxu0
        %v4046 = vadd.f32 %v4003, %v4045
        %v4047 = vpop.f32.mrb[0].mxu0
        %v4048 = vadd.f32 %v4005, %v4047
        %4049 = vdwg.mxu0
        %4050 = vmatprep.subr.bf16.mxu0 %v2772
        %4051 = vmatpush1.bf16.msra.mxu0 %v2771
        %4052 = vmatprep.subr.bf16.mxu0 %v2784
        %4053 = vmatpush1.bf16.msra.mxu0 %v2783
        %4054 = vmatprep.subr.bf16.mxu0 %v2796
        %4055 = vmatpush1.bf16.msra.mxu0 %v2795
        %4056 = vmatprep.subr.bf16.mxu0 %v2808
        %4057 = vmatpush1.bf16.msra.mxu0 %v2807
        %4058 = vmatprep.subr.bf16.mxu0 %v2820
        %4059 = vmatpush1.bf16.msra.mxu0 %v2819
        %4060 = vmatprep.subr.bf16.mxu0 %v2832
        %4061 = vmatpush1.bf16.msra.mxu0 %v2831
        %4062 = vmatprep.subr.bf16.mxu0 %v2844
        %4063 = vmatpush1.bf16.msra.mxu0 %v2843
        %4064 = vmatprep.subr.bf16.mxu0 %v2856
        %4065 = vmatpush1.bf16.msra.mxu0 %v2855
        %4066 = vmatprep.subr.bf16.mxu0 %v2868
        %4067 = vmatpush1.bf16.msra.mxu0 %v2867
        %4068 = vmatprep.subr.bf16.mxu0 %v2880
        %4069 = vmatpush1.bf16.msra.mxu0 %v2879
        %4070 = vmatprep.subr.bf16.mxu0 %v2892
        %4071 = vmatpush1.bf16.msra.mxu0 %v2891
        %4072 = vmatprep.subr.bf16.mxu0 %v2904
        %4073 = vmatpush1.bf16.msra.mxu0 %v2903
        %4074 = vmatprep.subr.bf16.mxu0 %v2916
        %4075 = vmatpush1.bf16.msra.mxu0 %v2915
        %4076 = vmatprep.subr.bf16.mxu0 %v2928
        %4077 = vmatpush1.bf16.msra.mxu0 %v2927
        %4078 = vmatprep.subr.bf16.mxu0 %v2940
        %4079 = vmatpush1.bf16.msra.mxu0 %v2939
        %4080 = vmatprep.subr.bf16.mxu0 %v2952
        %4081 = vmatpush1.bf16.msra.mxu0 %v2951
        %4082 = vmatprep.mubr.bf16.mxu0 %v1030
        %4083 = vmatmul.mubr.bf16.gmra.mrb[0].mxu0 %v1029
        %v4084 = vpop.f32.mrb[0].mxu0
        %v4085 = vadd.f32 %v962, %v4084
        %v4086 = vpop.f32.mrb[0].mxu0
        %v4087 = vadd.f32 %v966, %v4086
        %v4088 = vpop.f32.mrb[0].mxu0
        %v4089 = vadd.f32 %v962, %v4088
        %v4090 = vpop.f32.mrb[0].mxu0
        %v4091 = vadd.f32 %v966, %v4090
        %4092 = vdwg.mxu0
        %4093 = vmatprep.subr.bf16.mxu0 %v2964
        %4094 = vmatpush1.bf16.msra.mxu0 %v2963
        %4095 = vmatprep.subr.bf16.mxu0 %v2976
        %4096 = vmatpush1.bf16.msra.mxu0 %v2975
        %4097 = vmatprep.subr.bf16.mxu0 %v2988
        %4098 = vmatpush1.bf16.msra.mxu0 %v2987
        %4099 = vmatprep.subr.bf16.mxu0 %v3000
        %4100 = vmatpush1.bf16.msra.mxu0 %v2999
        %4101 = vmatprep.subr.bf16.mxu0 %v3012
        %4102 = vmatpush1.bf16.msra.mxu0 %v3011
        %4103 = vmatprep.subr.bf16.mxu0 %v3024
        %4104 = vmatpush1.bf16.msra.mxu0 %v3023
        %4105 = vmatprep.subr.bf16.mxu0 %v3036
        %4106 = vmatpush1.bf16.msra.mxu0 %v3035
        %4107 = vmatprep.subr.bf16.mxu0 %v3048
        %4108 = vmatpush1.bf16.msra.mxu0 %v3047
        %4109 = vmatprep.subr.bf16.mxu0 %v3060
        %4110 = vmatpush1.bf16.msra.mxu0 %v3059
        %4111 = vmatprep.subr.bf16.mxu0 %v3072
        %4112 = vmatpush1.bf16.msra.mxu0 %v3071
        %4113 = vmatprep.subr.bf16.mxu0 %v3084
        %4114 = vmatpush1.bf16.msra.mxu0 %v3083
        %4115 = vmatprep.subr.bf16.mxu0 %v3096
        %4116 = vmatpush1.bf16.msra.mxu0 %v3095
        %4117 = vmatprep.subr.bf16.mxu0 %v3108
        %4118 = vmatpush1.bf16.msra.mxu0 %v3107
        %4119 = vmatprep.subr.bf16.mxu0 %v3120
        %4120 = vmatpush1.bf16.msra.mxu0 %v3119
        %4121 = vmatprep.subr.bf16.mxu0 %v3132
        %4122 = vmatpush1.bf16.msra.mxu0 %v3131
        %4123 = vmatprep.subr.bf16.mxu0 %v3144
        %4124 = vmatpush1.bf16.msra.mxu0 %v3143
        %4125 = vmatprep.mubr.bf16.mxu0 %v1032
        %4126 = vmatmul.mubr.bf16.gmra.mrb[0].mxu0 %v1031
        %v4127 = vpop.f32.mrb[0].mxu0
        %v4128 = vadd.f32 %v4085, %v4127
        %v4129 = vpop.f32.mrb[0].mxu0
        %v4130 = vadd.f32 %v4087, %v4129
        %v4131 = vpop.f32.mrb[0].mxu0
        %v4132 = vadd.f32 %v4089, %v4131
        %v4133 = vpop.f32.mrb[0].mxu0
        %v4134 = vadd.f32 %v4091, %v4133
        %4135 = vdwg.mxu0
        %4136 = vmatprep.subr.bf16.mxu0 %v3156
        %4137 = vmatpush1.bf16.msra.mxu0 %v3155
        %4138 = vmatprep.subr.bf16.mxu0 %v3168
        %4139 = vmatpush1.bf16.msra.mxu0 %v3167
        %4140 = vmatprep.subr.bf16.mxu0 %v3180
        %4141 = vmatpush1.bf16.msra.mxu0 %v3179
        %4142 = vmatprep.subr.bf16.mxu0 %v3192
        %4143 = vmatpush1.bf16.msra.mxu0 %v3191
        %4144 = vmatprep.subr.bf16.mxu0 %v3204
        %4145 = vmatpush1.bf16.msra.mxu0 %v3203
        %4146 = vmatprep.subr.bf16.mxu0 %v3216
        %4147 = vmatpush1.bf16.msra.mxu0 %v3215
        %4148 = vmatprep.subr.bf16.mxu0 %v3228
        %4149 = vmatpush1.bf16.msra.mxu0 %v3227
        %4150 = vmatprep.subr.bf16.mxu0 %v3240
        %4151 = vmatpush1.bf16.msra.mxu0 %v3239
        %4152 = vmatprep.subr.bf16.mxu0 %v3252
        %4153 = vmatpush1.bf16.msra.mxu0 %v3251
        %4154 = vmatprep.subr.bf16.mxu0 %v3264
        %4155 = vmatpush1.bf16.msra.mxu0 %v3263
        %4156 = vmatprep.subr.bf16.mxu0 %v3276
        %4157 = vmatpush1.bf16.msra.mxu0 %v3275
        %4158 = vmatprep.subr.bf16.mxu0 %v3288
        %4159 = vmatpush1.bf16.msra.mxu0 %v3287
        %4160 = vmatprep.subr.bf16.mxu0 %v3300
        %4161 = vmatpush1.bf16.msra.mxu0 %v3299
        %4162 = vmatprep.subr.bf16.mxu0 %v3312
        %4163 = vmatpush1.bf16.msra.mxu0 %v3311
        %4164 = vmatprep.subr.bf16.mxu0 %v3324
        %4165 = vmatpush1.bf16.msra.mxu0 %v3323
        %4166 = vmatprep.subr.bf16.mxu0 %v3336
        %4167 = vmatpush1.bf16.msra.mxu0 %v3335
        %4168 = vmatprep.mubr.bf16.mxu0 %v1034
        %4169 = vmatmul.mubr.bf16.gmra.mrb[0].mxu0 %v1033
        %v4170 = vpop.f32.mrb[0].mxu0
        %v4171 = vadd.f32 %v4128, %v4170
        %v4172 = vpop.f32.mrb[0].mxu0
        %v4173 = vadd.f32 %v4130, %v4172
        %v4174 = vpop.f32.mrb[0].mxu0
        %v4175 = vadd.f32 %v4132, %v4174
        %v4176 = vpop.f32.mrb[0].mxu0
        %v4177 = vadd.f32 %v4134, %v4176
        %4178 = vdwg.mxu0
        %4179 = vmatprep.subr.bf16.mxu0 %v2774
        %4180 = vmatpush1.bf16.msra.mxu0 %v2773
        %4181 = vmatprep.subr.bf16.mxu0 %v2786
        %4182 = vmatpush1.bf16.msra.mxu0 %v2785
        %4183 = vmatprep.subr.bf16.mxu0 %v2798
        %4184 = vmatpush1.bf16.msra.mxu0 %v2797
        %4185 = vmatprep.subr.bf16.mxu0 %v2810
        %4186 = vmatpush1.bf16.msra.mxu0 %v2809
        %4187 = vmatprep.subr.bf16.mxu0 %v2822
        %4188 = vmatpush1.bf16.msra.mxu0 %v2821
        %4189 = vmatprep.subr.bf16.mxu0 %v2834
        %4190 = vmatpush1.bf16.msra.mxu0 %v2833
        %4191 = vmatprep.subr.bf16.mxu0 %v2846
        %4192 = vmatpush1.bf16.msra.mxu0 %v2845
        %4193 = vmatprep.subr.bf16.mxu0 %v2858
        %4194 = vmatpush1.bf16.msra.mxu0 %v2857
        %4195 = vmatprep.subr.bf16.mxu0 %v2870
        %4196 = vmatpush1.bf16.msra.mxu0 %v2869
        %4197 = vmatprep.subr.bf16.mxu0 %v2882
        %4198 = vmatpush1.bf16.msra.mxu0 %v2881
        %4199 = vmatprep.subr.bf16.mxu0 %v2894
        %4200 = vmatpush1.bf16.msra.mxu0 %v2893
        %4201 = vmatprep.subr.bf16.mxu0 %v2906
        %4202 = vmatpush1.bf16.msra.mxu0 %v2905
        %4203 = vmatprep.subr.bf16.mxu0 %v2918
        %4204 = vmatpush1.bf16.msra.mxu0 %v2917
        %4205 = vmatprep.subr.bf16.mxu0 %v2930
        %4206 = vmatpush1.bf16.msra.mxu0 %v2929
        %4207 = vmatprep.subr.bf16.mxu0 %v2942
        %4208 = vmatpush1.bf16.msra.mxu0 %v2941
        %4209 = vmatprep.subr.bf16.mxu0 %v2954
        %4210 = vmatpush1.bf16.msra.mxu0 %v2953
        %4211 = vmatprep.mubr.bf16.mxu0 %v1030
        %4212 = vmatmul.mubr.bf16.gmra.mrb[0].mxu0 %v1029
        %v4213 = vpop.f32.mrb[0].mxu0
        %v4214 = vadd.f32 %v970, %v4213
        %v4215 = vpop.f32.mrb[0].mxu0
        %v4216 = vadd.f32 %v974, %v4215
        %v4217 = vpop.f32.mrb[0].mxu0
        %v4218 = vadd.f32 %v970, %v4217
        %v4219 = vpop.f32.mrb[0].mxu0
        %v4220 = vadd.f32 %v974, %v4219
        %4221 = vdwg.mxu0
        %4222 = vmatprep.subr.bf16.mxu0 %v2966
        %4223 = vmatpush1.bf16.msra.mxu0 %v2965
        %4224 = vmatprep.subr.bf16.mxu0 %v2978
        %4225 = vmatpush1.bf16.msra.mxu0 %v2977
        %4226 = vmatprep.subr.bf16.mxu0 %v2990
        %4227 = vmatpush1.bf16.msra.mxu0 %v2989
        %4228 = vmatprep.subr.bf16.mxu0 %v3002
        %4229 = vmatpush1.bf16.msra.mxu0 %v3001
        %4230 = vmatprep.subr.bf16.mxu0 %v3014
        %4231 = vmatpush1.bf16.msra.mxu0 %v3013
        %4232 = vmatprep.subr.bf16.mxu0 %v3026
        %4233 = vmatpush1.bf16.msra.mxu0 %v3025
        %4234 = vmatprep.subr.bf16.mxu0 %v3038
        %4235 = vmatpush1.bf16.msra.mxu0 %v3037
        %4236 = vmatprep.subr.bf16.mxu0 %v3050
        %4237 = vmatpush1.bf16.msra.mxu0 %v3049
        %4238 = vmatprep.subr.bf16.mxu0 %v3062
        %4239 = vmatpush1.bf16.msra.mxu0 %v3061
        %4240 = vmatprep.subr.bf16.mxu0 %v3074
        %4241 = vmatpush1.bf16.msra.mxu0 %v3073
        %4242 = vmatprep.subr.bf16.mxu0 %v3086
        %4243 = vmatpush1.bf16.msra.mxu0 %v3085
        %4244 = vmatprep.subr.bf16.mxu0 %v3098
        %4245 = vmatpush1.bf16.msra.mxu0 %v3097
        %4246 = vmatprep.subr.bf16.mxu0 %v3110
        %4247 = vmatpush1.bf16.msra.mxu0 %v3109
        %4248 = vmatprep.subr.bf16.mxu0 %v3122
        %4249 = vmatpush1.bf16.msra.mxu0 %v3121
        %4250 = vmatprep.subr.bf16.mxu0 %v3134
        %4251 = vmatpush1.bf16.msra.mxu0 %v3133
        %4252 = vmatprep.subr.bf16.mxu0 %v3146
        %4253 = vmatpush1.bf16.msra.mxu0 %v3145
        %4254 = vmatprep.mubr.bf16.mxu0 %v1032
        %4255 = vmatmul.mubr.bf16.gmra.mrb[0].mxu0 %v1031
        %v4256 = vpop.f32.mrb[0].mxu0
        %v4257 = vadd.f32 %v4214, %v4256
        %v4258 = vpop.f32.mrb[0].mxu0
        %v4259 = vadd.f32 %v4216, %v4258
        %v4260 = vpop.f32.mrb[0].mxu0
        %v4261 = vadd.f32 %v4218, %v4260
        %v4262 = vpop.f32.mrb[0].mxu0
        %v4263 = vadd.f32 %v4220, %v4262
        %4264 = vdwg.mxu0
        %4265 = vmatprep.subr.bf16.mxu0 %v3158
        %4266 = vmatpush1.bf16.msra.mxu0 %v3157
        %4267 = vmatprep.subr.bf16.mxu0 %v3170
        %4268 = vmatpush1.bf16.msra.mxu0 %v3169
        %4269 = vmatprep.subr.bf16.mxu0 %v3182
        %4270 = vmatpush1.bf16.msra.mxu0 %v3181
        %4271 = vmatprep.subr.bf16.mxu0 %v3194
        %4272 = vmatpush1.bf16.msra.mxu0 %v3193
        %4273 = vmatprep.subr.bf16.mxu0 %v3206
        %4274 = vmatpush1.bf16.msra.mxu0 %v3205
        %4275 = vmatprep.subr.bf16.mxu0 %v3218
        %4276 = vmatpush1.bf16.msra.mxu0 %v3217
        %4277 = vmatprep.subr.bf16.mxu0 %v3230
        %4278 = vmatpush1.bf16.msra.mxu0 %v3229
        %4279 = vmatprep.subr.bf16.mxu0 %v3242
        %4280 = vmatpush1.bf16.msra.mxu0 %v3241
        %4281 = vmatprep.subr.bf16.mxu0 %v3254
        %4282 = vmatpush1.bf16.msra.mxu0 %v3253
        %4283 = vmatprep.subr.bf16.mxu0 %v3266
        %4284 = vmatpush1.bf16.msra.mxu0 %v3265
        %4285 = vmatprep.subr.bf16.mxu0 %v3278
        %4286 = vmatpush1.bf16.msra.mxu0 %v3277
        %4287 = vmatprep.subr.bf16.mxu0 %v3290
        %4288 = vmatpush1.bf16.msra.mxu0 %v3289
        %4289 = vmatprep.subr.bf16.mxu0 %v3302
        %4290 = vmatpush1.bf16.msra.mxu0 %v3301
        %4291 = vmatprep.subr.bf16.mxu0 %v3314
        %4292 = vmatpush1.bf16.msra.mxu0 %v3313
        %4293 = vmatprep.subr.bf16.mxu0 %v3326
        %4294 = vmatpush1.bf16.msra.mxu0 %v3325
        %4295 = vmatprep.subr.bf16.mxu0 %v3338
        %4296 = vmatpush1.bf16.msra.mxu0 %v3337
        %4297 = vmatprep.mubr.bf16.mxu0 %v1034
        %4298 = vmatmul.mubr.bf16.gmra.mrb[0].mxu0 %v1033
        %v4299 = vpop.f32.mrb[0].mxu0
        %v4300 = vadd.f32 %v4257, %v4299
        %v4301 = vpop.f32.mrb[0].mxu0
        %v4302 = vadd.f32 %v4259, %v4301
        %v4303 = vpop.f32.mrb[0].mxu0
        %v4304 = vadd.f32 %v4261, %v4303
        %v4305 = vpop.f32.mrb[0].mxu0
        %v4306 = vadd.f32 %v4263, %v4305
        %4307 = vdwg.mxu0
        %4308 = vmatprep.subr.bf16.mxu0 %v2776
        %4309 = vmatpush1.bf16.msra.mxu0 %v2775
        %4310 = vmatprep.subr.bf16.mxu0 %v2788
        %4311 = vmatpush1.bf16.msra.mxu0 %v2787
        %4312 = vmatprep.subr.bf16.mxu0 %v2800
        %4313 = vmatpush1.bf16.msra.mxu0 %v2799
        %4314 = vmatprep.subr.bf16.mxu0 %v2812
        %4315 = vmatpush1.bf16.msra.mxu0 %v2811
        %4316 = vmatprep.subr.bf16.mxu0 %v2824
        %4317 = vmatpush1.bf16.msra.mxu0 %v2823
        %4318 = vmatprep.subr.bf16.mxu0 %v2836
        %4319 = vmatpush1.bf16.msra.mxu0 %v2835
        %4320 = vmatprep.subr.bf16.mxu0 %v2848
        %4321 = vmatpush1.bf16.msra.mxu0 %v2847
        %4322 = vmatprep.subr.bf16.mxu0 %v2860
        %4323 = vmatpush1.bf16.msra.mxu0 %v2859
        %4324 = vmatprep.subr.bf16.mxu0 %v2872
        %4325 = vmatpush1.bf16.msra.mxu0 %v2871
        %4326 = vmatprep.subr.bf16.mxu0 %v2884
        %4327 = vmatpush1.bf16.msra.mxu0 %v2883
        %4328 = vmatprep.subr.bf16.mxu0 %v2896
        %4329 = vmatpush1.bf16.msra.mxu0 %v2895
        %4330 = vmatprep.subr.bf16.mxu0 %v2908
        %4331 = vmatpush1.bf16.msra.mxu0 %v2907
        %4332 = vmatprep.subr.bf16.mxu0 %v2920
        %4333 = vmatpush1.bf16.msra.mxu0 %v2919
        %4334 = vmatprep.subr.bf16.mxu0 %v2932
        %4335 = vmatpush1.bf16.msra.mxu0 %v2931
        %4336 = vmatprep.subr.bf16.mxu0 %v2944
        %4337 = vmatpush1.bf16.msra.mxu0 %v2943
        %4338 = vmatprep.subr.bf16.mxu0 %v2956
        %4339 = vmatpush1.bf16.msra.mxu0 %v2955
        %4340 = vmatprep.mubr.bf16.mxu0 %v1030
        %4341 = vmatmul.mubr.bf16.gmra.mrb[0].mxu0 %v1029
        %v4342 = vpop.f32.mrb[0].mxu0
        %v4343 = vadd.f32 %v978, %v4342
        %v4344 = vpop.f32.mrb[0].mxu0
        %v4345 = vadd.f32 %v982, %v4344
        %v4346 = vpop.f32.mrb[0].mxu0
        %v4347 = vadd.f32 %v978, %v4346
        %v4348 = vpop.f32.mrb[0].mxu0
        %v4349 = vadd.f32 %v982, %v4348
        %4350 = vdwg.mxu0
        %4351 = vmatprep.subr.bf16.mxu0 %v2968
        %4352 = vmatpush1.bf16.msra.mxu0 %v2967
        %4353 = vmatprep.subr.bf16.mxu0 %v2980
        %4354 = vmatpush1.bf16.msra.mxu0 %v2979
        %4355 = vmatprep.subr.bf16.mxu0 %v2992
        %4356 = vmatpush1.bf16.msra.mxu0 %v2991
        %4357 = vmatprep.subr.bf16.mxu0 %v3004
        %4358 = vmatpush1.bf16.msra.mxu0 %v3003
        %4359 = vmatprep.subr.bf16.mxu0 %v3016
        %4360 = vmatpush1.bf16.msra.mxu0 %v3015
        %4361 = vmatprep.subr.bf16.mxu0 %v3028
        %4362 = vmatpush1.bf16.msra.mxu0 %v3027
        %4363 = vmatprep.subr.bf16.mxu0 %v3040
        %4364 = vmatpush1.bf16.msra.mxu0 %v3039
        %4365 = vmatprep.subr.bf16.mxu0 %v3052
        %4366 = vmatpush1.bf16.msra.mxu0 %v3051
        %4367 = vmatprep.subr.bf16.mxu0 %v3064
        %4368 = vmatpush1.bf16.msra.mxu0 %v3063
        %4369 = vmatprep.subr.bf16.mxu0 %v3076
        %4370 = vmatpush1.bf16.msra.mxu0 %v3075
        %4371 = vmatprep.subr.bf16.mxu0 %v3088
        %4372 = vmatpush1.bf16.msra.mxu0 %v3087
        %4373 = vmatprep.subr.bf16.mxu0 %v3100
        %4374 = vmatpush1.bf16.msra.mxu0 %v3099
        %4375 = vmatprep.subr.bf16.mxu0 %v3112
        %4376 = vmatpush1.bf16.msra.mxu0 %v3111
        %4377 = vmatprep.subr.bf16.mxu0 %v3124
        %4378 = vmatpush1.bf16.msra.mxu0 %v3123
        %4379 = vmatprep.subr.bf16.mxu0 %v3136
        %4380 = vmatpush1.bf16.msra.mxu0 %v3135
        %4381 = vmatprep.subr.bf16.mxu0 %v3148
        %4382 = vmatpush1.bf16.msra.mxu0 %v3147
        %4383 = vmatprep.mubr.bf16.mxu0 %v1032
        %4384 = vmatmul.mubr.bf16.gmra.mrb[0].mxu0 %v1031
        %v4385 = vpop.f32.mrb[0].mxu0
        %v4386 = vadd.f32 %v4343, %v4385
        %v4387 = vpop.f32.mrb[0].mxu0
        %v4388 = vadd.f32 %v4345, %v4387
        %v4389 = vpop.f32.mrb[0].mxu0
        %v4390 = vadd.f32 %v4347, %v4389
        %v4391 = vpop.f32.mrb[0].mxu0
        %v4392 = vadd.f32 %v4349, %v4391
        %4393 = vdwg.mxu0
        %4394 = vmatprep.subr.bf16.mxu0 %v3160
        %4395 = vmatpush1.bf16.msra.mxu0 %v3159
        %4396 = vmatprep.subr.bf16.mxu0 %v3172
        %4397 = vmatpush1.bf16.msra.mxu0 %v3171
        %4398 = vmatprep.subr.bf16.mxu0 %v3184
        %4399 = vmatpush1.bf16.msra.mxu0 %v3183
        %4400 = vmatprep.subr.bf16.mxu0 %v3196
        %4401 = vmatpush1.bf16.msra.mxu0 %v3195
        %4402 = vmatprep.subr.bf16.mxu0 %v3208
        %4403 = vmatpush1.bf16.msra.mxu0 %v3207
        %4404 = vmatprep.subr.bf16.mxu0 %v3220
        %4405 = vmatpush1.bf16.msra.mxu0 %v3219
        %4406 = vmatprep.subr.bf16.mxu0 %v3232
        %4407 = vmatpush1.bf16.msra.mxu0 %v3231
        %4408 = vmatprep.subr.bf16.mxu0 %v3244
        %4409 = vmatpush1.bf16.msra.mxu0 %v3243
        %4410 = vmatprep.subr.bf16.mxu0 %v3256
        %4411 = vmatpush1.bf16.msra.mxu0 %v3255
        %4412 = vmatprep.subr.bf16.mxu0 %v3268
        %4413 = vmatpush1.bf16.msra.mxu0 %v3267
        %4414 = vmatprep.subr.bf16.mxu0 %v3280
        %4415 = vmatpush1.bf16.msra.mxu0 %v3279
        %4416 = vmatprep.subr.bf16.mxu0 %v3292
        %4417 = vmatpush1.bf16.msra.mxu0 %v3291
        %4418 = vmatprep.subr.bf16.mxu0 %v3304
        %4419 = vmatpush1.bf16.msra.mxu0 %v3303
        %4420 = vmatprep.subr.bf16.mxu0 %v3316
        %4421 = vmatpush1.bf16.msra.mxu0 %v3315
        %4422 = vmatprep.subr.bf16.mxu0 %v3328
        %4423 = vmatpush1.bf16.msra.mxu0 %v3327
        %4424 = vmatprep.subr.bf16.mxu0 %v3340
        %4425 = vmatpush1.bf16.msra.mxu0 %v3339
        %4426 = vmatprep.mubr.bf16.mxu0 %v1034
        %4427 = vmatmul.mubr.bf16.gmra.mrb[0].mxu0 %v1033
        %v4428 = vpop.f32.mrb[0].mxu0
        %v4429 = vadd.f32 %v4386, %v4428
        %v4430 = vpop.f32.mrb[0].mxu0
        %v4431 = vadd.f32 %v4388, %v4430
        %v4432 = vpop.f32.mrb[0].mxu0
        %v4433 = vadd.f32 %v4390, %v4432
        %v4434 = vpop.f32.mrb[0].mxu0
        %v4435 = vadd.f32 %v4392, %v4434
        %4436 = vdwg.mxu0
        %4437 = vmatprep.subr.bf16.mxu0 %v2778
        %4438 = vmatpush1.bf16.msra.mxu0 %v2777
        %4439 = vmatprep.subr.bf16.mxu0 %v2790
        %4440 = vmatpush1.bf16.msra.mxu0 %v2789
        %4441 = vmatprep.subr.bf16.mxu0 %v2802
        %4442 = vmatpush1.bf16.msra.mxu0 %v2801
        %4443 = vmatprep.subr.bf16.mxu0 %v2814
        %4444 = vmatpush1.bf16.msra.mxu0 %v2813
        %4445 = vmatprep.subr.bf16.mxu0 %v2826
        %4446 = vmatpush1.bf16.msra.mxu0 %v2825
        %4447 = vmatprep.subr.bf16.mxu0 %v2838
        %4448 = vmatpush1.bf16.msra.mxu0 %v2837
        %4449 = vmatprep.subr.bf16.mxu0 %v2850
        %4450 = vmatpush1.bf16.msra.mxu0 %v2849
        %4451 = vmatprep.subr.bf16.mxu0 %v2862
        %4452 = vmatpush1.bf16.msra.mxu0 %v2861
        %4453 = vmatprep.subr.bf16.mxu0 %v2874
        %4454 = vmatpush1.bf16.msra.mxu0 %v2873
        %4455 = vmatprep.subr.bf16.mxu0 %v2886
        %4456 = vmatpush1.bf16.msra.mxu0 %v2885
        %4457 = vmatprep.subr.bf16.mxu0 %v2898
        %4458 = vmatpush1.bf16.msra.mxu0 %v2897
        %4459 = vmatprep.subr.bf16.mxu0 %v2910
        %4460 = vmatpush1.bf16.msra.mxu0 %v2909
        %4461 = vmatprep.subr.bf16.mxu0 %v2922
        %4462 = vmatpush1.bf16.msra.mxu0 %v2921
        %4463 = vmatprep.subr.bf16.mxu0 %v2934
        %4464 = vmatpush1.bf16.msra.mxu0 %v2933
        %4465 = vmatprep.subr.bf16.mxu0 %v2946
        %4466 = vmatpush1.bf16.msra.mxu0 %v2945
        %4467 = vmatprep.subr.bf16.mxu0 %v2958
        %4468 = vmatpush1.bf16.msra.mxu0 %v2957
        %4469 = vmatprep.mubr.bf16.mxu0 %v1030
        %4470 = vmatmul.mubr.bf16.gmra.mrb[0].mxu0 %v1029
        %v4471 = vpop.f32.mrb[0].mxu0
        %v4472 = vadd.f32 %v986, %v4471
        %v4473 = vpop.f32.mrb[0].mxu0
        %v4474 = vadd.f32 %v990, %v4473
        %v4475 = vpop.f32.mrb[0].mxu0
        %v4476 = vadd.f32 %v986, %v4475
        %v4477 = vpop.f32.mrb[0].mxu0
        %v4478 = vadd.f32 %v990, %v4477
        %4479 = vdwg.mxu0
        %4480 = vmatprep.subr.bf16.mxu0 %v2970
        %4481 = vmatpush1.bf16.msra.mxu0 %v2969
        %4482 = vmatprep.subr.bf16.mxu0 %v2982
        %4483 = vmatpush1.bf16.msra.mxu0 %v2981
        %4484 = vmatprep.subr.bf16.mxu0 %v2994
        %4485 = vmatpush1.bf16.msra.mxu0 %v2993
        %4486 = vmatprep.subr.bf16.mxu0 %v3006
        %4487 = vmatpush1.bf16.msra.mxu0 %v3005
        %4488 = vmatprep.subr.bf16.mxu0 %v3018
        %4489 = vmatpush1.bf16.msra.mxu0 %v3017
        %4490 = vmatprep.subr.bf16.mxu0 %v3030
        %4491 = vmatpush1.bf16.msra.mxu0 %v3029
        %4492 = vmatprep.subr.bf16.mxu0 %v3042
        %4493 = vmatpush1.bf16.msra.mxu0 %v3041
        %4494 = vmatprep.subr.bf16.mxu0 %v3054
        %4495 = vmatpush1.bf16.msra.mxu0 %v3053
        %4496 = vmatprep.subr.bf16.mxu0 %v3066
        %4497 = vmatpush1.bf16.msra.mxu0 %v3065
        %4498 = vmatprep.subr.bf16.mxu0 %v3078
        %4499 = vmatpush1.bf16.msra.mxu0 %v3077
        %4500 = vmatprep.subr.bf16.mxu0 %v3090
        %4501 = vmatpush1.bf16.msra.mxu0 %v3089
        %4502 = vmatprep.subr.bf16.mxu0 %v3102
        %4503 = vmatpush1.bf16.msra.mxu0 %v3101
        %4504 = vmatprep.subr.bf16.mxu0 %v3114
        %4505 = vmatpush1.bf16.msra.mxu0 %v3113
        %4506 = vmatprep.subr.bf16.mxu0 %v3126
        %4507 = vmatpush1.bf16.msra.mxu0 %v3125
        %4508 = vmatprep.subr.bf16.mxu0 %v3138
        %4509 = vmatpush1.bf16.msra.mxu0 %v3137
        %4510 = vmatprep.subr.bf16.mxu0 %v3150
        %4511 = vmatpush1.bf16.msra.mxu0 %v3149
        %4512 = vmatprep.mubr.bf16.mxu0 %v1032
        %4513 = vmatmul.mubr.bf16.gmra.mrb[0].mxu0 %v1031
        %v4514 = vpop.f32.mrb[0].mxu0
        %v4515 = vadd.f32 %v4472, %v4514
        %v4516 = vpop.f32.mrb[0].mxu0
        %v4517 = vadd.f32 %v4474, %v4516
        %v4518 = vpop.f32.mrb[0].mxu0
        %v4519 = vadd.f32 %v4476, %v4518
        %v4520 = vpop.f32.mrb[0].mxu0
        %v4521 = vadd.f32 %v4478, %v4520
        %4522 = vdwg.mxu0
        %4523 = vmatprep.subr.bf16.mxu0 %v3162
        %4524 = vmatpush1.bf16.msra.mxu0 %v3161
        %4525 = vmatprep.subr.bf16.mxu0 %v3174
        %4526 = vmatpush1.bf16.msra.mxu0 %v3173
        %4527 = vmatprep.subr.bf16.mxu0 %v3186
        %4528 = vmatpush1.bf16.msra.mxu0 %v3185
        %4529 = vmatprep.subr.bf16.mxu0 %v3198
        %4530 = vmatpush1.bf16.msra.mxu0 %v3197
        %4531 = vmatprep.subr.bf16.mxu0 %v3210
        %4532 = vmatpush1.bf16.msra.mxu0 %v3209
        %4533 = vmatprep.subr.bf16.mxu0 %v3222
        %4534 = vmatpush1.bf16.msra.mxu0 %v3221
        %4535 = vmatprep.subr.bf16.mxu0 %v3234
        %4536 = vmatpush1.bf16.msra.mxu0 %v3233
        %4537 = vmatprep.subr.bf16.mxu0 %v3246
        %4538 = vmatpush1.bf16.msra.mxu0 %v3245
        %4539 = vmatprep.subr.bf16.mxu0 %v3258
        %4540 = vmatpush1.bf16.msra.mxu0 %v3257
        %4541 = vmatprep.subr.bf16.mxu0 %v3270
        %4542 = vmatpush1.bf16.msra.mxu0 %v3269
        %4543 = vmatprep.subr.bf16.mxu0 %v3282
        %4544 = vmatpush1.bf16.msra.mxu0 %v3281
        %4545 = vmatprep.subr.bf16.mxu0 %v3294
        %4546 = vmatpush1.bf16.msra.mxu0 %v3293
        %4547 = vmatprep.subr.bf16.mxu0 %v3306
        %4548 = vmatpush1.bf16.msra.mxu0 %v3305
        %4549 = vmatprep.subr.bf16.mxu0 %v3318
        %4550 = vmatpush1.bf16.msra.mxu0 %v3317
        %4551 = vmatprep.subr.bf16.mxu0 %v3330
        %4552 = vmatpush1.bf16.msra.mxu0 %v3329
        %4553 = vmatprep.subr.bf16.mxu0 %v3342
        %4554 = vmatpush1.bf16.msra.mxu0 %v3341
        %4555 = vmatprep.mubr.bf16.mxu0 %v1034
        %4556 = vmatmul.mubr.bf16.gmra.mrb[0].mxu0 %v1033
        %v4557 = vpop.f32.mrb[0].mxu0
        %v4558 = vadd.f32 %v4515, %v4557
        %v4559 = vpop.f32.mrb[0].mxu0
        %v4560 = vadd.f32 %v4517, %v4559
        %v4561 = vpop.f32.mrb[0].mxu0
        %v4562 = vadd.f32 %v4519, %v4561
        %v4563 = vpop.f32.mrb[0].mxu0
        %v4564 = vadd.f32 %v4521, %v4563
        %4565 = vdwg.mxu0
        %4566 = vmatprep.subr.bf16.mxu0 %v2780
        %4567 = vmatpush1.bf16.msra.mxu0 %v2779
        %4568 = vmatprep.subr.bf16.mxu0 %v2792
        %4569 = vmatpush1.bf16.msra.mxu0 %v2791
        %4570 = vmatprep.subr.bf16.mxu0 %v2804
        %4571 = vmatpush1.bf16.msra.mxu0 %v2803
        %4572 = vmatprep.subr.bf16.mxu0 %v2816
        %4573 = vmatpush1.bf16.msra.mxu0 %v2815
        %4574 = vmatprep.subr.bf16.mxu0 %v2828
        %4575 = vmatpush1.bf16.msra.mxu0 %v2827
        %4576 = vmatprep.subr.bf16.mxu0 %v2840
        %4577 = vmatpush1.bf16.msra.mxu0 %v2839
        %4578 = vmatprep.subr.bf16.mxu0 %v2852
        %4579 = vmatpush1.bf16.msra.mxu0 %v2851
        %4580 = vmatprep.subr.bf16.mxu0 %v2864
        %4581 = vmatpush1.bf16.msra.mxu0 %v2863
        %4582 = vmatprep.subr.bf16.mxu0 %v2876
        %4583 = vmatpush1.bf16.msra.mxu0 %v2875
        %4584 = vmatprep.subr.bf16.mxu0 %v2888
        %4585 = vmatpush1.bf16.msra.mxu0 %v2887
        %4586 = vmatprep.subr.bf16.mxu0 %v2900
        %4587 = vmatpush1.bf16.msra.mxu0 %v2899
        %4588 = vmatprep.subr.bf16.mxu0 %v2912
        %4589 = vmatpush1.bf16.msra.mxu0 %v2911
        %4590 = vmatprep.subr.bf16.mxu0 %v2924
        %4591 = vmatpush1.bf16.msra.mxu0 %v2923
        %4592 = vmatprep.subr.bf16.mxu0 %v2936
        %4593 = vmatpush1.bf16.msra.mxu0 %v2935
        %4594 = vmatprep.subr.bf16.mxu0 %v2948
        %4595 = vmatpush1.bf16.msra.mxu0 %v2947
        %4596 = vmatprep.subr.bf16.mxu0 %v2960
        %4597 = vmatpush1.bf16.msra.mxu0 %v2959
        %4598 = vmatprep.mubr.bf16.mxu0 %v1030
        %4599 = vmatmul.mubr.bf16.gmra.mrb[0].mxu0 %v1029
        %v4600 = vpop.f32.mrb[0].mxu0
        %v4601 = vadd.f32 %v994, %v4600
        %v4602 = vpop.f32.mrb[0].mxu0
        %v4603 = vadd.f32 %v998, %v4602
        %v4604 = vpop.f32.mrb[0].mxu0
        %v4605 = vadd.f32 %v994, %v4604
        %v4606 = vpop.f32.mrb[0].mxu0
        %v4607 = vadd.f32 %v998, %v4606
        %4608 = vdwg.mxu0
        %4609 = vmatprep.subr.bf16.mxu0 %v2972
        %4610 = vmatpush1.bf16.msra.mxu0 %v2971
        %4611 = vmatprep.subr.bf16.mxu0 %v2984
        %4612 = vmatpush1.bf16.msra.mxu0 %v2983
        %4613 = vmatprep.subr.bf16.mxu0 %v2996
        %4614 = vmatpush1.bf16.msra.mxu0 %v2995
        %4615 = vmatprep.subr.bf16.mxu0 %v3008
        %4616 = vmatpush1.bf16.msra.mxu0 %v3007
        %4617 = vmatprep.subr.bf16.mxu0 %v3020
        %4618 = vmatpush1.bf16.msra.mxu0 %v3019
        %4619 = vmatprep.subr.bf16.mxu0 %v3032
        %4620 = vmatpush1.bf16.msra.mxu0 %v3031
        %4621 = vmatprep.subr.bf16.mxu0 %v3044
        %4622 = vmatpush1.bf16.msra.mxu0 %v3043
        %4623 = vmatprep.subr.bf16.mxu0 %v3056
        %4624 = vmatpush1.bf16.msra.mxu0 %v3055
        %4625 = vmatprep.subr.bf16.mxu0 %v3068
        %4626 = vmatpush1.bf16.msra.mxu0 %v3067
        %4627 = vmatprep.subr.bf16.mxu0 %v3080
        %4628 = vmatpush1.bf16.msra.mxu0 %v3079
        %4629 = vmatprep.subr.bf16.mxu0 %v3092
        %4630 = vmatpush1.bf16.msra.mxu0 %v3091
        %4631 = vmatprep.subr.bf16.mxu0 %v3104
        %4632 = vmatpush1.bf16.msra.mxu0 %v3103
        %4633 = vmatprep.subr.bf16.mxu0 %v3116
        %4634 = vmatpush1.bf16.msra.mxu0 %v3115
        %4635 = vmatprep.subr.bf16.mxu0 %v3128
        %4636 = vmatpush1.bf16.msra.mxu0 %v3127
        %4637 = vmatprep.subr.bf16.mxu0 %v3140
        %4638 = vmatpush1.bf16.msra.mxu0 %v3139
        %4639 = vmatprep.subr.bf16.mxu0 %v3152
        %4640 = vmatpush1.bf16.msra.mxu0 %v3151
        %4641 = vmatprep.mubr.bf16.mxu0 %v1032
        %4642 = vmatmul.mubr.bf16.gmra.mrb[0].mxu0 %v1031
        %v4643 = vpop.f32.mrb[0].mxu0
        %v4644 = vadd.f32 %v4601, %v4643
        %v4645 = vpop.f32.mrb[0].mxu0
        %v4646 = vadd.f32 %v4603, %v4645
        %v4647 = vpop.f32.mrb[0].mxu0
        %v4648 = vadd.f32 %v4605, %v4647
        %v4649 = vpop.f32.mrb[0].mxu0
        %v4650 = vadd.f32 %v4607, %v4649
        %4651 = vdwg.mxu0
        %4652 = vmatprep.subr.bf16.mxu0 %v3164
        %4653 = vmatpush1.bf16.msra.mxu0 %v3163
        %4654 = vmatprep.subr.bf16.mxu0 %v3176
        %4655 = vmatpush1.bf16.msra.mxu0 %v3175
        %4656 = vmatprep.subr.bf16.mxu0 %v3188
        %4657 = vmatpush1.bf16.msra.mxu0 %v3187
        %4658 = vmatprep.subr.bf16.mxu0 %v3200
        %4659 = vmatpush1.bf16.msra.mxu0 %v3199
        %4660 = vmatprep.subr.bf16.mxu0 %v3212
        %4661 = vmatpush1.bf16.msra.mxu0 %v3211
        %4662 = vmatprep.subr.bf16.mxu0 %v3224
        %4663 = vmatpush1.bf16.msra.mxu0 %v3223
        %4664 = vmatprep.subr.bf16.mxu0 %v3236
        %4665 = vmatpush1.bf16.msra.mxu0 %v3235
        %4666 = vmatprep.subr.bf16.mxu0 %v3248
        %4667 = vmatpush1.bf16.msra.mxu0 %v3247
        %4668 = vmatprep.subr.bf16.mxu0 %v3260
        %4669 = vmatpush1.bf16.msra.mxu0 %v3259
        %4670 = vmatprep.subr.bf16.mxu0 %v3272
        %4671 = vmatpush1.bf16.msra.mxu0 %v3271
        %4672 = vmatprep.subr.bf16.mxu0 %v3284
        %4673 = vmatpush1.bf16.msra.mxu0 %v3283
        %4674 = vmatprep.subr.bf16.mxu0 %v3296
        %4675 = vmatpush1.bf16.msra.mxu0 %v3295
        %4676 = vmatprep.subr.bf16.mxu0 %v3308
        %4677 = vmatpush1.bf16.msra.mxu0 %v3307
        %4678 = vmatprep.subr.bf16.mxu0 %v3320
        %4679 = vmatpush1.bf16.msra.mxu0 %v3319
        %4680 = vmatprep.subr.bf16.mxu0 %v3332
        %4681 = vmatpush1.bf16.msra.mxu0 %v3331
        %4682 = vmatprep.subr.bf16.mxu0 %v3344
        %4683 = vmatpush1.bf16.msra.mxu0 %v3343
        %4684 = vmatprep.mubr.bf16.mxu0 %v1034
        %4685 = vmatmul.mubr.bf16.gmra.mrb[0].mxu0 %v1033
        %v4686 = vpop.f32.mrb[0].mxu0
        %v4687 = vadd.f32 %v4644, %v4686
        %v4688 = vpop.f32.mrb[0].mxu0
        %v4689 = vadd.f32 %v4646, %v4688
        %v4690 = vpop.f32.mrb[0].mxu0
        %v4691 = vadd.f32 %v4648, %v4690
        %v4692 = vpop.f32.mrb[0].mxu0
        %v4693 = vadd.f32 %v4650, %v4692
        %4694 = vdwg.mxu0
        %v4695 = vmul.f32 %v4042, 0.044715
        %v4696 = vmul.f32 %v4044, 0.044715
        %v4697 = vmul.f32 %v4171, 0.044715
        %v4698 = vmul.f32 %v4173, 0.044715
        %v4699 = vmul.f32 %v4300, 0.044715
        %v4700 = vmul.f32 %v4302, 0.044715
        %v4701 = vmul.f32 %v4429, 0.044715
        %v4702 = vmul.f32 %v4431, 0.044715
        %v4703 = vmul.f32 %v4558, 0.044715
        %v4704 = vmul.f32 %v4560, 0.044715
        %v4705 = vmul.f32 %v4687, 0.044715
        %v4706 = vmul.f32 %v4689, 0.044715
        %v4707 = vmul.f32 %v4046, 0.044715
        %v4708 = vmul.f32 %v4048, 0.044715
        %v4709 = vmul.f32 %v4175, 0.044715
        %v4710 = vmul.f32 %v4177, 0.044715
        %v4711 = vmul.f32 %v4304, 0.044715
        %v4712 = vmul.f32 %v4306, 0.044715
        %v4713 = vmul.f32 %v4433, 0.044715
        %v4714 = vmul.f32 %v4435, 0.044715
        %v4715 = vmul.f32 %v4562, 0.044715
        %v4716 = vmul.f32 %v4564, 0.044715
        %v4717 = vmul.f32 %v4691, 0.044715
        %v4718 = vmul.f32 %v4693, 0.044715
        %v4719 = vmul.f32 %v4695, %v4042
        %v4720 = vmul.f32 %v4696, %v4044
        %v4721 = vmul.f32 %v4697, %v4171
        %v4722 = vmul.f32 %v4698, %v4173
        %v4723 = vmul.f32 %v4699, %v4300
        %v4724 = vmul.f32 %v4700, %v4302
        %v4725 = vmul.f32 %v4701, %v4429
        %v4726 = vmul.f32 %v4702, %v4431
        %v4727 = vmul.f32 %v4703, %v4558
        %v4728 = vmul.f32 %v4704, %v4560
        %v4729 = vmul.f32 %v4705, %v4687
        %v4730 = vmul.f32 %v4706, %v4689
        %v4731 = vmul.f32 %v4707, %v4046
        %v4732 = vmul.f32 %v4708, %v4048
        %v4733 = vmul.f32 %v4709, %v4175
        %v4734 = vmul.f32 %v4710, %v4177
        %v4735 = vmul.f32 %v4711, %v4304
        %v4736 = vmul.f32 %v4712, %v4306
        %v4737 = vmul.f32 %v4713, %v4433
        %v4738 = vmul.f32 %v4714, %v4435
        %v4739 = vmul.f32 %v4715, %v4562
        %v4740 = vmul.f32 %v4716, %v4564
        %v4741 = vmul.f32 %v4717, %v4691
        %v4742 = vmul.f32 %v4718, %v4693
        %v4743 = vmul.f32 %v4719, %v4042
        %v4744 = vmul.f32 %v4720, %v4044
        %v4745 = vmul.f32 %v4721, %v4171
        %v4746 = vmul.f32 %v4722, %v4173
        %v4747 = vmul.f32 %v4723, %v4300
        %v4748 = vmul.f32 %v4724, %v4302
        %v4749 = vmul.f32 %v4725, %v4429
        %v4750 = vmul.f32 %v4726, %v4431
        %v4751 = vmul.f32 %v4727, %v4558
        %v4752 = vmul.f32 %v4728, %v4560
        %v4753 = vmul.f32 %v4729, %v4687
        %v4754 = vmul.f32 %v4730, %v4689
        %v4755 = vmul.f32 %v4731, %v4046
        %v4756 = vmul.f32 %v4732, %v4048
        %v4757 = vmul.f32 %v4733, %v4175
        %v4758 = vmul.f32 %v4734, %v4177
        %v4759 = vmul.f32 %v4735, %v4304
        %v4760 = vmul.f32 %v4736, %v4306
        %v4761 = vmul.f32 %v4737, %v4433
        %v4762 = vmul.f32 %v4738, %v4435
        %v4763 = vmul.f32 %v4739, %v4562
        %v4764 = vmul.f32 %v4740, %v4564
        %v4765 = vmul.f32 %v4741, %v4691
        %v4766 = vmul.f32 %v4742, %v4693
        %v4767 = vadd.f32 %v4042, %v4743
        %v4768 = vadd.f32 %v4044, %v4744
        %v4769 = vadd.f32 %v4171, %v4745
        %v4770 = vadd.f32 %v4173, %v4746
        %v4771 = vadd.f32 %v4300, %v4747
        %v4772 = vadd.f32 %v4302, %v4748
        %v4773 = vadd.f32 %v4429, %v4749
        %v4774 = vadd.f32 %v4431, %v4750
        %v4775 = vadd.f32 %v4558, %v4751
        %v4776 = vadd.f32 %v4560, %v4752
        %v4777 = vadd.f32 %v4687, %v4753
        %v4778 = vadd.f32 %v4689, %v4754
        %v4779 = vadd.f32 %v4046, %v4755
        %v4780 = vadd.f32 %v4048, %v4756
        %v4781 = vadd.f32 %v4175, %v4757
        %v4782 = vadd.f32 %v4177, %v4758
        %v4783 = vadd.f32 %v4304, %v4759
        %v4784 = vadd.f32 %v4306, %v4760
        %v4785 = vadd.f32 %v4433, %v4761
        %v4786 = vadd.f32 %v4435, %v4762
        %v4787 = vadd.f32 %v4562, %v4763
        %v4788 = vadd.f32 %v4564, %v4764
        %v4789 = vadd.f32 %v4691, %v4765
        %v4790 = vadd.f32 %v4693, %v4766
        %v4791 = vmul.f32 %v4767, 0.7978846
        %v4792 = vmul.f32 %v4768, 0.7978846
        %v4793 = vmul.f32 %v4769, 0.7978846
        %v4794 = vmul.f32 %v4770, 0.7978846
        %v4795 = vmul.f32 %v4771, 0.7978846
        %v4796 = vmul.f32 %v4772, 0.7978846
        %v4797 = vmul.f32 %v4773, 0.7978846
        %v4798 = vmul.f32 %v4774, 0.7978846
        %v4799 = vmul.f32 %v4775, 0.7978846
        %v4800 = vmul.f32 %v4776, 0.7978846
        %v4801 = vmul.f32 %v4777, 0.7978846
        %v4802 = vmul.f32 %v4778, 0.7978846
        %v4803 = vmul.f32 %v4779, 0.7978846
        %v4804 = vmul.f32 %v4780, 0.7978846
        %v4805 = vmul.f32 %v4781, 0.7978846
        %v4806 = vmul.f32 %v4782, 0.7978846
        %v4807 = vmul.f32 %v4783, 0.7978846
        %v4808 = vmul.f32 %v4784, 0.7978846
        %v4809 = vmul.f32 %v4785, 0.7978846
        %v4810 = vmul.f32 %v4786, 0.7978846
        %v4811 = vmul.f32 %v4787, 0.7978846
        %v4812 = vmul.f32 %v4788, 0.7978846
        %v4813 = vmul.f32 %v4789, 0.7978846
        %v4814 = vmul.f32 %v4790, 0.7978846
        %v4815 = vmul.f32 %v4042, 0.5
        %v4816 = vmul.f32 %v4044, 0.5
        %v4817 = vmul.f32 %v4171, 0.5
        %v4818 = vmul.f32 %v4173, 0.5
        %v4819 = vmul.f32 %v4300, 0.5
        %v4820 = vmul.f32 %v4302, 0.5
        %v4821 = vmul.f32 %v4429, 0.5
        %v4822 = vmul.f32 %v4431, 0.5
        %v4823 = vmul.f32 %v4558, 0.5
        %v4824 = vmul.f32 %v4560, 0.5
        %v4825 = vmul.f32 %v4687, 0.5
        %v4826 = vmul.f32 %v4689, 0.5
        %v4827 = vmul.f32 %v4046, 0.5
        %v4828 = vmul.f32 %v4048, 0.5
        %v4829 = vmul.f32 %v4175, 0.5
        %v4830 = vmul.f32 %v4177, 0.5
        %v4831 = vmul.f32 %v4304, 0.5
        %v4832 = vmul.f32 %v4306, 0.5
        %v4833 = vmul.f32 %v4433, 0.5
        %v4834 = vmul.f32 %v4435, 0.5
        %v4835 = vmul.f32 %v4562, 0.5
        %v4836 = vmul.f32 %v4564, 0.5
        %v4837 = vmul.f32 %v4691, 0.5
        %v4838 = vmul.f32 %v4693, 0.5
        %v4839 = vtanh.pop %v4791
        %v4840 = vtanh.pop %v4792
        %v4841 = vtanh.pop %v4793
        %v4842 = vtanh.pop %v4794
        %v4843 = vtanh.pop %v4795
        %v4844 = vtanh.pop %v4796
        %v4845 = vtanh.pop %v4797
        %v4846 = vtanh.pop %v4798
        %v4847 = vtanh.pop %v4799
        %v4848 = vtanh.pop %v4800
        %v4849 = vtanh.pop %v4801
        %v4850 = vtanh.pop %v4802
        %v4851 = vtanh.pop %v4803
        %v4852 = vtanh.pop %v4804
        %v4853 = vtanh.pop %v4805
        %v4854 = vtanh.pop %v4806
        %v4855 = vtanh.pop %v4807
        %v4856 = vtanh.pop %v4808
        %v4857 = vtanh.pop %v4809
        %v4858 = vtanh.pop %v4810
        %v4859 = vtanh.pop %v4811
        %v4860 = vtanh.pop %v4812
        %v4861 = vtanh.pop %v4813
        %v4862 = vtanh.pop %v4814
        %v4863 = vadd.f32 %v4839, 1.0
        %v4864 = vadd.f32 %v4840, 1.0
        %v4865 = vadd.f32 %v4841, 1.0
        %v4866 = vadd.f32 %v4842, 1.0
        %v4867 = vadd.f32 %v4843, 1.0
        %v4868 = vadd.f32 %v4844, 1.0
        %v4869 = vadd.f32 %v4845, 1.0
        %v4870 = vadd.f32 %v4846, 1.0
        %v4871 = vadd.f32 %v4847, 1.0
        %v4872 = vadd.f32 %v4848, 1.0
        %v4873 = vadd.f32 %v4849, 1.0
        %v4874 = vadd.f32 %v4850, 1.0
        %v4875 = vadd.f32 %v4851, 1.0
        %v4876 = vadd.f32 %v4852, 1.0
        %v4877 = vadd.f32 %v4853, 1.0
        %v4878 = vadd.f32 %v4854, 1.0
        %v4879 = vadd.f32 %v4855, 1.0
        %v4880 = vadd.f32 %v4856, 1.0
        %v4881 = vadd.f32 %v4857, 1.0
        %v4882 = vadd.f32 %v4858, 1.0
        %v4883 = vadd.f32 %v4859, 1.0
        %v4884 = vadd.f32 %v4860, 1.0
        %v4885 = vadd.f32 %v4861, 1.0
        %v4886 = vadd.f32 %v4862, 1.0
        %v4887 = vmul.f32 %v4815, %v4863
        %v4888 = vmul.f32 %v4816, %v4864
        %v4889 = vmul.f32 %v4817, %v4865
        %v4890 = vmul.f32 %v4818, %v4866
        %v4891 = vmul.f32 %v4819, %v4867
        %v4892 = vmul.f32 %v4820, %v4868
        %v4893 = vmul.f32 %v4821, %v4869
        %v4894 = vmul.f32 %v4822, %v4870
        %v4895 = vmul.f32 %v4823, %v4871
        %v4896 = vmul.f32 %v4824, %v4872
        %v4897 = vmul.f32 %v4825, %v4873
        %v4898 = vmul.f32 %v4826, %v4874
        %v4899 = vmul.f32 %v4827, %v4875
        %v4900 = vmul.f32 %v4828, %v4876
        %v4901 = vmul.f32 %v4829, %v4877
        %v4902 = vmul.f32 %v4830, %v4878
        %v4903 = vmul.f32 %v4831, %v4879
        %v4904 = vmul.f32 %v4832, %v4880
        %v4905 = vmul.f32 %v4833, %v4881
        %v4906 = vmul.f32 %v4834, %v4882
        %v4907 = vmul.f32 %v4835, %v4883
        %v4908 = vmul.f32 %v4836, %v4884
        %v4909 = vmul.f32 %v4837, %v4885
        %v4910 = vmul.f32 %v4838, %v4886
        %v4911 = vpack.c.bf16 %v4899, %v4887
        %v4912 = vpack.c.bf16 %v4900, %v4888
        %v4913 = vpack.c.bf16 %v4901, %v4889
        %v4914 = vpack.c.bf16 %v4902, %v4890
        %v4915 = vpack.c.bf16 %v4903, %v4891
        %v4916 = vpack.c.bf16 %v4904, %v4892
        %v4917 = vpack.c.bf16 %v4905, %v4893
        %v4918 = vpack.c.bf16 %v4906, %v4894
        %v4919 = vpack.c.bf16 %v4907, %v4895
        %v4920 = vpack.c.bf16 %v4908, %v4896
        %v4921 = vpack.c.bf16 %v4909, %v4897
        %v4922 = vpack.c.bf16 %v4910, %v4898
        %v4923 = vld [vmem:[%s324] sm:$0xff]
        %v4924 = vld [vmem:[%s324 + $0x8] sm:$0xff]
        %v4925 = vld [vmem:[%s324 + $0x10] sm:$0xff]
        %v4926 = vld [vmem:[%s324 + $0x18] sm:$0xff]
        %v4927 = vld [vmem:[%s324 + $0x20] sm:$0xff]
        %v4928 = vld [vmem:[%s324 + $0x28] sm:$0xff]
        %v4929 = vld [vmem:[%s324 + $0x30] sm:$0xff]
        %v4930 = vld [vmem:[%s324 + $0x38] sm:$0xff]
        %v4931 = vld [vmem:[%s324 + $0x40] sm:$0xff]
        %v4932 = vld [vmem:[%s324 + $0x48] sm:$0xff]
        %v4933 = vld [vmem:[%s324 + $0x50] sm:$0xff]
        %v4934 = vld [vmem:[%s324 + $0x58] sm:$0xff]
        %v4935 = vld [vmem:[%s324 + $0x60] sm:$0xff]
        %v4936 = vld [vmem:[%s324 + $0x68] sm:$0xff]
        %v4937 = vld [vmem:[%s324 + $0x70] sm:$0xff]
        %v4938 = vld [vmem:[%s324 + $0x78] sm:$0xff]
        %v4939 = vld [vmem:[%s324 + $0x80] sm:$0xff]
        %v4940 = vld [vmem:[%s324 + $0x88] sm:$0xff]
        %v4941 = vld [vmem:[%s324 + $0x90] sm:$0xff]
        %v4942 = vld [vmem:[%s324 + $0x98] sm:$0xff]
        %v4943 = vld [vmem:[%s324 + $0xa0] sm:$0xff]
        %v4944 = vld [vmem:[%s324 + $0xa8] sm:$0xff]
        %v4945 = vld [vmem:[%s324 + $0xb0] sm:$0xff]
        %v4946 = vld [vmem:[%s324 + $0xb8] sm:$0xff]
        %v4947 = vld [vmem:[%s324 + $0xc0] sm:$0xff]
        %v4948 = vld [vmem:[%s324 + $0xc8] sm:$0xff]
        %v4949 = vld [vmem:[%s324 + $0xd0] sm:$0xff]
        %v4950 = vld [vmem:[%s324 + $0xd8] sm:$0xff]
        %v4951 = vld [vmem:[%s324 + $0xe0] sm:$0xff]
        %v4952 = vld [vmem:[%s324 + $0xe8] sm:$0xff]
        %v4953 = vld [vmem:[%s324 + $0xf0] sm:$0xff]
        %v4954 = vld [vmem:[%s324 + $0xf8] sm:$0xff]
        %v4955 = vld [vmem:[%s324 + $0x100] sm:$0xff]
        %v4956 = vld [vmem:[%s324 + $0x108] sm:$0xff]
        %v4957 = vld [vmem:[%s324 + $0x110] sm:$0xff]
        %v4958 = vld [vmem:[%s324 + $0x118] sm:$0xff]
        %v4959 = vld [vmem:[%s324 + $0x120] sm:$0xff]
        %v4960 = vld [vmem:[%s324 + $0x128] sm:$0xff]
        %v4961 = vld [vmem:[%s324 + $0x130] sm:$0xff]
        %v4962 = vld [vmem:[%s324 + $0x138] sm:$0xff]
        %v4963 = vld [vmem:[%s324 + $0x140] sm:$0xff]
        %v4964 = vld [vmem:[%s324 + $0x148] sm:$0xff]
        %v4965 = vld [vmem:[%s324 + $0x150] sm:$0xff]
        %v4966 = vld [vmem:[%s324 + $0x158] sm:$0xff]
        %v4967 = vld [vmem:[%s324 + $0x160] sm:$0xff]
        %v4968 = vld [vmem:[%s324 + $0x168] sm:$0xff]
        %v4969 = vld [vmem:[%s324 + $0x170] sm:$0xff]
        %v4970 = vld [vmem:[%s324 + $0x178] sm:$0xff]
        %v4971 = vld [vmem:[%s324 + $0x180] sm:$0xff]
        %v4972 = vld [vmem:[%s324 + $0x188] sm:$0xff]
        %v4973 = vld [vmem:[%s324 + $0x190] sm:$0xff]
        %v4974 = vld [vmem:[%s324 + $0x198] sm:$0xff]
        %v4975 = vld [vmem:[%s324 + $0x1a0] sm:$0xff]
        %v4976 = vld [vmem:[%s324 + $0x1a8] sm:$0xff]
        %v4977 = vld [vmem:[%s324 + $0x1b0] sm:$0xff]
        %v4978 = vld [vmem:[%s324 + $0x1b8] sm:$0xff]
        %v4979 = vld [vmem:[%s324 + $0x1c0] sm:$0xff]
        %v4980 = vld [vmem:[%s324 + $0x1c8] sm:$0xff]
        %v4981 = vld [vmem:[%s324 + $0x1d0] sm:$0xff]
        %v4982 = vld [vmem:[%s324 + $0x1d8] sm:$0xff]
        %v4983 = vld [vmem:[%s324 + $0x1e0] sm:$0xff]
        %v4984 = vld [vmem:[%s324 + $0x1e8] sm:$0xff]
        %v4985 = vld [vmem:[%s324 + $0x1f0] sm:$0xff]
        %v4986 = vld [vmem:[%s324 + $0x1f8] sm:$0xff]
        %v4987 = vld [vmem:[%s324 + $0x200] sm:$0xff]
        %v4988 = vld [vmem:[%s324 + $0x208] sm:$0xff]
        %v4989 = vld [vmem:[%s324 + $0x210] sm:$0xff]
        %v4990 = vld [vmem:[%s324 + $0x218] sm:$0xff]
        %v4991 = vld [vmem:[%s324 + $0x220] sm:$0xff]
        %v4992 = vld [vmem:[%s324 + $0x228] sm:$0xff]
        %v4993 = vld [vmem:[%s324 + $0x230] sm:$0xff]
        %v4994 = vld [vmem:[%s324 + $0x238] sm:$0xff]
        %v4995 = vld [vmem:[%s324 + $0x240] sm:$0xff]
        %v4996 = vld [vmem:[%s324 + $0x248] sm:$0xff]
        %v4997 = vld [vmem:[%s324 + $0x250] sm:$0xff]
        %v4998 = vld [vmem:[%s324 + $0x258] sm:$0xff]
        %v4999 = vld [vmem:[%s324 + $0x260] sm:$0xff]
        %v5000 = vld [vmem:[%s324 + $0x268] sm:$0xff]
        %v5001 = vld [vmem:[%s324 + $0x270] sm:$0xff]
        %v5002 = vld [vmem:[%s324 + $0x278] sm:$0xff]
        %v5003 = vld [vmem:[%s324 + $0x280] sm:$0xff]
        %v5004 = vld [vmem:[%s324 + $0x288] sm:$0xff]
        %v5005 = vld [vmem:[%s324 + $0x290] sm:$0xff]
        %v5006 = vld [vmem:[%s324 + $0x298] sm:$0xff]
        %v5007 = vld [vmem:[%s324 + $0x2a0] sm:$0xff]
        %v5008 = vld [vmem:[%s324 + $0x2a8] sm:$0xff]
        %v5009 = vld [vmem:[%s324 + $0x2b0] sm:$0xff]
        %v5010 = vld [vmem:[%s324 + $0x2b8] sm:$0xff]
        %v5011 = vld [vmem:[%s324 + $0x2c0] sm:$0xff]
        %v5012 = vld [vmem:[%s324 + $0x2c8] sm:$0xff]
        %v5013 = vld [vmem:[%s324 + $0x2d0] sm:$0xff]
        %v5014 = vld [vmem:[%s324 + $0x2d8] sm:$0xff]
        %v5015 = vld [vmem:[%s324 + $0x2e0] sm:$0xff]
        %v5016 = vld [vmem:[%s324 + $0x2e8] sm:$0xff]
        %v5017 = vld [vmem:[%s324 + $0x2f0] sm:$0xff]
        %v5018 = vld [vmem:[%s324 + $0x2f8] sm:$0xff]
        %v5019 = vld [vmem:[%s324 + $0x300] sm:$0xff]
        %v5020 = vld [vmem:[%s324 + $0x308] sm:$0xff]
        %v5021 = vld [vmem:[%s324 + $0x310] sm:$0xff]
        %v5022 = vld [vmem:[%s324 + $0x318] sm:$0xff]
        %v5023 = vld [vmem:[%s324 + $0x320] sm:$0xff]
        %v5024 = vld [vmem:[%s324 + $0x328] sm:$0xff]
        %v5025 = vld [vmem:[%s324 + $0x330] sm:$0xff]
        %v5026 = vld [vmem:[%s324 + $0x338] sm:$0xff]
        %v5027 = vld [vmem:[%s324 + $0x340] sm:$0xff]
        %v5028 = vld [vmem:[%s324 + $0x348] sm:$0xff]
        %v5029 = vld [vmem:[%s324 + $0x350] sm:$0xff]
        %v5030 = vld [vmem:[%s324 + $0x358] sm:$0xff]
        %v5031 = vld [vmem:[%s324 + $0x360] sm:$0xff]
        %v5032 = vld [vmem:[%s324 + $0x368] sm:$0xff]
        %v5033 = vld [vmem:[%s324 + $0x370] sm:$0xff]
        %v5034 = vld [vmem:[%s324 + $0x378] sm:$0xff]
        %v5035 = vld [vmem:[%s324 + $0x380] sm:$0xff]
        %v5036 = vld [vmem:[%s324 + $0x388] sm:$0xff]
        %v5037 = vld [vmem:[%s324 + $0x390] sm:$0xff]
        %v5038 = vld [vmem:[%s324 + $0x398] sm:$0xff]
        %v5039 = vld [vmem:[%s324 + $0x3a0] sm:$0xff]
        %v5040 = vld [vmem:[%s324 + $0x3a8] sm:$0xff]
        %v5041 = vld [vmem:[%s324 + $0x3b0] sm:$0xff]
        %v5042 = vld [vmem:[%s324 + $0x3b8] sm:$0xff]
        %v5043 = vld [vmem:[%s324 + $0x3c0] sm:$0xff]
        %v5044 = vld [vmem:[%s324 + $0x3c8] sm:$0xff]
        %v5045 = vld [vmem:[%s324 + $0x3d0] sm:$0xff]
        %v5046 = vld [vmem:[%s324 + $0x3d8] sm:$0xff]
        %v5047 = vld [vmem:[%s324 + $0x3e0] sm:$0xff]
        %v5048 = vld [vmem:[%s324 + $0x3e8] sm:$0xff]
        %v5049 = vld [vmem:[%s324 + $0x3f0] sm:$0xff]
        %v5050 = vld [vmem:[%s324 + $0x3f8] sm:$0xff]
        %v5051 = vld [vmem:[%s324 + $0x400] sm:$0xff]
        %v5052 = vld [vmem:[%s324 + $0x408] sm:$0xff]
        %v5053 = vld [vmem:[%s324 + $0x410] sm:$0xff]
        %v5054 = vld [vmem:[%s324 + $0x418] sm:$0xff]
        %v5055 = vld [vmem:[%s324 + $0x420] sm:$0xff]
        %v5056 = vld [vmem:[%s324 + $0x428] sm:$0xff]
        %v5057 = vld [vmem:[%s324 + $0x430] sm:$0xff]
        %v5058 = vld [vmem:[%s324 + $0x438] sm:$0xff]
        %v5059 = vld [vmem:[%s324 + $0x440] sm:$0xff]
        %v5060 = vld [vmem:[%s324 + $0x448] sm:$0xff]
        %v5061 = vld [vmem:[%s324 + $0x450] sm:$0xff]
        %v5062 = vld [vmem:[%s324 + $0x458] sm:$0xff]
        %v5063 = vld [vmem:[%s324 + $0x460] sm:$0xff]
        %v5064 = vld [vmem:[%s324 + $0x468] sm:$0xff]
        %v5065 = vld [vmem:[%s324 + $0x470] sm:$0xff]
        %v5066 = vld [vmem:[%s324 + $0x478] sm:$0xff]
        %v5067 = vld [vmem:[%s324 + $0x480] sm:$0xff]
        %v5068 = vld [vmem:[%s324 + $0x488] sm:$0xff]
        %v5069 = vld [vmem:[%s324 + $0x490] sm:$0xff]
        %v5070 = vld [vmem:[%s324 + $0x498] sm:$0xff]
        %v5071 = vld [vmem:[%s324 + $0x4a0] sm:$0xff]
        %v5072 = vld [vmem:[%s324 + $0x4a8] sm:$0xff]
        %v5073 = vld [vmem:[%s324 + $0x4b0] sm:$0xff]
        %v5074 = vld [vmem:[%s324 + $0x4b8] sm:$0xff]
        %v5075 = vld [vmem:[%s324 + $0x4c0] sm:$0xff]
        %v5076 = vld [vmem:[%s324 + $0x4c8] sm:$0xff]
        %v5077 = vld [vmem:[%s324 + $0x4d0] sm:$0xff]
        %v5078 = vld [vmem:[%s324 + $0x4d8] sm:$0xff]
        %v5079 = vld [vmem:[%s324 + $0x4e0] sm:$0xff]
        %v5080 = vld [vmem:[%s324 + $0x4e8] sm:$0xff]
        %v5081 = vld [vmem:[%s324 + $0x4f0] sm:$0xff]
        %v5082 = vld [vmem:[%s324 + $0x4f8] sm:$0xff]
        %v5083 = vld [vmem:[%s324 + $0x500] sm:$0xff]
        %v5084 = vld [vmem:[%s324 + $0x508] sm:$0xff]
        %v5085 = vld [vmem:[%s324 + $0x510] sm:$0xff]
        %v5086 = vld [vmem:[%s324 + $0x518] sm:$0xff]
        %v5087 = vld [vmem:[%s324 + $0x520] sm:$0xff]
        %v5088 = vld [vmem:[%s324 + $0x528] sm:$0xff]
        %v5089 = vld [vmem:[%s324 + $0x530] sm:$0xff]
        %v5090 = vld [vmem:[%s324 + $0x538] sm:$0xff]
        %v5091 = vld [vmem:[%s324 + $0x540] sm:$0xff]
        %v5092 = vld [vmem:[%s324 + $0x548] sm:$0xff]
        %v5093 = vld [vmem:[%s324 + $0x550] sm:$0xff]
        %v5094 = vld [vmem:[%s324 + $0x558] sm:$0xff]
        %v5095 = vld [vmem:[%s324 + $0x560] sm:$0xff]
        %v5096 = vld [vmem:[%s324 + $0x568] sm:$0xff]
        %v5097 = vld [vmem:[%s324 + $0x570] sm:$0xff]
        %v5098 = vld [vmem:[%s324 + $0x578] sm:$0xff]
        %v5099 = vld [vmem:[%s324 + $0x580] sm:$0xff]
        %v5100 = vld [vmem:[%s324 + $0x588] sm:$0xff]
        %v5101 = vld [vmem:[%s324 + $0x590] sm:$0xff]
        %v5102 = vld [vmem:[%s324 + $0x598] sm:$0xff]
        %v5103 = vld [vmem:[%s324 + $0x5a0] sm:$0xff]
        %v5104 = vld [vmem:[%s324 + $0x5a8] sm:$0xff]
        %v5105 = vld [vmem:[%s324 + $0x5b0] sm:$0xff]
        %v5106 = vld [vmem:[%s324 + $0x5b8] sm:$0xff]
        %v5107 = vld [vmem:[%s324 + $0x5c0] sm:$0xff]
        %v5108 = vld [vmem:[%s324 + $0x5c8] sm:$0xff]
        %v5109 = vld [vmem:[%s324 + $0x5d0] sm:$0xff]
        %v5110 = vld [vmem:[%s324 + $0x5d8] sm:$0xff]
        %v5111 = vld [vmem:[%s324 + $0x5e0] sm:$0xff]
        %v5112 = vld [vmem:[%s324 + $0x5e8] sm:$0xff]
        %v5113 = vld [vmem:[%s324 + $0x5f0] sm:$0xff]
        %v5114 = vld [vmem:[%s324 + $0x5f8] sm:$0xff]
        %v5115 = vld [vmem:[%s324 + $0x600] sm:$0xff]
        %v5116 = vld [vmem:[%s324 + $0x608] sm:$0xff]
        %v5117 = vld [vmem:[%s324 + $0x610] sm:$0xff]
        %v5118 = vld [vmem:[%s324 + $0x618] sm:$0xff]
        %v5119 = vld [vmem:[%s324 + $0x620] sm:$0xff]
        %v5120 = vld [vmem:[%s324 + $0x628] sm:$0xff]
        %v5121 = vld [vmem:[%s324 + $0x630] sm:$0xff]
        %v5122 = vld [vmem:[%s324 + $0x638] sm:$0xff]
        %v5123 = vld [vmem:[%s324 + $0x640] sm:$0xff]
        %v5124 = vld [vmem:[%s324 + $0x648] sm:$0xff]
        %v5125 = vld [vmem:[%s324 + $0x650] sm:$0xff]
        %v5126 = vld [vmem:[%s324 + $0x658] sm:$0xff]
        %v5127 = vld [vmem:[%s324 + $0x660] sm:$0xff]
        %v5128 = vld [vmem:[%s324 + $0x668] sm:$0xff]
        %v5129 = vld [vmem:[%s324 + $0x670] sm:$0xff]
        %v5130 = vld [vmem:[%s324 + $0x678] sm:$0xff]
        %v5131 = vld [vmem:[%s324 + $0x680] sm:$0xff]
        %v5132 = vld [vmem:[%s324 + $0x688] sm:$0xff]
        %v5133 = vld [vmem:[%s324 + $0x690] sm:$0xff]
        %v5134 = vld [vmem:[%s324 + $0x698] sm:$0xff]
        %v5135 = vld [vmem:[%s324 + $0x6a0] sm:$0xff]
        %v5136 = vld [vmem:[%s324 + $0x6a8] sm:$0xff]
        %v5137 = vld [vmem:[%s324 + $0x6b0] sm:$0xff]
        %v5138 = vld [vmem:[%s324 + $0x6b8] sm:$0xff]
        %v5139 = vld [vmem:[%s324 + $0x6c0] sm:$0xff]
        %v5140 = vld [vmem:[%s324 + $0x6c8] sm:$0xff]
        %v5141 = vld [vmem:[%s324 + $0x6d0] sm:$0xff]
        %v5142 = vld [vmem:[%s324 + $0x6d8] sm:$0xff]
        %v5143 = vld [vmem:[%s324 + $0x6e0] sm:$0xff]
        %v5144 = vld [vmem:[%s324 + $0x6e8] sm:$0xff]
        %v5145 = vld [vmem:[%s324 + $0x6f0] sm:$0xff]
        %v5146 = vld [vmem:[%s324 + $0x6f8] sm:$0xff]
        %v5147 = vld [vmem:[%s324 + $0x700] sm:$0xff]
        %v5148 = vld [vmem:[%s324 + $0x708] sm:$0xff]
        %v5149 = vld [vmem:[%s324 + $0x710] sm:$0xff]
        %v5150 = vld [vmem:[%s324 + $0x718] sm:$0xff]
        %v5151 = vld [vmem:[%s324 + $0x720] sm:$0xff]
        %v5152 = vld [vmem:[%s324 + $0x728] sm:$0xff]
        %v5153 = vld [vmem:[%s324 + $0x730] sm:$0xff]
        %v5154 = vld [vmem:[%s324 + $0x738] sm:$0xff]
        %v5155 = vld [vmem:[%s324 + $0x740] sm:$0xff]
        %v5156 = vld [vmem:[%s324 + $0x748] sm:$0xff]
        %v5157 = vld [vmem:[%s324 + $0x750] sm:$0xff]
        %v5158 = vld [vmem:[%s324 + $0x758] sm:$0xff]
        %v5159 = vld [vmem:[%s324 + $0x760] sm:$0xff]
        %v5160 = vld [vmem:[%s324 + $0x768] sm:$0xff]
        %v5161 = vld [vmem:[%s324 + $0x770] sm:$0xff]
        %v5162 = vld [vmem:[%s324 + $0x778] sm:$0xff]
        %v5163 = vld [vmem:[%s324 + $0x780] sm:$0xff]
        %v5164 = vld [vmem:[%s324 + $0x788] sm:$0xff]
        %v5165 = vld [vmem:[%s324 + $0x790] sm:$0xff]
        %v5166 = vld [vmem:[%s324 + $0x798] sm:$0xff]
        %v5167 = vld [vmem:[%s324 + $0x7a0] sm:$0xff]
        %v5168 = vld [vmem:[%s324 + $0x7a8] sm:$0xff]
        %v5169 = vld [vmem:[%s324 + $0x7b0] sm:$0xff]
        %v5170 = vld [vmem:[%s324 + $0x7b8] sm:$0xff]
        %v5171 = vld [vmem:[%s324 + $0x7c0] sm:$0xff]
        %v5172 = vld [vmem:[%s324 + $0x7c8] sm:$0xff]
        %v5173 = vld [vmem:[%s324 + $0x7d0] sm:$0xff]
        %v5174 = vld [vmem:[%s324 + $0x7d8] sm:$0xff]
        %v5175 = vld [vmem:[%s324 + $0x7e0] sm:$0xff]
        %v5176 = vld [vmem:[%s324 + $0x7e8] sm:$0xff]
        %v5177 = vld [vmem:[%s324 + $0x7f0] sm:$0xff]
        %v5178 = vld [vmem:[%s324 + $0x7f8] sm:$0xff]
        %v5179 = vld [vmem:[%s324 + $0x800] sm:$0xff]
        %v5180 = vld [vmem:[%s324 + $0x808] sm:$0xff]
        %v5181 = vld [vmem:[%s324 + $0x810] sm:$0xff]
        %v5182 = vld [vmem:[%s324 + $0x818] sm:$0xff]
        %v5183 = vld [vmem:[%s324 + $0x820] sm:$0xff]
        %v5184 = vld [vmem:[%s324 + $0x828] sm:$0xff]
        %v5185 = vld [vmem:[%s324 + $0x830] sm:$0xff]
        %v5186 = vld [vmem:[%s324 + $0x838] sm:$0xff]
        %v5187 = vld [vmem:[%s324 + $0x840] sm:$0xff]
        %v5188 = vld [vmem:[%s324 + $0x848] sm:$0xff]
        %v5189 = vld [vmem:[%s324 + $0x850] sm:$0xff]
        %v5190 = vld [vmem:[%s324 + $0x858] sm:$0xff]
        %v5191 = vld [vmem:[%s324 + $0x860] sm:$0xff]
        %v5192 = vld [vmem:[%s324 + $0x868] sm:$0xff]
        %v5193 = vld [vmem:[%s324 + $0x870] sm:$0xff]
        %v5194 = vld [vmem:[%s324 + $0x878] sm:$0xff]
        %v5195 = vld [vmem:[%s324 + $0x880] sm:$0xff]
        %v5196 = vld [vmem:[%s324 + $0x888] sm:$0xff]
        %v5197 = vld [vmem:[%s324 + $0x890] sm:$0xff]
        %v5198 = vld [vmem:[%s324 + $0x898] sm:$0xff]
        %v5199 = vld [vmem:[%s324 + $0x8a0] sm:$0xff]
        %v5200 = vld [vmem:[%s324 + $0x8a8] sm:$0xff]
        %v5201 = vld [vmem:[%s324 + $0x8b0] sm:$0xff]
        %v5202 = vld [vmem:[%s324 + $0x8b8] sm:$0xff]
        %v5203 = vld [vmem:[%s324 + $0x8c0] sm:$0xff]
        %v5204 = vld [vmem:[%s324 + $0x8c8] sm:$0xff]
        %v5205 = vld [vmem:[%s324 + $0x8d0] sm:$0xff]
        %v5206 = vld [vmem:[%s324 + $0x8d8] sm:$0xff]
        %v5207 = vld [vmem:[%s324 + $0x8e0] sm:$0xff]
        %v5208 = vld [vmem:[%s324 + $0x8e8] sm:$0xff]
        %v5209 = vld [vmem:[%s324 + $0x8f0] sm:$0xff]
        %v5210 = vld [vmem:[%s324 + $0x8f8] sm:$0xff]
        %v5211 = vld [vmem:[%s324 + $0x900] sm:$0xff]
        %v5212 = vld [vmem:[%s324 + $0x908] sm:$0xff]
        %v5213 = vld [vmem:[%s324 + $0x910] sm:$0xff]
        %v5214 = vld [vmem:[%s324 + $0x918] sm:$0xff]
        %v5215 = vld [vmem:[%s324 + $0x920] sm:$0xff]
        %v5216 = vld [vmem:[%s324 + $0x928] sm:$0xff]
        %v5217 = vld [vmem:[%s324 + $0x930] sm:$0xff]
        %v5218 = vld [vmem:[%s324 + $0x938] sm:$0xff]
        %v5219 = vld [vmem:[%s324 + $0x940] sm:$0xff]
        %v5220 = vld [vmem:[%s324 + $0x948] sm:$0xff]
        %v5221 = vld [vmem:[%s324 + $0x950] sm:$0xff]
        %v5222 = vld [vmem:[%s324 + $0x958] sm:$0xff]
        %v5223 = vld [vmem:[%s324 + $0x960] sm:$0xff]
        %v5224 = vld [vmem:[%s324 + $0x968] sm:$0xff]
        %v5225 = vld [vmem:[%s324 + $0x970] sm:$0xff]
        %v5226 = vld [vmem:[%s324 + $0x978] sm:$0xff]
        %v5227 = vld [vmem:[%s324 + $0x980] sm:$0xff]
        %v5228 = vld [vmem:[%s324 + $0x988] sm:$0xff]
        %v5229 = vld [vmem:[%s324 + $0x990] sm:$0xff]
        %v5230 = vld [vmem:[%s324 + $0x998] sm:$0xff]
        %v5231 = vld [vmem:[%s324 + $0x9a0] sm:$0xff]
        %v5232 = vld [vmem:[%s324 + $0x9a8] sm:$0xff]
        %v5233 = vld [vmem:[%s324 + $0x9b0] sm:$0xff]
        %v5234 = vld [vmem:[%s324 + $0x9b8] sm:$0xff]
        %v5235 = vld [vmem:[%s324 + $0x9c0] sm:$0xff]
        %v5236 = vld [vmem:[%s324 + $0x9c8] sm:$0xff]
        %v5237 = vld [vmem:[%s324 + $0x9d0] sm:$0xff]
        %v5238 = vld [vmem:[%s324 + $0x9d8] sm:$0xff]
        %v5239 = vld [vmem:[%s324 + $0x9e0] sm:$0xff]
        %v5240 = vld [vmem:[%s324 + $0x9e8] sm:$0xff]
        %v5241 = vld [vmem:[%s324 + $0x9f0] sm:$0xff]
        %v5242 = vld [vmem:[%s324 + $0x9f8] sm:$0xff]
        %v5243 = vld [vmem:[%s324 + $0xa00] sm:$0xff]
        %v5244 = vld [vmem:[%s324 + $0xa08] sm:$0xff]
        %v5245 = vld [vmem:[%s324 + $0xa10] sm:$0xff]
        %v5246 = vld [vmem:[%s324 + $0xa18] sm:$0xff]
        %v5247 = vld [vmem:[%s324 + $0xa20] sm:$0xff]
        %v5248 = vld [vmem:[%s324 + $0xa28] sm:$0xff]
        %v5249 = vld [vmem:[%s324 + $0xa30] sm:$0xff]
        %v5250 = vld [vmem:[%s324 + $0xa38] sm:$0xff]
        %v5251 = vld [vmem:[%s324 + $0xa40] sm:$0xff]
        %v5252 = vld [vmem:[%s324 + $0xa48] sm:$0xff]
        %v5253 = vld [vmem:[%s324 + $0xa50] sm:$0xff]
        %v5254 = vld [vmem:[%s324 + $0xa58] sm:$0xff]
        %v5255 = vld [vmem:[%s324 + $0xa60] sm:$0xff]
        %v5256 = vld [vmem:[%s324 + $0xa68] sm:$0xff]
        %v5257 = vld [vmem:[%s324 + $0xa70] sm:$0xff]
        %v5258 = vld [vmem:[%s324 + $0xa78] sm:$0xff]
        %v5259 = vld [vmem:[%s324 + $0xa80] sm:$0xff]
        %v5260 = vld [vmem:[%s324 + $0xa88] sm:$0xff]
        %v5261 = vld [vmem:[%s324 + $0xa90] sm:$0xff]
        %v5262 = vld [vmem:[%s324 + $0xa98] sm:$0xff]
        %v5263 = vld [vmem:[%s324 + $0xaa0] sm:$0xff]
        %v5264 = vld [vmem:[%s324 + $0xaa8] sm:$0xff]
        %v5265 = vld [vmem:[%s324 + $0xab0] sm:$0xff]
        %v5266 = vld [vmem:[%s324 + $0xab8] sm:$0xff]
        %v5267 = vld [vmem:[%s324 + $0xac0] sm:$0xff]
        %v5268 = vld [vmem:[%s324 + $0xac8] sm:$0xff]
        %v5269 = vld [vmem:[%s324 + $0xad0] sm:$0xff]
        %v5270 = vld [vmem:[%s324 + $0xad8] sm:$0xff]
        %v5271 = vld [vmem:[%s324 + $0xae0] sm:$0xff]
        %v5272 = vld [vmem:[%s324 + $0xae8] sm:$0xff]
        %v5273 = vld [vmem:[%s324 + $0xaf0] sm:$0xff]
        %v5274 = vld [vmem:[%s324 + $0xaf8] sm:$0xff]
        %v5275 = vld [vmem:[%s324 + $0xb00] sm:$0xff]
        %v5276 = vld [vmem:[%s324 + $0xb08] sm:$0xff]
        %v5277 = vld [vmem:[%s324 + $0xb10] sm:$0xff]
        %v5278 = vld [vmem:[%s324 + $0xb18] sm:$0xff]
        %v5279 = vld [vmem:[%s324 + $0xb20] sm:$0xff]
        %v5280 = vld [vmem:[%s324 + $0xb28] sm:$0xff]
        %v5281 = vld [vmem:[%s324 + $0xb30] sm:$0xff]
        %v5282 = vld [vmem:[%s324 + $0xb38] sm:$0xff]
        %v5283 = vld [vmem:[%s324 + $0xb40] sm:$0xff]
        %v5284 = vld [vmem:[%s324 + $0xb48] sm:$0xff]
        %v5285 = vld [vmem:[%s324 + $0xb50] sm:$0xff]
        %v5286 = vld [vmem:[%s324 + $0xb58] sm:$0xff]
        %v5287 = vld [vmem:[%s324 + $0xb60] sm:$0xff]
        %v5288 = vld [vmem:[%s324 + $0xb68] sm:$0xff]
        %v5289 = vld [vmem:[%s324 + $0xb70] sm:$0xff]
        %v5290 = vld [vmem:[%s324 + $0xb78] sm:$0xff]
        %v5291 = vld [vmem:[%s324 + $0xb80] sm:$0xff]
        %v5292 = vld [vmem:[%s324 + $0xb88] sm:$0xff]
        %v5293 = vld [vmem:[%s324 + $0xb90] sm:$0xff]
        %v5294 = vld [vmem:[%s324 + $0xb98] sm:$0xff]
        %v5295 = vld [vmem:[%s324 + $0xba0] sm:$0xff]
        %v5296 = vld [vmem:[%s324 + $0xba8] sm:$0xff]
        %v5297 = vld [vmem:[%s324 + $0xbb0] sm:$0xff]
        %v5298 = vld [vmem:[%s324 + $0xbb8] sm:$0xff]
        %v5299 = vld [vmem:[%s324 + $0xbc0] sm:$0xff]
        %v5300 = vld [vmem:[%s324 + $0xbc8] sm:$0xff]
        %v5301 = vld [vmem:[%s324 + $0xbd0] sm:$0xff]
        %v5302 = vld [vmem:[%s324 + $0xbd8] sm:$0xff]
        %v5303 = vld [vmem:[%s324 + $0xbe0] sm:$0xff]
        %v5304 = vld [vmem:[%s324 + $0xbe8] sm:$0xff]
        %v5305 = vld [vmem:[%s324 + $0xbf0] sm:$0xff]
        %v5306 = vld [vmem:[%s324 + $0xbf8] sm:$0xff]
        %v5307 = vld [vmem:[%s324 + $0xc00] sm:$0xff]
        %v5308 = vld [vmem:[%s324 + $0xc08] sm:$0xff]
        %v5309 = vld [vmem:[%s324 + $0xc10] sm:$0xff]
        %v5310 = vld [vmem:[%s324 + $0xc18] sm:$0xff]
        %v5311 = vld [vmem:[%s324 + $0xc20] sm:$0xff]
        %v5312 = vld [vmem:[%s324 + $0xc28] sm:$0xff]
        %v5313 = vld [vmem:[%s324 + $0xc30] sm:$0xff]
        %v5314 = vld [vmem:[%s324 + $0xc38] sm:$0xff]
        %v5315 = vld [vmem:[%s324 + $0xc40] sm:$0xff]
        %v5316 = vld [vmem:[%s324 + $0xc48] sm:$0xff]
        %v5317 = vld [vmem:[%s324 + $0xc50] sm:$0xff]
        %v5318 = vld [vmem:[%s324 + $0xc58] sm:$0xff]
        %v5319 = vld [vmem:[%s324 + $0xc60] sm:$0xff]
        %v5320 = vld [vmem:[%s324 + $0xc68] sm:$0xff]
        %v5321 = vld [vmem:[%s324 + $0xc70] sm:$0xff]
        %v5322 = vld [vmem:[%s324 + $0xc78] sm:$0xff]
        %v5323 = vld [vmem:[%s324 + $0xc80] sm:$0xff]
        %v5324 = vld [vmem:[%s324 + $0xc88] sm:$0xff]
        %v5325 = vld [vmem:[%s324 + $0xc90] sm:$0xff]
        %v5326 = vld [vmem:[%s324 + $0xc98] sm:$0xff]
        %v5327 = vld [vmem:[%s324 + $0xca0] sm:$0xff]
        %v5328 = vld [vmem:[%s324 + $0xca8] sm:$0xff]
        %v5329 = vld [vmem:[%s324 + $0xcb0] sm:$0xff]
        %v5330 = vld [vmem:[%s324 + $0xcb8] sm:$0xff]
        %v5331 = vld [vmem:[%s324 + $0xcc0] sm:$0xff]
        %v5332 = vld [vmem:[%s324 + $0xcc8] sm:$0xff]
        %v5333 = vld [vmem:[%s324 + $0xcd0] sm:$0xff]
        %v5334 = vld [vmem:[%s324 + $0xcd8] sm:$0xff]
        %v5335 = vld [vmem:[%s324 + $0xce0] sm:$0xff]
        %v5336 = vld [vmem:[%s324 + $0xce8] sm:$0xff]
        %v5337 = vld [vmem:[%s324 + $0xcf0] sm:$0xff]
        %v5338 = vld [vmem:[%s324 + $0xcf8] sm:$0xff]
        %v5339 = vld [vmem:[%s324 + $0xd00] sm:$0xff]
        %v5340 = vld [vmem:[%s324 + $0xd08] sm:$0xff]
        %v5341 = vld [vmem:[%s324 + $0xd10] sm:$0xff]
        %v5342 = vld [vmem:[%s324 + $0xd18] sm:$0xff]
        %v5343 = vld [vmem:[%s324 + $0xd20] sm:$0xff]
        %v5344 = vld [vmem:[%s324 + $0xd28] sm:$0xff]
        %v5345 = vld [vmem:[%s324 + $0xd30] sm:$0xff]
        %v5346 = vld [vmem:[%s324 + $0xd38] sm:$0xff]
        %v5347 = vld [vmem:[%s324 + $0xd40] sm:$0xff]
        %v5348 = vld [vmem:[%s324 + $0xd48] sm:$0xff]
        %v5349 = vld [vmem:[%s324 + $0xd50] sm:$0xff]
        %v5350 = vld [vmem:[%s324 + $0xd58] sm:$0xff]
        %v5351 = vld [vmem:[%s324 + $0xd60] sm:$0xff]
        %v5352 = vld [vmem:[%s324 + $0xd68] sm:$0xff]
        %v5353 = vld [vmem:[%s324 + $0xd70] sm:$0xff]
        %v5354 = vld [vmem:[%s324 + $0xd78] sm:$0xff]
        %v5355 = vld [vmem:[%s324 + $0xd80] sm:$0xff]
        %v5356 = vld [vmem:[%s324 + $0xd88] sm:$0xff]
        %v5357 = vld [vmem:[%s324 + $0xd90] sm:$0xff]
        %v5358 = vld [vmem:[%s324 + $0xd98] sm:$0xff]
        %v5359 = vld [vmem:[%s324 + $0xda0] sm:$0xff]
        %v5360 = vld [vmem:[%s324 + $0xda8] sm:$0xff]
        %v5361 = vld [vmem:[%s324 + $0xdb0] sm:$0xff]
        %v5362 = vld [vmem:[%s324 + $0xdb8] sm:$0xff]
        %v5363 = vld [vmem:[%s324 + $0xdc0] sm:$0xff]
        %v5364 = vld [vmem:[%s324 + $0xdc8] sm:$0xff]
        %v5365 = vld [vmem:[%s324 + $0xdd0] sm:$0xff]
        %v5366 = vld [vmem:[%s324 + $0xdd8] sm:$0xff]
        %v5367 = vld [vmem:[%s324 + $0xde0] sm:$0xff]
        %v5368 = vld [vmem:[%s324 + $0xde8] sm:$0xff]
        %v5369 = vld [vmem:[%s324 + $0xdf0] sm:$0xff]
        %v5370 = vld [vmem:[%s324 + $0xdf8] sm:$0xff]
        %v5371 = vld [vmem:[%s324 + $0xe00] sm:$0xff]
        %v5372 = vld [vmem:[%s324 + $0xe08] sm:$0xff]
        %v5373 = vld [vmem:[%s324 + $0xe10] sm:$0xff]
        %v5374 = vld [vmem:[%s324 + $0xe18] sm:$0xff]
        %v5375 = vld [vmem:[%s324 + $0xe20] sm:$0xff]
        %v5376 = vld [vmem:[%s324 + $0xe28] sm:$0xff]
        %v5377 = vld [vmem:[%s324 + $0xe30] sm:$0xff]
        %v5378 = vld [vmem:[%s324 + $0xe38] sm:$0xff]
        %v5379 = vld [vmem:[%s324 + $0xe40] sm:$0xff]
        %v5380 = vld [vmem:[%s324 + $0xe48] sm:$0xff]
        %v5381 = vld [vmem:[%s324 + $0xe50] sm:$0xff]
        %v5382 = vld [vmem:[%s324 + $0xe58] sm:$0xff]
        %v5383 = vld [vmem:[%s324 + $0xe60] sm:$0xff]
        %v5384 = vld [vmem:[%s324 + $0xe68] sm:$0xff]
        %v5385 = vld [vmem:[%s324 + $0xe70] sm:$0xff]
        %v5386 = vld [vmem:[%s324 + $0xe78] sm:$0xff]
        %v5387 = vld [vmem:[%s324 + $0xe80] sm:$0xff]
        %v5388 = vld [vmem:[%s324 + $0xe88] sm:$0xff]
        %v5389 = vld [vmem:[%s324 + $0xe90] sm:$0xff]
        %v5390 = vld [vmem:[%s324 + $0xe98] sm:$0xff]
        %v5391 = vld [vmem:[%s324 + $0xea0] sm:$0xff]
        %v5392 = vld [vmem:[%s324 + $0xea8] sm:$0xff]
        %v5393 = vld [vmem:[%s324 + $0xeb0] sm:$0xff]
        %v5394 = vld [vmem:[%s324 + $0xeb8] sm:$0xff]
        %v5395 = vld [vmem:[%s324 + $0xec0] sm:$0xff]
        %v5396 = vld [vmem:[%s324 + $0xec8] sm:$0xff]
        %v5397 = vld [vmem:[%s324 + $0xed0] sm:$0xff]
        %v5398 = vld [vmem:[%s324 + $0xed8] sm:$0xff]
        %v5399 = vld [vmem:[%s324 + $0xee0] sm:$0xff]
        %v5400 = vld [vmem:[%s324 + $0xee8] sm:$0xff]
        %v5401 = vld [vmem:[%s324 + $0xef0] sm:$0xff]
        %v5402 = vld [vmem:[%s324 + $0xef8] sm:$0xff]
        %v5403 = vld [vmem:[%s324 + $0xf00] sm:$0xff]
        %v5404 = vld [vmem:[%s324 + $0xf08] sm:$0xff]
        %v5405 = vld [vmem:[%s324 + $0xf10] sm:$0xff]
        %v5406 = vld [vmem:[%s324 + $0xf18] sm:$0xff]
        %v5407 = vld [vmem:[%s324 + $0xf20] sm:$0xff]
        %v5408 = vld [vmem:[%s324 + $0xf28] sm:$0xff]
        %v5409 = vld [vmem:[%s324 + $0xf30] sm:$0xff]
        %v5410 = vld [vmem:[%s324 + $0xf38] sm:$0xff]
        %v5411 = vld [vmem:[%s324 + $0xf40] sm:$0xff]
        %v5412 = vld [vmem:[%s324 + $0xf48] sm:$0xff]
        %v5413 = vld [vmem:[%s324 + $0xf50] sm:$0xff]
        %v5414 = vld [vmem:[%s324 + $0xf58] sm:$0xff]
        %v5415 = vld [vmem:[%s324 + $0xf60] sm:$0xff]
        %v5416 = vld [vmem:[%s324 + $0xf68] sm:$0xff]
        %v5417 = vld [vmem:[%s324 + $0xf70] sm:$0xff]
        %v5418 = vld [vmem:[%s324 + $0xf78] sm:$0xff]
        %v5419 = vld [vmem:[%s324 + $0xf80] sm:$0xff]
        %v5420 = vld [vmem:[%s324 + $0xf88] sm:$0xff]
        %v5421 = vld [vmem:[%s324 + $0xf90] sm:$0xff]
        %v5422 = vld [vmem:[%s324 + $0xf98] sm:$0xff]
        %v5423 = vld [vmem:[%s324 + $0xfa0] sm:$0xff]
        %v5424 = vld [vmem:[%s324 + $0xfa8] sm:$0xff]
        %v5425 = vld [vmem:[%s324 + $0xfb0] sm:$0xff]
        %v5426 = vld [vmem:[%s324 + $0xfb8] sm:$0xff]
        %v5427 = vld [vmem:[%s324 + $0xfc0] sm:$0xff]
        %v5428 = vld [vmem:[%s324 + $0xfc8] sm:$0xff]
        %v5429 = vld [vmem:[%s324 + $0xfd0] sm:$0xff]
        %v5430 = vld [vmem:[%s324 + $0xfd8] sm:$0xff]
        %v5431 = vld [vmem:[%s324 + $0xfe0] sm:$0xff]
        %v5432 = vld [vmem:[%s324 + $0xfe8] sm:$0xff]
        %v5433 = vld [vmem:[%s324 + $0xff0] sm:$0xff]
        %v5434 = vld [vmem:[%s324 + $0xff8] sm:$0xff]
        %v5435 = vld [vmem:[%s324 + $0x1000] sm:$0xff]
        %v5436 = vld [vmem:[%s324 + $0x1008] sm:$0xff]
        %v5437 = vld [vmem:[%s324 + $0x1010] sm:$0xff]
        %v5438 = vld [vmem:[%s324 + $0x1018] sm:$0xff]
        %v5439 = vld [vmem:[%s324 + $0x1020] sm:$0xff]
        %v5440 = vld [vmem:[%s324 + $0x1028] sm:$0xff]
        %v5441 = vld [vmem:[%s324 + $0x1030] sm:$0xff]
        %v5442 = vld [vmem:[%s324 + $0x1038] sm:$0xff]
        %v5443 = vld [vmem:[%s324 + $0x1040] sm:$0xff]
        %v5444 = vld [vmem:[%s324 + $0x1048] sm:$0xff]
        %v5445 = vld [vmem:[%s324 + $0x1050] sm:$0xff]
        %v5446 = vld [vmem:[%s324 + $0x1058] sm:$0xff]
        %v5447 = vld [vmem:[%s324 + $0x1060] sm:$0xff]
        %v5448 = vld [vmem:[%s324 + $0x1068] sm:$0xff]
        %v5449 = vld [vmem:[%s324 + $0x1070] sm:$0xff]
        %v5450 = vld [vmem:[%s324 + $0x1078] sm:$0xff]
        %v5451 = vld [vmem:[%s324 + $0x1080] sm:$0xff]
        %v5452 = vld [vmem:[%s324 + $0x1088] sm:$0xff]
        %v5453 = vld [vmem:[%s324 + $0x1090] sm:$0xff]
        %v5454 = vld [vmem:[%s324 + $0x1098] sm:$0xff]
        %v5455 = vld [vmem:[%s324 + $0x10a0] sm:$0xff]
        %v5456 = vld [vmem:[%s324 + $0x10a8] sm:$0xff]
        %v5457 = vld [vmem:[%s324 + $0x10b0] sm:$0xff]
        %v5458 = vld [vmem:[%s324 + $0x10b8] sm:$0xff]
        %v5459 = vld [vmem:[%s324 + $0x10c0] sm:$0xff]
        %v5460 = vld [vmem:[%s324 + $0x10c8] sm:$0xff]
        %v5461 = vld [vmem:[%s324 + $0x10d0] sm:$0xff]
        %v5462 = vld [vmem:[%s324 + $0x10d8] sm:$0xff]
        %v5463 = vld [vmem:[%s324 + $0x10e0] sm:$0xff]
        %v5464 = vld [vmem:[%s324 + $0x10e8] sm:$0xff]
        %v5465 = vld [vmem:[%s324 + $0x10f0] sm:$0xff]
        %v5466 = vld [vmem:[%s324 + $0x10f8] sm:$0xff]
        %v5467 = vld [vmem:[%s324 + $0x1100] sm:$0xff]
        %v5468 = vld [vmem:[%s324 + $0x1108] sm:$0xff]
        %v5469 = vld [vmem:[%s324 + $0x1110] sm:$0xff]
        %v5470 = vld [vmem:[%s324 + $0x1118] sm:$0xff]
        %v5471 = vld [vmem:[%s324 + $0x1120] sm:$0xff]
        %v5472 = vld [vmem:[%s324 + $0x1128] sm:$0xff]
        %v5473 = vld [vmem:[%s324 + $0x1130] sm:$0xff]
        %v5474 = vld [vmem:[%s324 + $0x1138] sm:$0xff]
        %v5475 = vld [vmem:[%s324 + $0x1140] sm:$0xff]
        %v5476 = vld [vmem:[%s324 + $0x1148] sm:$0xff]
        %v5477 = vld [vmem:[%s324 + $0x1150] sm:$0xff]
        %v5478 = vld [vmem:[%s324 + $0x1158] sm:$0xff]
        %v5479 = vld [vmem:[%s324 + $0x1160] sm:$0xff]
        %v5480 = vld [vmem:[%s324 + $0x1168] sm:$0xff]
        %v5481 = vld [vmem:[%s324 + $0x1170] sm:$0xff]
        %v5482 = vld [vmem:[%s324 + $0x1178] sm:$0xff]
        %v5483 = vld [vmem:[%s324 + $0x1180] sm:$0xff]
        %v5484 = vld [vmem:[%s324 + $0x1188] sm:$0xff]
        %v5485 = vld [vmem:[%s324 + $0x1190] sm:$0xff]
        %v5486 = vld [vmem:[%s324 + $0x1198] sm:$0xff]
        %v5487 = vld [vmem:[%s324 + $0x11a0] sm:$0xff]
        %v5488 = vld [vmem:[%s324 + $0x11a8] sm:$0xff]
        %v5489 = vld [vmem:[%s324 + $0x11b0] sm:$0xff]
        %v5490 = vld [vmem:[%s324 + $0x11b8] sm:$0xff]
        %v5491 = vld [vmem:[%s324 + $0x11c0] sm:$0xff]
        %v5492 = vld [vmem:[%s324 + $0x11c8] sm:$0xff]
        %v5493 = vld [vmem:[%s324 + $0x11d0] sm:$0xff]
        %v5494 = vld [vmem:[%s324 + $0x11d8] sm:$0xff]
        %v5495 = vld [vmem:[%s324 + $0x11e0] sm:$0xff]
        %v5496 = vld [vmem:[%s324 + $0x11e8] sm:$0xff]
        %v5497 = vld [vmem:[%s324 + $0x11f0] sm:$0xff]
        %v5498 = vld [vmem:[%s324 + $0x11f8] sm:$0xff]
        %v6075 = vunpack.c.l.b16 %v4923
        %v6076 = vunpack.c.h.b16 %v4923
        %v6077 = vunpack.c.l.b16 %v4924
        %v6078 = vunpack.c.h.b16 %v4924
        %v6079 = vunpack.c.l.b16 %v4925
        %v6080 = vunpack.c.h.b16 %v4925
        %v6081 = vunpack.c.l.b16 %v4926
        %v6082 = vunpack.c.h.b16 %v4926
        %v6083 = vunpack.c.l.b16 %v4927
        %v6084 = vunpack.c.h.b16 %v4927
        %v6085 = vunpack.c.l.b16 %v4928
        %v6086 = vunpack.c.h.b16 %v4928
        %v6087 = vunpack.c.l.b16 %v4929
        %v6088 = vunpack.c.h.b16 %v4929
        %v6089 = vunpack.c.l.b16 %v4930
        %v6090 = vunpack.c.h.b16 %v4930
        %v6091 = vunpack.c.l.b16 %v4931
        %v6092 = vunpack.c.h.b16 %v4931
        %v6093 = vunpack.c.l.b16 %v4932
        %v6094 = vunpack.c.h.b16 %v4932
        %v6095 = vunpack.c.l.b16 %v4933
        %v6096 = vunpack.c.h.b16 %v4933
        %v6097 = vunpack.c.l.b16 %v4934
        %v6098 = vunpack.c.h.b16 %v4934
        %v6099 = vunpack.c.l.b16 %v4935
        %v6100 = vunpack.c.h.b16 %v4935
        %v6101 = vunpack.c.l.b16 %v4936
        %v6102 = vunpack.c.h.b16 %v4936
        %v6103 = vunpack.c.l.b16 %v4937
        %v6104 = vunpack.c.h.b16 %v4937
        %v6105 = vunpack.c.l.b16 %v4938
        %v6106 = vunpack.c.h.b16 %v4938
        %v6107 = vunpack.c.l.b16 %v4939
        %v6108 = vunpack.c.h.b16 %v4939
        %v6109 = vunpack.c.l.b16 %v4940
        %v6110 = vunpack.c.h.b16 %v4940
        %v6111 = vunpack.c.l.b16 %v4941
        %v6112 = vunpack.c.h.b16 %v4941
        %v6113 = vunpack.c.l.b16 %v4942
        %v6114 = vunpack.c.h.b16 %v4942
        %v6115 = vunpack.c.l.b16 %v4943
        %v6116 = vunpack.c.h.b16 %v4943
        %v6117 = vunpack.c.l.b16 %v4944
        %v6118 = vunpack.c.h.b16 %v4944
        %v6119 = vunpack.c.l.b16 %v4945
        %v6120 = vunpack.c.h.b16 %v4945
        %v6121 = vunpack.c.l.b16 %v4946
        %v6122 = vunpack.c.h.b16 %v4946
        %v6123 = vunpack.c.l.b16 %v4947
        %v6124 = vunpack.c.h.b16 %v4947
        %v6125 = vunpack.c.l.b16 %v4948
        %v6126 = vunpack.c.h.b16 %v4948
        %v6127 = vunpack.c.l.b16 %v4949
        %v6128 = vunpack.c.h.b16 %v4949
        %v6129 = vunpack.c.l.b16 %v4950
        %v6130 = vunpack.c.h.b16 %v4950
        %v6131 = vunpack.c.l.b16 %v4951
        %v6132 = vunpack.c.h.b16 %v4951
        %v6133 = vunpack.c.l.b16 %v4952
        %v6134 = vunpack.c.h.b16 %v4952
        %v6135 = vunpack.c.l.b16 %v4953
        %v6136 = vunpack.c.h.b16 %v4953
        %v6137 = vunpack.c.l.b16 %v4954
        %v6138 = vunpack.c.h.b16 %v4954
        %v6139 = vunpack.c.l.b16 %v4955
        %v6140 = vunpack.c.h.b16 %v4955
        %v6141 = vunpack.c.l.b16 %v4956
        %v6142 = vunpack.c.h.b16 %v4956
        %v6143 = vunpack.c.l.b16 %v4957
        %v6144 = vunpack.c.h.b16 %v4957
        %v6145 = vunpack.c.l.b16 %v4958
        %v6146 = vunpack.c.h.b16 %v4958
        %v6147 = vunpack.c.l.b16 %v4959
        %v6148 = vunpack.c.h.b16 %v4959
        %v6149 = vunpack.c.l.b16 %v4960
        %v6150 = vunpack.c.h.b16 %v4960
        %v6151 = vunpack.c.l.b16 %v4961
        %v6152 = vunpack.c.h.b16 %v4961
        %v6153 = vunpack.c.l.b16 %v4962
        %v6154 = vunpack.c.h.b16 %v4962
        %v6155 = vunpack.c.l.b16 %v4963
        %v6156 = vunpack.c.h.b16 %v4963
        %v6157 = vunpack.c.l.b16 %v4964
        %v6158 = vunpack.c.h.b16 %v4964
        %v6159 = vunpack.c.l.b16 %v4965
        %v6160 = vunpack.c.h.b16 %v4965
        %v6161 = vunpack.c.l.b16 %v4966
        %v6162 = vunpack.c.h.b16 %v4966
        %v6163 = vunpack.c.l.b16 %v4967
        %v6164 = vunpack.c.h.b16 %v4967
        %v6165 = vunpack.c.l.b16 %v4968
        %v6166 = vunpack.c.h.b16 %v4968
        %v6167 = vunpack.c.l.b16 %v4969
        %v6168 = vunpack.c.h.b16 %v4969
        %v6169 = vunpack.c.l.b16 %v4970
        %v6170 = vunpack.c.h.b16 %v4970
        %v6171 = vunpack.c.l.b16 %v4971
        %v6172 = vunpack.c.h.b16 %v4971
        %v6173 = vunpack.c.l.b16 %v4972
        %v6174 = vunpack.c.h.b16 %v4972
        %v6175 = vunpack.c.l.b16 %v4973
        %v6176 = vunpack.c.h.b16 %v4973
        %v6177 = vunpack.c.l.b16 %v4974
        %v6178 = vunpack.c.h.b16 %v4974
        %v6179 = vunpack.c.l.b16 %v4975
        %v6180 = vunpack.c.h.b16 %v4975
        %v6181 = vunpack.c.l.b16 %v4976
        %v6182 = vunpack.c.h.b16 %v4976
        %v6183 = vunpack.c.l.b16 %v4977
        %v6184 = vunpack.c.h.b16 %v4977
        %v6185 = vunpack.c.l.b16 %v4978
        %v6186 = vunpack.c.h.b16 %v4978
        %v6187 = vunpack.c.l.b16 %v4979
        %v6188 = vunpack.c.h.b16 %v4979
        %v6189 = vunpack.c.l.b16 %v4980
        %v6190 = vunpack.c.h.b16 %v4980
        %v6191 = vunpack.c.l.b16 %v4981
        %v6192 = vunpack.c.h.b16 %v4981
        %v6193 = vunpack.c.l.b16 %v4982
        %v6194 = vunpack.c.h.b16 %v4982
        %v6195 = vunpack.c.l.b16 %v4983
        %v6196 = vunpack.c.h.b16 %v4983
        %v6197 = vunpack.c.l.b16 %v4984
        %v6198 = vunpack.c.h.b16 %v4984
        %v6199 = vunpack.c.l.b16 %v4985
        %v6200 = vunpack.c.h.b16 %v4985
        %v6201 = vunpack.c.l.b16 %v4986
        %v6202 = vunpack.c.h.b16 %v4986
        %v6203 = vunpack.c.l.b16 %v4987
        %v6204 = vunpack.c.h.b16 %v4987
        %v6205 = vunpack.c.l.b16 %v4988
        %v6206 = vunpack.c.h.b16 %v4988
        %v6207 = vunpack.c.l.b16 %v4989
        %v6208 = vunpack.c.h.b16 %v4989
        %v6209 = vunpack.c.l.b16 %v4990
        %v6210 = vunpack.c.h.b16 %v4990
        %v6211 = vunpack.c.l.b16 %v4991
        %v6212 = vunpack.c.h.b16 %v4991
        %v6213 = vunpack.c.l.b16 %v4992
        %v6214 = vunpack.c.h.b16 %v4992
        %v6215 = vunpack.c.l.b16 %v4993
        %v6216 = vunpack.c.h.b16 %v4993
        %v6217 = vunpack.c.l.b16 %v4994
        %v6218 = vunpack.c.h.b16 %v4994
        %v6219 = vunpack.c.l.b16 %v4995
        %v6220 = vunpack.c.h.b16 %v4995
        %v6221 = vunpack.c.l.b16 %v4996
        %v6222 = vunpack.c.h.b16 %v4996
        %v6223 = vunpack.c.l.b16 %v4997
        %v6224 = vunpack.c.h.b16 %v4997
        %v6225 = vunpack.c.l.b16 %v4998
        %v6226 = vunpack.c.h.b16 %v4998
        %v6227 = vunpack.c.l.b16 %v4999
        %v6228 = vunpack.c.h.b16 %v4999
        %v6229 = vunpack.c.l.b16 %v5000
        %v6230 = vunpack.c.h.b16 %v5000
        %v6231 = vunpack.c.l.b16 %v5001
        %v6232 = vunpack.c.h.b16 %v5001
        %v6233 = vunpack.c.l.b16 %v5002
        %v6234 = vunpack.c.h.b16 %v5002
        %v6235 = vunpack.c.l.b16 %v5003
        %v6236 = vunpack.c.h.b16 %v5003
        %v6237 = vunpack.c.l.b16 %v5004
        %v6238 = vunpack.c.h.b16 %v5004
        %v6239 = vunpack.c.l.b16 %v5005
        %v6240 = vunpack.c.h.b16 %v5005
        %v6241 = vunpack.c.l.b16 %v5006
        %v6242 = vunpack.c.h.b16 %v5006
        %v6243 = vunpack.c.l.b16 %v5007
        %v6244 = vunpack.c.h.b16 %v5007
        %v6245 = vunpack.c.l.b16 %v5008
        %v6246 = vunpack.c.h.b16 %v5008
        %v6247 = vunpack.c.l.b16 %v5009
        %v6248 = vunpack.c.h.b16 %v5009
        %v6249 = vunpack.c.l.b16 %v5010
        %v6250 = vunpack.c.h.b16 %v5010
        %v6251 = vunpack.c.l.b16 %v5011
        %v6252 = vunpack.c.h.b16 %v5011
        %v6253 = vunpack.c.l.b16 %v5012
        %v6254 = vunpack.c.h.b16 %v5012
        %v6255 = vunpack.c.l.b16 %v5013
        %v6256 = vunpack.c.h.b16 %v5013
        %v6257 = vunpack.c.l.b16 %v5014
        %v6258 = vunpack.c.h.b16 %v5014
        %v6259 = vunpack.c.l.b16 %v5015
        %v6260 = vunpack.c.h.b16 %v5015
        %v6261 = vunpack.c.l.b16 %v5016
        %v6262 = vunpack.c.h.b16 %v5016
        %v6263 = vunpack.c.l.b16 %v5017
        %v6264 = vunpack.c.h.b16 %v5017
        %v6265 = vunpack.c.l.b16 %v5018
        %v6266 = vunpack.c.h.b16 %v5018
        %v6267 = vunpack.c.l.b16 %v5019
        %v6268 = vunpack.c.h.b16 %v5019
        %v6269 = vunpack.c.l.b16 %v5020
        %v6270 = vunpack.c.h.b16 %v5020
        %v6271 = vunpack.c.l.b16 %v5021
        %v6272 = vunpack.c.h.b16 %v5021
        %v6273 = vunpack.c.l.b16 %v5022
        %v6274 = vunpack.c.h.b16 %v5022
        %v6275 = vunpack.c.l.b16 %v5023
        %v6276 = vunpack.c.h.b16 %v5023
        %v6277 = vunpack.c.l.b16 %v5024
        %v6278 = vunpack.c.h.b16 %v5024
        %v6279 = vunpack.c.l.b16 %v5025
        %v6280 = vunpack.c.h.b16 %v5025
        %v6281 = vunpack.c.l.b16 %v5026
        %v6282 = vunpack.c.h.b16 %v5026
        %v6283 = vunpack.c.l.b16 %v5027
        %v6284 = vunpack.c.h.b16 %v5027
        %v6285 = vunpack.c.l.b16 %v5028
        %v6286 = vunpack.c.h.b16 %v5028
        %v6287 = vunpack.c.l.b16 %v5029
        %v6288 = vunpack.c.h.b16 %v5029
        %v6289 = vunpack.c.l.b16 %v5030
        %v6290 = vunpack.c.h.b16 %v5030
        %v6291 = vunpack.c.l.b16 %v5031
        %v6292 = vunpack.c.h.b16 %v5031
        %v6293 = vunpack.c.l.b16 %v5032
        %v6294 = vunpack.c.h.b16 %v5032
        %v6295 = vunpack.c.l.b16 %v5033
        %v6296 = vunpack.c.h.b16 %v5033
        %v6297 = vunpack.c.l.b16 %v5034
        %v6298 = vunpack.c.h.b16 %v5034
        %v6299 = vunpack.c.l.b16 %v5035
        %v6300 = vunpack.c.h.b16 %v5035
        %v6301 = vunpack.c.l.b16 %v5036
        %v6302 = vunpack.c.h.b16 %v5036
        %v6303 = vunpack.c.l.b16 %v5037
        %v6304 = vunpack.c.h.b16 %v5037
        %v6305 = vunpack.c.l.b16 %v5038
        %v6306 = vunpack.c.h.b16 %v5038
        %v6307 = vunpack.c.l.b16 %v5039
        %v6308 = vunpack.c.h.b16 %v5039
        %v6309 = vunpack.c.l.b16 %v5040
        %v6310 = vunpack.c.h.b16 %v5040
        %v6311 = vunpack.c.l.b16 %v5041
        %v6312 = vunpack.c.h.b16 %v5041
        %v6313 = vunpack.c.l.b16 %v5042
        %v6314 = vunpack.c.h.b16 %v5042
        %v6315 = vunpack.c.l.b16 %v5043
        %v6316 = vunpack.c.h.b16 %v5043
        %v6317 = vunpack.c.l.b16 %v5044
        %v6318 = vunpack.c.h.b16 %v5044
        %v6319 = vunpack.c.l.b16 %v5045
        %v6320 = vunpack.c.h.b16 %v5045
        %v6321 = vunpack.c.l.b16 %v5046
        %v6322 = vunpack.c.h.b16 %v5046
        %v6323 = vunpack.c.l.b16 %v5047
        %v6324 = vunpack.c.h.b16 %v5047
        %v6325 = vunpack.c.l.b16 %v5048
        %v6326 = vunpack.c.h.b16 %v5048
        %v6327 = vunpack.c.l.b16 %v5049
        %v6328 = vunpack.c.h.b16 %v5049
        %v6329 = vunpack.c.l.b16 %v5050
        %v6330 = vunpack.c.h.b16 %v5050
        %v6331 = vunpack.c.l.b16 %v5051
        %v6332 = vunpack.c.h.b16 %v5051
        %v6333 = vunpack.c.l.b16 %v5052
        %v6334 = vunpack.c.h.b16 %v5052
        %v6335 = vunpack.c.l.b16 %v5053
        %v6336 = vunpack.c.h.b16 %v5053
        %v6337 = vunpack.c.l.b16 %v5054
        %v6338 = vunpack.c.h.b16 %v5054
        %v6339 = vunpack.c.l.b16 %v5055
        %v6340 = vunpack.c.h.b16 %v5055
        %v6341 = vunpack.c.l.b16 %v5056
        %v6342 = vunpack.c.h.b16 %v5056
        %v6343 = vunpack.c.l.b16 %v5057
        %v6344 = vunpack.c.h.b16 %v5057
        %v6345 = vunpack.c.l.b16 %v5058
        %v6346 = vunpack.c.h.b16 %v5058
        %v6347 = vunpack.c.l.b16 %v5059
        %v6348 = vunpack.c.h.b16 %v5059
        %v6349 = vunpack.c.l.b16 %v5060
        %v6350 = vunpack.c.h.b16 %v5060
        %v6351 = vunpack.c.l.b16 %v5061
        %v6352 = vunpack.c.h.b16 %v5061
        %v6353 = vunpack.c.l.b16 %v5062
        %v6354 = vunpack.c.h.b16 %v5062
        %v6355 = vunpack.c.l.b16 %v5063
        %v6356 = vunpack.c.h.b16 %v5063
        %v6357 = vunpack.c.l.b16 %v5064
        %v6358 = vunpack.c.h.b16 %v5064
        %v6359 = vunpack.c.l.b16 %v5065
        %v6360 = vunpack.c.h.b16 %v5065
        %v6361 = vunpack.c.l.b16 %v5066
        %v6362 = vunpack.c.h.b16 %v5066
        %v6363 = vunpack.c.l.b16 %v5067
        %v6364 = vunpack.c.h.b16 %v5067
        %v6365 = vunpack.c.l.b16 %v5068
        %v6366 = vunpack.c.h.b16 %v5068
        %v6367 = vunpack.c.l.b16 %v5069
        %v6368 = vunpack.c.h.b16 %v5069
        %v6369 = vunpack.c.l.b16 %v5070
        %v6370 = vunpack.c.h.b16 %v5070
        %v6371 = vunpack.c.l.b16 %v5071
        %v6372 = vunpack.c.h.b16 %v5071
        %v6373 = vunpack.c.l.b16 %v5072
        %v6374 = vunpack.c.h.b16 %v5072
        %v6375 = vunpack.c.l.b16 %v5073
        %v6376 = vunpack.c.h.b16 %v5073
        %v6377 = vunpack.c.l.b16 %v5074
        %v6378 = vunpack.c.h.b16 %v5074
        %v6379 = vunpack.c.l.b16 %v5075
        %v6380 = vunpack.c.h.b16 %v5075
        %v6381 = vunpack.c.l.b16 %v5076
        %v6382 = vunpack.c.h.b16 %v5076
        %v6383 = vunpack.c.l.b16 %v5077
        %v6384 = vunpack.c.h.b16 %v5077
        %v6385 = vunpack.c.l.b16 %v5078
        %v6386 = vunpack.c.h.b16 %v5078
        %v6387 = vunpack.c.l.b16 %v5079
        %v6388 = vunpack.c.h.b16 %v5079
        %v6389 = vunpack.c.l.b16 %v5080
        %v6390 = vunpack.c.h.b16 %v5080
        %v6391 = vunpack.c.l.b16 %v5081
        %v6392 = vunpack.c.h.b16 %v5081
        %v6393 = vunpack.c.l.b16 %v5082
        %v6394 = vunpack.c.h.b16 %v5082
        %v6395 = vunpack.c.l.b16 %v5083
        %v6396 = vunpack.c.h.b16 %v5083
        %v6397 = vunpack.c.l.b16 %v5084
        %v6398 = vunpack.c.h.b16 %v5084
        %v6399 = vunpack.c.l.b16 %v5085
        %v6400 = vunpack.c.h.b16 %v5085
        %v6401 = vunpack.c.l.b16 %v5086
        %v6402 = vunpack.c.h.b16 %v5086
        %v6403 = vunpack.c.l.b16 %v5087
        %v6404 = vunpack.c.h.b16 %v5087
        %v6405 = vunpack.c.l.b16 %v5088
        %v6406 = vunpack.c.h.b16 %v5088
        %v6407 = vunpack.c.l.b16 %v5089
        %v6408 = vunpack.c.h.b16 %v5089
        %v6409 = vunpack.c.l.b16 %v5090
        %v6410 = vunpack.c.h.b16 %v5090
        %v6411 = vunpack.c.l.b16 %v5091
        %v6412 = vunpack.c.h.b16 %v5091
        %v6413 = vunpack.c.l.b16 %v5092
        %v6414 = vunpack.c.h.b16 %v5092
        %v6415 = vunpack.c.l.b16 %v5093
        %v6416 = vunpack.c.h.b16 %v5093
        %v6417 = vunpack.c.l.b16 %v5094
        %v6418 = vunpack.c.h.b16 %v5094
        %v6419 = vunpack.c.l.b16 %v5095
        %v6420 = vunpack.c.h.b16 %v5095
        %v6421 = vunpack.c.l.b16 %v5096
        %v6422 = vunpack.c.h.b16 %v5096
        %v6423 = vunpack.c.l.b16 %v5097
        %v6424 = vunpack.c.h.b16 %v5097
        %v6425 = vunpack.c.l.b16 %v5098
        %v6426 = vunpack.c.h.b16 %v5098
        %v6427 = vunpack.c.l.b16 %v5099
        %v6428 = vunpack.c.h.b16 %v5099
        %v6429 = vunpack.c.l.b16 %v5100
        %v6430 = vunpack.c.h.b16 %v5100
        %v6431 = vunpack.c.l.b16 %v5101
        %v6432 = vunpack.c.h.b16 %v5101
        %v6433 = vunpack.c.l.b16 %v5102
        %v6434 = vunpack.c.h.b16 %v5102
        %v6435 = vunpack.c.l.b16 %v5103
        %v6436 = vunpack.c.h.b16 %v5103
        %v6437 = vunpack.c.l.b16 %v5104
        %v6438 = vunpack.c.h.b16 %v5104
        %v6439 = vunpack.c.l.b16 %v5105
        %v6440 = vunpack.c.h.b16 %v5105
        %v6441 = vunpack.c.l.b16 %v5106
        %v6442 = vunpack.c.h.b16 %v5106
        %v6443 = vunpack.c.l.b16 %v5107
        %v6444 = vunpack.c.h.b16 %v5107
        %v6445 = vunpack.c.l.b16 %v5108
        %v6446 = vunpack.c.h.b16 %v5108
        %v6447 = vunpack.c.l.b16 %v5109
        %v6448 = vunpack.c.h.b16 %v5109
        %v6449 = vunpack.c.l.b16 %v5110
        %v6450 = vunpack.c.h.b16 %v5110
        %v6451 = vunpack.c.l.b16 %v5111
        %v6452 = vunpack.c.h.b16 %v5111
        %v6453 = vunpack.c.l.b16 %v5112
        %v6454 = vunpack.c.h.b16 %v5112
        %v6455 = vunpack.c.l.b16 %v5113
        %v6456 = vunpack.c.h.b16 %v5113
        %v6457 = vunpack.c.l.b16 %v5114
        %v6458 = vunpack.c.h.b16 %v5114
        %v6459 = vunpack.c.l.b16 %v5115
        %v6460 = vunpack.c.h.b16 %v5115
        %v6461 = vunpack.c.l.b16 %v5116
        %v6462 = vunpack.c.h.b16 %v5116
        %v6463 = vunpack.c.l.b16 %v5117
        %v6464 = vunpack.c.h.b16 %v5117
        %v6465 = vunpack.c.l.b16 %v5118
        %v6466 = vunpack.c.h.b16 %v5118
        %v6467 = vunpack.c.l.b16 %v5119
        %v6468 = vunpack.c.h.b16 %v5119
        %v6469 = vunpack.c.l.b16 %v5120
        %v6470 = vunpack.c.h.b16 %v5120
        %v6471 = vunpack.c.l.b16 %v5121
        %v6472 = vunpack.c.h.b16 %v5121
        %v6473 = vunpack.c.l.b16 %v5122
        %v6474 = vunpack.c.h.b16 %v5122
        %v6475 = vunpack.c.l.b16 %v5123
        %v6476 = vunpack.c.h.b16 %v5123
        %v6477 = vunpack.c.l.b16 %v5124
        %v6478 = vunpack.c.h.b16 %v5124
        %v6479 = vunpack.c.l.b16 %v5125
        %v6480 = vunpack.c.h.b16 %v5125
        %v6481 = vunpack.c.l.b16 %v5126
        %v6482 = vunpack.c.h.b16 %v5126
        %v6483 = vunpack.c.l.b16 %v5127
        %v6484 = vunpack.c.h.b16 %v5127
        %v6485 = vunpack.c.l.b16 %v5128
        %v6486 = vunpack.c.h.b16 %v5128
        %v6487 = vunpack.c.l.b16 %v5129
        %v6488 = vunpack.c.h.b16 %v5129
        %v6489 = vunpack.c.l.b16 %v5130
        %v6490 = vunpack.c.h.b16 %v5130
        %v6491 = vunpack.c.l.b16 %v5131
        %v6492 = vunpack.c.h.b16 %v5131
        %v6493 = vunpack.c.l.b16 %v5132
        %v6494 = vunpack.c.h.b16 %v5132
        %v6495 = vunpack.c.l.b16 %v5133
        %v6496 = vunpack.c.h.b16 %v5133
        %v6497 = vunpack.c.l.b16 %v5134
        %v6498 = vunpack.c.h.b16 %v5134
        %v6499 = vunpack.c.l.b16 %v5135
        %v6500 = vunpack.c.h.b16 %v5135
        %v6501 = vunpack.c.l.b16 %v5136
        %v6502 = vunpack.c.h.b16 %v5136
        %v6503 = vunpack.c.l.b16 %v5137
        %v6504 = vunpack.c.h.b16 %v5137
        %v6505 = vunpack.c.l.b16 %v5138
        %v6506 = vunpack.c.h.b16 %v5138
        %v6507 = vunpack.c.l.b16 %v5139
        %v6508 = vunpack.c.h.b16 %v5139
        %v6509 = vunpack.c.l.b16 %v5140
        %v6510 = vunpack.c.h.b16 %v5140
        %v6511 = vunpack.c.l.b16 %v5141
        %v6512 = vunpack.c.h.b16 %v5141
        %v6513 = vunpack.c.l.b16 %v5142
        %v6514 = vunpack.c.h.b16 %v5142
        %v6515 = vunpack.c.l.b16 %v5143
        %v6516 = vunpack.c.h.b16 %v5143
        %v6517 = vunpack.c.l.b16 %v5144
        %v6518 = vunpack.c.h.b16 %v5144
        %v6519 = vunpack.c.l.b16 %v5145
        %v6520 = vunpack.c.h.b16 %v5145
        %v6521 = vunpack.c.l.b16 %v5146
        %v6522 = vunpack.c.h.b16 %v5146
        %v6523 = vunpack.c.l.b16 %v5147
        %v6524 = vunpack.c.h.b16 %v5147
        %v6525 = vunpack.c.l.b16 %v5148
        %v6526 = vunpack.c.h.b16 %v5148
        %v6527 = vunpack.c.l.b16 %v5149
        %v6528 = vunpack.c.h.b16 %v5149
        %v6529 = vunpack.c.l.b16 %v5150
        %v6530 = vunpack.c.h.b16 %v5150
        %v6531 = vunpack.c.l.b16 %v5151
        %v6532 = vunpack.c.h.b16 %v5151
        %v6533 = vunpack.c.l.b16 %v5152
        %v6534 = vunpack.c.h.b16 %v5152
        %v6535 = vunpack.c.l.b16 %v5153
        %v6536 = vunpack.c.h.b16 %v5153
        %v6537 = vunpack.c.l.b16 %v5154
        %v6538 = vunpack.c.h.b16 %v5154
        %v6539 = vunpack.c.l.b16 %v5155
        %v6540 = vunpack.c.h.b16 %v5155
        %v6541 = vunpack.c.l.b16 %v5156
        %v6542 = vunpack.c.h.b16 %v5156
        %v6543 = vunpack.c.l.b16 %v5157
        %v6544 = vunpack.c.h.b16 %v5157
        %v6545 = vunpack.c.l.b16 %v5158
        %v6546 = vunpack.c.h.b16 %v5158
        %v6547 = vunpack.c.l.b16 %v5159
        %v6548 = vunpack.c.h.b16 %v5159
        %v6549 = vunpack.c.l.b16 %v5160
        %v6550 = vunpack.c.h.b16 %v5160
        %v6551 = vunpack.c.l.b16 %v5161
        %v6552 = vunpack.c.h.b16 %v5161
        %v6553 = vunpack.c.l.b16 %v5162
        %v6554 = vunpack.c.h.b16 %v5162
        %v6555 = vunpack.c.l.b16 %v5163
        %v6556 = vunpack.c.h.b16 %v5163
        %v6557 = vunpack.c.l.b16 %v5164
        %v6558 = vunpack.c.h.b16 %v5164
        %v6559 = vunpack.c.l.b16 %v5165
        %v6560 = vunpack.c.h.b16 %v5165
        %v6561 = vunpack.c.l.b16 %v5166
        %v6562 = vunpack.c.h.b16 %v5166
        %v6563 = vunpack.c.l.b16 %v5167
        %v6564 = vunpack.c.h.b16 %v5167
        %v6565 = vunpack.c.l.b16 %v5168
        %v6566 = vunpack.c.h.b16 %v5168
        %v6567 = vunpack.c.l.b16 %v5169
        %v6568 = vunpack.c.h.b16 %v5169
        %v6569 = vunpack.c.l.b16 %v5170
        %v6570 = vunpack.c.h.b16 %v5170
        %v6571 = vunpack.c.l.b16 %v5171
        %v6572 = vunpack.c.h.b16 %v5171
        %v6573 = vunpack.c.l.b16 %v5172
        %v6574 = vunpack.c.h.b16 %v5172
        %v6575 = vunpack.c.l.b16 %v5173
        %v6576 = vunpack.c.h.b16 %v5173
        %v6577 = vunpack.c.l.b16 %v5174
        %v6578 = vunpack.c.h.b16 %v5174
        %v6579 = vunpack.c.l.b16 %v5175
        %v6580 = vunpack.c.h.b16 %v5175
        %v6581 = vunpack.c.l.b16 %v5176
        %v6582 = vunpack.c.h.b16 %v5176
        %v6583 = vunpack.c.l.b16 %v5177
        %v6584 = vunpack.c.h.b16 %v5177
        %v6585 = vunpack.c.l.b16 %v5178
        %v6586 = vunpack.c.h.b16 %v5178
        %v6587 = vunpack.c.l.b16 %v5179
        %v6588 = vunpack.c.h.b16 %v5179
        %v6589 = vunpack.c.l.b16 %v5180
        %v6590 = vunpack.c.h.b16 %v5180
        %v6591 = vunpack.c.l.b16 %v5181
        %v6592 = vunpack.c.h.b16 %v5181
        %v6593 = vunpack.c.l.b16 %v5182
        %v6594 = vunpack.c.h.b16 %v5182
        %v6595 = vunpack.c.l.b16 %v5183
        %v6596 = vunpack.c.h.b16 %v5183
        %v6597 = vunpack.c.l.b16 %v5184
        %v6598 = vunpack.c.h.b16 %v5184
        %v6599 = vunpack.c.l.b16 %v5185
        %v6600 = vunpack.c.h.b16 %v5185
        %v6601 = vunpack.c.l.b16 %v5186
        %v6602 = vunpack.c.h.b16 %v5186
        %v6603 = vunpack.c.l.b16 %v5187
        %v6604 = vunpack.c.h.b16 %v5187
        %v6605 = vunpack.c.l.b16 %v5188
        %v6606 = vunpack.c.h.b16 %v5188
        %v6607 = vunpack.c.l.b16 %v5189
        %v6608 = vunpack.c.h.b16 %v5189
        %v6609 = vunpack.c.l.b16 %v5190
        %v6610 = vunpack.c.h.b16 %v5190
        %v6611 = vunpack.c.l.b16 %v5191
        %v6612 = vunpack.c.h.b16 %v5191
        %v6613 = vunpack.c.l.b16 %v5192
        %v6614 = vunpack.c.h.b16 %v5192
        %v6615 = vunpack.c.l.b16 %v5193
        %v6616 = vunpack.c.h.b16 %v5193
        %v6617 = vunpack.c.l.b16 %v5194
        %v6618 = vunpack.c.h.b16 %v5194
        %v6619 = vunpack.c.l.b16 %v5195
        %v6620 = vunpack.c.h.b16 %v5195
        %v6621 = vunpack.c.l.b16 %v5196
        %v6622 = vunpack.c.h.b16 %v5196
        %v6623 = vunpack.c.l.b16 %v5197
        %v6624 = vunpack.c.h.b16 %v5197
        %v6625 = vunpack.c.l.b16 %v5198
        %v6626 = vunpack.c.h.b16 %v5198
        %v6627 = vunpack.c.l.b16 %v5199
        %v6628 = vunpack.c.h.b16 %v5199
        %v6629 = vunpack.c.l.b16 %v5200
        %v6630 = vunpack.c.h.b16 %v5200
        %v6631 = vunpack.c.l.b16 %v5201
        %v6632 = vunpack.c.h.b16 %v5201
        %v6633 = vunpack.c.l.b16 %v5202
        %v6634 = vunpack.c.h.b16 %v5202
        %v6635 = vunpack.c.l.b16 %v5203
        %v6636 = vunpack.c.h.b16 %v5203
        %v6637 = vunpack.c.l.b16 %v5204
        %v6638 = vunpack.c.h.b16 %v5204
        %v6639 = vunpack.c.l.b16 %v5205
        %v6640 = vunpack.c.h.b16 %v5205
        %v6641 = vunpack.c.l.b16 %v5206
        %v6642 = vunpack.c.h.b16 %v5206
        %v6643 = vunpack.c.l.b16 %v5207
        %v6644 = vunpack.c.h.b16 %v5207
        %v6645 = vunpack.c.l.b16 %v5208
        %v6646 = vunpack.c.h.b16 %v5208
        %v6647 = vunpack.c.l.b16 %v5209
        %v6648 = vunpack.c.h.b16 %v5209
        %v6649 = vunpack.c.l.b16 %v5210
        %v6650 = vunpack.c.h.b16 %v5210
        %v6651 = vunpack.c.l.b16 %v5211
        %v6652 = vunpack.c.h.b16 %v5211
        %v6653 = vunpack.c.l.b16 %v5212
        %v6654 = vunpack.c.h.b16 %v5212
        %v6655 = vunpack.c.l.b16 %v5213
        %v6656 = vunpack.c.h.b16 %v5213
        %v6657 = vunpack.c.l.b16 %v5214
        %v6658 = vunpack.c.h.b16 %v5214
        %v6659 = vunpack.c.l.b16 %v5215
        %v6660 = vunpack.c.h.b16 %v5215
        %v6661 = vunpack.c.l.b16 %v5216
        %v6662 = vunpack.c.h.b16 %v5216
        %v6663 = vunpack.c.l.b16 %v5217
        %v6664 = vunpack.c.h.b16 %v5217
        %v6665 = vunpack.c.l.b16 %v5218
        %v6666 = vunpack.c.h.b16 %v5218
        %v6667 = vunpack.c.l.b16 %v5219
        %v6668 = vunpack.c.h.b16 %v5219
        %v6669 = vunpack.c.l.b16 %v5220
        %v6670 = vunpack.c.h.b16 %v5220
        %v6671 = vunpack.c.l.b16 %v5221
        %v6672 = vunpack.c.h.b16 %v5221
        %v6673 = vunpack.c.l.b16 %v5222
        %v6674 = vunpack.c.h.b16 %v5222
        %v6675 = vunpack.c.l.b16 %v5223
        %v6676 = vunpack.c.h.b16 %v5223
        %v6677 = vunpack.c.l.b16 %v5224
        %v6678 = vunpack.c.h.b16 %v5224
        %v6679 = vunpack.c.l.b16 %v5225
        %v6680 = vunpack.c.h.b16 %v5225
        %v6681 = vunpack.c.l.b16 %v5226
        %v6682 = vunpack.c.h.b16 %v5226
        %v6683 = vunpack.c.l.b16 %v5227
        %v6684 = vunpack.c.h.b16 %v5227
        %v6685 = vunpack.c.l.b16 %v5228
        %v6686 = vunpack.c.h.b16 %v5228
        %v6687 = vunpack.c.l.b16 %v5229
        %v6688 = vunpack.c.h.b16 %v5229
        %v6689 = vunpack.c.l.b16 %v5230
        %v6690 = vunpack.c.h.b16 %v5230
        %v6691 = vunpack.c.l.b16 %v5231
        %v6692 = vunpack.c.h.b16 %v5231
        %v6693 = vunpack.c.l.b16 %v5232
        %v6694 = vunpack.c.h.b16 %v5232
        %v6695 = vunpack.c.l.b16 %v5233
        %v6696 = vunpack.c.h.b16 %v5233
        %v6697 = vunpack.c.l.b16 %v5234
        %v6698 = vunpack.c.h.b16 %v5234
        %v6699 = vunpack.c.l.b16 %v5235
        %v6700 = vunpack.c.h.b16 %v5235
        %v6701 = vunpack.c.l.b16 %v5236
        %v6702 = vunpack.c.h.b16 %v5236
        %v6703 = vunpack.c.l.b16 %v5237
        %v6704 = vunpack.c.h.b16 %v5237
        %v6705 = vunpack.c.l.b16 %v5238
        %v6706 = vunpack.c.h.b16 %v5238
        %v6707 = vunpack.c.l.b16 %v5239
        %v6708 = vunpack.c.h.b16 %v5239
        %v6709 = vunpack.c.l.b16 %v5240
        %v6710 = vunpack.c.h.b16 %v5240
        %v6711 = vunpack.c.l.b16 %v5241
        %v6712 = vunpack.c.h.b16 %v5241
        %v6713 = vunpack.c.l.b16 %v5242
        %v6714 = vunpack.c.h.b16 %v5242
        %v6715 = vunpack.c.l.b16 %v5243
        %v6716 = vunpack.c.h.b16 %v5243
        %v6717 = vunpack.c.l.b16 %v5244
        %v6718 = vunpack.c.h.b16 %v5244
        %v6719 = vunpack.c.l.b16 %v5245
        %v6720 = vunpack.c.h.b16 %v5245
        %v6721 = vunpack.c.l.b16 %v5246
        %v6722 = vunpack.c.h.b16 %v5246
        %v6723 = vunpack.c.l.b16 %v5247
        %v6724 = vunpack.c.h.b16 %v5247
        %v6725 = vunpack.c.l.b16 %v5248
        %v6726 = vunpack.c.h.b16 %v5248
        %v6727 = vunpack.c.l.b16 %v5249
        %v6728 = vunpack.c.h.b16 %v5249
        %v6729 = vunpack.c.l.b16 %v5250
        %v6730 = vunpack.c.h.b16 %v5250
        %v6731 = vunpack.c.l.b16 %v5251
        %v6732 = vunpack.c.h.b16 %v5251
        %v6733 = vunpack.c.l.b16 %v5252
        %v6734 = vunpack.c.h.b16 %v5252
        %v6735 = vunpack.c.l.b16 %v5253
        %v6736 = vunpack.c.h.b16 %v5253
        %v6737 = vunpack.c.l.b16 %v5254
        %v6738 = vunpack.c.h.b16 %v5254
        %v6739 = vunpack.c.l.b16 %v5255
        %v6740 = vunpack.c.h.b16 %v5255
        %v6741 = vunpack.c.l.b16 %v5256
        %v6742 = vunpack.c.h.b16 %v5256
        %v6743 = vunpack.c.l.b16 %v5257
        %v6744 = vunpack.c.h.b16 %v5257
        %v6745 = vunpack.c.l.b16 %v5258
        %v6746 = vunpack.c.h.b16 %v5258
        %v6747 = vunpack.c.l.b16 %v5259
        %v6748 = vunpack.c.h.b16 %v5259
        %v6749 = vunpack.c.l.b16 %v5260
        %v6750 = vunpack.c.h.b16 %v5260
        %v6751 = vunpack.c.l.b16 %v5261
        %v6752 = vunpack.c.h.b16 %v5261
        %v6753 = vunpack.c.l.b16 %v5262
        %v6754 = vunpack.c.h.b16 %v5262
        %v6755 = vunpack.c.l.b16 %v5263
        %v6756 = vunpack.c.h.b16 %v5263
        %v6757 = vunpack.c.l.b16 %v5264
        %v6758 = vunpack.c.h.b16 %v5264
        %v6759 = vunpack.c.l.b16 %v5265
        %v6760 = vunpack.c.h.b16 %v5265
        %v6761 = vunpack.c.l.b16 %v5266
        %v6762 = vunpack.c.h.b16 %v5266
        %v6763 = vunpack.c.l.b16 %v5267
        %v6764 = vunpack.c.h.b16 %v5267
        %v6765 = vunpack.c.l.b16 %v5268
        %v6766 = vunpack.c.h.b16 %v5268
        %v6767 = vunpack.c.l.b16 %v5269
        %v6768 = vunpack.c.h.b16 %v5269
        %v6769 = vunpack.c.l.b16 %v5270
        %v6770 = vunpack.c.h.b16 %v5270
        %v6771 = vunpack.c.l.b16 %v5271
        %v6772 = vunpack.c.h.b16 %v5271
        %v6773 = vunpack.c.l.b16 %v5272
        %v6774 = vunpack.c.h.b16 %v5272
        %v6775 = vunpack.c.l.b16 %v5273
        %v6776 = vunpack.c.h.b16 %v5273
        %v6777 = vunpack.c.l.b16 %v5274
        %v6778 = vunpack.c.h.b16 %v5274
        %v6779 = vunpack.c.l.b16 %v5275
        %v6780 = vunpack.c.h.b16 %v5275
        %v6781 = vunpack.c.l.b16 %v5276
        %v6782 = vunpack.c.h.b16 %v5276
        %v6783 = vunpack.c.l.b16 %v5277
        %v6784 = vunpack.c.h.b16 %v5277
        %v6785 = vunpack.c.l.b16 %v5278
        %v6786 = vunpack.c.h.b16 %v5278
        %v6787 = vunpack.c.l.b16 %v5279
        %v6788 = vunpack.c.h.b16 %v5279
        %v6789 = vunpack.c.l.b16 %v5280
        %v6790 = vunpack.c.h.b16 %v5280
        %v6791 = vunpack.c.l.b16 %v5281
        %v6792 = vunpack.c.h.b16 %v5281
        %v6793 = vunpack.c.l.b16 %v5282
        %v6794 = vunpack.c.h.b16 %v5282
        %v6795 = vunpack.c.l.b16 %v5283
        %v6796 = vunpack.c.h.b16 %v5283
        %v6797 = vunpack.c.l.b16 %v5284
        %v6798 = vunpack.c.h.b16 %v5284
        %v6799 = vunpack.c.l.b16 %v5285
        %v6800 = vunpack.c.h.b16 %v5285
        %v6801 = vunpack.c.l.b16 %v5286
        %v6802 = vunpack.c.h.b16 %v5286
        %v6803 = vunpack.c.l.b16 %v5287
        %v6804 = vunpack.c.h.b16 %v5287
        %v6805 = vunpack.c.l.b16 %v5288
        %v6806 = vunpack.c.h.b16 %v5288
        %v6807 = vunpack.c.l.b16 %v5289
        %v6808 = vunpack.c.h.b16 %v5289
        %v6809 = vunpack.c.l.b16 %v5290
        %v6810 = vunpack.c.h.b16 %v5290
        %v6811 = vunpack.c.l.b16 %v5291
        %v6812 = vunpack.c.h.b16 %v5291
        %v6813 = vunpack.c.l.b16 %v5292
        %v6814 = vunpack.c.h.b16 %v5292
        %v6815 = vunpack.c.l.b16 %v5293
        %v6816 = vunpack.c.h.b16 %v5293
        %v6817 = vunpack.c.l.b16 %v5294
        %v6818 = vunpack.c.h.b16 %v5294
        %v6819 = vunpack.c.l.b16 %v5295
        %v6820 = vunpack.c.h.b16 %v5295
        %v6821 = vunpack.c.l.b16 %v5296
        %v6822 = vunpack.c.h.b16 %v5296
        %v6823 = vunpack.c.l.b16 %v5297
        %v6824 = vunpack.c.h.b16 %v5297
        %v6825 = vunpack.c.l.b16 %v5298
        %v6826 = vunpack.c.h.b16 %v5298
        %v6827 = vunpack.c.l.b16 %v5299
        %v6828 = vunpack.c.h.b16 %v5299
        %v6829 = vunpack.c.l.b16 %v5300
        %v6830 = vunpack.c.h.b16 %v5300
        %v6831 = vunpack.c.l.b16 %v5301
        %v6832 = vunpack.c.h.b16 %v5301
        %v6833 = vunpack.c.l.b16 %v5302
        %v6834 = vunpack.c.h.b16 %v5302
        %v6835 = vunpack.c.l.b16 %v5303
        %v6836 = vunpack.c.h.b16 %v5303
        %v6837 = vunpack.c.l.b16 %v5304
        %v6838 = vunpack.c.h.b16 %v5304
        %v6839 = vunpack.c.l.b16 %v5305
        %v6840 = vunpack.c.h.b16 %v5305
        %v6841 = vunpack.c.l.b16 %v5306
        %v6842 = vunpack.c.h.b16 %v5306
        %v6843 = vunpack.c.l.b16 %v5307
        %v6844 = vunpack.c.h.b16 %v5307
        %v6845 = vunpack.c.l.b16 %v5308
        %v6846 = vunpack.c.h.b16 %v5308
        %v6847 = vunpack.c.l.b16 %v5309
        %v6848 = vunpack.c.h.b16 %v5309
        %v6849 = vunpack.c.l.b16 %v5310
        %v6850 = vunpack.c.h.b16 %v5310
        %v6851 = vunpack.c.l.b16 %v5311
        %v6852 = vunpack.c.h.b16 %v5311
        %v6853 = vunpack.c.l.b16 %v5312
        %v6854 = vunpack.c.h.b16 %v5312
        %v6855 = vunpack.c.l.b16 %v5313
        %v6856 = vunpack.c.h.b16 %v5313
        %v6857 = vunpack.c.l.b16 %v5314
        %v6858 = vunpack.c.h.b16 %v5314
        %v6859 = vunpack.c.l.b16 %v5315
        %v6860 = vunpack.c.h.b16 %v5315
        %v6861 = vunpack.c.l.b16 %v5316
        %v6862 = vunpack.c.h.b16 %v5316
        %v6863 = vunpack.c.l.b16 %v5317
        %v6864 = vunpack.c.h.b16 %v5317
        %v6865 = vunpack.c.l.b16 %v5318
        %v6866 = vunpack.c.h.b16 %v5318
        %v6867 = vunpack.c.l.b16 %v5319
        %v6868 = vunpack.c.h.b16 %v5319
        %v6869 = vunpack.c.l.b16 %v5320
        %v6870 = vunpack.c.h.b16 %v5320
        %v6871 = vunpack.c.l.b16 %v5321
        %v6872 = vunpack.c.h.b16 %v5321
        %v6873 = vunpack.c.l.b16 %v5322
        %v6874 = vunpack.c.h.b16 %v5322
        %v6875 = vunpack.c.l.b16 %v5323
        %v6876 = vunpack.c.h.b16 %v5323
        %v6877 = vunpack.c.l.b16 %v5324
        %v6878 = vunpack.c.h.b16 %v5324
        %v6879 = vunpack.c.l.b16 %v5325
        %v6880 = vunpack.c.h.b16 %v5325
        %v6881 = vunpack.c.l.b16 %v5326
        %v6882 = vunpack.c.h.b16 %v5326
        %v6883 = vunpack.c.l.b16 %v5327
        %v6884 = vunpack.c.h.b16 %v5327
        %v6885 = vunpack.c.l.b16 %v5328
        %v6886 = vunpack.c.h.b16 %v5328
        %v6887 = vunpack.c.l.b16 %v5329
        %v6888 = vunpack.c.h.b16 %v5329
        %v6889 = vunpack.c.l.b16 %v5330
        %v6890 = vunpack.c.h.b16 %v5330
        %v6891 = vunpack.c.l.b16 %v5331
        %v6892 = vunpack.c.h.b16 %v5331
        %v6893 = vunpack.c.l.b16 %v5332
        %v6894 = vunpack.c.h.b16 %v5332
        %v6895 = vunpack.c.l.b16 %v5333
        %v6896 = vunpack.c.h.b16 %v5333
        %v6897 = vunpack.c.l.b16 %v5334
        %v6898 = vunpack.c.h.b16 %v5334
        %v6899 = vunpack.c.l.b16 %v5335
        %v6900 = vunpack.c.h.b16 %v5335
        %v6901 = vunpack.c.l.b16 %v5336
        %v6902 = vunpack.c.h.b16 %v5336
        %v6903 = vunpack.c.l.b16 %v5337
        %v6904 = vunpack.c.h.b16 %v5337
        %v6905 = vunpack.c.l.b16 %v5338
        %v6906 = vunpack.c.h.b16 %v5338
        %v6907 = vunpack.c.l.b16 %v5339
        %v6908 = vunpack.c.h.b16 %v5339
        %v6909 = vunpack.c.l.b16 %v5340
        %v6910 = vunpack.c.h.b16 %v5340
        %v6911 = vunpack.c.l.b16 %v5341
        %v6912 = vunpack.c.h.b16 %v5341
        %v6913 = vunpack.c.l.b16 %v5342
        %v6914 = vunpack.c.h.b16 %v5342
        %v6915 = vunpack.c.l.b16 %v5343
        %v6916 = vunpack.c.h.b16 %v5343
        %v6917 = vunpack.c.l.b16 %v5344
        %v6918 = vunpack.c.h.b16 %v5344
        %v6919 = vunpack.c.l.b16 %v5345
        %v6920 = vunpack.c.h.b16 %v5345
        %v6921 = vunpack.c.l.b16 %v5346
        %v6922 = vunpack.c.h.b16 %v5346
        %v6923 = vunpack.c.l.b16 %v5347
        %v6924 = vunpack.c.h.b16 %v5347
        %v6925 = vunpack.c.l.b16 %v5348
        %v6926 = vunpack.c.h.b16 %v5348
        %v6927 = vunpack.c.l.b16 %v5349
        %v6928 = vunpack.c.h.b16 %v5349
        %v6929 = vunpack.c.l.b16 %v5350
        %v6930 = vunpack.c.h.b16 %v5350
        %v6931 = vunpack.c.l.b16 %v5351
        %v6932 = vunpack.c.h.b16 %v5351
        %v6933 = vunpack.c.l.b16 %v5352
        %v6934 = vunpack.c.h.b16 %v5352
        %v6935 = vunpack.c.l.b16 %v5353
        %v6936 = vunpack.c.h.b16 %v5353
        %v6937 = vunpack.c.l.b16 %v5354
        %v6938 = vunpack.c.h.b16 %v5354
        %v6939 = vunpack.c.l.b16 %v5355
        %v6940 = vunpack.c.h.b16 %v5355
        %v6941 = vunpack.c.l.b16 %v5356
        %v6942 = vunpack.c.h.b16 %v5356
        %v6943 = vunpack.c.l.b16 %v5357
        %v6944 = vunpack.c.h.b16 %v5357
        %v6945 = vunpack.c.l.b16 %v5358
        %v6946 = vunpack.c.h.b16 %v5358
        %v6947 = vunpack.c.l.b16 %v5359
        %v6948 = vunpack.c.h.b16 %v5359
        %v6949 = vunpack.c.l.b16 %v5360
        %v6950 = vunpack.c.h.b16 %v5360
        %v6951 = vunpack.c.l.b16 %v5361
        %v6952 = vunpack.c.h.b16 %v5361
        %v6953 = vunpack.c.l.b16 %v5362
        %v6954 = vunpack.c.h.b16 %v5362
        %v6955 = vunpack.c.l.b16 %v5363
        %v6956 = vunpack.c.h.b16 %v5363
        %v6957 = vunpack.c.l.b16 %v5364
        %v6958 = vunpack.c.h.b16 %v5364
        %v6959 = vunpack.c.l.b16 %v5365
        %v6960 = vunpack.c.h.b16 %v5365
        %v6961 = vunpack.c.l.b16 %v5366
        %v6962 = vunpack.c.h.b16 %v5366
        %v6963 = vunpack.c.l.b16 %v5367
        %v6964 = vunpack.c.h.b16 %v5367
        %v6965 = vunpack.c.l.b16 %v5368
        %v6966 = vunpack.c.h.b16 %v5368
        %v6967 = vunpack.c.l.b16 %v5369
        %v6968 = vunpack.c.h.b16 %v5369
        %v6969 = vunpack.c.l.b16 %v5370
        %v6970 = vunpack.c.h.b16 %v5370
        %v6971 = vunpack.c.l.b16 %v5371
        %v6972 = vunpack.c.h.b16 %v5371
        %v6973 = vunpack.c.l.b16 %v5372
        %v6974 = vunpack.c.h.b16 %v5372
        %v6975 = vunpack.c.l.b16 %v5373
        %v6976 = vunpack.c.h.b16 %v5373
        %v6977 = vunpack.c.l.b16 %v5374
        %v6978 = vunpack.c.h.b16 %v5374
        %v6979 = vunpack.c.l.b16 %v5375
        %v6980 = vunpack.c.h.b16 %v5375
        %v6981 = vunpack.c.l.b16 %v5376
        %v6982 = vunpack.c.h.b16 %v5376
        %v6983 = vunpack.c.l.b16 %v5377
        %v6984 = vunpack.c.h.b16 %v5377
        %v6985 = vunpack.c.l.b16 %v5378
        %v6986 = vunpack.c.h.b16 %v5378
        %v6987 = vunpack.c.l.b16 %v5379
        %v6988 = vunpack.c.h.b16 %v5379
        %v6989 = vunpack.c.l.b16 %v5380
        %v6990 = vunpack.c.h.b16 %v5380
        %v6991 = vunpack.c.l.b16 %v5381
        %v6992 = vunpack.c.h.b16 %v5381
        %v6993 = vunpack.c.l.b16 %v5382
        %v6994 = vunpack.c.h.b16 %v5382
        %v6995 = vunpack.c.l.b16 %v5383
        %v6996 = vunpack.c.h.b16 %v5383
        %v6997 = vunpack.c.l.b16 %v5384
        %v6998 = vunpack.c.h.b16 %v5384
        %v6999 = vunpack.c.l.b16 %v5385
        %v7000 = vunpack.c.h.b16 %v5385
        %v7001 = vunpack.c.l.b16 %v5386
        %v7002 = vunpack.c.h.b16 %v5386
        %v7003 = vunpack.c.l.b16 %v5387
        %v7004 = vunpack.c.h.b16 %v5387
        %v7005 = vunpack.c.l.b16 %v5388
        %v7006 = vunpack.c.h.b16 %v5388
        %v7007 = vunpack.c.l.b16 %v5389
        %v7008 = vunpack.c.h.b16 %v5389
        %v7009 = vunpack.c.l.b16 %v5390
        %v7010 = vunpack.c.h.b16 %v5390
        %v7011 = vunpack.c.l.b16 %v5391
        %v7012 = vunpack.c.h.b16 %v5391
        %v7013 = vunpack.c.l.b16 %v5392
        %v7014 = vunpack.c.h.b16 %v5392
        %v7015 = vunpack.c.l.b16 %v5393
        %v7016 = vunpack.c.h.b16 %v5393
        %v7017 = vunpack.c.l.b16 %v5394
        %v7018 = vunpack.c.h.b16 %v5394
        %v7019 = vunpack.c.l.b16 %v5395
        %v7020 = vunpack.c.h.b16 %v5395
        %v7021 = vunpack.c.l.b16 %v5396
        %v7022 = vunpack.c.h.b16 %v5396
        %v7023 = vunpack.c.l.b16 %v5397
        %v7024 = vunpack.c.h.b16 %v5397
        %v7025 = vunpack.c.l.b16 %v5398
        %v7026 = vunpack.c.h.b16 %v5398
        %v7027 = vunpack.c.l.b16 %v5399
        %v7028 = vunpack.c.h.b16 %v5399
        %v7029 = vunpack.c.l.b16 %v5400
        %v7030 = vunpack.c.h.b16 %v5400
        %v7031 = vunpack.c.l.b16 %v5401
        %v7032 = vunpack.c.h.b16 %v5401
        %v7033 = vunpack.c.l.b16 %v5402
        %v7034 = vunpack.c.h.b16 %v5402
        %v7035 = vunpack.c.l.b16 %v5403
        %v7036 = vunpack.c.h.b16 %v5403
        %v7037 = vunpack.c.l.b16 %v5404
        %v7038 = vunpack.c.h.b16 %v5404
        %v7039 = vunpack.c.l.b16 %v5405
        %v7040 = vunpack.c.h.b16 %v5405
        %v7041 = vunpack.c.l.b16 %v5406
        %v7042 = vunpack.c.h.b16 %v5406
        %v7043 = vunpack.c.l.b16 %v5407
        %v7044 = vunpack.c.h.b16 %v5407
        %v7045 = vunpack.c.l.b16 %v5408
        %v7046 = vunpack.c.h.b16 %v5408
        %v7047 = vunpack.c.l.b16 %v5409
        %v7048 = vunpack.c.h.b16 %v5409
        %v7049 = vunpack.c.l.b16 %v5410
        %v7050 = vunpack.c.h.b16 %v5410
        %v7051 = vunpack.c.l.b16 %v5411
        %v7052 = vunpack.c.h.b16 %v5411
        %v7053 = vunpack.c.l.b16 %v5412
        %v7054 = vunpack.c.h.b16 %v5412
        %v7055 = vunpack.c.l.b16 %v5413
        %v7056 = vunpack.c.h.b16 %v5413
        %v7057 = vunpack.c.l.b16 %v5414
        %v7058 = vunpack.c.h.b16 %v5414
        %v7059 = vunpack.c.l.b16 %v5415
        %v7060 = vunpack.c.h.b16 %v5415
        %v7061 = vunpack.c.l.b16 %v5416
        %v7062 = vunpack.c.h.b16 %v5416
        %v7063 = vunpack.c.l.b16 %v5417
        %v7064 = vunpack.c.h.b16 %v5417
        %v7065 = vunpack.c.l.b16 %v5418
        %v7066 = vunpack.c.h.b16 %v5418
        %v7067 = vunpack.c.l.b16 %v5419
        %v7068 = vunpack.c.h.b16 %v5419
        %v7069 = vunpack.c.l.b16 %v5420
        %v7070 = vunpack.c.h.b16 %v5420
        %v7071 = vunpack.c.l.b16 %v5421
        %v7072 = vunpack.c.h.b16 %v5421
        %v7073 = vunpack.c.l.b16 %v5422
        %v7074 = vunpack.c.h.b16 %v5422
        %v7075 = vunpack.c.l.b16 %v5423
        %v7076 = vunpack.c.h.b16 %v5423
        %v7077 = vunpack.c.l.b16 %v5424
        %v7078 = vunpack.c.h.b16 %v5424
        %v7079 = vunpack.c.l.b16 %v5425
        %v7080 = vunpack.c.h.b16 %v5425
        %v7081 = vunpack.c.l.b16 %v5426
        %v7082 = vunpack.c.h.b16 %v5426
        %v7083 = vunpack.c.l.b16 %v5427
        %v7084 = vunpack.c.h.b16 %v5427
        %v7085 = vunpack.c.l.b16 %v5428
        %v7086 = vunpack.c.h.b16 %v5428
        %v7087 = vunpack.c.l.b16 %v5429
        %v7088 = vunpack.c.h.b16 %v5429
        %v7089 = vunpack.c.l.b16 %v5430
        %v7090 = vunpack.c.h.b16 %v5430
        %v7091 = vunpack.c.l.b16 %v5431
        %v7092 = vunpack.c.h.b16 %v5431
        %v7093 = vunpack.c.l.b16 %v5432
        %v7094 = vunpack.c.h.b16 %v5432
        %v7095 = vunpack.c.l.b16 %v5433
        %v7096 = vunpack.c.h.b16 %v5433
        %v7097 = vunpack.c.l.b16 %v5434
        %v7098 = vunpack.c.h.b16 %v5434
        %v7099 = vunpack.c.l.b16 %v5435
        %v7100 = vunpack.c.h.b16 %v5435
        %v7101 = vunpack.c.l.b16 %v5436
        %v7102 = vunpack.c.h.b16 %v5436
        %v7103 = vunpack.c.l.b16 %v5437
        %v7104 = vunpack.c.h.b16 %v5437
        %v7105 = vunpack.c.l.b16 %v5438
        %v7106 = vunpack.c.h.b16 %v5438
        %v7107 = vunpack.c.l.b16 %v5439
        %v7108 = vunpack.c.h.b16 %v5439
        %v7109 = vunpack.c.l.b16 %v5440
        %v7110 = vunpack.c.h.b16 %v5440
        %v7111 = vunpack.c.l.b16 %v5441
        %v7112 = vunpack.c.h.b16 %v5441
        %v7113 = vunpack.c.l.b16 %v5442
        %v7114 = vunpack.c.h.b16 %v5442
        %v7115 = vunpack.c.l.b16 %v5443
        %v7116 = vunpack.c.h.b16 %v5443
        %v7117 = vunpack.c.l.b16 %v5444
        %v7118 = vunpack.c.h.b16 %v5444
        %v7119 = vunpack.c.l.b16 %v5445
        %v7120 = vunpack.c.h.b16 %v5445
        %v7121 = vunpack.c.l.b16 %v5446
        %v7122 = vunpack.c.h.b16 %v5446
        %v7123 = vunpack.c.l.b16 %v5447
        %v7124 = vunpack.c.h.b16 %v5447
        %v7125 = vunpack.c.l.b16 %v5448
        %v7126 = vunpack.c.h.b16 %v5448
        %v7127 = vunpack.c.l.b16 %v5449
        %v7128 = vunpack.c.h.b16 %v5449
        %v7129 = vunpack.c.l.b16 %v5450
        %v7130 = vunpack.c.h.b16 %v5450
        %v7131 = vunpack.c.l.b16 %v5451
        %v7132 = vunpack.c.h.b16 %v5451
        %v7133 = vunpack.c.l.b16 %v5452
        %v7134 = vunpack.c.h.b16 %v5452
        %v7135 = vunpack.c.l.b16 %v5453
        %v7136 = vunpack.c.h.b16 %v5453
        %v7137 = vunpack.c.l.b16 %v5454
        %v7138 = vunpack.c.h.b16 %v5454
        %v7139 = vunpack.c.l.b16 %v5455
        %v7140 = vunpack.c.h.b16 %v5455
        %v7141 = vunpack.c.l.b16 %v5456
        %v7142 = vunpack.c.h.b16 %v5456
        %v7143 = vunpack.c.l.b16 %v5457
        %v7144 = vunpack.c.h.b16 %v5457
        %v7145 = vunpack.c.l.b16 %v5458
        %v7146 = vunpack.c.h.b16 %v5458
        %v7147 = vunpack.c.l.b16 %v5459
        %v7148 = vunpack.c.h.b16 %v5459
        %v7149 = vunpack.c.l.b16 %v5460
        %v7150 = vunpack.c.h.b16 %v5460
        %v7151 = vunpack.c.l.b16 %v5461
        %v7152 = vunpack.c.h.b16 %v5461
        %v7153 = vunpack.c.l.b16 %v5462
        %v7154 = vunpack.c.h.b16 %v5462
        %v7155 = vunpack.c.l.b16 %v5463
        %v7156 = vunpack.c.h.b16 %v5463
        %v7157 = vunpack.c.l.b16 %v5464
        %v7158 = vunpack.c.h.b16 %v5464
        %v7159 = vunpack.c.l.b16 %v5465
        %v7160 = vunpack.c.h.b16 %v5465
        %v7161 = vunpack.c.l.b16 %v5466
        %v7162 = vunpack.c.h.b16 %v5466
        %v7163 = vunpack.c.l.b16 %v5467
        %v7164 = vunpack.c.h.b16 %v5467
        %v7165 = vunpack.c.l.b16 %v5468
        %v7166 = vunpack.c.h.b16 %v5468
        %v7167 = vunpack.c.l.b16 %v5469
        %v7168 = vunpack.c.h.b16 %v5469
        %v7169 = vunpack.c.l.b16 %v5470
        %v7170 = vunpack.c.h.b16 %v5470
        %v7171 = vunpack.c.l.b16 %v5471
        %v7172 = vunpack.c.h.b16 %v5471
        %v7173 = vunpack.c.l.b16 %v5472
        %v7174 = vunpack.c.h.b16 %v5472
        %v7175 = vunpack.c.l.b16 %v5473
        %v7176 = vunpack.c.h.b16 %v5473
        %v7177 = vunpack.c.l.b16 %v5474
        %v7178 = vunpack.c.h.b16 %v5474
        %v7179 = vunpack.c.l.b16 %v5475
        %v7180 = vunpack.c.h.b16 %v5475
        %v7181 = vunpack.c.l.b16 %v5476
        %v7182 = vunpack.c.h.b16 %v5476
        %v7183 = vunpack.c.l.b16 %v5477
        %v7184 = vunpack.c.h.b16 %v5477
        %v7185 = vunpack.c.l.b16 %v5478
        %v7186 = vunpack.c.h.b16 %v5478
        %v7187 = vunpack.c.l.b16 %v5479
        %v7188 = vunpack.c.h.b16 %v5479
        %v7189 = vunpack.c.l.b16 %v5480
        %v7190 = vunpack.c.h.b16 %v5480
        %v7191 = vunpack.c.l.b16 %v5481
        %v7192 = vunpack.c.h.b16 %v5481
        %v7193 = vunpack.c.l.b16 %v5482
        %v7194 = vunpack.c.h.b16 %v5482
        %v7195 = vunpack.c.l.b16 %v5483
        %v7196 = vunpack.c.h.b16 %v5483
        %v7197 = vunpack.c.l.b16 %v5484
        %v7198 = vunpack.c.h.b16 %v5484
        %v7199 = vunpack.c.l.b16 %v5485
        %v7200 = vunpack.c.h.b16 %v5485
        %v7201 = vunpack.c.l.b16 %v5486
        %v7202 = vunpack.c.h.b16 %v5486
        %v7203 = vunpack.c.l.b16 %v5487
        %v7204 = vunpack.c.h.b16 %v5487
        %v7205 = vunpack.c.l.b16 %v5488
        %v7206 = vunpack.c.h.b16 %v5488
        %v7207 = vunpack.c.l.b16 %v5489
        %v7208 = vunpack.c.h.b16 %v5489
        %v7209 = vunpack.c.l.b16 %v5490
        %v7210 = vunpack.c.h.b16 %v5490
        %v7211 = vunpack.c.l.b16 %v5491
        %v7212 = vunpack.c.h.b16 %v5491
        %v7213 = vunpack.c.l.b16 %v5492
        %v7214 = vunpack.c.h.b16 %v5492
        %v7215 = vunpack.c.l.b16 %v5493
        %v7216 = vunpack.c.h.b16 %v5493
        %v7217 = vunpack.c.l.b16 %v5494
        %v7218 = vunpack.c.h.b16 %v5494
        %v7219 = vunpack.c.l.b16 %v5495
        %v7220 = vunpack.c.h.b16 %v5495
        %v7221 = vunpack.c.l.b16 %v5496
        %v7222 = vunpack.c.h.b16 %v5496
        %v7223 = vunpack.c.l.b16 %v5497
        %v7224 = vunpack.c.h.b16 %v5497
        %v7225 = vunpack.c.l.b16 %v5498
        %v7226 = vunpack.c.h.b16 %v5498
        %v7227 = vpack.c.b16 %v6081, %v6075
        %v7228 = vpack.c.b16 %v6082, %v6076
        %v7229 = vpack.c.b16 %v6083, %v6077
        %v7230 = vpack.c.b16 %v6084, %v6078
        %v7231 = vpack.c.b16 %v6085, %v6079
        %v7232 = vpack.c.b16 %v6086, %v6080
        %v7233 = vpack.c.b16 %v6093, %v6087
        %v7234 = vpack.c.b16 %v6094, %v6088
        %v7235 = vpack.c.b16 %v6095, %v6089
        %v7236 = vpack.c.b16 %v6096, %v6090
        %v7237 = vpack.c.b16 %v6097, %v6091
        %v7238 = vpack.c.b16 %v6098, %v6092
        %v7239 = vpack.c.b16 %v6105, %v6099
        %v7240 = vpack.c.b16 %v6106, %v6100
        %v7241 = vpack.c.b16 %v6107, %v6101
        %v7242 = vpack.c.b16 %v6108, %v6102
        %v7243 = vpack.c.b16 %v6109, %v6103
        %v7244 = vpack.c.b16 %v6110, %v6104
        %v7245 = vpack.c.b16 %v6117, %v6111
        %v7246 = vpack.c.b16 %v6118, %v6112
        %v7247 = vpack.c.b16 %v6119, %v6113
        %v7248 = vpack.c.b16 %v6120, %v6114
        %v7249 = vpack.c.b16 %v6121, %v6115
        %v7250 = vpack.c.b16 %v6122, %v6116
        %v7251 = vpack.c.b16 %v6129, %v6123
        %v7252 = vpack.c.b16 %v6130, %v6124
        %v7253 = vpack.c.b16 %v6131, %v6125
        %v7254 = vpack.c.b16 %v6132, %v6126
        %v7255 = vpack.c.b16 %v6133, %v6127
        %v7256 = vpack.c.b16 %v6134, %v6128
        %v7257 = vpack.c.b16 %v6141, %v6135
        %v7258 = vpack.c.b16 %v6142, %v6136
        %v7259 = vpack.c.b16 %v6143, %v6137
        %v7260 = vpack.c.b16 %v6144, %v6138
        %v7261 = vpack.c.b16 %v6145, %v6139
        %v7262 = vpack.c.b16 %v6146, %v6140
        %v7263 = vpack.c.b16 %v6153, %v6147
        %v7264 = vpack.c.b16 %v6154, %v6148
        %v7265 = vpack.c.b16 %v6155, %v6149
        %v7266 = vpack.c.b16 %v6156, %v6150
        %v7267 = vpack.c.b16 %v6157, %v6151
        %v7268 = vpack.c.b16 %v6158, %v6152
        %v7269 = vpack.c.b16 %v6165, %v6159
        %v7270 = vpack.c.b16 %v6166, %v6160
        %v7271 = vpack.c.b16 %v6167, %v6161
        %v7272 = vpack.c.b16 %v6168, %v6162
        %v7273 = vpack.c.b16 %v6169, %v6163
        %v7274 = vpack.c.b16 %v6170, %v6164
        %v7275 = vpack.c.b16 %v6177, %v6171
        %v7276 = vpack.c.b16 %v6178, %v6172
        %v7277 = vpack.c.b16 %v6179, %v6173
        %v7278 = vpack.c.b16 %v6180, %v6174
        %v7279 = vpack.c.b16 %v6181, %v6175
        %v7280 = vpack.c.b16 %v6182, %v6176
        %v7281 = vpack.c.b16 %v6189, %v6183
        %v7282 = vpack.c.b16 %v6190, %v6184
        %v7283 = vpack.c.b16 %v6191, %v6185
        %v7284 = vpack.c.b16 %v6192, %v6186
        %v7285 = vpack.c.b16 %v6193, %v6187
        %v7286 = vpack.c.b16 %v6194, %v6188
        %v7287 = vpack.c.b16 %v6201, %v6195
        %v7288 = vpack.c.b16 %v6202, %v6196
        %v7289 = vpack.c.b16 %v6203, %v6197
        %v7290 = vpack.c.b16 %v6204, %v6198
        %v7291 = vpack.c.b16 %v6205, %v6199
        %v7292 = vpack.c.b16 %v6206, %v6200
        %v7293 = vpack.c.b16 %v6213, %v6207
        %v7294 = vpack.c.b16 %v6214, %v6208
        %v7295 = vpack.c.b16 %v6215, %v6209
        %v7296 = vpack.c.b16 %v6216, %v6210
        %v7297 = vpack.c.b16 %v6217, %v6211
        %v7298 = vpack.c.b16 %v6218, %v6212
        %v7299 = vpack.c.b16 %v6225, %v6219
        %v7300 = vpack.c.b16 %v6226, %v6220
        %v7301 = vpack.c.b16 %v6227, %v6221
        %v7302 = vpack.c.b16 %v6228, %v6222
        %v7303 = vpack.c.b16 %v6229, %v6223
        %v7304 = vpack.c.b16 %v6230, %v6224
        %v7305 = vpack.c.b16 %v6237, %v6231
        %v7306 = vpack.c.b16 %v6238, %v6232
        %v7307 = vpack.c.b16 %v6239, %v6233
        %v7308 = vpack.c.b16 %v6240, %v6234
        %v7309 = vpack.c.b16 %v6241, %v6235
        %v7310 = vpack.c.b16 %v6242, %v6236
        %v7311 = vpack.c.b16 %v6249, %v6243
        %v7312 = vpack.c.b16 %v6250, %v6244
        %v7313 = vpack.c.b16 %v6251, %v6245
        %v7314 = vpack.c.b16 %v6252, %v6246
        %v7315 = vpack.c.b16 %v6253, %v6247
        %v7316 = vpack.c.b16 %v6254, %v6248
        %v7317 = vpack.c.b16 %v6261, %v6255
        %v7318 = vpack.c.b16 %v6262, %v6256
        %v7319 = vpack.c.b16 %v6263, %v6257
        %v7320 = vpack.c.b16 %v6264, %v6258
        %v7321 = vpack.c.b16 %v6265, %v6259
        %v7322 = vpack.c.b16 %v6266, %v6260
        %v7323 = vpack.c.b16 %v6273, %v6267
        %v7324 = vpack.c.b16 %v6274, %v6268
        %v7325 = vpack.c.b16 %v6275, %v6269
        %v7326 = vpack.c.b16 %v6276, %v6270
        %v7327 = vpack.c.b16 %v6277, %v6271
        %v7328 = vpack.c.b16 %v6278, %v6272
        %v7329 = vpack.c.b16 %v6285, %v6279
        %v7330 = vpack.c.b16 %v6286, %v6280
        %v7331 = vpack.c.b16 %v6287, %v6281
        %v7332 = vpack.c.b16 %v6288, %v6282
        %v7333 = vpack.c.b16 %v6289, %v6283
        %v7334 = vpack.c.b16 %v6290, %v6284
        %v7335 = vpack.c.b16 %v6297, %v6291
        %v7336 = vpack.c.b16 %v6298, %v6292
        %v7337 = vpack.c.b16 %v6299, %v6293
        %v7338 = vpack.c.b16 %v6300, %v6294
        %v7339 = vpack.c.b16 %v6301, %v6295
        %v7340 = vpack.c.b16 %v6302, %v6296
        %v7341 = vpack.c.b16 %v6309, %v6303
        %v7342 = vpack.c.b16 %v6310, %v6304
        %v7343 = vpack.c.b16 %v6311, %v6305
        %v7344 = vpack.c.b16 %v6312, %v6306
        %v7345 = vpack.c.b16 %v6313, %v6307
        %v7346 = vpack.c.b16 %v6314, %v6308
        %v7347 = vpack.c.b16 %v6321, %v6315
        %v7348 = vpack.c.b16 %v6322, %v6316
        %v7349 = vpack.c.b16 %v6323, %v6317
        %v7350 = vpack.c.b16 %v6324, %v6318
        %v7351 = vpack.c.b16 %v6325, %v6319
        %v7352 = vpack.c.b16 %v6326, %v6320
        %v7353 = vpack.c.b16 %v6333, %v6327
        %v7354 = vpack.c.b16 %v6334, %v6328
        %v7355 = vpack.c.b16 %v6335, %v6329
        %v7356 = vpack.c.b16 %v6336, %v6330
        %v7357 = vpack.c.b16 %v6337, %v6331
        %v7358 = vpack.c.b16 %v6338, %v6332
        %v7359 = vpack.c.b16 %v6345, %v6339
        %v7360 = vpack.c.b16 %v6346, %v6340
        %v7361 = vpack.c.b16 %v6347, %v6341
        %v7362 = vpack.c.b16 %v6348, %v6342
        %v7363 = vpack.c.b16 %v6349, %v6343
        %v7364 = vpack.c.b16 %v6350, %v6344
        %v7365 = vpack.c.b16 %v6357, %v6351
        %v7366 = vpack.c.b16 %v6358, %v6352
        %v7367 = vpack.c.b16 %v6359, %v6353
        %v7368 = vpack.c.b16 %v6360, %v6354
        %v7369 = vpack.c.b16 %v6361, %v6355
        %v7370 = vpack.c.b16 %v6362, %v6356
        %v7371 = vpack.c.b16 %v6369, %v6363
        %v7372 = vpack.c.b16 %v6370, %v6364
        %v7373 = vpack.c.b16 %v6371, %v6365
        %v7374 = vpack.c.b16 %v6372, %v6366
        %v7375 = vpack.c.b16 %v6373, %v6367
        %v7376 = vpack.c.b16 %v6374, %v6368
        %v7377 = vpack.c.b16 %v6381, %v6375
        %v7378 = vpack.c.b16 %v6382, %v6376
        %v7379 = vpack.c.b16 %v6383, %v6377
        %v7380 = vpack.c.b16 %v6384, %v6378
        %v7381 = vpack.c.b16 %v6385, %v6379
        %v7382 = vpack.c.b16 %v6386, %v6380
        %v7383 = vpack.c.b16 %v6393, %v6387
        %v7384 = vpack.c.b16 %v6394, %v6388
        %v7385 = vpack.c.b16 %v6395, %v6389
        %v7386 = vpack.c.b16 %v6396, %v6390
        %v7387 = vpack.c.b16 %v6397, %v6391
        %v7388 = vpack.c.b16 %v6398, %v6392
        %v7389 = vpack.c.b16 %v6405, %v6399
        %v7390 = vpack.c.b16 %v6406, %v6400
        %v7391 = vpack.c.b16 %v6407, %v6401
        %v7392 = vpack.c.b16 %v6408, %v6402
        %v7393 = vpack.c.b16 %v6409, %v6403
        %v7394 = vpack.c.b16 %v6410, %v6404
        %v7395 = vpack.c.b16 %v6417, %v6411
        %v7396 = vpack.c.b16 %v6418, %v6412
        %v7397 = vpack.c.b16 %v6419, %v6413
        %v7398 = vpack.c.b16 %v6420, %v6414
        %v7399 = vpack.c.b16 %v6421, %v6415
        %v7400 = vpack.c.b16 %v6422, %v6416
        %v7401 = vpack.c.b16 %v6429, %v6423
        %v7402 = vpack.c.b16 %v6430, %v6424
        %v7403 = vpack.c.b16 %v6431, %v6425
        %v7404 = vpack.c.b16 %v6432, %v6426
        %v7405 = vpack.c.b16 %v6433, %v6427
        %v7406 = vpack.c.b16 %v6434, %v6428
        %v7407 = vpack.c.b16 %v6441, %v6435
        %v7408 = vpack.c.b16 %v6442, %v6436
        %v7409 = vpack.c.b16 %v6443, %v6437
        %v7410 = vpack.c.b16 %v6444, %v6438
        %v7411 = vpack.c.b16 %v6445, %v6439
        %v7412 = vpack.c.b16 %v6446, %v6440
        %v7413 = vpack.c.b16 %v6453, %v6447
        %v7414 = vpack.c.b16 %v6454, %v6448
        %v7415 = vpack.c.b16 %v6455, %v6449
        %v7416 = vpack.c.b16 %v6456, %v6450
        %v7417 = vpack.c.b16 %v6457, %v6451
        %v7418 = vpack.c.b16 %v6458, %v6452
        %v7419 = vpack.c.b16 %v6465, %v6459
        %v7420 = vpack.c.b16 %v6466, %v6460
        %v7421 = vpack.c.b16 %v6467, %v6461
        %v7422 = vpack.c.b16 %v6468, %v6462
        %v7423 = vpack.c.b16 %v6469, %v6463
        %v7424 = vpack.c.b16 %v6470, %v6464
        %v7425 = vpack.c.b16 %v6477, %v6471
        %v7426 = vpack.c.b16 %v6478, %v6472
        %v7427 = vpack.c.b16 %v6479, %v6473
        %v7428 = vpack.c.b16 %v6480, %v6474
        %v7429 = vpack.c.b16 %v6481, %v6475
        %v7430 = vpack.c.b16 %v6482, %v6476
        %v7431 = vpack.c.b16 %v6489, %v6483
        %v7432 = vpack.c.b16 %v6490, %v6484
        %v7433 = vpack.c.b16 %v6491, %v6485
        %v7434 = vpack.c.b16 %v6492, %v6486
        %v7435 = vpack.c.b16 %v6493, %v6487
        %v7436 = vpack.c.b16 %v6494, %v6488
        %v7437 = vpack.c.b16 %v6501, %v6495
        %v7438 = vpack.c.b16 %v6502, %v6496
        %v7439 = vpack.c.b16 %v6503, %v6497
        %v7440 = vpack.c.b16 %v6504, %v6498
        %v7441 = vpack.c.b16 %v6505, %v6499
        %v7442 = vpack.c.b16 %v6506, %v6500
        %v7443 = vpack.c.b16 %v6513, %v6507
        %v7444 = vpack.c.b16 %v6514, %v6508
        %v7445 = vpack.c.b16 %v6515, %v6509
        %v7446 = vpack.c.b16 %v6516, %v6510
        %v7447 = vpack.c.b16 %v6517, %v6511
        %v7448 = vpack.c.b16 %v6518, %v6512
        %v7449 = vpack.c.b16 %v6525, %v6519
        %v7450 = vpack.c.b16 %v6526, %v6520
        %v7451 = vpack.c.b16 %v6527, %v6521
        %v7452 = vpack.c.b16 %v6528, %v6522
        %v7453 = vpack.c.b16 %v6529, %v6523
        %v7454 = vpack.c.b16 %v6530, %v6524
        %v7455 = vpack.c.b16 %v6537, %v6531
        %v7456 = vpack.c.b16 %v6538, %v6532
        %v7457 = vpack.c.b16 %v6539, %v6533
        %v7458 = vpack.c.b16 %v6540, %v6534
        %v7459 = vpack.c.b16 %v6541, %v6535
        %v7460 = vpack.c.b16 %v6542, %v6536
        %v7461 = vpack.c.b16 %v6549, %v6543
        %v7462 = vpack.c.b16 %v6550, %v6544
        %v7463 = vpack.c.b16 %v6551, %v6545
        %v7464 = vpack.c.b16 %v6552, %v6546
        %v7465 = vpack.c.b16 %v6553, %v6547
        %v7466 = vpack.c.b16 %v6554, %v6548
        %v7467 = vpack.c.b16 %v6561, %v6555
        %v7468 = vpack.c.b16 %v6562, %v6556
        %v7469 = vpack.c.b16 %v6563, %v6557
        %v7470 = vpack.c.b16 %v6564, %v6558
        %v7471 = vpack.c.b16 %v6565, %v6559
        %v7472 = vpack.c.b16 %v6566, %v6560
        %v7473 = vpack.c.b16 %v6573, %v6567
        %v7474 = vpack.c.b16 %v6574, %v6568
        %v7475 = vpack.c.b16 %v6575, %v6569
        %v7476 = vpack.c.b16 %v6576, %v6570
        %v7477 = vpack.c.b16 %v6577, %v6571
        %v7478 = vpack.c.b16 %v6578, %v6572
        %v7479 = vpack.c.b16 %v6585, %v6579
        %v7480 = vpack.c.b16 %v6586, %v6580
        %v7481 = vpack.c.b16 %v6587, %v6581
        %v7482 = vpack.c.b16 %v6588, %v6582
        %v7483 = vpack.c.b16 %v6589, %v6583
        %v7484 = vpack.c.b16 %v6590, %v6584
        %v7485 = vpack.c.b16 %v6597, %v6591
        %v7486 = vpack.c.b16 %v6598, %v6592
        %v7487 = vpack.c.b16 %v6599, %v6593
        %v7488 = vpack.c.b16 %v6600, %v6594
        %v7489 = vpack.c.b16 %v6601, %v6595
        %v7490 = vpack.c.b16 %v6602, %v6596
        %v7491 = vpack.c.b16 %v6609, %v6603
        %v7492 = vpack.c.b16 %v6610, %v6604
        %v7493 = vpack.c.b16 %v6611, %v6605
        %v7494 = vpack.c.b16 %v6612, %v6606
        %v7495 = vpack.c.b16 %v6613, %v6607
        %v7496 = vpack.c.b16 %v6614, %v6608
        %v7497 = vpack.c.b16 %v6621, %v6615
        %v7498 = vpack.c.b16 %v6622, %v6616
        %v7499 = vpack.c.b16 %v6623, %v6617
        %v7500 = vpack.c.b16 %v6624, %v6618
        %v7501 = vpack.c.b16 %v6625, %v6619
        %v7502 = vpack.c.b16 %v6626, %v6620
        %v7503 = vpack.c.b16 %v6633, %v6627
        %v7504 = vpack.c.b16 %v6634, %v6628
        %v7505 = vpack.c.b16 %v6635, %v6629
        %v7506 = vpack.c.b16 %v6636, %v6630
        %v7507 = vpack.c.b16 %v6637, %v6631
        %v7508 = vpack.c.b16 %v6638, %v6632
        %v7509 = vpack.c.b16 %v6645, %v6639
        %v7510 = vpack.c.b16 %v6646, %v6640
        %v7511 = vpack.c.b16 %v6647, %v6641
        %v7512 = vpack.c.b16 %v6648, %v6642
        %v7513 = vpack.c.b16 %v6649, %v6643
        %v7514 = vpack.c.b16 %v6650, %v6644
        %v7515 = vpack.c.b16 %v6657, %v6651
        %v7516 = vpack.c.b16 %v6658, %v6652
        %v7517 = vpack.c.b16 %v6659, %v6653
        %v7518 = vpack.c.b16 %v6660, %v6654
        %v7519 = vpack.c.b16 %v6661, %v6655
        %v7520 = vpack.c.b16 %v6662, %v6656
        %v7521 = vpack.c.b16 %v6669, %v6663
        %v7522 = vpack.c.b16 %v6670, %v6664
        %v7523 = vpack.c.b16 %v6671, %v6665
        %v7524 = vpack.c.b16 %v6672, %v6666
        %v7525 = vpack.c.b16 %v6673, %v6667
        %v7526 = vpack.c.b16 %v6674, %v6668
        %v7527 = vpack.c.b16 %v6681, %v6675
        %v7528 = vpack.c.b16 %v6682, %v6676
        %v7529 = vpack.c.b16 %v6683, %v6677
        %v7530 = vpack.c.b16 %v6684, %v6678
        %v7531 = vpack.c.b16 %v6685, %v6679
        %v7532 = vpack.c.b16 %v6686, %v6680
        %v7533 = vpack.c.b16 %v6693, %v6687
        %v7534 = vpack.c.b16 %v6694, %v6688
        %v7535 = vpack.c.b16 %v6695, %v6689
        %v7536 = vpack.c.b16 %v6696, %v6690
        %v7537 = vpack.c.b16 %v6697, %v6691
        %v7538 = vpack.c.b16 %v6698, %v6692
        %v7539 = vpack.c.b16 %v6705, %v6699
        %v7540 = vpack.c.b16 %v6706, %v6700
        %v7541 = vpack.c.b16 %v6707, %v6701
        %v7542 = vpack.c.b16 %v6708, %v6702
        %v7543 = vpack.c.b16 %v6709, %v6703
        %v7544 = vpack.c.b16 %v6710, %v6704
        %v7545 = vpack.c.b16 %v6717, %v6711
        %v7546 = vpack.c.b16 %v6718, %v6712
        %v7547 = vpack.c.b16 %v6719, %v6713
        %v7548 = vpack.c.b16 %v6720, %v6714
        %v7549 = vpack.c.b16 %v6721, %v6715
        %v7550 = vpack.c.b16 %v6722, %v6716
        %v7551 = vpack.c.b16 %v6729, %v6723
        %v7552 = vpack.c.b16 %v6730, %v6724
        %v7553 = vpack.c.b16 %v6731, %v6725
        %v7554 = vpack.c.b16 %v6732, %v6726
        %v7555 = vpack.c.b16 %v6733, %v6727
        %v7556 = vpack.c.b16 %v6734, %v6728
        %v7557 = vpack.c.b16 %v6741, %v6735
        %v7558 = vpack.c.b16 %v6742, %v6736
        %v7559 = vpack.c.b16 %v6743, %v6737
        %v7560 = vpack.c.b16 %v6744, %v6738
        %v7561 = vpack.c.b16 %v6745, %v6739
        %v7562 = vpack.c.b16 %v6746, %v6740
        %v7563 = vpack.c.b16 %v6753, %v6747
        %v7564 = vpack.c.b16 %v6754, %v6748
        %v7565 = vpack.c.b16 %v6755, %v6749
        %v7566 = vpack.c.b16 %v6756, %v6750
        %v7567 = vpack.c.b16 %v6757, %v6751
        %v7568 = vpack.c.b16 %v6758, %v6752
        %v7569 = vpack.c.b16 %v6765, %v6759
        %v7570 = vpack.c.b16 %v6766, %v6760
        %v7571 = vpack.c.b16 %v6767, %v6761
        %v7572 = vpack.c.b16 %v6768, %v6762
        %v7573 = vpack.c.b16 %v6769, %v6763
        %v7574 = vpack.c.b16 %v6770, %v6764
        %v7575 = vpack.c.b16 %v6777, %v6771
        %v7576 = vpack.c.b16 %v6778, %v6772
        %v7577 = vpack.c.b16 %v6779, %v6773
        %v7578 = vpack.c.b16 %v6780, %v6774
        %v7579 = vpack.c.b16 %v6781, %v6775
        %v7580 = vpack.c.b16 %v6782, %v6776
        %v7581 = vpack.c.b16 %v6789, %v6783
        %v7582 = vpack.c.b16 %v6790, %v6784
        %v7583 = vpack.c.b16 %v6791, %v6785
        %v7584 = vpack.c.b16 %v6792, %v6786
        %v7585 = vpack.c.b16 %v6793, %v6787
        %v7586 = vpack.c.b16 %v6794, %v6788
        %v7587 = vpack.c.b16 %v6801, %v6795
        %v7588 = vpack.c.b16 %v6802, %v6796
        %v7589 = vpack.c.b16 %v6803, %v6797
        %v7590 = vpack.c.b16 %v6804, %v6798
        %v7591 = vpack.c.b16 %v6805, %v6799
        %v7592 = vpack.c.b16 %v6806, %v6800
        %v7593 = vpack.c.b16 %v6813, %v6807
        %v7594 = vpack.c.b16 %v6814, %v6808
        %v7595 = vpack.c.b16 %v6815, %v6809
        %v7596 = vpack.c.b16 %v6816, %v6810
        %v7597 = vpack.c.b16 %v6817, %v6811
        %v7598 = vpack.c.b16 %v6818, %v6812
        %v7599 = vpack.c.b16 %v6825, %v6819
        %v7600 = vpack.c.b16 %v6826, %v6820
        %v7601 = vpack.c.b16 %v6827, %v6821
        %v7602 = vpack.c.b16 %v6828, %v6822
        %v7603 = vpack.c.b16 %v6829, %v6823
        %v7604 = vpack.c.b16 %v6830, %v6824
        %v7605 = vpack.c.b16 %v6837, %v6831
        %v7606 = vpack.c.b16 %v6838, %v6832
        %v7607 = vpack.c.b16 %v6839, %v6833
        %v7608 = vpack.c.b16 %v6840, %v6834
        %v7609 = vpack.c.b16 %v6841, %v6835
        %v7610 = vpack.c.b16 %v6842, %v6836
        %v7611 = vpack.c.b16 %v6849, %v6843
        %v7612 = vpack.c.b16 %v6850, %v6844
        %v7613 = vpack.c.b16 %v6851, %v6845
        %v7614 = vpack.c.b16 %v6852, %v6846
        %v7615 = vpack.c.b16 %v6853, %v6847
        %v7616 = vpack.c.b16 %v6854, %v6848
        %v7617 = vpack.c.b16 %v6861, %v6855
        %v7618 = vpack.c.b16 %v6862, %v6856
        %v7619 = vpack.c.b16 %v6863, %v6857
        %v7620 = vpack.c.b16 %v6864, %v6858
        %v7621 = vpack.c.b16 %v6865, %v6859
        %v7622 = vpack.c.b16 %v6866, %v6860
        %v7623 = vpack.c.b16 %v6873, %v6867
        %v7624 = vpack.c.b16 %v6874, %v6868
        %v7625 = vpack.c.b16 %v6875, %v6869
        %v7626 = vpack.c.b16 %v6876, %v6870
        %v7627 = vpack.c.b16 %v6877, %v6871
        %v7628 = vpack.c.b16 %v6878, %v6872
        %v7629 = vpack.c.b16 %v6885, %v6879
        %v7630 = vpack.c.b16 %v6886, %v6880
        %v7631 = vpack.c.b16 %v6887, %v6881
        %v7632 = vpack.c.b16 %v6888, %v6882
        %v7633 = vpack.c.b16 %v6889, %v6883
        %v7634 = vpack.c.b16 %v6890, %v6884
        %v7635 = vpack.c.b16 %v6897, %v6891
        %v7636 = vpack.c.b16 %v6898, %v6892
        %v7637 = vpack.c.b16 %v6899, %v6893
        %v7638 = vpack.c.b16 %v6900, %v6894
        %v7639 = vpack.c.b16 %v6901, %v6895
        %v7640 = vpack.c.b16 %v6902, %v6896
        %v7641 = vpack.c.b16 %v6909, %v6903
        %v7642 = vpack.c.b16 %v6910, %v6904
        %v7643 = vpack.c.b16 %v6911, %v6905
        %v7644 = vpack.c.b16 %v6912, %v6906
        %v7645 = vpack.c.b16 %v6913, %v6907
        %v7646 = vpack.c.b16 %v6914, %v6908
        %v7647 = vpack.c.b16 %v6921, %v6915
        %v7648 = vpack.c.b16 %v6922, %v6916
        %v7649 = vpack.c.b16 %v6923, %v6917
        %v7650 = vpack.c.b16 %v6924, %v6918
        %v7651 = vpack.c.b16 %v6925, %v6919
        %v7652 = vpack.c.b16 %v6926, %v6920
        %v7653 = vpack.c.b16 %v6933, %v6927
        %v7654 = vpack.c.b16 %v6934, %v6928
        %v7655 = vpack.c.b16 %v6935, %v6929
        %v7656 = vpack.c.b16 %v6936, %v6930
        %v7657 = vpack.c.b16 %v6937, %v6931
        %v7658 = vpack.c.b16 %v6938, %v6932
        %v7659 = vpack.c.b16 %v6945, %v6939
        %v7660 = vpack.c.b16 %v6946, %v6940
        %v7661 = vpack.c.b16 %v6947, %v6941
        %v7662 = vpack.c.b16 %v6948, %v6942
        %v7663 = vpack.c.b16 %v6949, %v6943
        %v7664 = vpack.c.b16 %v6950, %v6944
        %v7665 = vpack.c.b16 %v6957, %v6951
        %v7666 = vpack.c.b16 %v6958, %v6952
        %v7667 = vpack.c.b16 %v6959, %v6953
        %v7668 = vpack.c.b16 %v6960, %v6954
        %v7669 = vpack.c.b16 %v6961, %v6955
        %v7670 = vpack.c.b16 %v6962, %v6956
        %v7671 = vpack.c.b16 %v6969, %v6963
        %v7672 = vpack.c.b16 %v6970, %v6964
        %v7673 = vpack.c.b16 %v6971, %v6965
        %v7674 = vpack.c.b16 %v6972, %v6966
        %v7675 = vpack.c.b16 %v6973, %v6967
        %v7676 = vpack.c.b16 %v6974, %v6968
        %v7677 = vpack.c.b16 %v6981, %v6975
        %v7678 = vpack.c.b16 %v6982, %v6976
        %v7679 = vpack.c.b16 %v6983, %v6977
        %v7680 = vpack.c.b16 %v6984, %v6978
        %v7681 = vpack.c.b16 %v6985, %v6979
        %v7682 = vpack.c.b16 %v6986, %v6980
        %v7683 = vpack.c.b16 %v6993, %v6987
        %v7684 = vpack.c.b16 %v6994, %v6988
        %v7685 = vpack.c.b16 %v6995, %v6989
        %v7686 = vpack.c.b16 %v6996, %v6990
        %v7687 = vpack.c.b16 %v6997, %v6991
        %v7688 = vpack.c.b16 %v6998, %v6992
        %v7689 = vpack.c.b16 %v7005, %v6999
        %v7690 = vpack.c.b16 %v7006, %v7000
        %v7691 = vpack.c.b16 %v7007, %v7001
        %v7692 = vpack.c.b16 %v7008, %v7002
        %v7693 = vpack.c.b16 %v7009, %v7003
        %v7694 = vpack.c.b16 %v7010, %v7004
        %v7695 = vpack.c.b16 %v7017, %v7011
        %v7696 = vpack.c.b16 %v7018, %v7012
        %v7697 = vpack.c.b16 %v7019, %v7013
        %v7698 = vpack.c.b16 %v7020, %v7014
        %v7699 = vpack.c.b16 %v7021, %v7015
        %v7700 = vpack.c.b16 %v7022, %v7016
        %v7701 = vpack.c.b16 %v7029, %v7023
        %v7702 = vpack.c.b16 %v7030, %v7024
        %v7703 = vpack.c.b16 %v7031, %v7025
        %v7704 = vpack.c.b16 %v7032, %v7026
        %v7705 = vpack.c.b16 %v7033, %v7027
        %v7706 = vpack.c.b16 %v7034, %v7028
        %v7707 = vpack.c.b16 %v7041, %v7035
        %v7708 = vpack.c.b16 %v7042, %v7036
        %v7709 = vpack.c.b16 %v7043, %v7037
        %v7710 = vpack.c.b16 %v7044, %v7038
        %v7711 = vpack.c.b16 %v7045, %v7039
        %v7712 = vpack.c.b16 %v7046, %v7040
        %v7713 = vpack.c.b16 %v7053, %v7047
        %v7714 = vpack.c.b16 %v7054, %v7048
        %v7715 = vpack.c.b16 %v7055, %v7049
        %v7716 = vpack.c.b16 %v7056, %v7050
        %v7717 = vpack.c.b16 %v7057, %v7051
        %v7718 = vpack.c.b16 %v7058, %v7052
        %v7719 = vpack.c.b16 %v7065, %v7059
        %v7720 = vpack.c.b16 %v7066, %v7060
        %v7721 = vpack.c.b16 %v7067, %v7061
        %v7722 = vpack.c.b16 %v7068, %v7062
        %v7723 = vpack.c.b16 %v7069, %v7063
        %v7724 = vpack.c.b16 %v7070, %v7064
        %v7725 = vpack.c.b16 %v7077, %v7071
        %v7726 = vpack.c.b16 %v7078, %v7072
        %v7727 = vpack.c.b16 %v7079, %v7073
        %v7728 = vpack.c.b16 %v7080, %v7074
        %v7729 = vpack.c.b16 %v7081, %v7075
        %v7730 = vpack.c.b16 %v7082, %v7076
        %v7731 = vpack.c.b16 %v7089, %v7083
        %v7732 = vpack.c.b16 %v7090, %v7084
        %v7733 = vpack.c.b16 %v7091, %v7085
        %v7734 = vpack.c.b16 %v7092, %v7086
        %v7735 = vpack.c.b16 %v7093, %v7087
        %v7736 = vpack.c.b16 %v7094, %v7088
        %v7737 = vpack.c.b16 %v7101, %v7095
        %v7738 = vpack.c.b16 %v7102, %v7096
        %v7739 = vpack.c.b16 %v7103, %v7097
        %v7740 = vpack.c.b16 %v7104, %v7098
        %v7741 = vpack.c.b16 %v7105, %v7099
        %v7742 = vpack.c.b16 %v7106, %v7100
        %v7743 = vpack.c.b16 %v7113, %v7107
        %v7744 = vpack.c.b16 %v7114, %v7108
        %v7745 = vpack.c.b16 %v7115, %v7109
        %v7746 = vpack.c.b16 %v7116, %v7110
        %v7747 = vpack.c.b16 %v7117, %v7111
        %v7748 = vpack.c.b16 %v7118, %v7112
        %v7749 = vpack.c.b16 %v7125, %v7119
        %v7750 = vpack.c.b16 %v7126, %v7120
        %v7751 = vpack.c.b16 %v7127, %v7121
        %v7752 = vpack.c.b16 %v7128, %v7122
        %v7753 = vpack.c.b16 %v7129, %v7123
        %v7754 = vpack.c.b16 %v7130, %v7124
        %v7755 = vpack.c.b16 %v7137, %v7131
        %v7756 = vpack.c.b16 %v7138, %v7132
        %v7757 = vpack.c.b16 %v7139, %v7133
        %v7758 = vpack.c.b16 %v7140, %v7134
        %v7759 = vpack.c.b16 %v7141, %v7135
        %v7760 = vpack.c.b16 %v7142, %v7136
        %v7761 = vpack.c.b16 %v7149, %v7143
        %v7762 = vpack.c.b16 %v7150, %v7144
        %v7763 = vpack.c.b16 %v7151, %v7145
        %v7764 = vpack.c.b16 %v7152, %v7146
        %v7765 = vpack.c.b16 %v7153, %v7147
        %v7766 = vpack.c.b16 %v7154, %v7148
        %v7767 = vpack.c.b16 %v7161, %v7155
        %v7768 = vpack.c.b16 %v7162, %v7156
        %v7769 = vpack.c.b16 %v7163, %v7157
        %v7770 = vpack.c.b16 %v7164, %v7158
        %v7771 = vpack.c.b16 %v7165, %v7159
        %v7772 = vpack.c.b16 %v7166, %v7160
        %v7773 = vpack.c.b16 %v7173, %v7167
        %v7774 = vpack.c.b16 %v7174, %v7168
        %v7775 = vpack.c.b16 %v7175, %v7169
        %v7776 = vpack.c.b16 %v7176, %v7170
        %v7777 = vpack.c.b16 %v7177, %v7171
        %v7778 = vpack.c.b16 %v7178, %v7172
        %v7779 = vpack.c.b16 %v7185, %v7179
        %v7780 = vpack.c.b16 %v7186, %v7180
        %v7781 = vpack.c.b16 %v7187, %v7181
        %v7782 = vpack.c.b16 %v7188, %v7182
        %v7783 = vpack.c.b16 %v7189, %v7183
        %v7784 = vpack.c.b16 %v7190, %v7184
        %v7785 = vpack.c.b16 %v7197, %v7191
        %v7786 = vpack.c.b16 %v7198, %v7192
        %v7787 = vpack.c.b16 %v7199, %v7193
        %v7788 = vpack.c.b16 %v7200, %v7194
        %v7789 = vpack.c.b16 %v7201, %v7195
        %v7790 = vpack.c.b16 %v7202, %v7196
        %v7791 = vpack.c.b16 %v7209, %v7203
        %v7792 = vpack.c.b16 %v7210, %v7204
        %v7793 = vpack.c.b16 %v7211, %v7205
        %v7794 = vpack.c.b16 %v7212, %v7206
        %v7795 = vpack.c.b16 %v7213, %v7207
        %v7796 = vpack.c.b16 %v7214, %v7208
        %v7797 = vpack.c.b16 %v7221, %v7215
        %v7798 = vpack.c.b16 %v7222, %v7216
        %v7799 = vpack.c.b16 %v7223, %v7217
        %v7800 = vpack.c.b16 %v7224, %v7218
        %v7801 = vpack.c.b16 %v7225, %v7219
        %v7802 = vpack.c.b16 %v7226, %v7220
        %8379 = vmatprep.subr.bf16.mxu0 %v7228
        %8380 = vmatpush1.bf16.msra.mxu0 %v7227
        %8381 = vmatprep.subr.bf16.mxu0 %v7234
        %8382 = vmatpush1.bf16.msra.mxu0 %v7233
        %8383 = vmatprep.subr.bf16.mxu0 %v7240
        %8384 = vmatpush1.bf16.msra.mxu0 %v7239
        %8385 = vmatprep.subr.bf16.mxu0 %v7246
        %8386 = vmatpush1.bf16.msra.mxu0 %v7245
        %8387 = vmatprep.subr.bf16.mxu0 %v7252
        %8388 = vmatpush1.bf16.msra.mxu0 %v7251
        %8389 = vmatprep.subr.bf16.mxu0 %v7258
        %8390 = vmatpush1.bf16.msra.mxu0 %v7257
        %8391 = vmatprep.subr.bf16.mxu0 %v7264
        %8392 = vmatpush1.bf16.msra.mxu0 %v7263
        %8393 = vmatprep.subr.bf16.mxu0 %v7270
        %8394 = vmatpush1.bf16.msra.mxu0 %v7269
        %8395 = vmatprep.subr.bf16.mxu0 %v7276
        %8396 = vmatpush1.bf16.msra.mxu0 %v7275
        %8397 = vmatprep.subr.bf16.mxu0 %v7282
        %8398 = vmatpush1.bf16.msra.mxu0 %v7281
        %8399 = vmatprep.subr.bf16.mxu0 %v7288
        %8400 = vmatpush1.bf16.msra.mxu0 %v7287
        %8401 = vmatprep.subr.bf16.mxu0 %v7294
        %8402 = vmatpush1.bf16.msra.mxu0 %v7293
        %8403 = vmatprep.subr.bf16.mxu0 %v7300
        %8404 = vmatpush1.bf16.msra.mxu0 %v7299
        %8405 = vmatprep.subr.bf16.mxu0 %v7306
        %8406 = vmatpush1.bf16.msra.mxu0 %v7305
        %8407 = vmatprep.subr.bf16.mxu0 %v7312
        %8408 = vmatpush1.bf16.msra.mxu0 %v7311
        %8409 = vmatprep.subr.bf16.mxu0 %v7318
        %8410 = vmatpush1.bf16.msra.mxu0 %v7317
        %8411 = vmatprep.mubr.bf16.mxu0 %v4912
        %8412 = vmatmul.mubr.bf16.gmra.mrb[0].mxu0 %v4911
        %v8413 = vpop.f32.mrb[0].mxu0
        %v8414 = vadd.f32 0.0, %v8413
        %v8415 = vpop.f32.mrb[0].mxu0
        %v8416 = vadd.f32 0.0, %v8415
        %v8417 = vpop.f32.mrb[0].mxu0
        %v8418 = vadd.f32 0.0, %v8417
        %v8419 = vpop.f32.mrb[0].mxu0
        %v8420 = vadd.f32 0.0, %v8419
        %8421 = vdwg.mxu0
        %8422 = vmatprep.subr.bf16.mxu0 %v7324
        %8423 = vmatpush1.bf16.msra.mxu0 %v7323
        %8424 = vmatprep.subr.bf16.mxu0 %v7330
        %8425 = vmatpush1.bf16.msra.mxu0 %v7329
        %8426 = vmatprep.subr.bf16.mxu0 %v7336
        %8427 = vmatpush1.bf16.msra.mxu0 %v7335
        %8428 = vmatprep.subr.bf16.mxu0 %v7342
        %8429 = vmatpush1.bf16.msra.mxu0 %v7341
        %8430 = vmatprep.subr.bf16.mxu0 %v7348
        %8431 = vmatpush1.bf16.msra.mxu0 %v7347
        %8432 = vmatprep.subr.bf16.mxu0 %v7354
        %8433 = vmatpush1.bf16.msra.mxu0 %v7353
        %8434 = vmatprep.subr.bf16.mxu0 %v7360
        %8435 = vmatpush1.bf16.msra.mxu0 %v7359
        %8436 = vmatprep.subr.bf16.mxu0 %v7366
        %8437 = vmatpush1.bf16.msra.mxu0 %v7365
        %8438 = vmatprep.subr.bf16.mxu0 %v7372
        %8439 = vmatpush1.bf16.msra.mxu0 %v7371
        %8440 = vmatprep.subr.bf16.mxu0 %v7378
        %8441 = vmatpush1.bf16.msra.mxu0 %v7377
        %8442 = vmatprep.subr.bf16.mxu0 %v7384
        %8443 = vmatpush1.bf16.msra.mxu0 %v7383
        %8444 = vmatprep.subr.bf16.mxu0 %v7390
        %8445 = vmatpush1.bf16.msra.mxu0 %v7389
        %8446 = vmatprep.subr.bf16.mxu0 %v7396
        %8447 = vmatpush1.bf16.msra.mxu0 %v7395
        %8448 = vmatprep.subr.bf16.mxu0 %v7402
        %8449 = vmatpush1.bf16.msra.mxu0 %v7401
        %8450 = vmatprep.subr.bf16.mxu0 %v7408
        %8451 = vmatpush1.bf16.msra.mxu0 %v7407
        %8452 = vmatprep.subr.bf16.mxu0 %v7414
        %8453 = vmatpush1.bf16.msra.mxu0 %v7413
        %8454 = vmatprep.mubr.bf16.mxu0 %v4914
        %8455 = vmatmul.mubr.bf16.gmra.mrb[0].mxu0 %v4913
        %v8456 = vpop.f32.mrb[0].mxu0
        %v8457 = vadd.f32 %v8414, %v8456
        %v8458 = vpop.f32.mrb[0].mxu0
        %v8459 = vadd.f32 %v8416, %v8458
        %v8460 = vpop.f32.mrb[0].mxu0
        %v8461 = vadd.f32 %v8418, %v8460
        %v8462 = vpop.f32.mrb[0].mxu0
        %v8463 = vadd.f32 %v8420, %v8462
        %8464 = vdwg.mxu0
        %8465 = vmatprep.subr.bf16.mxu0 %v7420
        %8466 = vmatpush1.bf16.msra.mxu0 %v7419
        %8467 = vmatprep.subr.bf16.mxu0 %v7426
        %8468 = vmatpush1.bf16.msra.mxu0 %v7425
        %8469 = vmatprep.subr.bf16.mxu0 %v7432
        %8470 = vmatpush1.bf16.msra.mxu0 %v7431
        %8471 = vmatprep.subr.bf16.mxu0 %v7438
        %8472 = vmatpush1.bf16.msra.mxu0 %v7437
        %8473 = vmatprep.subr.bf16.mxu0 %v7444
        %8474 = vmatpush1.bf16.msra.mxu0 %v7443
        %8475 = vmatprep.subr.bf16.mxu0 %v7450
        %8476 = vmatpush1.bf16.msra.mxu0 %v7449
        %8477 = vmatprep.subr.bf16.mxu0 %v7456
        %8478 = vmatpush1.bf16.msra.mxu0 %v7455
        %8479 = vmatprep.subr.bf16.mxu0 %v7462
        %8480 = vmatpush1.bf16.msra.mxu0 %v7461
        %8481 = vmatprep.subr.bf16.mxu0 %v7468
        %8482 = vmatpush1.bf16.msra.mxu0 %v7467
        %8483 = vmatprep.subr.bf16.mxu0 %v7474
        %8484 = vmatpush1.bf16.msra.mxu0 %v7473
        %8485 = vmatprep.subr.bf16.mxu0 %v7480
        %8486 = vmatpush1.bf16.msra.mxu0 %v7479
        %8487 = vmatprep.subr.bf16.mxu0 %v7486
        %8488 = vmatpush1.bf16.msra.mxu0 %v7485
        %8489 = vmatprep.subr.bf16.mxu0 %v7492
        %8490 = vmatpush1.bf16.msra.mxu0 %v7491
        %8491 = vmatprep.subr.bf16.mxu0 %v7498
        %8492 = vmatpush1.bf16.msra.mxu0 %v7497
        %8493 = vmatprep.subr.bf16.mxu0 %v7504
        %8494 = vmatpush1.bf16.msra.mxu0 %v7503
        %8495 = vmatprep.subr.bf16.mxu0 %v7510
        %8496 = vmatpush1.bf16.msra.mxu0 %v7509
        %8497 = vmatprep.mubr.bf16.mxu0 %v4916
        %8498 = vmatmul.mubr.bf16.gmra.mrb[0].mxu0 %v4915
        %v8499 = vpop.f32.mrb[0].mxu0
        %v8500 = vadd.f32 %v8457, %v8499
        %v8501 = vpop.f32.mrb[0].mxu0
        %v8502 = vadd.f32 %v8459, %v8501
        %v8503 = vpop.f32.mrb[0].mxu0
        %v8504 = vadd.f32 %v8461, %v8503
        %v8505 = vpop.f32.mrb[0].mxu0
        %v8506 = vadd.f32 %v8463, %v8505
        %8507 = vdwg.mxu0
        %8508 = vmatprep.subr.bf16.mxu0 %v7516
        %8509 = vmatpush1.bf16.msra.mxu0 %v7515
        %8510 = vmatprep.subr.bf16.mxu0 %v7522
        %8511 = vmatpush1.bf16.msra.mxu0 %v7521
        %8512 = vmatprep.subr.bf16.mxu0 %v7528
        %8513 = vmatpush1.bf16.msra.mxu0 %v7527
        %8514 = vmatprep.subr.bf16.mxu0 %v7534
        %8515 = vmatpush1.bf16.msra.mxu0 %v7533
        %8516 = vmatprep.subr.bf16.mxu0 %v7540
        %8517 = vmatpush1.bf16.msra.mxu0 %v7539
        %8518 = vmatprep.subr.bf16.mxu0 %v7546
        %8519 = vmatpush1.bf16.msra.mxu0 %v7545
        %8520 = vmatprep.subr.bf16.mxu0 %v7552
        %8521 = vmatpush1.bf16.msra.mxu0 %v7551
        %8522 = vmatprep.subr.bf16.mxu0 %v7558
        %8523 = vmatpush1.bf16.msra.mxu0 %v7557
        %8524 = vmatprep.subr.bf16.mxu0 %v7564
        %8525 = vmatpush1.bf16.msra.mxu0 %v7563
        %8526 = vmatprep.subr.bf16.mxu0 %v7570
        %8527 = vmatpush1.bf16.msra.mxu0 %v7569
        %8528 = vmatprep.subr.bf16.mxu0 %v7576
        %8529 = vmatpush1.bf16.msra.mxu0 %v7575
        %8530 = vmatprep.subr.bf16.mxu0 %v7582
        %8531 = vmatpush1.bf16.msra.mxu0 %v7581
        %8532 = vmatprep.subr.bf16.mxu0 %v7588
        %8533 = vmatpush1.bf16.msra.mxu0 %v7587
        %8534 = vmatprep.subr.bf16.mxu0 %v7594
        %8535 = vmatpush1.bf16.msra.mxu0 %v7593
        %8536 = vmatprep.subr.bf16.mxu0 %v7600
        %8537 = vmatpush1.bf16.msra.mxu0 %v7599
        %8538 = vmatprep.subr.bf16.mxu0 %v7606
        %8539 = vmatpush1.bf16.msra.mxu0 %v7605
        %8540 = vmatprep.mubr.bf16.mxu0 %v4918
        %8541 = vmatmul.mubr.bf16.gmra.mrb[0].mxu0 %v4917
        %v8542 = vpop.f32.mrb[0].mxu0
        %v8543 = vadd.f32 %v8500, %v8542
        %v8544 = vpop.f32.mrb[0].mxu0
        %v8545 = vadd.f32 %v8502, %v8544
        %v8546 = vpop.f32.mrb[0].mxu0
        %v8547 = vadd.f32 %v8504, %v8546
        %v8548 = vpop.f32.mrb[0].mxu0
        %v8549 = vadd.f32 %v8506, %v8548
        %8550 = vdwg.mxu0
        %8551 = vmatprep.subr.bf16.mxu0 %v7612
        %8552 = vmatpush1.bf16.msra.mxu0 %v7611
        %8553 = vmatprep.subr.bf16.mxu0 %v7618
        %8554 = vmatpush1.bf16.msra.mxu0 %v7617
        %8555 = vmatprep.subr.bf16.mxu0 %v7624
        %8556 = vmatpush1.bf16.msra.mxu0 %v7623
        %8557 = vmatprep.subr.bf16.mxu0 %v7630
        %8558 = vmatpush1.bf16.msra.mxu0 %v7629
        %8559 = vmatprep.subr.bf16.mxu0 %v7636
        %8560 = vmatpush1.bf16.msra.mxu0 %v7635
        %8561 = vmatprep.subr.bf16.mxu0 %v7642
        %8562 = vmatpush1.bf16.msra.mxu0 %v7641
        %8563 = vmatprep.subr.bf16.mxu0 %v7648
        %8564 = vmatpush1.bf16.msra.mxu0 %v7647
        %8565 = vmatprep.subr.bf16.mxu0 %v7654
        %8566 = vmatpush1.bf16.msra.mxu0 %v7653
        %8567 = vmatprep.subr.bf16.mxu0 %v7660
        %8568 = vmatpush1.bf16.msra.mxu0 %v7659
        %8569 = vmatprep.subr.bf16.mxu0 %v7666
        %8570 = vmatpush1.bf16.msra.mxu0 %v7665
        %8571 = vmatprep.subr.bf16.mxu0 %v7672
        %8572 = vmatpush1.bf16.msra.mxu0 %v7671
        %8573 = vmatprep.subr.bf16.mxu0 %v7678
        %8574 = vmatpush1.bf16.msra.mxu0 %v7677
        %8575 = vmatprep.subr.bf16.mxu0 %v7684
        %8576 = vmatpush1.bf16.msra.mxu0 %v7683
        %8577 = vmatprep.subr.bf16.mxu0 %v7690
        %8578 = vmatpush1.bf16.msra.mxu0 %v7689
        %8579 = vmatprep.subr.bf16.mxu0 %v7696
        %8580 = vmatpush1.bf16.msra.mxu0 %v7695
        %8581 = vmatprep.subr.bf16.mxu0 %v7702
        %8582 = vmatpush1.bf16.msra.mxu0 %v7701
        %8583 = vmatprep.mubr.bf16.mxu0 %v4920
        %8584 = vmatmul.mubr.bf16.gmra.mrb[0].mxu0 %v4919
        %v8585 = vpop.f32.mrb[0].mxu0
        %v8586 = vadd.f32 %v8543, %v8585
        %v8587 = vpop.f32.mrb[0].mxu0
        %v8588 = vadd.f32 %v8545, %v8587
        %v8589 = vpop.f32.mrb[0].mxu0
        %v8590 = vadd.f32 %v8547, %v8589
        %v8591 = vpop.f32.mrb[0].mxu0
        %v8592 = vadd.f32 %v8549, %v8591
        %8593 = vdwg.mxu0
        %8594 = vmatprep.subr.bf16.mxu0 %v7708
        %8595 = vmatpush1.bf16.msra.mxu0 %v7707
        %8596 = vmatprep.subr.bf16.mxu0 %v7714
        %8597 = vmatpush1.bf16.msra.mxu0 %v7713
        %8598 = vmatprep.subr.bf16.mxu0 %v7720
        %8599 = vmatpush1.bf16.msra.mxu0 %v7719
        %8600 = vmatprep.subr.bf16.mxu0 %v7726
        %8601 = vmatpush1.bf16.msra.mxu0 %v7725
        %8602 = vmatprep.subr.bf16.mxu0 %v7732
        %8603 = vmatpush1.bf16.msra.mxu0 %v7731
        %8604 = vmatprep.subr.bf16.mxu0 %v7738
        %8605 = vmatpush1.bf16.msra.mxu0 %v7737
        %8606 = vmatprep.subr.bf16.mxu0 %v7744
        %8607 = vmatpush1.bf16.msra.mxu0 %v7743
        %8608 = vmatprep.subr.bf16.mxu0 %v7750
        %8609 = vmatpush1.bf16.msra.mxu0 %v7749
        %8610 = vmatprep.subr.bf16.mxu0 %v7756
        %8611 = vmatpush1.bf16.msra.mxu0 %v7755
        %8612 = vmatprep.subr.bf16.mxu0 %v7762
        %8613 = vmatpush1.bf16.msra.mxu0 %v7761
        %8614 = vmatprep.subr.bf16.mxu0 %v7768
        %8615 = vmatpush1.bf16.msra.mxu0 %v7767
        %8616 = vmatprep.subr.bf16.mxu0 %v7774
        %8617 = vmatpush1.bf16.msra.mxu0 %v7773
        %8618 = vmatprep.subr.bf16.mxu0 %v7780
        %8619 = vmatpush1.bf16.msra.mxu0 %v7779
        %8620 = vmatprep.subr.bf16.mxu0 %v7786
        %8621 = vmatpush1.bf16.msra.mxu0 %v7785
        %8622 = vmatprep.subr.bf16.mxu0 %v7792
        %8623 = vmatpush1.bf16.msra.mxu0 %v7791
        %8624 = vmatprep.subr.bf16.mxu0 %v7798
        %8625 = vmatpush1.bf16.msra.mxu0 %v7797
        %8626 = vmatprep.mubr.bf16.mxu0 %v4922
        %8627 = vmatmul.mubr.bf16.gmra.mrb[0].mxu0 %v4921
        %v8628 = vpop.f32.mrb[0].mxu0
        %v8629 = vadd.f32 %v8586, %v8628
        %v8630 = vpop.f32.mrb[0].mxu0
        %v8631 = vadd.f32 %v8588, %v8630
        %v8632 = vpop.f32.mrb[0].mxu0
        %v8633 = vadd.f32 %v8590, %v8632
        %v8634 = vpop.f32.mrb[0].mxu0
        %v8635 = vadd.f32 %v8592, %v8634
        %8636 = vdwg.mxu0
        %8637 = vmatprep.subr.bf16.mxu0 %v7230
        %8638 = vmatpush1.bf16.msra.mxu0 %v7229
        %8639 = vmatprep.subr.bf16.mxu0 %v7236
        %8640 = vmatpush1.bf16.msra.mxu0 %v7235
        %8641 = vmatprep.subr.bf16.mxu0 %v7242
        %8642 = vmatpush1.bf16.msra.mxu0 %v7241
        %8643 = vmatprep.subr.bf16.mxu0 %v7248
        %8644 = vmatpush1.bf16.msra.mxu0 %v7247
        %8645 = vmatprep.subr.bf16.mxu0 %v7254
        %8646 = vmatpush1.bf16.msra.mxu0 %v7253
        %8647 = vmatprep.subr.bf16.mxu0 %v7260
        %8648 = vmatpush1.bf16.msra.mxu0 %v7259
        %8649 = vmatprep.subr.bf16.mxu0 %v7266
        %8650 = vmatpush1.bf16.msra.mxu0 %v7265
        %8651 = vmatprep.subr.bf16.mxu0 %v7272
        %8652 = vmatpush1.bf16.msra.mxu0 %v7271
        %8653 = vmatprep.subr.bf16.mxu0 %v7278
        %8654 = vmatpush1.bf16.msra.mxu0 %v7277
        %8655 = vmatprep.subr.bf16.mxu0 %v7284
        %8656 = vmatpush1.bf16.msra.mxu0 %v7283
        %8657 = vmatprep.subr.bf16.mxu0 %v7290
        %8658 = vmatpush1.bf16.msra.mxu0 %v7289
        %8659 = vmatprep.subr.bf16.mxu0 %v7296
        %8660 = vmatpush1.bf16.msra.mxu0 %v7295
        %8661 = vmatprep.subr.bf16.mxu0 %v7302
        %8662 = vmatpush1.bf16.msra.mxu0 %v7301
        %8663 = vmatprep.subr.bf16.mxu0 %v7308
        %8664 = vmatpush1.bf16.msra.mxu0 %v7307
        %8665 = vmatprep.subr.bf16.mxu0 %v7314
        %8666 = vmatpush1.bf16.msra.mxu0 %v7313
        %8667 = vmatprep.subr.bf16.mxu0 %v7320
        %8668 = vmatpush1.bf16.msra.mxu0 %v7319
        %8669 = vmatprep.mubr.bf16.mxu0 %v4912
        %8670 = vmatmul.mubr.bf16.gmra.mrb[0].mxu0 %v4911
        %v8671 = vpop.f32.mrb[0].mxu0
        %v8672 = vadd.f32 0.0, %v8671
        %v8673 = vpop.f32.mrb[0].mxu0
        %v8674 = vadd.f32 0.0, %v8673
        %v8675 = vpop.f32.mrb[0].mxu0
        %v8676 = vadd.f32 0.0, %v8675
        %v8677 = vpop.f32.mrb[0].mxu0
        %v8678 = vadd.f32 0.0, %v8677
        %8679 = vdwg.mxu0
        %8680 = vmatprep.subr.bf16.mxu0 %v7326
        %8681 = vmatpush1.bf16.msra.mxu0 %v7325
        %8682 = vmatprep.subr.bf16.mxu0 %v7332
        %8683 = vmatpush1.bf16.msra.mxu0 %v7331
        %8684 = vmatprep.subr.bf16.mxu0 %v7338
        %8685 = vmatpush1.bf16.msra.mxu0 %v7337
        %8686 = vmatprep.subr.bf16.mxu0 %v7344
        %8687 = vmatpush1.bf16.msra.mxu0 %v7343
        %8688 = vmatprep.subr.bf16.mxu0 %v7350
        %8689 = vmatpush1.bf16.msra.mxu0 %v7349
        %8690 = vmatprep.subr.bf16.mxu0 %v7356
        %8691 = vmatpush1.bf16.msra.mxu0 %v7355
        %8692 = vmatprep.subr.bf16.mxu0 %v7362
        %8693 = vmatpush1.bf16.msra.mxu0 %v7361
        %8694 = vmatprep.subr.bf16.mxu0 %v7368
        %8695 = vmatpush1.bf16.msra.mxu0 %v7367
        %8696 = vmatprep.subr.bf16.mxu0 %v7374
        %8697 = vmatpush1.bf16.msra.mxu0 %v7373
        %8698 = vmatprep.subr.bf16.mxu0 %v7380
        %8699 = vmatpush1.bf16.msra.mxu0 %v7379
        %8700 = vmatprep.subr.bf16.mxu0 %v7386
        %8701 = vmatpush1.bf16.msra.mxu0 %v7385
        %8702 = vmatprep.subr.bf16.mxu0 %v7392
        %8703 = vmatpush1.bf16.msra.mxu0 %v7391
        %8704 = vmatprep.subr.bf16.mxu0 %v7398
        %8705 = vmatpush1.bf16.msra.mxu0 %v7397
        %8706 = vmatprep.subr.bf16.mxu0 %v7404
        %8707 = vmatpush1.bf16.msra.mxu0 %v7403
        %8708 = vmatprep.subr.bf16.mxu0 %v7410
        %8709 = vmatpush1.bf16.msra.mxu0 %v7409
        %8710 = vmatprep.subr.bf16.mxu0 %v7416
        %8711 = vmatpush1.bf16.msra.mxu0 %v7415
        %8712 = vmatprep.mubr.bf16.mxu0 %v4914
        %8713 = vmatmul.mubr.bf16.gmra.mrb[0].mxu0 %v4913
        %v8714 = vpop.f32.mrb[0].mxu0
        %v8715 = vadd.f32 %v8672, %v8714
        %v8716 = vpop.f32.mrb[0].mxu0
        %v8717 = vadd.f32 %v8674, %v8716
        %v8718 = vpop.f32.mrb[0].mxu0
        %v8719 = vadd.f32 %v8676, %v8718
        %v8720 = vpop.f32.mrb[0].mxu0
        %v8721 = vadd.f32 %v8678, %v8720
        %8722 = vdwg.mxu0
        %8723 = vmatprep.subr.bf16.mxu0 %v7422
        %8724 = vmatpush1.bf16.msra.mxu0 %v7421
        %8725 = vmatprep.subr.bf16.mxu0 %v7428
        %8726 = vmatpush1.bf16.msra.mxu0 %v7427
        %8727 = vmatprep.subr.bf16.mxu0 %v7434
        %8728 = vmatpush1.bf16.msra.mxu0 %v7433
        %8729 = vmatprep.subr.bf16.mxu0 %v7440
        %8730 = vmatpush1.bf16.msra.mxu0 %v7439
        %8731 = vmatprep.subr.bf16.mxu0 %v7446
        %8732 = vmatpush1.bf16.msra.mxu0 %v7445
        %8733 = vmatprep.subr.bf16.mxu0 %v7452
        %8734 = vmatpush1.bf16.msra.mxu0 %v7451
        %8735 = vmatprep.subr.bf16.mxu0 %v7458
        %8736 = vmatpush1.bf16.msra.mxu0 %v7457
        %8737 = vmatprep.subr.bf16.mxu0 %v7464
        %8738 = vmatpush1.bf16.msra.mxu0 %v7463
        %8739 = vmatprep.subr.bf16.mxu0 %v7470
        %8740 = vmatpush1.bf16.msra.mxu0 %v7469
        %8741 = vmatprep.subr.bf16.mxu0 %v7476
        %8742 = vmatpush1.bf16.msra.mxu0 %v7475
        %8743 = vmatprep.subr.bf16.mxu0 %v7482
        %8744 = vmatpush1.bf16.msra.mxu0 %v7481
        %8745 = vmatprep.subr.bf16.mxu0 %v7488
        %8746 = vmatpush1.bf16.msra.mxu0 %v7487
        %8747 = vmatprep.subr.bf16.mxu0 %v7494
        %8748 = vmatpush1.bf16.msra.mxu0 %v7493
        %8749 = vmatprep.subr.bf16.mxu0 %v7500
        %8750 = vmatpush1.bf16.msra.mxu0 %v7499
        %8751 = vmatprep.subr.bf16.mxu0 %v7506
        %8752 = vmatpush1.bf16.msra.mxu0 %v7505
        %8753 = vmatprep.subr.bf16.mxu0 %v7512
        %8754 = vmatpush1.bf16.msra.mxu0 %v7511
        %8755 = vmatprep.mubr.bf16.mxu0 %v4916
        %8756 = vmatmul.mubr.bf16.gmra.mrb[0].mxu0 %v4915
        %v8757 = vpop.f32.mrb[0].mxu0
        %v8758 = vadd.f32 %v8715, %v8757
        %v8759 = vpop.f32.mrb[0].mxu0
        %v8760 = vadd.f32 %v8717, %v8759
        %v8761 = vpop.f32.mrb[0].mxu0
        %v8762 = vadd.f32 %v8719, %v8761
        %v8763 = vpop.f32.mrb[0].mxu0
        %v8764 = vadd.f32 %v8721, %v8763
        %8765 = vdwg.mxu0
        %8766 = vmatprep.subr.bf16.mxu0 %v7518
        %8767 = vmatpush1.bf16.msra.mxu0 %v7517
        %8768 = vmatprep.subr.bf16.mxu0 %v7524
        %8769 = vmatpush1.bf16.msra.mxu0 %v7523
        %8770 = vmatprep.subr.bf16.mxu0 %v7530
        %8771 = vmatpush1.bf16.msra.mxu0 %v7529
        %8772 = vmatprep.subr.bf16.mxu0 %v7536
        %8773 = vmatpush1.bf16.msra.mxu0 %v7535
        %8774 = vmatprep.subr.bf16.mxu0 %v7542
        %8775 = vmatpush1.bf16.msra.mxu0 %v7541
        %8776 = vmatprep.subr.bf16.mxu0 %v7548
        %8777 = vmatpush1.bf16.msra.mxu0 %v7547
        %8778 = vmatprep.subr.bf16.mxu0 %v7554
        %8779 = vmatpush1.bf16.msra.mxu0 %v7553
        %8780 = vmatprep.subr.bf16.mxu0 %v7560
        %8781 = vmatpush1.bf16.msra.mxu0 %v7559
        %8782 = vmatprep.subr.bf16.mxu0 %v7566
        %8783 = vmatpush1.bf16.msra.mxu0 %v7565
        %8784 = vmatprep.subr.bf16.mxu0 %v7572
        %8785 = vmatpush1.bf16.msra.mxu0 %v7571
        %8786 = vmatprep.subr.bf16.mxu0 %v7578
        %8787 = vmatpush1.bf16.msra.mxu0 %v7577
        %8788 = vmatprep.subr.bf16.mxu0 %v7584
        %8789 = vmatpush1.bf16.msra.mxu0 %v7583
        %8790 = vmatprep.subr.bf16.mxu0 %v7590
        %8791 = vmatpush1.bf16.msra.mxu0 %v7589
        %8792 = vmatprep.subr.bf16.mxu0 %v7596
        %8793 = vmatpush1.bf16.msra.mxu0 %v7595
        %8794 = vmatprep.subr.bf16.mxu0 %v7602
        %8795 = vmatpush1.bf16.msra.mxu0 %v7601
        %8796 = vmatprep.subr.bf16.mxu0 %v7608
        %8797 = vmatpush1.bf16.msra.mxu0 %v7607
        %8798 = vmatprep.mubr.bf16.mxu0 %v4918
        %8799 = vmatmul.mubr.bf16.gmra.mrb[0].mxu0 %v4917
        %v8800 = vpop.f32.mrb[0].mxu0
        %v8801 = vadd.f32 %v8758, %v8800
        %v8802 = vpop.f32.mrb[0].mxu0
        %v8803 = vadd.f32 %v8760, %v8802
        %v8804 = vpop.f32.mrb[0].mxu0
        %v8805 = vadd.f32 %v8762, %v8804
        %v8806 = vpop.f32.mrb[0].mxu0
        %v8807 = vadd.f32 %v8764, %v8806
        %8808 = vdwg.mxu0
        %8809 = vmatprep.subr.bf16.mxu0 %v7614
        %8810 = vmatpush1.bf16.msra.mxu0 %v7613
        %8811 = vmatprep.subr.bf16.mxu0 %v7620
        %8812 = vmatpush1.bf16.msra.mxu0 %v7619
        %8813 = vmatprep.subr.bf16.mxu0 %v7626
        %8814 = vmatpush1.bf16.msra.mxu0 %v7625
        %8815 = vmatprep.subr.bf16.mxu0 %v7632
        %8816 = vmatpush1.bf16.msra.mxu0 %v7631
        %8817 = vmatprep.subr.bf16.mxu0 %v7638
        %8818 = vmatpush1.bf16.msra.mxu0 %v7637
        %8819 = vmatprep.subr.bf16.mxu0 %v7644
        %8820 = vmatpush1.bf16.msra.mxu0 %v7643
        %8821 = vmatprep.subr.bf16.mxu0 %v7650
        %8822 = vmatpush1.bf16.msra.mxu0 %v7649
        %8823 = vmatprep.subr.bf16.mxu0 %v7656
        %8824 = vmatpush1.bf16.msra.mxu0 %v7655
        %8825 = vmatprep.subr.bf16.mxu0 %v7662
        %8826 = vmatpush1.bf16.msra.mxu0 %v7661
        %8827 = vmatprep.subr.bf16.mxu0 %v7668
        %8828 = vmatpush1.bf16.msra.mxu0 %v7667
        %8829 = vmatprep.subr.bf16.mxu0 %v7674
        %8830 = vmatpush1.bf16.msra.mxu0 %v7673
        %8831 = vmatprep.subr.bf16.mxu0 %v7680
        %8832 = vmatpush1.bf16.msra.mxu0 %v7679
        %8833 = vmatprep.subr.bf16.mxu0 %v7686
        %8834 = vmatpush1.bf16.msra.mxu0 %v7685
        %8835 = vmatprep.subr.bf16.mxu0 %v7692
        %8836 = vmatpush1.bf16.msra.mxu0 %v7691
        %8837 = vmatprep.subr.bf16.mxu0 %v7698
        %8838 = vmatpush1.bf16.msra.mxu0 %v7697
        %8839 = vmatprep.subr.bf16.mxu0 %v7704
        %8840 = vmatpush1.bf16.msra.mxu0 %v7703
        %8841 = vmatprep.mubr.bf16.mxu0 %v4920
        %8842 = vmatmul.mubr.bf16.gmra.mrb[0].mxu0 %v4919
        %v8843 = vpop.f32.mrb[0].mxu0
        %v8844 = vadd.f32 %v8801, %v8843
        %v8845 = vpop.f32.mrb[0].mxu0
        %v8846 = vadd.f32 %v8803, %v8845
        %v8847 = vpop.f32.mrb[0].mxu0
        %v8848 = vadd.f32 %v8805, %v8847
        %v8849 = vpop.f32.mrb[0].mxu0
        %v8850 = vadd.f32 %v8807, %v8849
        %8851 = vdwg.mxu0
        %8852 = vmatprep.subr.bf16.mxu0 %v7710
        %8853 = vmatpush1.bf16.msra.mxu0 %v7709
        %8854 = vmatprep.subr.bf16.mxu0 %v7716
        %8855 = vmatpush1.bf16.msra.mxu0 %v7715
        %8856 = vmatprep.subr.bf16.mxu0 %v7722
        %8857 = vmatpush1.bf16.msra.mxu0 %v7721
        %8858 = vmatprep.subr.bf16.mxu0 %v7728
        %8859 = vmatpush1.bf16.msra.mxu0 %v7727
        %8860 = vmatprep.subr.bf16.mxu0 %v7734
        %8861 = vmatpush1.bf16.msra.mxu0 %v7733
        %8862 = vmatprep.subr.bf16.mxu0 %v7740
        %8863 = vmatpush1.bf16.msra.mxu0 %v7739
        %8864 = vmatprep.subr.bf16.mxu0 %v7746
        %8865 = vmatpush1.bf16.msra.mxu0 %v7745
        %8866 = vmatprep.subr.bf16.mxu0 %v7752
        %8867 = vmatpush1.bf16.msra.mxu0 %v7751
        %8868 = vmatprep.subr.bf16.mxu0 %v7758
        %8869 = vmatpush1.bf16.msra.mxu0 %v7757
        %8870 = vmatprep.subr.bf16.mxu0 %v7764
        %8871 = vmatpush1.bf16.msra.mxu0 %v7763
        %8872 = vmatprep.subr.bf16.mxu0 %v7770
        %8873 = vmatpush1.bf16.msra.mxu0 %v7769
        %8874 = vmatprep.subr.bf16.mxu0 %v7776
        %8875 = vmatpush1.bf16.msra.mxu0 %v7775
        %8876 = vmatprep.subr.bf16.mxu0 %v7782
        %8877 = vmatpush1.bf16.msra.mxu0 %v7781
        %8878 = vmatprep.subr.bf16.mxu0 %v7788
        %8879 = vmatpush1.bf16.msra.mxu0 %v7787
        %8880 = vmatprep.subr.bf16.mxu0 %v7794
        %8881 = vmatpush1.bf16.msra.mxu0 %v7793
        %8882 = vmatprep.subr.bf16.mxu0 %v7800
        %8883 = vmatpush1.bf16.msra.mxu0 %v7799
        %8884 = vmatprep.mubr.bf16.mxu0 %v4922
        %8885 = vmatmul.mubr.bf16.gmra.mrb[0].mxu0 %v4921
        %v8886 = vpop.f32.mrb[0].mxu0
        %v8887 = vadd.f32 %v8844, %v8886
        %v8888 = vpop.f32.mrb[0].mxu0
        %v8889 = vadd.f32 %v8846, %v8888
        %v8890 = vpop.f32.mrb[0].mxu0
        %v8891 = vadd.f32 %v8848, %v8890
        %v8892 = vpop.f32.mrb[0].mxu0
        %v8893 = vadd.f32 %v8850, %v8892
        %8894 = vdwg.mxu0
        %8895 = vmatprep.subr.bf16.mxu0 %v7232
        %8896 = vmatpush1.bf16.msra.mxu0 %v7231
        %8897 = vmatprep.subr.bf16.mxu0 %v7238
        %8898 = vmatpush1.bf16.msra.mxu0 %v7237
        %8899 = vmatprep.subr.bf16.mxu0 %v7244
        %8900 = vmatpush1.bf16.msra.mxu0 %v7243
        %8901 = vmatprep.subr.bf16.mxu0 %v7250
        %8902 = vmatpush1.bf16.msra.mxu0 %v7249
        %8903 = vmatprep.subr.bf16.mxu0 %v7256
        %8904 = vmatpush1.bf16.msra.mxu0 %v7255
        %8905 = vmatprep.subr.bf16.mxu0 %v7262
        %8906 = vmatpush1.bf16.msra.mxu0 %v7261
        %8907 = vmatprep.subr.bf16.mxu0 %v7268
        %8908 = vmatpush1.bf16.msra.mxu0 %v7267
        %8909 = vmatprep.subr.bf16.mxu0 %v7274
        %8910 = vmatpush1.bf16.msra.mxu0 %v7273
        %8911 = vmatprep.subr.bf16.mxu0 %v7280
        %8912 = vmatpush1.bf16.msra.mxu0 %v7279
        %8913 = vmatprep.subr.bf16.mxu0 %v7286
        %8914 = vmatpush1.bf16.msra.mxu0 %v7285
        %8915 = vmatprep.subr.bf16.mxu0 %v7292
        %8916 = vmatpush1.bf16.msra.mxu0 %v7291
        %8917 = vmatprep.subr.bf16.mxu0 %v7298
        %8918 = vmatpush1.bf16.msra.mxu0 %v7297
        %8919 = vmatprep.subr.bf16.mxu0 %v7304
        %8920 = vmatpush1.bf16.msra.mxu0 %v7303
        %8921 = vmatprep.subr.bf16.mxu0 %v7310
        %8922 = vmatpush1.bf16.msra.mxu0 %v7309
        %8923 = vmatprep.subr.bf16.mxu0 %v7316
        %8924 = vmatpush1.bf16.msra.mxu0 %v7315
        %8925 = vmatprep.subr.bf16.mxu0 %v7322
        %8926 = vmatpush1.bf16.msra.mxu0 %v7321
        %8927 = vmatprep.mubr.bf16.mxu0 %v4912
        %8928 = vmatmul.mubr.bf16.gmra.mrb[0].mxu0 %v4911
        %v8929 = vpop.f32.mrb[0].mxu0
        %v8930 = vadd.f32 0.0, %v8929
        %v8931 = vpop.f32.mrb[0].mxu0
        %v8932 = vadd.f32 0.0, %v8931
        %v8933 = vpop.f32.mrb[0].mxu0
        %v8934 = vadd.f32 0.0, %v8933
        %v8935 = vpop.f32.mrb[0].mxu0
        %v8936 = vadd.f32 0.0, %v8935
        %8937 = vdwg.mxu0
        %8938 = vmatprep.subr.bf16.mxu0 %v7328
        %8939 = vmatpush1.bf16.msra.mxu0 %v7327
        %8940 = vmatprep.subr.bf16.mxu0 %v7334
        %8941 = vmatpush1.bf16.msra.mxu0 %v7333
        %8942 = vmatprep.subr.bf16.mxu0 %v7340
        %8943 = vmatpush1.bf16.msra.mxu0 %v7339
        %8944 = vmatprep.subr.bf16.mxu0 %v7346
        %8945 = vmatpush1.bf16.msra.mxu0 %v7345
        %8946 = vmatprep.subr.bf16.mxu0 %v7352
        %8947 = vmatpush1.bf16.msra.mxu0 %v7351
        %8948 = vmatprep.subr.bf16.mxu0 %v7358
        %8949 = vmatpush1.bf16.msra.mxu0 %v7357
        %8950 = vmatprep.subr.bf16.mxu0 %v7364
        %8951 = vmatpush1.bf16.msra.mxu0 %v7363
        %8952 = vmatprep.subr.bf16.mxu0 %v7370
        %8953 = vmatpush1.bf16.msra.mxu0 %v7369
        %8954 = vmatprep.subr.bf16.mxu0 %v7376
        %8955 = vmatpush1.bf16.msra.mxu0 %v7375
        %8956 = vmatprep.subr.bf16.mxu0 %v7382
        %8957 = vmatpush1.bf16.msra.mxu0 %v7381
        %8958 = vmatprep.subr.bf16.mxu0 %v7388
        %8959 = vmatpush1.bf16.msra.mxu0 %v7387
        %8960 = vmatprep.subr.bf16.mxu0 %v7394
        %8961 = vmatpush1.bf16.msra.mxu0 %v7393
        %8962 = vmatprep.subr.bf16.mxu0 %v7400
        %8963 = vmatpush1.bf16.msra.mxu0 %v7399
        %8964 = vmatprep.subr.bf16.mxu0 %v7406
        %8965 = vmatpush1.bf16.msra.mxu0 %v7405
        %8966 = vmatprep.subr.bf16.mxu0 %v7412
        %8967 = vmatpush1.bf16.msra.mxu0 %v7411
        %8968 = vmatprep.subr.bf16.mxu0 %v7418
        %8969 = vmatpush1.bf16.msra.mxu0 %v7417
        %8970 = vmatprep.mubr.bf16.mxu0 %v4914
        %8971 = vmatmul.mubr.bf16.gmra.mrb[0].mxu0 %v4913
        %v8972 = vpop.f32.mrb[0].mxu0
        %v8973 = vadd.f32 %v8930, %v8972
        %v8974 = vpop.f32.mrb[0].mxu0
        %v8975 = vadd.f32 %v8932, %v8974
        %v8976 = vpop.f32.mrb[0].mxu0
        %v8977 = vadd.f32 %v8934, %v8976
        %v8978 = vpop.f32.mrb[0].mxu0
        %v8979 = vadd.f32 %v8936, %v8978
        %8980 = vdwg.mxu0
        %8981 = vmatprep.subr.bf16.mxu0 %v7424
        %8982 = vmatpush1.bf16.msra.mxu0 %v7423
        %8983 = vmatprep.subr.bf16.mxu0 %v7430
        %8984 = vmatpush1.bf16.msra.mxu0 %v7429
        %8985 = vmatprep.subr.bf16.mxu0 %v7436
        %8986 = vmatpush1.bf16.msra.mxu0 %v7435
        %8987 = vmatprep.subr.bf16.mxu0 %v7442
        %8988 = vmatpush1.bf16.msra.mxu0 %v7441
        %8989 = vmatprep.subr.bf16.mxu0 %v7448
        %8990 = vmatpush1.bf16.msra.mxu0 %v7447
        %8991 = vmatprep.subr.bf16.mxu0 %v7454
        %8992 = vmatpush1.bf16.msra.mxu0 %v7453
        %8993 = vmatprep.subr.bf16.mxu0 %v7460
        %8994 = vmatpush1.bf16.msra.mxu0 %v7459
        %8995 = vmatprep.subr.bf16.mxu0 %v7466
        %8996 = vmatpush1.bf16.msra.mxu0 %v7465
        %8997 = vmatprep.subr.bf16.mxu0 %v7472
        %8998 = vmatpush1.bf16.msra.mxu0 %v7471
        %8999 = vmatprep.subr.bf16.mxu0 %v7478
        %9000 = vmatpush1.bf16.msra.mxu0 %v7477
        %9001 = vmatprep.subr.bf16.mxu0 %v7484
        %9002 = vmatpush1.bf16.msra.mxu0 %v7483
        %9003 = vmatprep.subr.bf16.mxu0 %v7490
        %9004 = vmatpush1.bf16.msra.mxu0 %v7489
        %9005 = vmatprep.subr.bf16.mxu0 %v7496
        %9006 = vmatpush1.bf16.msra.mxu0 %v7495
        %9007 = vmatprep.subr.bf16.mxu0 %v7502
        %9008 = vmatpush1.bf16.msra.mxu0 %v7501
        %9009 = vmatprep.subr.bf16.mxu0 %v7508
        %9010 = vmatpush1.bf16.msra.mxu0 %v7507
        %9011 = vmatprep.subr.bf16.mxu0 %v7514
        %9012 = vmatpush1.bf16.msra.mxu0 %v7513
        %9013 = vmatprep.mubr.bf16.mxu0 %v4916
        %9014 = vmatmul.mubr.bf16.gmra.mrb[0].mxu0 %v4915
        %v9015 = vpop.f32.mrb[0].mxu0
        %v9016 = vadd.f32 %v8973, %v9015
        %v9017 = vpop.f32.mrb[0].mxu0
        %v9018 = vadd.f32 %v8975, %v9017
        %v9019 = vpop.f32.mrb[0].mxu0
        %v9020 = vadd.f32 %v8977, %v9019
        %v9021 = vpop.f32.mrb[0].mxu0
        %v9022 = vadd.f32 %v8979, %v9021
        %9023 = vdwg.mxu0
        %9024 = vmatprep.subr.bf16.mxu0 %v7520
        %9025 = vmatpush1.bf16.msra.mxu0 %v7519
        %9026 = vmatprep.subr.bf16.mxu0 %v7526
        %9027 = vmatpush1.bf16.msra.mxu0 %v7525
        %9028 = vmatprep.subr.bf16.mxu0 %v7532
        %9029 = vmatpush1.bf16.msra.mxu0 %v7531
        %9030 = vmatprep.subr.bf16.mxu0 %v7538
        %9031 = vmatpush1.bf16.msra.mxu0 %v7537
        %9032 = vmatprep.subr.bf16.mxu0 %v7544
        %9033 = vmatpush1.bf16.msra.mxu0 %v7543
        %9034 = vmatprep.subr.bf16.mxu0 %v7550
        %9035 = vmatpush1.bf16.msra.mxu0 %v7549
        %9036 = vmatprep.subr.bf16.mxu0 %v7556
        %9037 = vmatpush1.bf16.msra.mxu0 %v7555
        %9038 = vmatprep.subr.bf16.mxu0 %v7562
        %9039 = vmatpush1.bf16.msra.mxu0 %v7561
        %9040 = vmatprep.subr.bf16.mxu0 %v7568
        %9041 = vmatpush1.bf16.msra.mxu0 %v7567
        %9042 = vmatprep.subr.bf16.mxu0 %v7574
        %9043 = vmatpush1.bf16.msra.mxu0 %v7573
        %9044 = vmatprep.subr.bf16.mxu0 %v7580
        %9045 = vmatpush1.bf16.msra.mxu0 %v7579
        %9046 = vmatprep.subr.bf16.mxu0 %v7586
        %9047 = vmatpush1.bf16.msra.mxu0 %v7585
        %9048 = vmatprep.subr.bf16.mxu0 %v7592
        %9049 = vmatpush1.bf16.msra.mxu0 %v7591
        %9050 = vmatprep.subr.bf16.mxu0 %v7598
        %9051 = vmatpush1.bf16.msra.mxu0 %v7597
        %9052 = vmatprep.subr.bf16.mxu0 %v7604
        %9053 = vmatpush1.bf16.msra.mxu0 %v7603
        %9054 = vmatprep.subr.bf16.mxu0 %v7610
        %9055 = vmatpush1.bf16.msra.mxu0 %v7609
        %9056 = vmatprep.mubr.bf16.mxu0 %v4918
        %9057 = vmatmul.mubr.bf16.gmra.mrb[0].mxu0 %v4917
        %v9058 = vpop.f32.mrb[0].mxu0
        %v9059 = vadd.f32 %v9016, %v9058
        %v9060 = vpop.f32.mrb[0].mxu0
        %v9061 = vadd.f32 %v9018, %v9060
        %v9062 = vpop.f32.mrb[0].mxu0
        %v9063 = vadd.f32 %v9020, %v9062
        %v9064 = vpop.f32.mrb[0].mxu0
        %v9065 = vadd.f32 %v9022, %v9064
        %9066 = vdwg.mxu0
        %9067 = vmatprep.subr.bf16.mxu0 %v7616
        %9068 = vmatpush1.bf16.msra.mxu0 %v7615
        %9069 = vmatprep.subr.bf16.mxu0 %v7622
        %9070 = vmatpush1.bf16.msra.mxu0 %v7621
        %9071 = vmatprep.subr.bf16.mxu0 %v7628
        %9072 = vmatpush1.bf16.msra.mxu0 %v7627
        %9073 = vmatprep.subr.bf16.mxu0 %v7634
        %9074 = vmatpush1.bf16.msra.mxu0 %v7633
        %9075 = vmatprep.subr.bf16.mxu0 %v7640
        %9076 = vmatpush1.bf16.msra.mxu0 %v7639
        %9077 = vmatprep.subr.bf16.mxu0 %v7646
        %9078 = vmatpush1.bf16.msra.mxu0 %v7645
        %9079 = vmatprep.subr.bf16.mxu0 %v7652
        %9080 = vmatpush1.bf16.msra.mxu0 %v7651
        %9081 = vmatprep.subr.bf16.mxu0 %v7658
        %9082 = vmatpush1.bf16.msra.mxu0 %v7657
        %9083 = vmatprep.subr.bf16.mxu0 %v7664
        %9084 = vmatpush1.bf16.msra.mxu0 %v7663
        %9085 = vmatprep.subr.bf16.mxu0 %v7670
        %9086 = vmatpush1.bf16.msra.mxu0 %v7669
        %9087 = vmatprep.subr.bf16.mxu0 %v7676
        %9088 = vmatpush1.bf16.msra.mxu0 %v7675
        %9089 = vmatprep.subr.bf16.mxu0 %v7682
        %9090 = vmatpush1.bf16.msra.mxu0 %v7681
        %9091 = vmatprep.subr.bf16.mxu0 %v7688
        %9092 = vmatpush1.bf16.msra.mxu0 %v7687
        %9093 = vmatprep.subr.bf16.mxu0 %v7694
        %9094 = vmatpush1.bf16.msra.mxu0 %v7693
        %9095 = vmatprep.subr.bf16.mxu0 %v7700
        %9096 = vmatpush1.bf16.msra.mxu0 %v7699
        %9097 = vmatprep.subr.bf16.mxu0 %v7706
        %9098 = vmatpush1.bf16.msra.mxu0 %v7705
        %9099 = vmatprep.mubr.bf16.mxu0 %v4920
        %9100 = vmatmul.mubr.bf16.gmra.mrb[0].mxu0 %v4919
        %v9101 = vpop.f32.mrb[0].mxu0
        %v9102 = vadd.f32 %v9059, %v9101
        %v9103 = vpop.f32.mrb[0].mxu0
        %v9104 = vadd.f32 %v9061, %v9103
        %v9105 = vpop.f32.mrb[0].mxu0
        %v9106 = vadd.f32 %v9063, %v9105
        %v9107 = vpop.f32.mrb[0].mxu0
        %v9108 = vadd.f32 %v9065, %v9107
        %9109 = vdwg.mxu0
        %9110 = vmatprep.subr.bf16.mxu0 %v7712
        %9111 = vmatpush1.bf16.msra.mxu0 %v7711
        %9112 = vmatprep.subr.bf16.mxu0 %v7718
        %9113 = vmatpush1.bf16.msra.mxu0 %v7717
        %9114 = vmatprep.subr.bf16.mxu0 %v7724
        %9115 = vmatpush1.bf16.msra.mxu0 %v7723
        %9116 = vmatprep.subr.bf16.mxu0 %v7730
        %9117 = vmatpush1.bf16.msra.mxu0 %v7729
        %9118 = vmatprep.subr.bf16.mxu0 %v7736
        %9119 = vmatpush1.bf16.msra.mxu0 %v7735
        %9120 = vmatprep.subr.bf16.mxu0 %v7742
        %9121 = vmatpush1.bf16.msra.mxu0 %v7741
        %9122 = vmatprep.subr.bf16.mxu0 %v7748
        %9123 = vmatpush1.bf16.msra.mxu0 %v7747
        %9124 = vmatprep.subr.bf16.mxu0 %v7754
        %9125 = vmatpush1.bf16.msra.mxu0 %v7753
        %9126 = vmatprep.subr.bf16.mxu0 %v7760
        %9127 = vmatpush1.bf16.msra.mxu0 %v7759
        %9128 = vmatprep.subr.bf16.mxu0 %v7766
        %9129 = vmatpush1.bf16.msra.mxu0 %v7765
        %9130 = vmatprep.subr.bf16.mxu0 %v7772
        %9131 = vmatpush1.bf16.msra.mxu0 %v7771
        %9132 = vmatprep.subr.bf16.mxu0 %v7778
        %9133 = vmatpush1.bf16.msra.mxu0 %v7777
        %9134 = vmatprep.subr.bf16.mxu0 %v7784
        %9135 = vmatpush1.bf16.msra.mxu0 %v7783
        %9136 = vmatprep.subr.bf16.mxu0 %v7790
        %9137 = vmatpush1.bf16.msra.mxu0 %v7789
        %9138 = vmatprep.subr.bf16.mxu0 %v7796
        %9139 = vmatpush1.bf16.msra.mxu0 %v7795
        %9140 = vmatprep.subr.bf16.mxu0 %v7802
        %9141 = vmatpush1.bf16.msra.mxu0 %v7801
        %9142 = vmatprep.mubr.bf16.mxu0 %v4922
        %9143 = vmatmul.mubr.bf16.gmra.mrb[0].mxu0 %v4921
        %v9144 = vpop.f32.mrb[0].mxu0
        %v9145 = vadd.f32 %v9102, %v9144
        %v9146 = vpop.f32.mrb[0].mxu0
        %v9147 = vadd.f32 %v9104, %v9146
        %v9148 = vpop.f32.mrb[0].mxu0
        %v9149 = vadd.f32 %v9106, %v9148
        %v9150 = vpop.f32.mrb[0].mxu0
        %v9151 = vadd.f32 %v9108, %v9150
        %9152 = vdwg.mxu0
        %p9153 = scmp.eq.s32.totalorder %s29, 0
        // Predicated region
        $region61: #{tpu_custom_call.1} parent=39 // pred_check
          %p9154 = pneg %p9153
        $region62: #{tpu_custom_call.1} parent=39 // pred_check_branch
          %9156 = sbr.rel (%p9154) target = $region64
        $region63: #{tpu_custom_call.1} parent=39 // pred_region
          %v9157 = vld [vmem:[#allocation10] sm:$0x3f]
          %v9159 = vlaneseq
          %v9160 = vshrl.u32 %v9159, 7
          %v9161 = vsub.s32 0, %v9160
          %v9162 = vrot.slane %v9157, %v9161
          %v9163 = vlaneseq
          %v9164 = vshrl.u32 %v9163, 7
          %v9165 = vsub.s32 1, %v9164
          %v9166 = vrot.slane %v9157, %v9165
          %v9167 = vlaneseq
          %v9168 = vshrl.u32 %v9167, 7
          %v9169 = vsub.s32 2, %v9168
          %v9170 = vrot.slane %v9157, %v9169
          %v9171 = vlaneseq
          %v9172 = vshrl.u32 %v9171, 7
          %v9173 = vsub.s32 3, %v9172
          %v9174 = vrot.slane %v9157, %v9173
          %v9175 = vlaneseq
          %v9176 = vshrl.u32 %v9175, 7
          %v9177 = vsub.s32 4, %v9176
          %v9178 = vrot.slane %v9157, %v9177
          %v9179 = vlaneseq
          %v9180 = vshrl.u32 %v9179, 7
          %v9181 = vsub.s32 5, %v9180
          %v9182 = vrot.slane %v9157, %v9181
          %v9189 = vadd.f32 %v8629, %v9162
          %v9190 = vadd.f32 %v8631, %v9166
          %v9191 = vadd.f32 %v8887, %v9170
          %v9192 = vadd.f32 %v8889, %v9174
          %v9193 = vadd.f32 %v9145, %v9178
          %v9194 = vadd.f32 %v9147, %v9182
          %v9195 = vadd.f32 %v8633, %v9162
          %v9196 = vadd.f32 %v8635, %v9166
          %v9197 = vadd.f32 %v8891, %v9170
          %v9198 = vadd.f32 %v8893, %v9174
          %v9199 = vadd.f32 %v9149, %v9178
          %v9200 = vadd.f32 %v9151, %v9182
          %9201 = vst [vmem:[#allocation11] sm:$0xff] %v9189
          %9202 = vst [vmem:[#allocation11 + $0x8] sm:$0xff] %v9190
          %9203 = vst [vmem:[#allocation11 + $0x10] sm:$0xff] %v9191
          %9204 = vst [vmem:[#allocation11 + $0x18] sm:$0xff] %v9192
          %9205 = vst [vmem:[#allocation11 + $0x20] sm:$0xff] %v9193
          %9206 = vst [vmem:[#allocation11 + $0x28] sm:$0xff] %v9194
          %9207 = vst [vmem:[#allocation11 + $0x30] sm:$0xff] %v9195
          %9208 = vst [vmem:[#allocation11 + $0x38] sm:$0xff] %v9196
          %9209 = vst [vmem:[#allocation11 + $0x40] sm:$0xff] %v9197
          %9210 = vst [vmem:[#allocation11 + $0x48] sm:$0xff] %v9198
          %9211 = vst [vmem:[#allocation11 + $0x50] sm:$0xff] %v9199
          %9212 = vst [vmem:[#allocation11 + $0x58] sm:$0xff] %v9200
        $region64: #{tpu_custom_call.1} parent=39 // pred_fallthru
          _
        %p9213 = scmp.ne.s32.totalorder %s29, 0
        // Predicated region
        $region65: #{tpu_custom_call.1} parent=39 // pred_check
          %p9214 = pneg %p9213
        $region66: #{tpu_custom_call.1} parent=39 // pred_check_branch
          %9216 = sbr.rel (%p9214) target = $region68
        $region67: #{tpu_custom_call.1} parent=39 // pred_region
          %v9217 = vld [vmem:[#allocation11] sm:$0xff]
          %v9218 = vld [vmem:[#allocation11 + $0x8] sm:$0xff]
          %v9219 = vld [vmem:[#allocation11 + $0x10] sm:$0xff]
          %v9220 = vld [vmem:[#allocation11 + $0x18] sm:$0xff]
          %v9221 = vld [vmem:[#allocation11 + $0x20] sm:$0xff]
          %v9222 = vld [vmem:[#allocation11 + $0x28] sm:$0xff]
          %v9223 = vld [vmem:[#allocation11 + $0x30] sm:$0xff]
          %v9224 = vld [vmem:[#allocation11 + $0x38] sm:$0xff]
          %v9225 = vld [vmem:[#allocation11 + $0x40] sm:$0xff]
          %v9226 = vld [vmem:[#allocation11 + $0x48] sm:$0xff]
          %v9227 = vld [vmem:[#allocation11 + $0x50] sm:$0xff]
          %v9228 = vld [vmem:[#allocation11 + $0x58] sm:$0xff]
          %v9229 = vadd.f32 %v9217, %v8629
          %v9230 = vadd.f32 %v9218, %v8631
          %v9231 = vadd.f32 %v9219, %v8887
          %v9232 = vadd.f32 %v9220, %v8889
          %v9233 = vadd.f32 %v9221, %v9145
          %v9234 = vadd.f32 %v9222, %v9147
          %v9235 = vadd.f32 %v9223, %v8633
          %v9236 = vadd.f32 %v9224, %v8635
          %v9237 = vadd.f32 %v9225, %v8891
          %v9238 = vadd.f32 %v9226, %v8893
          %v9239 = vadd.f32 %v9227, %v9149
          %v9240 = vadd.f32 %v9228, %v9151
          %9241 = vst [vmem:[#allocation11] sm:$0xff] %v9229
          %9242 = vst [vmem:[#allocation11 + $0x8] sm:$0xff] %v9230
          %9243 = vst [vmem:[#allocation11 + $0x10] sm:$0xff] %v9231
          %9244 = vst [vmem:[#allocation11 + $0x18] sm:$0xff] %v9232
          %9245 = vst [vmem:[#allocation11 + $0x20] sm:$0xff] %v9233
          %9246 = vst [vmem:[#allocation11 + $0x28] sm:$0xff] %v9234
          %9247 = vst [vmem:[#allocation11 + $0x30] sm:$0xff] %v9235
          %9248 = vst [vmem:[#allocation11 + $0x38] sm:$0xff] %v9236
          %9249 = vst [vmem:[#allocation11 + $0x40] sm:$0xff] %v9237
          %9250 = vst [vmem:[#allocation11 + $0x48] sm:$0xff] %v9238
          %9251 = vst [vmem:[#allocation11 + $0x50] sm:$0xff] %v9239
          %9252 = vst [vmem:[#allocation11 + $0x58] sm:$0xff] %v9240
        $region68: #{tpu_custom_call.1} parent=39 // pred_fallthru
          _
        // Predicated region
        $region69: #{tpu_custom_call.1} parent=39 // pred_check
          %p9253 = pneg %p179
        $region70: #{tpu_custom_call.1} parent=39 // pred_check_branch
          %9255 = sbr.rel (%p9253) target = $region72
        $region71: #{tpu_custom_call.1} parent=39 // pred_region
          %s9256 = smul.u32 2, %s28
          %s9258 = ssub.s32 1536, 1536
          %9259 = vsyncadd [#allocation4], %s9258
          %s9260 = smul.addr %s9256, 6
          %s9261 = smul.addr %s9260, 128
          %s9262 = scalar_lea.hbm %s5, %s9261
          %s9263 = sshll.u32 [#allocation11], 4
          %s9264 = int_to_ptr.vmem [resolvable:$true] %s9263
          %9269 = dma.vmem_to_hbm [thread:$0]  %s9264, 1536, %s9262, [#allocation4], 768, 768, 48
        $region72: #{tpu_custom_call.1} parent=39 // pred_fallthru
          _
        // Predicated region
        $region73: #{tpu_custom_call.1} parent=39 // pred_check
          %p9270 = pneg %p179
        $region74: #{tpu_custom_call.1} parent=39 // pred_check_branch
          %9272 = sbr.rel (%p9270) target = $region76
        $region75: #{tpu_custom_call.1} parent=39 // pred_region
          %9273 = dma.done [#allocation4], 1536
        $region76: #{tpu_custom_call.1} parent=39 // pred_fallthru
          _
      $region40: #{tpu_custom_call.1} parent=5 // pred_fallthru
        _
      %p9274 = scmp.le.s32.totalorder 2, %s19
      // Predicated region
      $region77: #{tpu_custom_call.1} parent=5 // pred_check
        %p9275 = pneg %p9274
      $region78: #{tpu_custom_call.1} parent=5 // pred_check_branch
        %9277 = sbr.rel (%p9275) target = $region80
      $region79: #{tpu_custom_call.1} parent=5 // pred_region
        %s9278 = ssub.s32 %s19, 2
      $region80: #{tpu_custom_call.1} parent=5 // pred_fallthru
        _
    $region6: #{tpu_custom_call.1} parent=1 // loop_footer
      %s23 = sadd.s32 1, %s19
    $region7: #{tpu_custom_call.1} parent=1 // loop_footer_branch
      %18 = sbr.rel target = $region3
    $region8: #{tpu_custom_call.1} parent=1 // loop_exit
      _
    %9279 = vsyncpa [#allocation3], 1
    %s9280 = scalar_lea.sflag [#allocation3], 1
    %9281 = vsyncpa %s9280, 1
    %9282 = vsyncpa [#allocation6], 1
    %s9283 = scalar_lea.sflag [#allocation6], 1
    %9284 = vsyncpa %s9283, 1
    %9285 = vsyncpa [#allocation9], 1
    %s9286 = scalar_lea.sflag [#allocation9], 1
    %9287 = vsyncpa %s9286, 1
    %9288 = vsyncpa [#allocation4], 1
    %s9289 = scalar_lea.sflag [#allocation4], 1
    %9290 = vsyncpa %s9289, 1

</llo_original>
